<compile_context>
chip_gen: v5e
topology: v5e:2x2
jax: 0.10.0
libtpu: 0.0.40
codegen_flags: <defaults>
</compile_context>

<pallas_src>
import functools

import jax
import jax.numpy as jnp
from jax import lax
from jax.experimental import pallas as pl
from jax.experimental.pallas import tpu as pltpu

EPS = 1e-5  # nn.LayerNorm default eps


def _layernorm_cn(x, gamma, beta):
    """LayerNorm over the channel (sublane) axis of a (C, Ntile) tile."""
    mean = jnp.mean(x, axis=0, keepdims=True)
    var = jnp.mean((x - mean) ** 2, axis=0, keepdims=True)
    return (x - mean) * lax.rsqrt(var + EPS) * gamma + beta


def linear_attention_kernel(xf_ref, xt_ref, wq_ref, wkv_ref, wo_ref, aux_ref,
                            o_ref, *, num_heads, head_dim, mxu_dtype):
    _, C, N = xf_ref.shape            # full token set (keys / values)
    _, _, NQ = xt_ref.shape           # query tile (== N when not split)
    HP, _ = wq_ref.shape              # num_heads * hd_pad (padded head rows)
    hd_pad = HP // num_heads

    def mm(a, b, dims):
        return lax.dot_general(a.astype(mxu_dtype), b.astype(mxu_dtype), dims,
                               preferred_element_type=jnp.float32)

    aux = aux_ref[...]                                   # (C, 8) packed params
    g1, b1 = aux[:, 0:1], aux[:, 1:2]
    b_out = aux[:, 2:3]
    g2, b2 = aux[:, 3:4], aux[:, 4:5]

    # ---- keys / values from the full token set (sublane-aligned padded heads) --
    x_full = xf_ref[0]                                   # (C, N)
    xn_full = _layernorm_cn(x_full, g1, b1)
    kv = mm(wkv_ref[...], xn_full, (((1,), (0,)), ((), ())))     # (2*HP, N) f32
    k = kv[:HP].reshape(num_heads, hd_pad, N)
    v = kv[HP:].reshape(num_heads, hd_pad, N)
    # Ones row at padded index `head_dim`: the p @ v_aug matmul then also yields
    # the softmax denominator (no separate XLU lane-sum over p).
    ridx = lax.broadcasted_iota(jnp.int32, v.shape, 1)
    v_aug = jnp.where(ridx == head_dim, 1.0, v)

    # ---- queries / residual only for this query tile ---------------------------
    x_tile = xt_ref[0]                                   # (C, NQ)
    xn_tile = _layernorm_cn(x_tile, g1, b1)
    # 1/sqrt(head_dim) already folded into wq in the wrapper.
    q = mm(wq_ref[...], xn_tile, (((1,), (0,)), ((), ()))).reshape(
        num_heads, hd_pad, NQ)

    # scores[h, n, m] = sum_r q[h,r,n] * k[h,r,m]  (padding rows are zero)
    scores = mm(q, k, (((1,), (1,)), ((0,), (0,))))      # (H, NQ, N) f32

    m = jnp.max(scores, axis=-1, keepdims=True)
    p = jnp.exp(scores - m).astype(mxu_dtype)            # bf16 on v6e/v7x, f32 on v5e

    # out_aug[h, r, n] = sum_m v_aug[h,r,m] * p[h,n,m]; row `head_dim` == row-sum(p)
    out_aug = mm(v_aug, p, (((2,), (2,)), ((0,), (0,))))  # (H, hd_pad, NQ) f32
    inv_l = pl.reciprocal(out_aug[:, head_dim:head_dim + 1, :], approx=True)
    out_norm = (out_aug * inv_l).reshape(HP, NQ)

    # to_out: padded-head columns of wo are zero, so padding/denominator rows drop out.
    attn = mm(wo_ref[...], out_norm, (((1,), (0,)), ((), ()))) + b_out   # (C, NQ)

    # TODO(synk): nn.Dropout(0.1) is identity in eval mode; training dropout not implemented.
    out1 = attn + x_tile
    out2 = _layernorm_cn(out1, g2, b2) + out1
    o_ref[0] = out2

    # TODO(synk): for large H*W (scores = heads*N*N) switch to a key-tiled
    # online-softmax (flash) loop; on v7x (64 MiB VMEM) this matters at ~half the
    # N of v5e/v6e, and on v5e the default scoped VMEM is only 16 MiB.


def _device_kind():
    try:
        return jax.devices()[0].device_kind.lower()
    except Exception:
        return ""


def _pick_mxu_dtype(kind):
    # v5e and older: no bf16 VPU/EUP -> keep element-wise math and MXU feed in f32.
    if any(g in kind for g in ("v2", "v3", "v4", "v5")):
        return jnp.float32
    return jnp.bfloat16


def linear_attention_forward(x_nchw, params, num_heads):
    b, c, h, w = x_nchw.shape
    n = h * w
    hd = c // num_heads
    scale = float(hd) ** -0.5
    hd_pad = ((hd + 1 + 7) // 8) * 8          # >= hd+1, multiple of 8 (room for ones-row)
    hp = num_heads * hd_pad

    kind = _device_kind()
    mxu_dtype = _pick_mxu_dtype(kind)
    # v7x has 2 TensorCores per chip: split query tokens so both get work.
    two_cores = "7" in kind
    nq = 128 if (two_cores and n % 256 == 0) else n
    n_qt = n // nq

    tokens = x_nchw.reshape(b, c, n)          # (B, C, N): lane-dense, no transpose

    # ---- one-time tiny weight repack: pad head_dim -> hd_pad, fold scale into Wq.
    w_qkv = params["w_qkv"]                   # (3C, C), PyTorch (out, in)
    wq, wk, wv = w_qkv[:c], w_qkv[c:2 * c], w_qkv[2 * c:]

    def pad_out_rows(wmat):                   # (C, C) -> (hp, C)
        wr = wmat.reshape(num_heads, hd, c)
        return (jnp.zeros((num_heads, hd_pad, c), wmat.dtype)
                .at[:, :hd, :].set(wr).reshape(hp, c))

    wq_pad = pad_out_rows(wq) * scale
    wkv_pad = jnp.concatenate([pad_out_rows(wk), pad_out_rows(wv)], axis=0)  # (2*hp, C)
    wo = params["w_out"].reshape(c, num_heads, hd)
    wo_pad = (jnp.zeros((c, num_heads, hd_pad), wo.dtype)
              .at[:, :, :hd].set(wo).reshape(c, hp))

    # Pack the five tiny per-channel vectors into one (C, 8) input (one DMA).
    aux = jnp.concatenate(
        [params["g1"], params["b1"], params["b_out"], params["g2"], params["b2"],
         jnp.zeros((c, 3), jnp.float32)], axis=1)

    kernel = functools.partial(linear_attention_kernel, num_heads=num_heads,
                               head_dim=hd, mxu_dtype=mxu_dtype)

    out_tokens = pl.pallas_call(
        kernel,
        out_shape=jax.ShapeDtypeStruct((b, c, n), jnp.float32),
        grid_spec=pltpu.PrefetchScalarGridSpec(
            num_scalar_prefetch=0,
            grid=(b, n_qt),
            in_specs=[
                pl.BlockSpec((1, c, n), lambda i, t: (i, 0, 0)),     # x (all tokens, K/V)
                pl.BlockSpec((1, c, nq), lambda i, t: (i, 0, t)),    # x (query tile / residual)
                pl.BlockSpec((hp, c), lambda i, t: (0, 0)),          # Wq padded, pre-scaled
                pl.BlockSpec((2 * hp, c), lambda i, t: (0, 0)),      # [Wk; Wv] padded
                pl.BlockSpec((c, hp), lambda i, t: (0, 0)),          # W_out padded columns
                pl.BlockSpec((c, 8), lambda i, t: (0, 0)),           # g1,b1,b_out,g2,b2
            ],
            out_specs=pl.BlockSpec((1, c, nq), lambda i, t: (i, 0, t)),  # lane-dense
        ),
        compiler_params=pltpu.CompilerParams(
            dimension_semantics=("parallel", "parallel")),
    )(tokens, tokens, wq_pad, wkv_pad, wo_pad, aux)

    return out_tokens.reshape(b, c, h, w)


# ----------------------------- pure-JAX reference -----------------------------

def _layernorm_nc(x, gamma, beta):
    mean = jnp.mean(x, axis=-1, keepdims=True)
    var = jnp.mean((x - mean) ** 2, axis=-1, keepdims=True)
    return (x - mean) * lax.rsqrt(var + EPS) * gamma + beta


def reference_forward(x_nchw, params, num_heads):
    """Replicates the PyTorch forward (window=False, eval mode) in plain JAX."""
    b, c, h, w = x_nchw.shape
    n = h * w
    hd = c // num_heads
    g1, b1 = params["g1"][:, 0], params["b1"][:, 0]
    g2, b2 = params["g2"][:, 0], params["b2"][:, 0]
    bout = params["b_out"][:, 0]

    x = x_nchw.reshape(b, c, n).transpose(0, 2, 1)            # (b, n, c) tokens
    residual = x
    xn = _layernorm_nc(x, g1, b1)
    qkv = xn @ params["w_qkv"].T                              # nn.Linear: x @ W^T
    q, k, v = jnp.split(qkv, 3, axis=-1)

    def to_heads(t):
        return t.reshape(b, n, num_heads, hd).transpose(0, 2, 1, 3)

    q, k, v = map(to_heads, (q, k, v))
    dots = jnp.einsum("bhnd,bhmd->bhnm", q, k) * (hd ** -0.5)
    attn = jax.nn.softmax(dots, axis=-1)
    out = jnp.einsum("bhnm,bhmd->bhnd", attn, v).transpose(0, 2, 1, 3).reshape(b, n, c)
    out = out @ params["w_out"].T + bout
    out = out + residual
    residual = out
    out = _layernorm_nc(out, g2, b2) + residual
    return out.transpose(0, 2, 1).reshape(b, c, h, w)


def init_params(key, c):
    ks = jax.random.split(key, 7)
    s = 1.0 / jnp.sqrt(c)
    return {
        "w_qkv": jax.random.uniform(ks[0], (3 * c, c), jnp.float32, -s, s),  # (out, in)
        "w_out": jax.random.uniform(ks[1], (c, c), jnp.float32, -s, s),      # (out, in)
        "b_out": jax.random.uniform(ks[2], (c, 1), jnp.float32, -s, s),
        "g1": 1.0 + 0.1 * jax.random.normal(ks[3], (c, 1), jnp.float32),
        "b1": 0.1 * jax.random.normal(ks[4], (c, 1), jnp.float32),
        "g2": 1.0 + 0.1 * jax.random.normal(ks[5], (c, 1), jnp.float32),
        "b2": 0.1 * jax.random.normal(ks[6], (c, 1), jnp.float32),
    }


if __name__ == "__main__":
    B, C, H, W = 2, 32, 16, 16
    HEADS = 8

    key = jax.random.PRNGKey(0)
    kx, kp = jax.random.split(key)
    x = jax.random.normal(kx, (B, C, H, W), jnp.float32)
    params = init_params(kp, C)

    out = linear_attention_forward(x, params, HEADS)
    out = jax.block_until_ready(out)

    ref = reference_forward(x, params, HEADS)
    assert out.shape == (B, C, H, W)
    # f32 path (v5e and older): tight tolerance; bf16 MXU/p path (v6e/v7x): ~2e-2.
    tol = 2e-2 if _pick_mxu_dtype(_device_kind()) == jnp.bfloat16 else 2e-3
    assert jnp.allclose(out, ref, rtol=tol, atol=tol), "mismatch vs reference"

    print("KERNEL_OK")
</pallas_src>

<mosaic_0001>
module attributes {stable_mosaic.version = 11 : i64} {
  func.func @linear_attention_kernel(%arg0: i32, %arg1: i32, %arg2: memref<1x32x256xf32, #tpu.memory_space<vmem>>, %arg3: memref<1x32x256xf32, #tpu.memory_space<vmem>>, %arg4: memref<64x32xf32, #tpu.memory_space<vmem>>, %arg5: memref<128x32xf32, #tpu.memory_space<vmem>>, %arg6: memref<32x64xf32, #tpu.memory_space<vmem>>, %arg7: memref<32x8xf32, #tpu.memory_space<vmem>>, %arg8: memref<1x32x256xf32, #tpu.memory_space<vmem>>) attributes {dimension_semantics = [#tpu.dimension_semantics<parallel>, #tpu.dimension_semantics<parallel>], iteration_bounds = array<i64: 2, 1>, scalar_prefetch = 0 : i64, scratch_operands = 0 : i64, tpu.core_type = #tpu.core_type<tc>, window_params = [{transform_indices = @transform_0, window_bounds = array<i64: 1, 32, 256>}, {transform_indices = @transform_1, window_bounds = array<i64: 1, 32, 256>}, {pipeline_mode = #tpu.pipeline_mode<synchronous>, transform_indices = @transform_2, window_bounds = array<i64: 64, 32>}, {pipeline_mode = #tpu.pipeline_mode<synchronous>, transform_indices = @transform_3, window_bounds = array<i64: 128, 32>}, {pipeline_mode = #tpu.pipeline_mode<synchronous>, transform_indices = @transform_4, window_bounds = array<i64: 32, 64>}, {pipeline_mode = #tpu.pipeline_mode<synchronous>, transform_indices = @transform_5, window_bounds = array<i64: 32, 8>}, {transform_indices = @transform_6, window_bounds = array<i64: 1, 32, 256>}]} {
    %c0 = arith.constant 0 : index
    %c0_0 = arith.constant 0 : index
    %0 = vector.load %arg7[%c0, %c0_0] : memref<32x8xf32, #tpu.memory_space<vmem>>, vector<32x8xf32>
    %1 = vector.extract_strided_slice %0 {offsets = [0, 0], sizes = [32, 1], strides = [1, 1]} : vector<32x8xf32> to vector<32x1xf32>
    %2 = vector.extract_strided_slice %0 {offsets = [0, 1], sizes = [32, 1], strides = [1, 1]} : vector<32x8xf32> to vector<32x1xf32>
    %3 = vector.extract_strided_slice %0 {offsets = [0, 2], sizes = [32, 1], strides = [1, 1]} : vector<32x8xf32> to vector<32x1xf32>
    %4 = vector.extract_strided_slice %0 {offsets = [0, 3], sizes = [32, 1], strides = [1, 1]} : vector<32x8xf32> to vector<32x1xf32>
    %5 = vector.extract_strided_slice %0 {offsets = [0, 4], sizes = [32, 1], strides = [1, 1]} : vector<32x8xf32> to vector<32x1xf32>
    %c0_1 = arith.constant 0 : index
    %c0_2 = arith.constant 0 : index
    %c0_3 = arith.constant 0 : index
    %6 = vector.load %arg2[%c0_1, %c0_2, %c0_3] : memref<1x32x256xf32, #tpu.memory_space<vmem>>, vector<1x32x256xf32>
    %7 = vector.shape_cast %6 : vector<1x32x256xf32> to vector<32x256xf32>
    %cst = arith.constant dense<0.000000e+00> : vector<256xf32>
    %8 = vector.multi_reduction <add>, %7, %cst [0] : vector<32x256xf32> to vector<256xf32>
    %9 = vector.shape_cast %8 : vector<256xf32> to vector<1x256xf32>
    %cst_4 = arith.constant 3.200000e+01 : f32
    %10 = vector.broadcast %cst_4 : f32 to vector<1x256xf32>
    %11 = arith.divf %9, %10 : vector<1x256xf32>
    %12 = vector.broadcast %11 : vector<1x256xf32> to vector<32x256xf32>
    %13 = arith.subf %7, %12 : vector<32x256xf32>
    %14 = arith.mulf %13, %13 : vector<32x256xf32>
    %cst_5 = arith.constant dense<0.000000e+00> : vector<256xf32>
    %15 = vector.multi_reduction <add>, %14, %cst_5 [0] : vector<32x256xf32> to vector<256xf32>
    %16 = vector.shape_cast %15 : vector<256xf32> to vector<1x256xf32>
    %cst_6 = arith.constant 3.200000e+01 : f32
    %17 = vector.broadcast %cst_6 : f32 to vector<1x256xf32>
    %18 = arith.divf %16, %17 : vector<1x256xf32>
    %19 = vector.broadcast %11 : vector<1x256xf32> to vector<32x256xf32>
    %20 = arith.subf %7, %19 : vector<32x256xf32>
    %cst_7 = arith.constant 9.99999974E-6 : f32
    %21 = vector.broadcast %cst_7 : f32 to vector<1x256xf32>
    %22 = arith.addf %18, %21 : vector<1x256xf32>
    %23 = math.rsqrt %22 : vector<1x256xf32>
    %24 = vector.broadcast %23 : vector<1x256xf32> to vector<32x256xf32>
    %25 = arith.mulf %20, %24 : vector<32x256xf32>
    %26 = vector.broadcast %1 : vector<32x1xf32> to vector<32x256xf32>
    %27 = arith.mulf %25, %26 : vector<32x256xf32>
    %28 = vector.broadcast %2 : vector<32x1xf32> to vector<32x256xf32>
    %29 = arith.addf %27, %28 : vector<32x256xf32>
    %c0_8 = arith.constant 0 : index
    %c0_9 = arith.constant 0 : index
    %30 = vector.load %arg5[%c0_8, %c0_9] : memref<128x32xf32, #tpu.memory_space<vmem>>, vector<128x32xf32>
    %31 = arith.truncf %30 : vector<128x32xf32> to vector<128x32xbf16>
    %32 = arith.truncf %29 : vector<32x256xf32> to vector<32x256xbf16>
    %cst_10 = arith.constant dense<0.000000e+00> : vector<128x256xf32>
    %33 = tpu.matmul %31, %32, %cst_10 {dimension_numbers = #tpu.dot_dimension_numbers<[1], [0], [0], [1], [0, 0, 1, 1], [], []>} : vector<128x32xbf16>, vector<32x256xbf16>, vector<128x256xf32> -> vector<128x256xf32>
    %34 = vector.extract_strided_slice %33 {offsets = [0, 0], sizes = [64, 256], strides = [1, 1]} : vector<128x256xf32> to vector<64x256xf32>
    %35 = vector.shape_cast %34 : vector<64x256xf32> to vector<8x8x256xf32>
    %36 = vector.extract_strided_slice %33 {offsets = [64, 0], sizes = [64, 256], strides = [1, 1]} : vector<128x256xf32> to vector<64x256xf32>
    %37 = vector.shape_cast %36 : vector<64x256xf32> to vector<8x8x256xf32>
    %38 = tpu.iota {dimensions = array<i32: 1>} : vector<8x8x256xi32>
    %c4_i32 = arith.constant 4 : i32
    %39 = vector.broadcast %c4_i32 : i32 to vector<8x8x256xi32>
    %40 = arith.cmpi eq, %38, %39 : vector<8x8x256xi32>
    %cst_11 = arith.constant 1.000000e+00 : f32
    %41 = vector.broadcast %cst_11 : f32 to vector<8x8x256xf32>
    %42 = arith.select %40, %41, %37 : vector<8x8x256xi1>, vector<8x8x256xf32>
    %c0_12 = arith.constant 0 : index
    %c0_13 = arith.constant 0 : index
    %c0_14 = arith.constant 0 : index
    %43 = vector.load %arg3[%c0_12, %c0_13, %c0_14] : memref<1x32x256xf32, #tpu.memory_space<vmem>>, vector<1x32x256xf32>
    %44 = vector.shape_cast %43 : vector<1x32x256xf32> to vector<32x256xf32>
    %cst_15 = arith.constant dense<0.000000e+00> : vector<256xf32>
    %45 = vector.multi_reduction <add>, %44, %cst_15 [0] : vector<32x256xf32> to vector<256xf32>
    %46 = vector.shape_cast %45 : vector<256xf32> to vector<1x256xf32>
    %cst_16 = arith.constant 3.200000e+01 : f32
    %47 = vector.broadcast %cst_16 : f32 to vector<1x256xf32>
    %48 = arith.divf %46, %47 : vector<1x256xf32>
    %49 = vector.broadcast %48 : vector<1x256xf32> to vector<32x256xf32>
    %50 = arith.subf %44, %49 : vector<32x256xf32>
    %51 = arith.mulf %50, %50 : vector<32x256xf32>
    %cst_17 = arith.constant dense<0.000000e+00> : vector<256xf32>
    %52 = vector.multi_reduction <add>, %51, %cst_17 [0] : vector<32x256xf32> to vector<256xf32>
    %53 = vector.shape_cast %52 : vector<256xf32> to vector<1x256xf32>
    %cst_18 = arith.constant 3.200000e+01 : f32
    %54 = vector.broadcast %cst_18 : f32 to vector<1x256xf32>
    %55 = arith.divf %53, %54 : vector<1x256xf32>
    %56 = vector.broadcast %48 : vector<1x256xf32> to vector<32x256xf32>
    %57 = arith.subf %44, %56 : vector<32x256xf32>
    %cst_19 = arith.constant 9.99999974E-6 : f32
    %58 = vector.broadcast %cst_19 : f32 to vector<1x256xf32>
    %59 = arith.addf %55, %58 : vector<1x256xf32>
    %60 = math.rsqrt %59 : vector<1x256xf32>
    %61 = vector.broadcast %60 : vector<1x256xf32> to vector<32x256xf32>
    %62 = arith.mulf %57, %61 : vector<32x256xf32>
    %63 = vector.broadcast %1 : vector<32x1xf32> to vector<32x256xf32>
    %64 = arith.mulf %62, %63 : vector<32x256xf32>
    %65 = vector.broadcast %2 : vector<32x1xf32> to vector<32x256xf32>
    %66 = arith.addf %64, %65 : vector<32x256xf32>
    %c0_20 = arith.constant 0 : index
    %c0_21 = arith.constant 0 : index
    %67 = vector.load %arg4[%c0_20, %c0_21] : memref<64x32xf32, #tpu.memory_space<vmem>>, vector<64x32xf32>
    %68 = arith.truncf %67 : vector<64x32xf32> to vector<64x32xbf16>
    %69 = arith.truncf %66 : vector<32x256xf32> to vector<32x256xbf16>
    %cst_22 = arith.constant dense<0.000000e+00> : vector<64x256xf32>
    %70 = tpu.matmul %68, %69, %cst_22 {dimension_numbers = #tpu.dot_dimension_numbers<[1], [0], [0], [1], [0, 0, 1, 1], [], []>} : vector<64x32xbf16>, vector<32x256xbf16>, vector<64x256xf32> -> vector<64x256xf32>
    %71 = vector.shape_cast %70 : vector<64x256xf32> to vector<8x8x256xf32>
    %72 = arith.truncf %71 : vector<8x8x256xf32> to vector<8x8x256xbf16>
    %73 = arith.truncf %35 : vector<8x8x256xf32> to vector<8x8x256xbf16>
    %cst_23 = arith.constant dense<0.000000e+00> : vector<8x256x256xf32>
    %74 = tpu.matmul %72, %73, %cst_23 {dimension_numbers = #tpu.dot_dimension_numbers<[1], [1], [2], [2], [0, 0, 0, 2, 1, 2], [0], [0]>} : vector<8x8x256xbf16>, vector<8x8x256xbf16>, vector<8x256x256xf32> -> vector<8x256x256xf32>
    %cst_24 = arith.constant dense<0xFF800000> : vector<8x256xf32>
    %75 = vector.multi_reduction <maximumf>, %74, %cst_24 [2] : vector<8x256x256xf32> to vector<8x256xf32>
    %76 = vector.shape_cast %75 : vector<8x256xf32> to vector<8x256x1xf32>
    %77 = vector.broadcast %76 : vector<8x256x1xf32> to vector<8x256x256xf32>
    %78 = arith.subf %74, %77 : vector<8x256x256xf32>
    %79 = math.exp %78 : vector<8x256x256xf32>
    %80 = arith.truncf %79 : vector<8x256x256xf32> to vector<8x256x256xbf16>
    %81 = arith.truncf %42 : vector<8x8x256xf32> to vector<8x8x256xbf16>
    %cst_25 = arith.constant dense<0.000000e+00> : vector<8x8x256xf32>
    %82 = tpu.matmul %81, %80, %cst_25 {dimension_numbers = #tpu.dot_dimension_numbers<[2], [2], [1], [1], [0, 0, 0, 1, 1, 1], [0], [0]>} : vector<8x8x256xbf16>, vector<8x256x256xbf16>, vector<8x8x256xf32> -> vector<8x8x256xf32>
    %83 = vector.extract_strided_slice %82 {offsets = [0, 4, 0], sizes = [8, 1, 256], strides = [1, 1, 1]} : vector<8x8x256xf32> to vector<8x1x256xf32>
    %84 = tpu.reciprocal %83 {approx = true} : vector<8x1x256xf32> -> vector<8x1x256xf32>
    %85 = vector.broadcast %84 : vector<8x1x256xf32> to vector<8x8x256xf32>
    %86 = arith.mulf %82, %85 : vector<8x8x256xf32>
    %87 = vector.shape_cast %86 : vector<8x8x256xf32> to vector<64x256xf32>
    %c0_26 = arith.constant 0 : index
    %c0_27 = arith.constant 0 : index
    %88 = vector.load %arg6[%c0_26, %c0_27] : memref<32x64xf32, #tpu.memory_space<vmem>>, vector<32x64xf32>
    %89 = arith.truncf %88 : vector<32x64xf32> to vector<32x64xbf16>
    %90 = arith.truncf %87 : vector<64x256xf32> to vector<64x256xbf16>
    %cst_28 = arith.constant dense<0.000000e+00> : vector<32x256xf32>
    %91 = tpu.matmul %89, %90, %cst_28 {dimension_numbers = #tpu.dot_dimension_numbers<[1], [0], [0], [1], [0, 0, 1, 1], [], []>} : vector<32x64xbf16>, vector<64x256xbf16>, vector<32x256xf32> -> vector<32x256xf32>
    %92 = vector.broadcast %3 : vector<32x1xf32> to vector<32x256xf32>
    %93 = arith.addf %91, %92 : vector<32x256xf32>
    %94 = arith.addf %93, %44 : vector<32x256xf32>
    %cst_29 = arith.constant dense<0.000000e+00> : vector<256xf32>
    %95 = vector.multi_reduction <add>, %94, %cst_29 [0] : vector<32x256xf32> to vector<256xf32>
    %96 = vector.shape_cast %95 : vector<256xf32> to vector<1x256xf32>
    %cst_30 = arith.constant 3.200000e+01 : f32
    %97 = vector.broadcast %cst_30 : f32 to vector<1x256xf32>
    %98 = arith.divf %96, %97 : vector<1x256xf32>
    %99 = vector.broadcast %98 : vector<1x256xf32> to vector<32x256xf32>
    %100 = arith.subf %94, %99 : vector<32x256xf32>
    %101 = arith.mulf %100, %100 : vector<32x256xf32>
    %cst_31 = arith.constant dense<0.000000e+00> : vector<256xf32>
    %102 = vector.multi_reduction <add>, %101, %cst_31 [0] : vector<32x256xf32> to vector<256xf32>
    %103 = vector.shape_cast %102 : vector<256xf32> to vector<1x256xf32>
    %cst_32 = arith.constant 3.200000e+01 : f32
    %104 = vector.broadcast %cst_32 : f32 to vector<1x256xf32>
    %105 = arith.divf %103, %104 : vector<1x256xf32>
    %106 = vector.broadcast %98 : vector<1x256xf32> to vector<32x256xf32>
    %107 = arith.subf %94, %106 : vector<32x256xf32>
    %cst_33 = arith.constant 9.99999974E-6 : f32
    %108 = vector.broadcast %cst_33 : f32 to vector<1x256xf32>
    %109 = arith.addf %105, %108 : vector<1x256xf32>
    %110 = math.rsqrt %109 : vector<1x256xf32>
    %111 = vector.broadcast %110 : vector<1x256xf32> to vector<32x256xf32>
    %112 = arith.mulf %107, %111 : vector<32x256xf32>
    %113 = vector.broadcast %4 : vector<32x1xf32> to vector<32x256xf32>
    %114 = arith.mulf %112, %113 : vector<32x256xf32>
    %115 = vector.broadcast %5 : vector<32x1xf32> to vector<32x256xf32>
    %116 = arith.addf %114, %115 : vector<32x256xf32>
    %117 = arith.addf %116, %94 : vector<32x256xf32>
    %c0_34 = arith.constant 0 : index
    %c0_35 = arith.constant 0 : index
    %c0_36 = arith.constant 0 : index
    %118 = vector.load %arg8[%c0_34, %c0_35, %c0_36] : memref<1x32x256xf32, #tpu.memory_space<vmem>>, vector<1x32x256xf32>
    %119 = vector.shape_cast %118 : vector<1x32x256xf32> to vector<32x256xf32>
    %120 = vector.shape_cast %117 : vector<32x256xf32> to vector<1x32x256xf32>
    tpu.vector_store %arg8[%c0_34, %c0_35, %c0_36], %120 {strides = array<i32>} : memref<1x32x256xf32, #tpu.memory_space<vmem>>, vector<1x32x256xf32>,
    return
  }
  func.func @transform_0(%arg0: i32, %arg1: i32) -> (i32, i32, i32) {
    %c0_i32 = arith.constant 0 : i32
    %c0_i32_0 = arith.constant 0 : i32
    %c0_i32_1 = arith.constant 0 : i32
    return %arg0, %c0_i32, %c0_i32_0 : i32, i32, i32
  }
  func.func @transform_1(%arg0: i32, %arg1: i32) -> (i32, i32, i32) {
    %c0_i32 = arith.constant 0 : i32
    %c0_i32_0 = arith.constant 0 : i32
    return %arg0, %c0_i32, %arg1 : i32, i32, i32
  }
  func.func @transform_2(%arg0: i32, %arg1: i32) -> (i32, i32) {
    %c0_i32 = arith.constant 0 : i32
    %c0_i32_0 = arith.constant 0 : i32
    %c0_i32_1 = arith.constant 0 : i32
    return %c0_i32, %c0_i32_0 : i32, i32
  }
  func.func @transform_3(%arg0: i32, %arg1: i32) -> (i32, i32) {
    %c0_i32 = arith.constant 0 : i32
    %c0_i32_0 = arith.constant 0 : i32
    %c0_i32_1 = arith.constant 0 : i32
    return %c0_i32, %c0_i32_0 : i32, i32
  }
  func.func @transform_4(%arg0: i32, %arg1: i32) -> (i32, i32) {
    %c0_i32 = arith.constant 0 : i32
    %c0_i32_0 = arith.constant 0 : i32
    %c0_i32_1 = arith.constant 0 : i32
    return %c0_i32, %c0_i32_0 : i32, i32
  }
  func.func @transform_5(%arg0: i32, %arg1: i32) -> (i32, i32) {
    %c0_i32 = arith.constant 0 : i32
    %c0_i32_0 = arith.constant 0 : i32
    %c0_i32_1 = arith.constant 0 : i32
    return %c0_i32, %c0_i32_0 : i32, i32
  }
  func.func @transform_6(%arg0: i32, %arg1: i32) -> (i32, i32, i32) {
    %c0_i32 = arith.constant 0 : i32
    %c0_i32_0 = arith.constant 0 : i32
    return %arg0, %c0_i32, %arg1 : i32, i32, i32
  }
}

</mosaic_0001>

<llo_original>
// kernel: tpu_custom_call.1
$region0: #{tpu_custom_call.1}
  #allocation0 [shape = 'u32[]', space=smem, size = 0x4, offset = 0x4, fixed_abs, tag = 'smem constant byte address 0x4 - core index']
  #allocation1 [shape = 'u32[72,128]{1,0:T(1,128)}', space=vmem, size = 0x9000, scoped, tag = 'internal scratch']
  %s0 = inlined_call_operand.vmem [shape: f32[2,32,256], index: 0, kind: input, shape index: {}]
  %s1 = inlined_call_operand.hbm [shape: f32[2,32,256], index: 1, kind: input, shape index: {}]
  %s2 = inlined_call_operand.vmem [shape: f32[64,32], index: 2, kind: input, shape index: {}]
  %s3 = inlined_call_operand.vmem [shape: f32[128,32], index: 3, kind: input, shape index: {}]
  %s4 = inlined_call_operand.vmem [shape: f32[32,64], index: 4, kind: input, shape index: {}]
  %s5 = inlined_call_operand.vmem [shape: f32[32,8], index: 5, kind: input, shape index: {}]
  %s6 = inlined_call_operand.hbm [shape: f32[2,32,256], index: 6, kind: output, shape index: {}]
  %s7 = sld [smem:[#allocation0]]
  $region61: #{tpu_custom_call.1} parent=0
    _
  %s9 = ssub.s32 1, %s7
  %s10 = scalar_select 0, %s9, %s7
  $region1: #{tpu_custom_call.1} parent=0
    #allocation2 [shape = 'u8[65536]{0}', space=vmem, size = 0x10000, scoped, tag = 'input window, operand 1']
    #allocation3 [shape = 's32[2]{0}', space=sflag, size = 0x8, scoped, tag = 'scoped memory for tpu_custom_call.1']
    #allocation4 [shape = 's32[2]{0}', space=sflag, size = 0x8, scoped, tag = 'scoped memory for tpu_custom_call.1']
    #allocation5 [shape = 'u8[65536]{0}', space=vmem, size = 0x10000, scoped, tag = 'output window, operand 0']
    %11 = vsyncpa [#allocation3], 0
    %s12 = scalar_lea.sflag [#allocation3], 1
    %13 = vsyncpa %s12, 0
    %14 = vsyncpa [#allocation4], 0
    %s15 = scalar_lea.sflag [#allocation4], 1
    %16 = vsyncpa %s15, 0
    loop: start=0, step=1, limit=4
    $region2: #{tpu_custom_call.1} parent=1 // loop_pre_header
      _
    $region3: #{tpu_custom_call.1} parent=1 // loop_header
      %s18 = sphi 0, %s22
      %p19 = scmp.ge.s32.totalorder %s18, 4
      %s25 = sphi 0, %s37
      %s26 = sphi 0, %s33
      %s27 = sphi 0, %s25
      %s28 = sphi 0, %s26
      %s29 = sphi 0, %s27
      %s30 = sphi 0, %s28
      %s40 = sphi 0, %s42
      %s43 = sphi 0, %s40
      %s44 = sphi 0, %s43
      %s60 = sphi 0, %s44
      %s68 = sphi 0, %s70
      %s71 = sphi 0, %s68
      %s72 = sphi 0, %s71
      %s88 = sphi 0, %s72
      %s92 = sphi 0, %s92
      %s94 = sphi 0, %s92
      %s95 = sphi 0, %s94
      %s109 = sphi 0, %s95
      %s113 = sphi 0, %s113
      %s115 = sphi 0, %s113
      %s116 = sphi 0, %s115
      %s130 = sphi 0, %s116
      %s134 = sphi 0, %s134
      %s136 = sphi 0, %s134
      %s137 = sphi 0, %s136
      %s151 = sphi 0, %s137
      %s155 = sphi 0, %s155
      %s157 = sphi 0, %s155
      %s158 = sphi 0, %s157
      %s172 = sphi 0, %s158
      %s180 = sphi 0, %s182
      %s183 = sphi 0, %s180
      %s184 = sphi 0, %s183
      %s200 = sphi 0, %s184
    $region4: #{tpu_custom_call.1} parent=1 // loop_header_branch
      %21 = sbr.rel (%p19) target = $region8
    $region5: #{tpu_custom_call.1} parent=1 // loop_body
      %s23 = ssub.s32 %s18, 1
      %s24 = ssub.s32 %s18, 2
      %s31 = sadd.s32 1, %s26
      %p32 = scmp.ge.s32.totalorder %s31, 1
      %s33 = scalar_select %p32, 0, %s31
      %s34 = sadd.s32 1, %s25
      %s35 = scalar_select %p32, %s34, %s25
      %p36 = scmp.ge.s32.totalorder %s35, 2
      %s37 = scalar_select %p36, 0, %s35
      %s38 = ssub.s32 %s25, %s37
      %p39 = scmp.eq.s32.totalorder %s38, 0
      %s41 = sadd.s32 %s40, 1
      %s42 = scalar_select %p39, %s40, %s41
      %p45 = pneg %p39
      %p46 = scmp.eq.s32.totalorder %s18, 1
      %p47 = por %p45, %p46
      %p48 = scmp.ne.s32.totalorder %s40, %s43
      %p49 = scmp.eq.s32.totalorder %s18, 0
      %p50 = por %p48, %p49
      %p51 = scmp.ne.s32.totalorder %s40, %s43
      %p52 = scmp.eq.s32.totalorder %s23, 1
      %p53 = por %p51, %p52
      %p54 = scmp.ne.s32.totalorder %s43, %s44
      %p55 = scmp.eq.s32.totalorder %s23, 0
      %p56 = por %p54, %p55
      %p57 = scmp.ne.s32.totalorder %s43, %s44
      %p58 = scmp.eq.s32.totalorder %s24, 1
      %p59 = por %p57, %p58
      %p61 = scmp.ne.s32.totalorder %s44, %s60
      %p62 = scmp.eq.s32.totalorder %s24, 0
      %p63 = por %p61, %p62
      %s64 = ssub.s32 %s25, %s37
      %s65 = ssub.s32 %s26, %s33
      %s66 = sor.u32 %s64, %s65
      %p67 = scmp.eq.s32.totalorder %s66, 0
      %s69 = sadd.s32 %s68, 1
      %s70 = scalar_select %p67, %s68, %s69
      %p73 = pneg %p67
      %p74 = scmp.eq.s32.totalorder %s18, 1
      %p75 = por %p73, %p74
      %p76 = scmp.ne.s32.totalorder %s68, %s71
      %p77 = scmp.eq.s32.totalorder %s18, 0
      %p78 = por %p76, %p77
      %p79 = scmp.ne.s32.totalorder %s68, %s71
      %p80 = scmp.eq.s32.totalorder %s23, 1
      %p81 = por %p79, %p80
      %p82 = scmp.ne.s32.totalorder %s71, %s72
      %p83 = scmp.eq.s32.totalorder %s23, 0
      %p84 = por %p82, %p83
      %p85 = scmp.ne.s32.totalorder %s71, %s72
      %p86 = scmp.eq.s32.totalorder %s24, 1
      %p87 = por %p85, %p86
      %p89 = scmp.ne.s32.totalorder %s72, %s88
      %p90 = scmp.eq.s32.totalorder %s24, 0
      %p91 = por %p89, %p90
      %s93 = sadd.s32 %s92, 1
      %p96 = scmp.eq.s32.totalorder %s18, 1
      %p97 = scmp.ne.s32.totalorder %s92, %s94
      %p98 = scmp.eq.s32.totalorder %s18, 0
      %p99 = por %p97, %p98
      %p100 = scmp.ne.s32.totalorder %s92, %s94
      %p101 = scmp.eq.s32.totalorder %s23, 1
      %p102 = por %p100, %p101
      %p103 = scmp.ne.s32.totalorder %s94, %s95
      %p104 = scmp.eq.s32.totalorder %s23, 0
      %p105 = por %p103, %p104
      %p106 = scmp.ne.s32.totalorder %s94, %s95
      %p107 = scmp.eq.s32.totalorder %s24, 1
      %p108 = por %p106, %p107
      %p110 = scmp.ne.s32.totalorder %s95, %s109
      %p111 = scmp.eq.s32.totalorder %s24, 0
      %p112 = por %p110, %p111
      %s114 = sadd.s32 %s113, 1
      %p117 = scmp.eq.s32.totalorder %s18, 1
      %p118 = scmp.ne.s32.totalorder %s113, %s115
      %p119 = scmp.eq.s32.totalorder %s18, 0
      %p120 = por %p118, %p119
      %p121 = scmp.ne.s32.totalorder %s113, %s115
      %p122 = scmp.eq.s32.totalorder %s23, 1
      %p123 = por %p121, %p122
      %p124 = scmp.ne.s32.totalorder %s115, %s116
      %p125 = scmp.eq.s32.totalorder %s23, 0
      %p126 = por %p124, %p125
      %p127 = scmp.ne.s32.totalorder %s115, %s116
      %p128 = scmp.eq.s32.totalorder %s24, 1
      %p129 = por %p127, %p128
      %p131 = scmp.ne.s32.totalorder %s116, %s130
      %p132 = scmp.eq.s32.totalorder %s24, 0
      %p133 = por %p131, %p132
      %s135 = sadd.s32 %s134, 1
      %p138 = scmp.eq.s32.totalorder %s18, 1
      %p139 = scmp.ne.s32.totalorder %s134, %s136
      %p140 = scmp.eq.s32.totalorder %s18, 0
      %p141 = por %p139, %p140
      %p142 = scmp.ne.s32.totalorder %s134, %s136
      %p143 = scmp.eq.s32.totalorder %s23, 1
      %p144 = por %p142, %p143
      %p145 = scmp.ne.s32.totalorder %s136, %s137
      %p146 = scmp.eq.s32.totalorder %s23, 0
      %p147 = por %p145, %p146
      %p148 = scmp.ne.s32.totalorder %s136, %s137
      %p149 = scmp.eq.s32.totalorder %s24, 1
      %p150 = por %p148, %p149
      %p152 = scmp.ne.s32.totalorder %s137, %s151
      %p153 = scmp.eq.s32.totalorder %s24, 0
      %p154 = por %p152, %p153
      %s156 = sadd.s32 %s155, 1
      %p159 = scmp.eq.s32.totalorder %s18, 1
      %p160 = scmp.ne.s32.totalorder %s155, %s157
      %p161 = scmp.eq.s32.totalorder %s18, 0
      %p162 = por %p160, %p161
      %p163 = scmp.ne.s32.totalorder %s155, %s157
      %p164 = scmp.eq.s32.totalorder %s23, 1
      %p165 = por %p163, %p164
      %p166 = scmp.ne.s32.totalorder %s157, %s158
      %p167 = scmp.eq.s32.totalorder %s23, 0
      %p168 = por %p166, %p167
      %p169 = scmp.ne.s32.totalorder %s157, %s158
      %p170 = scmp.eq.s32.totalorder %s24, 1
      %p171 = por %p169, %p170
      %p173 = scmp.ne.s32.totalorder %s158, %s172
      %p174 = scmp.eq.s32.totalorder %s24, 0
      %p175 = por %p173, %p174
      %s176 = ssub.s32 %s25, %s37
      %s177 = ssub.s32 %s26, %s33
      %s178 = sor.u32 %s176, %s177
      %p179 = scmp.eq.s32.totalorder %s178, 0
      %s181 = sadd.s32 %s180, 1
      %s182 = scalar_select %p179, %s180, %s181
      %p185 = pneg %p179
      %p186 = scmp.eq.s32.totalorder %s18, 1
      %p187 = por %p185, %p186
      %p188 = scmp.ne.s32.totalorder %s180, %s183
      %p189 = scmp.eq.s32.totalorder %s18, 0
      %p190 = por %p188, %p189
      %p191 = scmp.ne.s32.totalorder %s180, %s183
      %p192 = scmp.eq.s32.totalorder %s23, 1
      %p193 = por %p191, %p192
      %p194 = scmp.ne.s32.totalorder %s183, %s184
      %p195 = scmp.eq.s32.totalorder %s23, 0
      %p196 = por %p194, %p195
      %p197 = scmp.ne.s32.totalorder %s183, %s184
      %p198 = scmp.eq.s32.totalorder %s24, 1
      %p199 = por %p197, %p198
      %p201 = scmp.ne.s32.totalorder %s184, %s200
      %p202 = scmp.eq.s32.totalorder %s24, 0
      %p203 = por %p201, %p202
      %p204 = scmp.le.s32.totalorder 1, %s18
      %p205 = scmp.lt.s32.totalorder %s18, 3
      %p206 = pnand %p204, %p205
      %p207 = pneg %p206
      // Predicated region
      $region9: #{tpu_custom_call.1} parent=5 // pred_check
        _
      $region10: #{tpu_custom_call.1} parent=5 // pred_check_branch
        %209 = sbr.rel (%p206) target = $region12
      $region11: #{tpu_custom_call.1} parent=5 // pred_region
        %s210 = ssub.s32 %s18, 1
        // Predicated region
        $region13: #{tpu_custom_call.1} parent=11 // pred_check
          %p211 = pneg %p105
        $region14: #{tpu_custom_call.1} parent=11 // pred_check_branch
          %213 = sbr.rel (%p211) target = $region16
        $region15: #{tpu_custom_call.1} parent=11 // pred_region
          _
        $region16: #{tpu_custom_call.1} parent=11 // pred_fallthru
          _
        // Predicated region
        $region17: #{tpu_custom_call.1} parent=11 // pred_check
          %p214 = pneg %p126
        $region18: #{tpu_custom_call.1} parent=11 // pred_check_branch
          %216 = sbr.rel (%p214) target = $region20
        $region19: #{tpu_custom_call.1} parent=11 // pred_region
          _
        $region20: #{tpu_custom_call.1} parent=11 // pred_fallthru
          _
        // Predicated region
        $region21: #{tpu_custom_call.1} parent=11 // pred_check
          %p217 = pneg %p147
        $region22: #{tpu_custom_call.1} parent=11 // pred_check_branch
          %219 = sbr.rel (%p217) target = $region24
        $region23: #{tpu_custom_call.1} parent=11 // pred_region
          _
        $region24: #{tpu_custom_call.1} parent=11 // pred_fallthru
          _
        // Predicated region
        $region25: #{tpu_custom_call.1} parent=11 // pred_check
          %p220 = pneg %p168
        $region26: #{tpu_custom_call.1} parent=11 // pred_check_branch
          %222 = sbr.rel (%p220) target = $region28
        $region27: #{tpu_custom_call.1} parent=11 // pred_region
          _
        $region28: #{tpu_custom_call.1} parent=11 // pred_fallthru
          _
      $region12: #{tpu_custom_call.1} parent=5 // pred_fallthru
        _
      %p223 = scmp.lt.s32.totalorder %s18, 2
      // Predicated region
      $region29: #{tpu_custom_call.1} parent=5 // pred_check
        %p224 = pneg %p223
      $region30: #{tpu_custom_call.1} parent=5 // pred_check_branch
        %226 = sbr.rel (%p224) target = $region32
      $region31: #{tpu_custom_call.1} parent=5 // pred_region
        // Predicated region
        $region33: #{tpu_custom_call.1} parent=31 // pred_check
          %p227 = pneg %p50
        $region34: #{tpu_custom_call.1} parent=31 // pred_check_branch
          %229 = sbr.rel (%p227) target = $region36
        $region35: #{tpu_custom_call.1} parent=31 // pred_region
          %p230 = scmp.lt.s32.totalorder %s25, 1
          %s231 = scalar_select %p230, %s25, 1
          %s232 = smul.addr %s231, 8
          %s233 = smul.addr %s232, 8
          %s234 = scalar_lea.vmem %s0, %s233
        $region36: #{tpu_custom_call.1} parent=31 // pred_fallthru
          _
        // Predicated region
        $region37: #{tpu_custom_call.1} parent=31 // pred_check
          %p235 = pneg %p78
        $region38: #{tpu_custom_call.1} parent=31 // pred_check_branch
          %237 = sbr.rel (%p235) target = $region40
        $region39: #{tpu_custom_call.1} parent=31 // pred_region
          %s238 = sand.u32 %s68, 1
          %s239 = scalar_lea.sflag [#allocation3], %s238
          %s240 = sand.u32 %s68, 1
          %s241 = smul.addr %s240, 64
          %s242 = scalar_lea.vmem [#allocation2], %s241
          %s243 = smul.u32 2, %s26
          %245 = vsyncadd %s239, 0
          %s246 = smul.addr %s25, 8
          %s247 = sadd.s32 %s243, %s246
          %s248 = smul.addr %s247, 8
          %s249 = scalar_lea.hbm %s1, %s248
          %s250 = sshll.u32 %s249, 4
          %s251 = int_to_ptr.hbm [resolvable:$true] %s250
          %s252 = sshll.u32 %s242, 4
          %s253 = int_to_ptr.vmem [resolvable:$true] %s252
          %258 = dma.hbm_to_vmem [thread:$0]  %s251, 1024, %s253, %s239, 256, 256, 16
        $region40: #{tpu_custom_call.1} parent=31 // pred_fallthru
          _
      $region32: #{tpu_custom_call.1} parent=5 // pred_fallthru
        _
      %p259 = scmp.le.s32.totalorder 1, %s18
      %p260 = scmp.lt.s32.totalorder %s18, 3
      %p261 = pnand %p259, %p260
      %p262 = pneg %p261
      // Predicated region
      $region41: #{tpu_custom_call.1} parent=5 // pred_check
        _
      $region42: #{tpu_custom_call.1} parent=5 // pred_check_branch
        %264 = sbr.rel (%p261) target = $region44
      $region43: #{tpu_custom_call.1} parent=5 // pred_region
        %s265 = ssub.s32 %s18, 1
        %s266 = sand.u32 %s71, 1
        %s267 = scalar_lea.sflag [#allocation3], %s266
        %s268 = sand.u32 %s71, 1
        %s269 = smul.addr %s268, 64
        %s270 = scalar_lea.vmem [#allocation2], %s269
        // Predicated region
        $region45: #{tpu_custom_call.1} parent=43 // pred_check
          %p271 = pneg %p84
        $region46: #{tpu_custom_call.1} parent=43 // pred_check_branch
          %273 = sbr.rel (%p271) target = $region48
        $region47: #{tpu_custom_call.1} parent=43 // pred_region
          %275 = dma.done %s267, 1024
        $region48: #{tpu_custom_call.1} parent=43 // pred_fallthru
          _
        %p276 = scmp.lt.s32.totalorder %s27, 1
        %s277 = scalar_select %p276, %s27, 1
        %s278 = smul.addr %s277, 8
        %s279 = smul.addr %s278, 8
        %s280 = scalar_lea.vmem %s0, %s279
        %p281 = pneg %p56
        %p282 = pneg %p53
        %s283 = sand.u32 %s71, 1
        %s284 = scalar_lea.sflag [#allocation3], %s283
        %s285 = sand.u32 %s71, 1
        %s286 = smul.addr %s285, 64
        %s287 = scalar_lea.vmem [#allocation2], %s286
        %p288 = pneg %p84
        %p289 = pneg %p81
        %p290 = pneg %p105
        %p291 = pneg %p102
        %p292 = pneg %p126
        %p293 = pneg %p123
        %p294 = pneg %p147
        %p295 = pneg %p144
        %p296 = pneg %p168
        %p297 = pneg %p165
        %p298 = pneg %p196
        %p299 = pneg %p193
        %s300 = sand.u32 %s183, 1
        %s301 = scalar_lea.sflag [#allocation4], %s300
        %s302 = sand.u32 %s183, 1
        %s303 = smul.addr %s302, 64
        %s304 = scalar_lea.vmem [#allocation5], %s303
        %p305 = scmp.lt.s32.totalorder %s27, 1
        %s306 = scalar_select %p305, %s27, 1
        %s307 = smul.addr %s306, 8
        %s308 = smul.addr %s307, 8
        %s309 = scalar_lea.vmem %s0, %s308
        %s310 = smul.u32 2, %s28
        %s311 = smul.u32 2, %s28
        %v313 = vld [vmem:[%s5] sm:$0xff]
        %v314 = vld [vmem:[%s5 + $0x8] sm:$0xff]
        %v315 = vld [vmem:[%s5 + $0x10] sm:$0xff]
        %v316 = vld [vmem:[%s5 + $0x18] sm:$0xff]
        %v317 = vld [vmem:[%s309] sm:$0xff]
        %v318 = vld [vmem:[%s309 + $0x8] sm:$0xff]
        %v319 = vld [vmem:[%s309 + $0x10] sm:$0xff]
        %v320 = vld [vmem:[%s309 + $0x18] sm:$0xff]
        %v321 = vld [vmem:[%s309 + $0x20] sm:$0xff]
        %v322 = vld [vmem:[%s309 + $0x28] sm:$0xff]
        %v323 = vld [vmem:[%s309 + $0x30] sm:$0xff]
        %v324 = vld [vmem:[%s309 + $0x38] sm:$0xff]
        %v325 = vadd.f32 %v317, %v319
        %v326 = vadd.f32 %v325, %v321
        %v327 = vadd.f32 %v326, %v323
        %v328 = vrot.slane %v327, 4
        %v329 = vadd.f32 %v327, %v328
        %v330 = vrot.slane %v329, 2
        %v331 = vadd.f32 %v329, %v330
        %v332 = vrot.slane %v331, 1
        %v333 = vadd.f32 %v331, %v332
        %v334 = vadd.f32 %v318, %v320
        %v335 = vadd.f32 %v334, %v322
        %v336 = vadd.f32 %v335, %v324
        %v337 = vrot.slane %v336, 4
        %v338 = vadd.f32 %v336, %v337
        %v339 = vrot.slane %v338, 2
        %v340 = vadd.f32 %v338, %v339
        %v341 = vrot.slane %v340, 1
        %v342 = vadd.f32 %v340, %v341
        %v343 = vrcp.pop 32.0
        %v344 = vmul.f32 32.0, %v343
        %v345 = vsub.f32 1.0, %v344
        %v346 = vmul.f32 %v343, %v345
        %v347 = vadd.f32 %v343, %v346
        %vm348 = vweird.f32 %v343
        %v349 = vsel %vm348, %v343, %v347
        %v350 = vmul.f32 %v333, %v349
        %v351 = vmul.f32 %v342, %v349
        %v352 = vsub.f32 %v317, %v350
        %v353 = vsub.f32 %v318, %v351
        %v354 = vsub.f32 %v319, %v350
        %v355 = vsub.f32 %v320, %v351
        %v356 = vsub.f32 %v321, %v350
        %v357 = vsub.f32 %v322, %v351
        %v358 = vsub.f32 %v323, %v350
        %v359 = vsub.f32 %v324, %v351
        %v360 = vmul.f32 %v352, %v352
        %v361 = vmul.f32 %v353, %v353
        %v362 = vmul.f32 %v354, %v354
        %v363 = vmul.f32 %v355, %v355
        %v364 = vmul.f32 %v356, %v356
        %v365 = vmul.f32 %v357, %v357
        %v366 = vmul.f32 %v358, %v358
        %v367 = vmul.f32 %v359, %v359
        %v368 = vadd.f32 %v360, %v362
        %v369 = vadd.f32 %v368, %v364
        %v370 = vadd.f32 %v369, %v366
        %v371 = vrot.slane %v370, 4
        %v372 = vadd.f32 %v370, %v371
        %v373 = vrot.slane %v372, 2
        %v374 = vadd.f32 %v372, %v373
        %v375 = vrot.slane %v374, 1
        %v376 = vadd.f32 %v374, %v375
        %v377 = vadd.f32 %v361, %v363
        %v378 = vadd.f32 %v377, %v365
        %v379 = vadd.f32 %v378, %v367
        %v380 = vrot.slane %v379, 4
        %v381 = vadd.f32 %v379, %v380
        %v382 = vrot.slane %v381, 2
        %v383 = vadd.f32 %v381, %v382
        %v384 = vrot.slane %v383, 1
        %v385 = vadd.f32 %v383, %v384
        %v386 = vmul.f32 %v376, %v349
        %v387 = vmul.f32 %v385, %v349
        %v388 = vadd.f32 %v386, 1e-05
        %v389 = vadd.f32 %v387, 1e-05
        %v390 = vrsqrt.pop %v388
        %v391 = vmul.f32 %v390, %v388
        %v392 = vmul.f32 %v391, %v390
        %v393 = vmul.f32 0.5, %v392
        %v394 = vsub.f32 1.5, %v393
        %v395 = vmul.f32 %v390, %v394
        %vm396 = vweird.f32 %v388
        %vm397 = vweird.f32 %v390
        %vm398 = vmor %vm396, %vm397
        %v399 = vsel %vm398, %v390, %v395
        %v400 = vrsqrt.pop %v389
        %v401 = vmul.f32 %v400, %v389
        %v402 = vmul.f32 %v401, %v400
        %v403 = vmul.f32 0.5, %v402
        %v404 = vsub.f32 1.5, %v403
        %v405 = vmul.f32 %v400, %v404
        %vm406 = vweird.f32 %v389
        %vm407 = vweird.f32 %v400
        %vm408 = vmor %vm406, %vm407
        %v409 = vsel %vm408, %v400, %v405
        %v410 = vmul.f32 %v352, %v399
        %v411 = vmul.f32 %v353, %v409
        %v412 = vmul.f32 %v354, %v399
        %v413 = vmul.f32 %v355, %v409
        %v414 = vmul.f32 %v356, %v399
        %v415 = vmul.f32 %v357, %v409
        %v416 = vmul.f32 %v358, %v399
        %v417 = vmul.f32 %v359, %v409
        %419 = vset.pattern.permute.xlu0 0
        %420 = vperm.xlu0 %419, %v313
        %v421 = vpop.permute.xlu0 %420
        %424 = vset.pattern.permute.xlu0 0
        %425 = vperm.xlu0 %424, %v314
        %v426 = vpop.permute.xlu0 %425
        %429 = vset.pattern.permute.xlu0 0
        %430 = vperm.xlu0 %429, %v315
        %v431 = vpop.permute.xlu0 %430
        %434 = vset.pattern.permute.xlu0 0
        %435 = vperm.xlu0 %434, %v316
        %v436 = vpop.permute.xlu0 %435
        %v438 = vmul.f32 %v410, %v421
        %v439 = vmul.f32 %v411, %v421
        %v440 = vmul.f32 %v412, %v426
        %v441 = vmul.f32 %v413, %v426
        %v442 = vmul.f32 %v414, %v431
        %v443 = vmul.f32 %v415, %v431
        %v444 = vmul.f32 %v416, %v436
        %v445 = vmul.f32 %v417, %v436
        %446 = vset.pattern.permute.xlu0 1
        %447 = vperm.xlu0 %446, %v313
        %v448 = vpop.permute.xlu0 %447
        %450 = vset.pattern.permute.xlu0 1
        %451 = vperm.xlu0 %450, %v314
        %v452 = vpop.permute.xlu0 %451
        %454 = vset.pattern.permute.xlu0 1
        %455 = vperm.xlu0 %454, %v315
        %v456 = vpop.permute.xlu0 %455
        %458 = vset.pattern.permute.xlu0 1
        %459 = vperm.xlu0 %458, %v316
        %v460 = vpop.permute.xlu0 %459
        %v462 = vadd.f32 %v438, %v448
        %v463 = vadd.f32 %v439, %v448
        %v464 = vadd.f32 %v440, %v452
        %v465 = vadd.f32 %v441, %v452
        %v466 = vadd.f32 %v442, %v456
        %v467 = vadd.f32 %v443, %v456
        %v468 = vadd.f32 %v444, %v460
        %v469 = vadd.f32 %v445, %v460
        %v470 = vld [vmem:[%s3] sm:$0xff]
        %v471 = vld [vmem:[%s3 + $0x8] sm:$0xff]
        %v472 = vld [vmem:[%s3 + $0x10] sm:$0xff]
        %v473 = vld [vmem:[%s3 + $0x18] sm:$0xff]
        %v474 = vld [vmem:[%s3 + $0x20] sm:$0xff]
        %v475 = vld [vmem:[%s3 + $0x28] sm:$0xff]
        %v476 = vld [vmem:[%s3 + $0x30] sm:$0xff]
        %v477 = vld [vmem:[%s3 + $0x38] sm:$0xff]
        %v478 = vld [vmem:[%s3 + $0x40] sm:$0xff]
        %v479 = vld [vmem:[%s3 + $0x48] sm:$0xff]
        %v480 = vld [vmem:[%s3 + $0x50] sm:$0xff]
        %v481 = vld [vmem:[%s3 + $0x58] sm:$0xff]
        %v482 = vld [vmem:[%s3 + $0x60] sm:$0xff]
        %v483 = vld [vmem:[%s3 + $0x68] sm:$0xff]
        %v484 = vld [vmem:[%s3 + $0x70] sm:$0xff]
        %v485 = vld [vmem:[%s3 + $0x78] sm:$0xff]
        %v486 = vpack.c.bf16 %v471, %v470
        %v487 = vpack.c.bf16 %v473, %v472
        %v488 = vpack.c.bf16 %v475, %v474
        %v489 = vpack.c.bf16 %v477, %v476
        %v490 = vpack.c.bf16 %v479, %v478
        %v491 = vpack.c.bf16 %v481, %v480
        %v492 = vpack.c.bf16 %v483, %v482
        %v493 = vpack.c.bf16 %v485, %v484
        %v494 = vpack.c.bf16 %v464, %v462
        %v495 = vpack.c.bf16 %v465, %v463
        %v496 = vpack.c.bf16 %v468, %v466
        %v497 = vpack.c.bf16 %v469, %v467
        %vm498 = vcmask 261120
        %v500 = vsel %vm498, %v486, 0
        %v503 = vsel %vm498, %v487, 0
        %v506 = vsel %vm498, %v488, 0
        %v509 = vsel %vm498, %v489, 0
        %v512 = vsel %vm498, %v490, 0
        %v515 = vsel %vm498, %v491, 0
        %v518 = vsel %vm498, %v492, 0
        %v521 = vsel %vm498, %v493, 0
        %523 = vmatpush.bf16.msra.mxu0 0
        %524 = vmatpush.bf16.msra.mxu0 0
        %525 = vmatpush.bf16.msra.mxu0 0
        %526 = vmatpush.bf16.msra.mxu0 0
        %527 = vmatpush.bf16.msra.mxu0 0
        %528 = vmatpush.bf16.msra.mxu0 0
        %529 = vmatpush.bf16.msra.mxu0 %v496
        %530 = vmatpush.bf16.msra.mxu0 %v494
        %531 = vmatmul.bf16.gmra.mxu0 %v500
        %v532 = vpop.f32.mrf.mxu0
        %v533 = vadd.f32 0.0, %v532
        %v534 = vpop.f32.mrf.mxu0
        %v535 = vadd.f32 0.0, %v534
        %536 = vmatmul.bf16.gmra.mxu0 %v503
        %v537 = vpop.f32.mrf.mxu0
        %v538 = vadd.f32 0.0, %v537
        %v539 = vpop.f32.mrf.mxu0
        %v540 = vadd.f32 0.0, %v539
        %541 = vmatmul.bf16.gmra.mxu0 %v506
        %v542 = vpop.f32.mrf.mxu0
        %v543 = vadd.f32 0.0, %v542
        %v544 = vpop.f32.mrf.mxu0
        %v545 = vadd.f32 0.0, %v544
        %546 = vmatmul.bf16.gmra.mxu0 %v509
        %v547 = vpop.f32.mrf.mxu0
        %v548 = vadd.f32 0.0, %v547
        %v549 = vpop.f32.mrf.mxu0
        %v550 = vadd.f32 0.0, %v549
        %551 = vmatmul.bf16.gmra.mxu0 %v512
        %v552 = vpop.f32.mrf.mxu0
        %v553 = vadd.f32 0.0, %v552
        %v554 = vpop.f32.mrf.mxu0
        %v555 = vadd.f32 0.0, %v554
        %556 = vmatmul.bf16.gmra.mxu0 %v515
        %v557 = vpop.f32.mrf.mxu0
        %v558 = vadd.f32 0.0, %v557
        %v559 = vpop.f32.mrf.mxu0
        %v560 = vadd.f32 0.0, %v559
        %561 = vmatmul.bf16.gmra.mxu0 %v518
        %v562 = vpop.f32.mrf.mxu0
        %v563 = vadd.f32 0.0, %v562
        %v564 = vpop.f32.mrf.mxu0
        %v565 = vadd.f32 0.0, %v564
        %566 = vmatmul.bf16.gmra.mxu0 %v521
        %v567 = vpop.f32.mrf.mxu0
        %v568 = vadd.f32 0.0, %v567
        %v569 = vpop.f32.mrf.mxu0
        %v570 = vadd.f32 0.0, %v569
        %571 = vdwg.mxu0
        %572 = vmatpush.bf16.msra.mxu0 0
        %573 = vmatpush.bf16.msra.mxu0 0
        %574 = vmatpush.bf16.msra.mxu0 0
        %575 = vmatpush.bf16.msra.mxu0 0
        %576 = vmatpush.bf16.msra.mxu0 0
        %577 = vmatpush.bf16.msra.mxu0 0
        %578 = vmatpush.bf16.msra.mxu0 %v497
        %579 = vmatpush.bf16.msra.mxu0 %v495
        %580 = vmatmul.bf16.gmra.mxu0 %v500
        %v581 = vpop.f32.mrf.mxu0
        %v582 = vadd.f32 0.0, %v581
        %v583 = vpop.f32.mrf.mxu0
        %v584 = vadd.f32 0.0, %v583
        %585 = vmatmul.bf16.gmra.mxu0 %v503
        %v586 = vpop.f32.mrf.mxu0
        %v587 = vadd.f32 0.0, %v586
        %v588 = vpop.f32.mrf.mxu0
        %v589 = vadd.f32 0.0, %v588
        %590 = vmatmul.bf16.gmra.mxu0 %v506
        %v591 = vpop.f32.mrf.mxu0
        %v592 = vadd.f32 0.0, %v591
        %v593 = vpop.f32.mrf.mxu0
        %v594 = vadd.f32 0.0, %v593
        %595 = vmatmul.bf16.gmra.mxu0 %v509
        %v596 = vpop.f32.mrf.mxu0
        %v597 = vadd.f32 0.0, %v596
        %v598 = vpop.f32.mrf.mxu0
        %v599 = vadd.f32 0.0, %v598
        %600 = vmatmul.bf16.gmra.mxu0 %v512
        %v601 = vpop.f32.mrf.mxu0
        %v602 = vadd.f32 0.0, %v601
        %v603 = vpop.f32.mrf.mxu0
        %v604 = vadd.f32 0.0, %v603
        %605 = vmatmul.bf16.gmra.mxu0 %v515
        %v606 = vpop.f32.mrf.mxu0
        %v607 = vadd.f32 0.0, %v606
        %v608 = vpop.f32.mrf.mxu0
        %v609 = vadd.f32 0.0, %v608
        %610 = vmatmul.bf16.gmra.mxu0 %v518
        %v611 = vpop.f32.mrf.mxu0
        %v612 = vadd.f32 0.0, %v611
        %v613 = vpop.f32.mrf.mxu0
        %v614 = vadd.f32 0.0, %v613
        %615 = vmatmul.bf16.gmra.mxu0 %v521
        %v616 = vpop.f32.mrf.mxu0
        %v617 = vadd.f32 0.0, %v616
        %v618 = vpop.f32.mrf.mxu0
        %v619 = vadd.f32 0.0, %v618
        %620 = vdwg.mxu0
        %v621 = vlaneseq
        %v622 = vshrl.u32 %v621, 7
        %vm623 = vcmp.eq.s32.totalorder %v622, 4
        %v624 = vsel %vm623, 1.0, %v553
        %v625 = vsel %vm623, 1.0, %v602
        %v626 = vsel %vm623, 1.0, %v555
        %v627 = vsel %vm623, 1.0, %v604
        %v628 = vsel %vm623, 1.0, %v558
        %v629 = vsel %vm623, 1.0, %v607
        %v630 = vsel %vm623, 1.0, %v560
        %v631 = vsel %vm623, 1.0, %v609
        %v632 = vsel %vm623, 1.0, %v563
        %v633 = vsel %vm623, 1.0, %v612
        %v634 = vsel %vm623, 1.0, %v565
        %v635 = vsel %vm623, 1.0, %v614
        %v636 = vsel %vm623, 1.0, %v568
        %v637 = vsel %vm623, 1.0, %v617
        %v638 = vsel %vm623, 1.0, %v570
        %v639 = vsel %vm623, 1.0, %v619
        %v640 = vld [vmem:[%s270] sm:$0xff]
        %v641 = vld [vmem:[%s270 + $0x8] sm:$0xff]
        %v642 = vld [vmem:[%s270 + $0x10] sm:$0xff]
        %v643 = vld [vmem:[%s270 + $0x18] sm:$0xff]
        %v644 = vld [vmem:[%s270 + $0x20] sm:$0xff]
        %v645 = vld [vmem:[%s270 + $0x28] sm:$0xff]
        %v646 = vld [vmem:[%s270 + $0x30] sm:$0xff]
        %v647 = vld [vmem:[%s270 + $0x38] sm:$0xff]
        %v648 = vadd.f32 %v640, %v642
        %v649 = vadd.f32 %v648, %v644
        %v650 = vadd.f32 %v649, %v646
        %v651 = vrot.slane %v650, 4
        %v652 = vadd.f32 %v650, %v651
        %v653 = vrot.slane %v652, 2
        %v654 = vadd.f32 %v652, %v653
        %v655 = vrot.slane %v654, 1
        %v656 = vadd.f32 %v654, %v655
        %v657 = vadd.f32 %v641, %v643
        %v658 = vadd.f32 %v657, %v645
        %v659 = vadd.f32 %v658, %v647
        %v660 = vrot.slane %v659, 4
        %v661 = vadd.f32 %v659, %v660
        %v662 = vrot.slane %v661, 2
        %v663 = vadd.f32 %v661, %v662
        %v664 = vrot.slane %v663, 1
        %v665 = vadd.f32 %v663, %v664
        %v666 = vmul.f32 %v656, %v349
        %v667 = vmul.f32 %v665, %v349
        %v668 = vsub.f32 %v640, %v666
        %v669 = vsub.f32 %v641, %v667
        %v670 = vsub.f32 %v642, %v666
        %v671 = vsub.f32 %v643, %v667
        %v672 = vsub.f32 %v644, %v666
        %v673 = vsub.f32 %v645, %v667
        %v674 = vsub.f32 %v646, %v666
        %v675 = vsub.f32 %v647, %v667
        %v676 = vmul.f32 %v668, %v668
        %v677 = vmul.f32 %v669, %v669
        %v678 = vmul.f32 %v670, %v670
        %v679 = vmul.f32 %v671, %v671
        %v680 = vmul.f32 %v672, %v672
        %v681 = vmul.f32 %v673, %v673
        %v682 = vmul.f32 %v674, %v674
        %v683 = vmul.f32 %v675, %v675
        %v684 = vadd.f32 %v676, %v678
        %v685 = vadd.f32 %v684, %v680
        %v686 = vadd.f32 %v685, %v682
        %v687 = vrot.slane %v686, 4
        %v688 = vadd.f32 %v686, %v687
        %v689 = vrot.slane %v688, 2
        %v690 = vadd.f32 %v688, %v689
        %v691 = vrot.slane %v690, 1
        %v692 = vadd.f32 %v690, %v691
        %v693 = vadd.f32 %v677, %v679
        %v694 = vadd.f32 %v693, %v681
        %v695 = vadd.f32 %v694, %v683
        %v696 = vrot.slane %v695, 4
        %v697 = vadd.f32 %v695, %v696
        %v698 = vrot.slane %v697, 2
        %v699 = vadd.f32 %v697, %v698
        %v700 = vrot.slane %v699, 1
        %v701 = vadd.f32 %v699, %v700
        %v702 = vmul.f32 %v692, %v349
        %v703 = vmul.f32 %v701, %v349
        %v704 = vadd.f32 %v702, 1e-05
        %v705 = vadd.f32 %v703, 1e-05
        %v706 = vrsqrt.pop %v704
        %v707 = vmul.f32 %v706, %v704
        %v708 = vmul.f32 %v707, %v706
        %v709 = vmul.f32 0.5, %v708
        %v710 = vsub.f32 1.5, %v709
        %v711 = vmul.f32 %v706, %v710
        %vm712 = vweird.f32 %v704
        %vm713 = vweird.f32 %v706
        %vm714 = vmor %vm712, %vm713
        %v715 = vsel %vm714, %v706, %v711
        %v716 = vrsqrt.pop %v705
        %v717 = vmul.f32 %v716, %v705
        %v718 = vmul.f32 %v717, %v716
        %v719 = vmul.f32 0.5, %v718
        %v720 = vsub.f32 1.5, %v719
        %v721 = vmul.f32 %v716, %v720
        %vm722 = vweird.f32 %v705
        %vm723 = vweird.f32 %v716
        %vm724 = vmor %vm722, %vm723
        %v725 = vsel %vm724, %v716, %v721
        %v726 = vmul.f32 %v668, %v715
        %v727 = vmul.f32 %v669, %v725
        %v728 = vmul.f32 %v670, %v715
        %v729 = vmul.f32 %v671, %v725
        %v730 = vmul.f32 %v672, %v715
        %v731 = vmul.f32 %v673, %v725
        %v732 = vmul.f32 %v674, %v715
        %v733 = vmul.f32 %v675, %v725
        %v734 = vmul.f32 %v726, %v421
        %v735 = vmul.f32 %v727, %v421
        %v736 = vmul.f32 %v728, %v426
        %v737 = vmul.f32 %v729, %v426
        %v738 = vmul.f32 %v730, %v431
        %v739 = vmul.f32 %v731, %v431
        %v740 = vmul.f32 %v732, %v436
        %v741 = vmul.f32 %v733, %v436
        %v742 = vadd.f32 %v734, %v448
        %v743 = vadd.f32 %v735, %v448
        %v744 = vadd.f32 %v736, %v452
        %v745 = vadd.f32 %v737, %v452
        %v746 = vadd.f32 %v738, %v456
        %v747 = vadd.f32 %v739, %v456
        %v748 = vadd.f32 %v740, %v460
        %v749 = vadd.f32 %v741, %v460
        %v750 = vld [vmem:[%s2] sm:$0xff]
        %v751 = vld [vmem:[%s2 + $0x8] sm:$0xff]
        %v752 = vld [vmem:[%s2 + $0x10] sm:$0xff]
        %v753 = vld [vmem:[%s2 + $0x18] sm:$0xff]
        %v754 = vld [vmem:[%s2 + $0x20] sm:$0xff]
        %v755 = vld [vmem:[%s2 + $0x28] sm:$0xff]
        %v756 = vld [vmem:[%s2 + $0x30] sm:$0xff]
        %v757 = vld [vmem:[%s2 + $0x38] sm:$0xff]
        %v758 = vpack.c.bf16 %v751, %v750
        %v759 = vpack.c.bf16 %v753, %v752
        %v760 = vpack.c.bf16 %v755, %v754
        %v761 = vpack.c.bf16 %v757, %v756
        %v762 = vpack.c.bf16 %v744, %v742
        %v763 = vpack.c.bf16 %v745, %v743
        %v764 = vpack.c.bf16 %v748, %v746
        %v765 = vpack.c.bf16 %v749, %v747
        %v767 = vsel %vm498, %v758, 0
        %v770 = vsel %vm498, %v759, 0
        %v773 = vsel %vm498, %v760, 0
        %v776 = vsel %vm498, %v761, 0
        %778 = vmatpush.bf16.msra.mxu0 0
        %779 = vmatpush.bf16.msra.mxu0 0
        %780 = vmatpush.bf16.msra.mxu0 0
        %781 = vmatpush.bf16.msra.mxu0 0
        %782 = vmatpush.bf16.msra.mxu0 0
        %783 = vmatpush.bf16.msra.mxu0 0
        %784 = vmatpush.bf16.msra.mxu0 %v764
        %785 = vmatpush.bf16.msra.mxu0 %v762
        %786 = vmatmul.bf16.gmra.mxu0 %v767
        %v787 = vpop.f32.mrf.mxu0
        %v788 = vadd.f32 0.0, %v787
        %v789 = vpop.f32.mrf.mxu0
        %v790 = vadd.f32 0.0, %v789
        %791 = vmatmul.bf16.gmra.mxu0 %v770
        %v792 = vpop.f32.mrf.mxu0
        %v793 = vadd.f32 0.0, %v792
        %v794 = vpop.f32.mrf.mxu0
        %v795 = vadd.f32 0.0, %v794
        %796 = vmatmul.bf16.gmra.mxu0 %v773
        %v797 = vpop.f32.mrf.mxu0
        %v798 = vadd.f32 0.0, %v797
        %v799 = vpop.f32.mrf.mxu0
        %v800 = vadd.f32 0.0, %v799
        %801 = vmatmul.bf16.gmra.mxu0 %v776
        %v802 = vpop.f32.mrf.mxu0
        %v803 = vadd.f32 0.0, %v802
        %v804 = vpop.f32.mrf.mxu0
        %v805 = vadd.f32 0.0, %v804
        %806 = vdwg.mxu0
        %807 = vmatpush.bf16.msra.mxu0 0
        %808 = vmatpush.bf16.msra.mxu0 0
        %809 = vmatpush.bf16.msra.mxu0 0
        %810 = vmatpush.bf16.msra.mxu0 0
        %811 = vmatpush.bf16.msra.mxu0 0
        %812 = vmatpush.bf16.msra.mxu0 0
        %813 = vmatpush.bf16.msra.mxu0 %v765
        %814 = vmatpush.bf16.msra.mxu0 %v763
        %815 = vmatmul.bf16.gmra.mxu0 %v767
        %v816 = vpop.f32.mrf.mxu0
        %v817 = vadd.f32 0.0, %v816
        %v818 = vpop.f32.mrf.mxu0
        %v819 = vadd.f32 0.0, %v818
        %820 = vmatmul.bf16.gmra.mxu0 %v770
        %v821 = vpop.f32.mrf.mxu0
        %v822 = vadd.f32 0.0, %v821
        %v823 = vpop.f32.mrf.mxu0
        %v824 = vadd.f32 0.0, %v823
        %825 = vmatmul.bf16.gmra.mxu0 %v773
        %v826 = vpop.f32.mrf.mxu0
        %v827 = vadd.f32 0.0, %v826
        %v828 = vpop.f32.mrf.mxu0
        %v829 = vadd.f32 0.0, %v828
        %830 = vmatmul.bf16.gmra.mxu0 %v776
        %v831 = vpop.f32.mrf.mxu0
        %v832 = vadd.f32 0.0, %v831
        %v833 = vpop.f32.mrf.mxu0
        %v834 = vadd.f32 0.0, %v833
        %835 = vdwg.mxu0
        %v836 = vpack.c.bf16 %v817, %v788
        %v837 = vpack.c.bf16 %v819, %v790
        %v838 = vpack.c.bf16 %v822, %v793
        %v839 = vpack.c.bf16 %v824, %v795
        %v840 = vpack.c.bf16 %v827, %v798
        %v841 = vpack.c.bf16 %v829, %v800
        %v842 = vpack.c.bf16 %v832, %v803
        %v843 = vpack.c.bf16 %v834, %v805
        %v844 = vpack.c.bf16 %v582, %v533
        %v845 = vpack.c.bf16 %v584, %v535
        %v846 = vpack.c.bf16 %v587, %v538
        %v847 = vpack.c.bf16 %v589, %v540
        %v848 = vpack.c.bf16 %v592, %v543
        %v849 = vpack.c.bf16 %v594, %v545
        %v850 = vpack.c.bf16 %v597, %v548
        %v851 = vpack.c.bf16 %v599, %v550
        %v853 = vunpack.c.l.b16 %v836
        %v854 = vunpack.c.h.b16 %v836
        %v855 = vpack.c.b16 %v853, %v853
        %v856 = vpack.c.b16 %v854, %v854
        %859 = vxpose.binary.xlu0.c.b16.start [1/16] %v856, %v855, 128
        %860 = vxpose.binary.xlu0.c.b16.cont [2/16] 0, 0, 128
        %861 = vxpose.binary.xlu0.c.b16.cont [3/16] 0, 0, 128
        %862 = vxpose.binary.xlu0.c.b16.cont [4/16] 0, 0, 128
        %863 = vxpose.binary.xlu0.c.b16.cont [5/16] 0, 0, 128
        %864 = vxpose.binary.xlu0.c.b16.cont [6/16] 0, 0, 128
        %865 = vxpose.binary.xlu0.c.b16.cont [7/16] 0, 0, 128
        %866 = vxpose.binary.xlu0.c.b16.end [8/16] 0, 0, 128
        %v867 = vpop.trf.xlu0
        %v868 = vpop.trf.xlu0
        %v869 = vpop.trf.xlu0
        %v870 = vpop.trf.xlu0
        %v871 = vpop.trf.xlu0
        %v872 = vpop.trf.xlu0
        %v873 = vpop.trf.xlu0
        %v874 = vpop.trf.xlu0
        %v875 = vpop.trf.xlu0
        %v876 = vpop.trf.xlu0
        %v877 = vpop.trf.xlu0
        %v878 = vpop.trf.xlu0
        %v879 = vpop.trf.xlu0
        %v880 = vpop.trf.xlu0
        %v881 = vpop.trf.xlu0
        %v882 = vpop.trf.xlu0
        %v884 = vunpack.c.l.b16 %v844
        %v885 = vunpack.c.h.b16 %v844
        %v886 = vpack.c.b16 %v884, %v884
        %v887 = vpack.c.b16 %v885, %v885
        %vm888 = vcmask 64512
        %v890 = vsel %vm888, %v867, 0
        %v893 = vsel %vm888, %v869, 0
        %v896 = vsel %vm888, %v871, 0
        %v899 = vsel %vm888, %v873, 0
        %v902 = vsel %vm888, %v875, 0
        %v905 = vsel %vm888, %v877, 0
        %v908 = vsel %vm888, %v879, 0
        %v911 = vsel %vm888, %v881, 0
        %v914 = vsel %vm888, %v868, 0
        %v917 = vsel %vm888, %v870, 0
        %v920 = vsel %vm888, %v872, 0
        %v923 = vsel %vm888, %v874, 0
        %v926 = vsel %vm888, %v876, 0
        %v929 = vsel %vm888, %v878, 0
        %v932 = vsel %vm888, %v880, 0
        %v935 = vsel %vm888, %v882, 0
        %vm937 = vcmask 1043456
        %v939 = vsel %vm937, %v886, 0
        %v942 = vsel %vm937, %v887, 0
        %944 = vmatpush.bf16.msra.mxu0 0
        %945 = vmatpush.bf16.msra.mxu0 0
        %946 = vmatpush.bf16.msra.mxu0 0
        %947 = vmatpush.bf16.msra.mxu0 0
        %948 = vmatpush.bf16.msra.mxu0 0
        %949 = vmatpush.bf16.msra.mxu0 0
        %950 = vmatpush.bf16.msra.mxu0 0
        %951 = vmatpush.bf16.msra.mxu0 %v939
        %952 = vmatmul.bf16.gmra.mxu0 %v890
        %v953 = vpop.f32.mrf.mxu0
        %v954 = vadd.f32 0.0, %v953
        %v955 = vpop.f32.mrf.mxu0
        %v956 = vadd.f32 0.0, %v955
        %957 = vmatmul.bf16.gmra.mxu0 %v893
        %v958 = vpop.f32.mrf.mxu0
        %v959 = vadd.f32 0.0, %v958
        %v960 = vpop.f32.mrf.mxu0
        %v961 = vadd.f32 0.0, %v960
        %962 = vmatmul.bf16.gmra.mxu0 %v896
        %v963 = vpop.f32.mrf.mxu0
        %v964 = vadd.f32 0.0, %v963
        %v965 = vpop.f32.mrf.mxu0
        %v966 = vadd.f32 0.0, %v965
        %967 = vmatmul.bf16.gmra.mxu0 %v899
        %v968 = vpop.f32.mrf.mxu0
        %v969 = vadd.f32 0.0, %v968
        %v970 = vpop.f32.mrf.mxu0
        %v971 = vadd.f32 0.0, %v970
        %972 = vmatmul.bf16.gmra.mxu0 %v902
        %v973 = vpop.f32.mrf.mxu0
        %v974 = vadd.f32 0.0, %v973
        %v975 = vpop.f32.mrf.mxu0
        %v976 = vadd.f32 0.0, %v975
        %977 = vmatmul.bf16.gmra.mxu0 %v905
        %v978 = vpop.f32.mrf.mxu0
        %v979 = vadd.f32 0.0, %v978
        %v980 = vpop.f32.mrf.mxu0
        %v981 = vadd.f32 0.0, %v980
        %982 = vmatmul.bf16.gmra.mxu0 %v908
        %v983 = vpop.f32.mrf.mxu0
        %v984 = vadd.f32 0.0, %v983
        %v985 = vpop.f32.mrf.mxu0
        %v986 = vadd.f32 0.0, %v985
        %987 = vmatmul.bf16.gmra.mxu0 %v911
        %v988 = vpop.f32.mrf.mxu0
        %v989 = vadd.f32 0.0, %v988
        %v990 = vpop.f32.mrf.mxu0
        %v991 = vadd.f32 0.0, %v990
        %992 = vmatmul.bf16.gmra.mxu0 %v914
        %v993 = vpop.f32.mrf.mxu0
        %v994 = vadd.f32 0.0, %v993
        %v995 = vpop.f32.mrf.mxu0
        %v996 = vadd.f32 0.0, %v995
        %997 = vmatmul.bf16.gmra.mxu0 %v917
        %v998 = vpop.f32.mrf.mxu0
        %v999 = vadd.f32 0.0, %v998
        %v1000 = vpop.f32.mrf.mxu0
        %v1001 = vadd.f32 0.0, %v1000
        %1002 = vmatmul.bf16.gmra.mxu0 %v920
        %v1003 = vpop.f32.mrf.mxu0
        %v1004 = vadd.f32 0.0, %v1003
        %v1005 = vpop.f32.mrf.mxu0
        %v1006 = vadd.f32 0.0, %v1005
        %1007 = vmatmul.bf16.gmra.mxu0 %v923
        %v1008 = vpop.f32.mrf.mxu0
        %v1009 = vadd.f32 0.0, %v1008
        %v1010 = vpop.f32.mrf.mxu0
        %v1011 = vadd.f32 0.0, %v1010
        %1012 = vmatmul.bf16.gmra.mxu0 %v926
        %v1013 = vpop.f32.mrf.mxu0
        %v1014 = vadd.f32 0.0, %v1013
        %v1015 = vpop.f32.mrf.mxu0
        %v1016 = vadd.f32 0.0, %v1015
        %1017 = vmatmul.bf16.gmra.mxu0 %v929
        %v1018 = vpop.f32.mrf.mxu0
        %v1019 = vadd.f32 0.0, %v1018
        %v1020 = vpop.f32.mrf.mxu0
        %v1021 = vadd.f32 0.0, %v1020
        %1022 = vmatmul.bf16.gmra.mxu0 %v932
        %v1023 = vpop.f32.mrf.mxu0
        %v1024 = vadd.f32 0.0, %v1023
        %v1025 = vpop.f32.mrf.mxu0
        %v1026 = vadd.f32 0.0, %v1025
        %1027 = vmatmul.bf16.gmra.mxu0 %v935
        %v1028 = vpop.f32.mrf.mxu0
        %v1029 = vadd.f32 0.0, %v1028
        %v1030 = vpop.f32.mrf.mxu0
        %v1031 = vadd.f32 0.0, %v1030
        %1032 = vdwg.mxu0
        %1033 = vmatpush.bf16.msra.mxu0 0
        %1034 = vmatpush.bf16.msra.mxu0 0
        %1035 = vmatpush.bf16.msra.mxu0 0
        %1036 = vmatpush.bf16.msra.mxu0 0
        %1037 = vmatpush.bf16.msra.mxu0 0
        %1038 = vmatpush.bf16.msra.mxu0 0
        %1039 = vmatpush.bf16.msra.mxu0 0
        %1040 = vmatpush.bf16.msra.mxu0 %v942
        %1041 = vmatmul.bf16.gmra.mxu0 %v890
        %v1042 = vpop.f32.mrf.mxu0
        %v1043 = vadd.f32 0.0, %v1042
        %v1044 = vpop.f32.mrf.mxu0
        %v1045 = vadd.f32 0.0, %v1044
        %1046 = vmatmul.bf16.gmra.mxu0 %v893
        %v1047 = vpop.f32.mrf.mxu0
        %v1048 = vadd.f32 0.0, %v1047
        %v1049 = vpop.f32.mrf.mxu0
        %v1050 = vadd.f32 0.0, %v1049
        %1051 = vmatmul.bf16.gmra.mxu0 %v896
        %v1052 = vpop.f32.mrf.mxu0
        %v1053 = vadd.f32 0.0, %v1052
        %v1054 = vpop.f32.mrf.mxu0
        %v1055 = vadd.f32 0.0, %v1054
        %1056 = vmatmul.bf16.gmra.mxu0 %v899
        %v1057 = vpop.f32.mrf.mxu0
        %v1058 = vadd.f32 0.0, %v1057
        %v1059 = vpop.f32.mrf.mxu0
        %v1060 = vadd.f32 0.0, %v1059
        %1061 = vmatmul.bf16.gmra.mxu0 %v902
        %v1062 = vpop.f32.mrf.mxu0
        %v1063 = vadd.f32 0.0, %v1062
        %v1064 = vpop.f32.mrf.mxu0
        %v1065 = vadd.f32 0.0, %v1064
        %1066 = vmatmul.bf16.gmra.mxu0 %v905
        %v1067 = vpop.f32.mrf.mxu0
        %v1068 = vadd.f32 0.0, %v1067
        %v1069 = vpop.f32.mrf.mxu0
        %v1070 = vadd.f32 0.0, %v1069
        %1071 = vmatmul.bf16.gmra.mxu0 %v908
        %v1072 = vpop.f32.mrf.mxu0
        %v1073 = vadd.f32 0.0, %v1072
        %v1074 = vpop.f32.mrf.mxu0
        %v1075 = vadd.f32 0.0, %v1074
        %1076 = vmatmul.bf16.gmra.mxu0 %v911
        %v1077 = vpop.f32.mrf.mxu0
        %v1078 = vadd.f32 0.0, %v1077
        %v1079 = vpop.f32.mrf.mxu0
        %v1080 = vadd.f32 0.0, %v1079
        %1081 = vmatmul.bf16.gmra.mxu0 %v914
        %v1082 = vpop.f32.mrf.mxu0
        %v1083 = vadd.f32 0.0, %v1082
        %v1084 = vpop.f32.mrf.mxu0
        %v1085 = vadd.f32 0.0, %v1084
        %1086 = vmatmul.bf16.gmra.mxu0 %v917
        %v1087 = vpop.f32.mrf.mxu0
        %v1088 = vadd.f32 0.0, %v1087
        %v1089 = vpop.f32.mrf.mxu0
        %v1090 = vadd.f32 0.0, %v1089
        %1091 = vmatmul.bf16.gmra.mxu0 %v920
        %v1092 = vpop.f32.mrf.mxu0
        %v1093 = vadd.f32 0.0, %v1092
        %v1094 = vpop.f32.mrf.mxu0
        %v1095 = vadd.f32 0.0, %v1094
        %1096 = vmatmul.bf16.gmra.mxu0 %v923
        %v1097 = vpop.f32.mrf.mxu0
        %v1098 = vadd.f32 0.0, %v1097
        %v1099 = vpop.f32.mrf.mxu0
        %v1100 = vadd.f32 0.0, %v1099
        %1101 = vmatmul.bf16.gmra.mxu0 %v926
        %v1102 = vpop.f32.mrf.mxu0
        %v1103 = vadd.f32 0.0, %v1102
        %v1104 = vpop.f32.mrf.mxu0
        %v1105 = vadd.f32 0.0, %v1104
        %1106 = vmatmul.bf16.gmra.mxu0 %v929
        %v1107 = vpop.f32.mrf.mxu0
        %v1108 = vadd.f32 0.0, %v1107
        %v1109 = vpop.f32.mrf.mxu0
        %v1110 = vadd.f32 0.0, %v1109
        %1111 = vmatmul.bf16.gmra.mxu0 %v932
        %v1112 = vpop.f32.mrf.mxu0
        %v1113 = vadd.f32 0.0, %v1112
        %v1114 = vpop.f32.mrf.mxu0
        %v1115 = vadd.f32 0.0, %v1114
        %1116 = vmatmul.bf16.gmra.mxu0 %v935
        %v1117 = vpop.f32.mrf.mxu0
        %v1118 = vadd.f32 0.0, %v1117
        %v1119 = vpop.f32.mrf.mxu0
        %v1120 = vadd.f32 0.0, %v1119
        %1121 = vdwg.mxu0
        %v1123 = vunpack.c.l.b16 %v837
        %v1124 = vunpack.c.h.b16 %v837
        %v1125 = vpack.c.b16 %v1123, %v1123
        %v1126 = vpack.c.b16 %v1124, %v1124
        %1129 = vxpose.binary.xlu0.c.b16.start [1/16] %v1126, %v1125, 128
        %1130 = vxpose.binary.xlu0.c.b16.cont [2/16] 0, 0, 128
        %1131 = vxpose.binary.xlu0.c.b16.cont [3/16] 0, 0, 128
        %1132 = vxpose.binary.xlu0.c.b16.cont [4/16] 0, 0, 128
        %1133 = vxpose.binary.xlu0.c.b16.cont [5/16] 0, 0, 128
        %1134 = vxpose.binary.xlu0.c.b16.cont [6/16] 0, 0, 128
        %1135 = vxpose.binary.xlu0.c.b16.cont [7/16] 0, 0, 128
        %1136 = vxpose.binary.xlu0.c.b16.end [8/16] 0, 0, 128
        %v1137 = vpop.trf.xlu0
        %v1138 = vpop.trf.xlu0
        %v1139 = vpop.trf.xlu0
        %v1140 = vpop.trf.xlu0
        %v1141 = vpop.trf.xlu0
        %v1142 = vpop.trf.xlu0
        %v1143 = vpop.trf.xlu0
        %v1144 = vpop.trf.xlu0
        %v1145 = vpop.trf.xlu0
        %v1146 = vpop.trf.xlu0
        %v1147 = vpop.trf.xlu0
        %v1148 = vpop.trf.xlu0
        %v1149 = vpop.trf.xlu0
        %v1150 = vpop.trf.xlu0
        %v1151 = vpop.trf.xlu0
        %v1152 = vpop.trf.xlu0
        %v1154 = vunpack.c.l.b16 %v845
        %v1155 = vunpack.c.h.b16 %v845
        %v1156 = vpack.c.b16 %v1154, %v1154
        %v1157 = vpack.c.b16 %v1155, %v1155
        %v1159 = vsel %vm888, %v1137, 0
        %v1162 = vsel %vm888, %v1139, 0
        %v1165 = vsel %vm888, %v1141, 0
        %v1168 = vsel %vm888, %v1143, 0
        %v1171 = vsel %vm888, %v1145, 0
        %v1174 = vsel %vm888, %v1147, 0
        %v1177 = vsel %vm888, %v1149, 0
        %v1180 = vsel %vm888, %v1151, 0
        %v1183 = vsel %vm888, %v1138, 0
        %v1186 = vsel %vm888, %v1140, 0
        %v1189 = vsel %vm888, %v1142, 0
        %v1192 = vsel %vm888, %v1144, 0
        %v1195 = vsel %vm888, %v1146, 0
        %v1198 = vsel %vm888, %v1148, 0
        %v1201 = vsel %vm888, %v1150, 0
        %v1204 = vsel %vm888, %v1152, 0
        %v1207 = vsel %vm937, %v1156, 0
        %v1210 = vsel %vm937, %v1157, 0
        %1212 = vmatpush.bf16.msra.mxu0 0
        %1213 = vmatpush.bf16.msra.mxu0 0
        %1214 = vmatpush.bf16.msra.mxu0 0
        %1215 = vmatpush.bf16.msra.mxu0 0
        %1216 = vmatpush.bf16.msra.mxu0 0
        %1217 = vmatpush.bf16.msra.mxu0 0
        %1218 = vmatpush.bf16.msra.mxu0 0
        %1219 = vmatpush.bf16.msra.mxu0 %v1207
        %1220 = vmatmul.bf16.gmra.mxu0 %v1159
        %v1221 = vpop.f32.mrf.mxu0
        %v1222 = vadd.f32 0.0, %v1221
        %v1223 = vpop.f32.mrf.mxu0
        %v1224 = vadd.f32 0.0, %v1223
        %1225 = vmatmul.bf16.gmra.mxu0 %v1162
        %v1226 = vpop.f32.mrf.mxu0
        %v1227 = vadd.f32 0.0, %v1226
        %v1228 = vpop.f32.mrf.mxu0
        %v1229 = vadd.f32 0.0, %v1228
        %1230 = vmatmul.bf16.gmra.mxu0 %v1165
        %v1231 = vpop.f32.mrf.mxu0
        %v1232 = vadd.f32 0.0, %v1231
        %v1233 = vpop.f32.mrf.mxu0
        %v1234 = vadd.f32 0.0, %v1233
        %1235 = vmatmul.bf16.gmra.mxu0 %v1168
        %v1236 = vpop.f32.mrf.mxu0
        %v1237 = vadd.f32 0.0, %v1236
        %v1238 = vpop.f32.mrf.mxu0
        %v1239 = vadd.f32 0.0, %v1238
        %1240 = vmatmul.bf16.gmra.mxu0 %v1171
        %v1241 = vpop.f32.mrf.mxu0
        %v1242 = vadd.f32 0.0, %v1241
        %v1243 = vpop.f32.mrf.mxu0
        %v1244 = vadd.f32 0.0, %v1243
        %1245 = vmatmul.bf16.gmra.mxu0 %v1174
        %v1246 = vpop.f32.mrf.mxu0
        %v1247 = vadd.f32 0.0, %v1246
        %v1248 = vpop.f32.mrf.mxu0
        %v1249 = vadd.f32 0.0, %v1248
        %1250 = vmatmul.bf16.gmra.mxu0 %v1177
        %v1251 = vpop.f32.mrf.mxu0
        %v1252 = vadd.f32 0.0, %v1251
        %v1253 = vpop.f32.mrf.mxu0
        %v1254 = vadd.f32 0.0, %v1253
        %1255 = vmatmul.bf16.gmra.mxu0 %v1180
        %v1256 = vpop.f32.mrf.mxu0
        %v1257 = vadd.f32 0.0, %v1256
        %v1258 = vpop.f32.mrf.mxu0
        %v1259 = vadd.f32 0.0, %v1258
        %1260 = vmatmul.bf16.gmra.mxu0 %v1183
        %v1261 = vpop.f32.mrf.mxu0
        %v1262 = vadd.f32 0.0, %v1261
        %v1263 = vpop.f32.mrf.mxu0
        %v1264 = vadd.f32 0.0, %v1263
        %1265 = vmatmul.bf16.gmra.mxu0 %v1186
        %v1266 = vpop.f32.mrf.mxu0
        %v1267 = vadd.f32 0.0, %v1266
        %v1268 = vpop.f32.mrf.mxu0
        %v1269 = vadd.f32 0.0, %v1268
        %1270 = vmatmul.bf16.gmra.mxu0 %v1189
        %v1271 = vpop.f32.mrf.mxu0
        %v1272 = vadd.f32 0.0, %v1271
        %v1273 = vpop.f32.mrf.mxu0
        %v1274 = vadd.f32 0.0, %v1273
        %1275 = vmatmul.bf16.gmra.mxu0 %v1192
        %v1276 = vpop.f32.mrf.mxu0
        %v1277 = vadd.f32 0.0, %v1276
        %v1278 = vpop.f32.mrf.mxu0
        %v1279 = vadd.f32 0.0, %v1278
        %1280 = vmatmul.bf16.gmra.mxu0 %v1195
        %v1281 = vpop.f32.mrf.mxu0
        %v1282 = vadd.f32 0.0, %v1281
        %v1283 = vpop.f32.mrf.mxu0
        %v1284 = vadd.f32 0.0, %v1283
        %1285 = vmatmul.bf16.gmra.mxu0 %v1198
        %v1286 = vpop.f32.mrf.mxu0
        %v1287 = vadd.f32 0.0, %v1286
        %v1288 = vpop.f32.mrf.mxu0
        %v1289 = vadd.f32 0.0, %v1288
        %1290 = vmatmul.bf16.gmra.mxu0 %v1201
        %v1291 = vpop.f32.mrf.mxu0
        %v1292 = vadd.f32 0.0, %v1291
        %v1293 = vpop.f32.mrf.mxu0
        %v1294 = vadd.f32 0.0, %v1293
        %1295 = vmatmul.bf16.gmra.mxu0 %v1204
        %v1296 = vpop.f32.mrf.mxu0
        %v1297 = vadd.f32 0.0, %v1296
        %v1298 = vpop.f32.mrf.mxu0
        %v1299 = vadd.f32 0.0, %v1298
        %1300 = vdwg.mxu0
        %1301 = vmatpush.bf16.msra.mxu0 0
        %1302 = vmatpush.bf16.msra.mxu0 0
        %1303 = vmatpush.bf16.msra.mxu0 0
        %1304 = vmatpush.bf16.msra.mxu0 0
        %1305 = vmatpush.bf16.msra.mxu0 0
        %1306 = vmatpush.bf16.msra.mxu0 0
        %1307 = vmatpush.bf16.msra.mxu0 0
        %1308 = vmatpush.bf16.msra.mxu0 %v1210
        %1309 = vmatmul.bf16.gmra.mxu0 %v1159
        %v1310 = vpop.f32.mrf.mxu0
        %v1311 = vadd.f32 0.0, %v1310
        %v1312 = vpop.f32.mrf.mxu0
        %v1313 = vadd.f32 0.0, %v1312
        %1314 = vmatmul.bf16.gmra.mxu0 %v1162
        %v1315 = vpop.f32.mrf.mxu0
        %v1316 = vadd.f32 0.0, %v1315
        %v1317 = vpop.f32.mrf.mxu0
        %v1318 = vadd.f32 0.0, %v1317
        %1319 = vmatmul.bf16.gmra.mxu0 %v1165
        %v1320 = vpop.f32.mrf.mxu0
        %v1321 = vadd.f32 0.0, %v1320
        %v1322 = vpop.f32.mrf.mxu0
        %v1323 = vadd.f32 0.0, %v1322
        %1324 = vmatmul.bf16.gmra.mxu0 %v1168
        %v1325 = vpop.f32.mrf.mxu0
        %v1326 = vadd.f32 0.0, %v1325
        %v1327 = vpop.f32.mrf.mxu0
        %v1328 = vadd.f32 0.0, %v1327
        %1329 = vmatmul.bf16.gmra.mxu0 %v1171
        %v1330 = vpop.f32.mrf.mxu0
        %v1331 = vadd.f32 0.0, %v1330
        %v1332 = vpop.f32.mrf.mxu0
        %v1333 = vadd.f32 0.0, %v1332
        %1334 = vmatmul.bf16.gmra.mxu0 %v1174
        %v1335 = vpop.f32.mrf.mxu0
        %v1336 = vadd.f32 0.0, %v1335
        %v1337 = vpop.f32.mrf.mxu0
        %v1338 = vadd.f32 0.0, %v1337
        %1339 = vmatmul.bf16.gmra.mxu0 %v1177
        %v1340 = vpop.f32.mrf.mxu0
        %v1341 = vadd.f32 0.0, %v1340
        %v1342 = vpop.f32.mrf.mxu0
        %v1343 = vadd.f32 0.0, %v1342
        %1344 = vmatmul.bf16.gmra.mxu0 %v1180
        %v1345 = vpop.f32.mrf.mxu0
        %v1346 = vadd.f32 0.0, %v1345
        %v1347 = vpop.f32.mrf.mxu0
        %v1348 = vadd.f32 0.0, %v1347
        %1349 = vmatmul.bf16.gmra.mxu0 %v1183
        %v1350 = vpop.f32.mrf.mxu0
        %v1351 = vadd.f32 0.0, %v1350
        %v1352 = vpop.f32.mrf.mxu0
        %v1353 = vadd.f32 0.0, %v1352
        %1354 = vmatmul.bf16.gmra.mxu0 %v1186
        %v1355 = vpop.f32.mrf.mxu0
        %v1356 = vadd.f32 0.0, %v1355
        %v1357 = vpop.f32.mrf.mxu0
        %v1358 = vadd.f32 0.0, %v1357
        %1359 = vmatmul.bf16.gmra.mxu0 %v1189
        %v1360 = vpop.f32.mrf.mxu0
        %v1361 = vadd.f32 0.0, %v1360
        %v1362 = vpop.f32.mrf.mxu0
        %v1363 = vadd.f32 0.0, %v1362
        %1364 = vmatmul.bf16.gmra.mxu0 %v1192
        %v1365 = vpop.f32.mrf.mxu0
        %v1366 = vadd.f32 0.0, %v1365
        %v1367 = vpop.f32.mrf.mxu0
        %v1368 = vadd.f32 0.0, %v1367
        %1369 = vmatmul.bf16.gmra.mxu0 %v1195
        %v1370 = vpop.f32.mrf.mxu0
        %v1371 = vadd.f32 0.0, %v1370
        %v1372 = vpop.f32.mrf.mxu0
        %v1373 = vadd.f32 0.0, %v1372
        %1374 = vmatmul.bf16.gmra.mxu0 %v1198
        %v1375 = vpop.f32.mrf.mxu0
        %v1376 = vadd.f32 0.0, %v1375
        %v1377 = vpop.f32.mrf.mxu0
        %v1378 = vadd.f32 0.0, %v1377
        %1379 = vmatmul.bf16.gmra.mxu0 %v1201
        %v1380 = vpop.f32.mrf.mxu0
        %v1381 = vadd.f32 0.0, %v1380
        %v1382 = vpop.f32.mrf.mxu0
        %v1383 = vadd.f32 0.0, %v1382
        %1384 = vmatmul.bf16.gmra.mxu0 %v1204
        %v1385 = vpop.f32.mrf.mxu0
        %v1386 = vadd.f32 0.0, %v1385
        %v1387 = vpop.f32.mrf.mxu0
        %v1388 = vadd.f32 0.0, %v1387
        %1389 = vdwg.mxu0
        %v1391 = vunpack.c.l.b16 %v838
        %v1392 = vunpack.c.h.b16 %v838
        %v1393 = vpack.c.b16 %v1391, %v1391
        %v1394 = vpack.c.b16 %v1392, %v1392
        %1397 = vxpose.binary.xlu0.c.b16.start [1/16] %v1394, %v1393, 128
        %1398 = vxpose.binary.xlu0.c.b16.cont [2/16] 0, 0, 128
        %1399 = vxpose.binary.xlu0.c.b16.cont [3/16] 0, 0, 128
        %1400 = vxpose.binary.xlu0.c.b16.cont [4/16] 0, 0, 128
        %1401 = vxpose.binary.xlu0.c.b16.cont [5/16] 0, 0, 128
        %1402 = vxpose.binary.xlu0.c.b16.cont [6/16] 0, 0, 128
        %1403 = vxpose.binary.xlu0.c.b16.cont [7/16] 0, 0, 128
        %1404 = vxpose.binary.xlu0.c.b16.end [8/16] 0, 0, 128
        %v1405 = vpop.trf.xlu0
        %v1406 = vpop.trf.xlu0
        %v1407 = vpop.trf.xlu0
        %v1408 = vpop.trf.xlu0
        %v1409 = vpop.trf.xlu0
        %v1410 = vpop.trf.xlu0
        %v1411 = vpop.trf.xlu0
        %v1412 = vpop.trf.xlu0
        %v1413 = vpop.trf.xlu0
        %v1414 = vpop.trf.xlu0
        %v1415 = vpop.trf.xlu0
        %v1416 = vpop.trf.xlu0
        %v1417 = vpop.trf.xlu0
        %v1418 = vpop.trf.xlu0
        %v1419 = vpop.trf.xlu0
        %v1420 = vpop.trf.xlu0
        %v1422 = vunpack.c.l.b16 %v846
        %v1423 = vunpack.c.h.b16 %v846
        %v1424 = vpack.c.b16 %v1422, %v1422
        %v1425 = vpack.c.b16 %v1423, %v1423
        %v1427 = vsel %vm888, %v1405, 0
        %v1430 = vsel %vm888, %v1407, 0
        %v1433 = vsel %vm888, %v1409, 0
        %v1436 = vsel %vm888, %v1411, 0
        %v1439 = vsel %vm888, %v1413, 0
        %v1442 = vsel %vm888, %v1415, 0
        %v1445 = vsel %vm888, %v1417, 0
        %v1448 = vsel %vm888, %v1419, 0
        %v1451 = vsel %vm888, %v1406, 0
        %v1454 = vsel %vm888, %v1408, 0
        %v1457 = vsel %vm888, %v1410, 0
        %v1460 = vsel %vm888, %v1412, 0
        %v1463 = vsel %vm888, %v1414, 0
        %v1466 = vsel %vm888, %v1416, 0
        %v1469 = vsel %vm888, %v1418, 0
        %v1472 = vsel %vm888, %v1420, 0
        %v1475 = vsel %vm937, %v1424, 0
        %v1478 = vsel %vm937, %v1425, 0
        %1480 = vmatpush.bf16.msra.mxu0 0
        %1481 = vmatpush.bf16.msra.mxu0 0
        %1482 = vmatpush.bf16.msra.mxu0 0
        %1483 = vmatpush.bf16.msra.mxu0 0
        %1484 = vmatpush.bf16.msra.mxu0 0
        %1485 = vmatpush.bf16.msra.mxu0 0
        %1486 = vmatpush.bf16.msra.mxu0 0
        %1487 = vmatpush.bf16.msra.mxu0 %v1475
        %1488 = vmatmul.bf16.gmra.mxu0 %v1427
        %v1489 = vpop.f32.mrf.mxu0
        %v1490 = vadd.f32 0.0, %v1489
        %v1491 = vpop.f32.mrf.mxu0
        %v1492 = vadd.f32 0.0, %v1491
        %1493 = vmatmul.bf16.gmra.mxu0 %v1430
        %v1494 = vpop.f32.mrf.mxu0
        %v1495 = vadd.f32 0.0, %v1494
        %v1496 = vpop.f32.mrf.mxu0
        %v1497 = vadd.f32 0.0, %v1496
        %1498 = vmatmul.bf16.gmra.mxu0 %v1433
        %v1499 = vpop.f32.mrf.mxu0
        %v1500 = vadd.f32 0.0, %v1499
        %v1501 = vpop.f32.mrf.mxu0
        %v1502 = vadd.f32 0.0, %v1501
        %1503 = vmatmul.bf16.gmra.mxu0 %v1436
        %v1504 = vpop.f32.mrf.mxu0
        %v1505 = vadd.f32 0.0, %v1504
        %v1506 = vpop.f32.mrf.mxu0
        %v1507 = vadd.f32 0.0, %v1506
        %1508 = vmatmul.bf16.gmra.mxu0 %v1439
        %v1509 = vpop.f32.mrf.mxu0
        %v1510 = vadd.f32 0.0, %v1509
        %v1511 = vpop.f32.mrf.mxu0
        %v1512 = vadd.f32 0.0, %v1511
        %1513 = vmatmul.bf16.gmra.mxu0 %v1442
        %v1514 = vpop.f32.mrf.mxu0
        %v1515 = vadd.f32 0.0, %v1514
        %v1516 = vpop.f32.mrf.mxu0
        %v1517 = vadd.f32 0.0, %v1516
        %1518 = vmatmul.bf16.gmra.mxu0 %v1445
        %v1519 = vpop.f32.mrf.mxu0
        %v1520 = vadd.f32 0.0, %v1519
        %v1521 = vpop.f32.mrf.mxu0
        %v1522 = vadd.f32 0.0, %v1521
        %1523 = vmatmul.bf16.gmra.mxu0 %v1448
        %v1524 = vpop.f32.mrf.mxu0
        %v1525 = vadd.f32 0.0, %v1524
        %v1526 = vpop.f32.mrf.mxu0
        %v1527 = vadd.f32 0.0, %v1526
        %1528 = vmatmul.bf16.gmra.mxu0 %v1451
        %v1529 = vpop.f32.mrf.mxu0
        %v1530 = vadd.f32 0.0, %v1529
        %v1531 = vpop.f32.mrf.mxu0
        %v1532 = vadd.f32 0.0, %v1531
        %1533 = vmatmul.bf16.gmra.mxu0 %v1454
        %v1534 = vpop.f32.mrf.mxu0
        %v1535 = vadd.f32 0.0, %v1534
        %v1536 = vpop.f32.mrf.mxu0
        %v1537 = vadd.f32 0.0, %v1536
        %1538 = vmatmul.bf16.gmra.mxu0 %v1457
        %v1539 = vpop.f32.mrf.mxu0
        %v1540 = vadd.f32 0.0, %v1539
        %v1541 = vpop.f32.mrf.mxu0
        %v1542 = vadd.f32 0.0, %v1541
        %1543 = vmatmul.bf16.gmra.mxu0 %v1460
        %v1544 = vpop.f32.mrf.mxu0
        %v1545 = vadd.f32 0.0, %v1544
        %v1546 = vpop.f32.mrf.mxu0
        %v1547 = vadd.f32 0.0, %v1546
        %1548 = vmatmul.bf16.gmra.mxu0 %v1463
        %v1549 = vpop.f32.mrf.mxu0
        %v1550 = vadd.f32 0.0, %v1549
        %v1551 = vpop.f32.mrf.mxu0
        %v1552 = vadd.f32 0.0, %v1551
        %1553 = vmatmul.bf16.gmra.mxu0 %v1466
        %v1554 = vpop.f32.mrf.mxu0
        %v1555 = vadd.f32 0.0, %v1554
        %v1556 = vpop.f32.mrf.mxu0
        %v1557 = vadd.f32 0.0, %v1556
        %1558 = vmatmul.bf16.gmra.mxu0 %v1469
        %v1559 = vpop.f32.mrf.mxu0
        %v1560 = vadd.f32 0.0, %v1559
        %v1561 = vpop.f32.mrf.mxu0
        %v1562 = vadd.f32 0.0, %v1561
        %1563 = vmatmul.bf16.gmra.mxu0 %v1472
        %v1564 = vpop.f32.mrf.mxu0
        %v1565 = vadd.f32 0.0, %v1564
        %v1566 = vpop.f32.mrf.mxu0
        %v1567 = vadd.f32 0.0, %v1566
        %1568 = vdwg.mxu0
        %1569 = vmatpush.bf16.msra.mxu0 0
        %1570 = vmatpush.bf16.msra.mxu0 0
        %1571 = vmatpush.bf16.msra.mxu0 0
        %1572 = vmatpush.bf16.msra.mxu0 0
        %1573 = vmatpush.bf16.msra.mxu0 0
        %1574 = vmatpush.bf16.msra.mxu0 0
        %1575 = vmatpush.bf16.msra.mxu0 0
        %1576 = vmatpush.bf16.msra.mxu0 %v1478
        %1577 = vmatmul.bf16.gmra.mxu0 %v1427
        %v1578 = vpop.f32.mrf.mxu0
        %v1579 = vadd.f32 0.0, %v1578
        %v1580 = vpop.f32.mrf.mxu0
        %v1581 = vadd.f32 0.0, %v1580
        %1582 = vmatmul.bf16.gmra.mxu0 %v1430
        %v1583 = vpop.f32.mrf.mxu0
        %v1584 = vadd.f32 0.0, %v1583
        %v1585 = vpop.f32.mrf.mxu0
        %v1586 = vadd.f32 0.0, %v1585
        %1587 = vmatmul.bf16.gmra.mxu0 %v1433
        %v1588 = vpop.f32.mrf.mxu0
        %v1589 = vadd.f32 0.0, %v1588
        %v1590 = vpop.f32.mrf.mxu0
        %v1591 = vadd.f32 0.0, %v1590
        %1592 = vmatmul.bf16.gmra.mxu0 %v1436
        %v1593 = vpop.f32.mrf.mxu0
        %v1594 = vadd.f32 0.0, %v1593
        %v1595 = vpop.f32.mrf.mxu0
        %v1596 = vadd.f32 0.0, %v1595
        %1597 = vmatmul.bf16.gmra.mxu0 %v1439
        %v1598 = vpop.f32.mrf.mxu0
        %v1599 = vadd.f32 0.0, %v1598
        %v1600 = vpop.f32.mrf.mxu0
        %v1601 = vadd.f32 0.0, %v1600
        %1602 = vmatmul.bf16.gmra.mxu0 %v1442
        %v1603 = vpop.f32.mrf.mxu0
        %v1604 = vadd.f32 0.0, %v1603
        %v1605 = vpop.f32.mrf.mxu0
        %v1606 = vadd.f32 0.0, %v1605
        %1607 = vmatmul.bf16.gmra.mxu0 %v1445
        %v1608 = vpop.f32.mrf.mxu0
        %v1609 = vadd.f32 0.0, %v1608
        %v1610 = vpop.f32.mrf.mxu0
        %v1611 = vadd.f32 0.0, %v1610
        %1612 = vmatmul.bf16.gmra.mxu0 %v1448
        %v1613 = vpop.f32.mrf.mxu0
        %v1614 = vadd.f32 0.0, %v1613
        %v1615 = vpop.f32.mrf.mxu0
        %v1616 = vadd.f32 0.0, %v1615
        %1617 = vmatmul.bf16.gmra.mxu0 %v1451
        %v1618 = vpop.f32.mrf.mxu0
        %v1619 = vadd.f32 0.0, %v1618
        %v1620 = vpop.f32.mrf.mxu0
        %v1621 = vadd.f32 0.0, %v1620
        %1622 = vmatmul.bf16.gmra.mxu0 %v1454
        %v1623 = vpop.f32.mrf.mxu0
        %v1624 = vadd.f32 0.0, %v1623
        %v1625 = vpop.f32.mrf.mxu0
        %v1626 = vadd.f32 0.0, %v1625
        %1627 = vmatmul.bf16.gmra.mxu0 %v1457
        %v1628 = vpop.f32.mrf.mxu0
        %v1629 = vadd.f32 0.0, %v1628
        %v1630 = vpop.f32.mrf.mxu0
        %v1631 = vadd.f32 0.0, %v1630
        %1632 = vmatmul.bf16.gmra.mxu0 %v1460
        %v1633 = vpop.f32.mrf.mxu0
        %v1634 = vadd.f32 0.0, %v1633
        %v1635 = vpop.f32.mrf.mxu0
        %v1636 = vadd.f32 0.0, %v1635
        %1637 = vmatmul.bf16.gmra.mxu0 %v1463
        %v1638 = vpop.f32.mrf.mxu0
        %v1639 = vadd.f32 0.0, %v1638
        %v1640 = vpop.f32.mrf.mxu0
        %v1641 = vadd.f32 0.0, %v1640
        %1642 = vmatmul.bf16.gmra.mxu0 %v1466
        %v1643 = vpop.f32.mrf.mxu0
        %v1644 = vadd.f32 0.0, %v1643
        %v1645 = vpop.f32.mrf.mxu0
        %v1646 = vadd.f32 0.0, %v1645
        %1647 = vmatmul.bf16.gmra.mxu0 %v1469
        %v1648 = vpop.f32.mrf.mxu0
        %v1649 = vadd.f32 0.0, %v1648
        %v1650 = vpop.f32.mrf.mxu0
        %v1651 = vadd.f32 0.0, %v1650
        %1652 = vmatmul.bf16.gmra.mxu0 %v1472
        %v1653 = vpop.f32.mrf.mxu0
        %v1654 = vadd.f32 0.0, %v1653
        %v1655 = vpop.f32.mrf.mxu0
        %v1656 = vadd.f32 0.0, %v1655
        %1657 = vdwg.mxu0
        %v1659 = vunpack.c.l.b16 %v839
        %v1660 = vunpack.c.h.b16 %v839
        %v1661 = vpack.c.b16 %v1659, %v1659
        %v1662 = vpack.c.b16 %v1660, %v1660
        %1665 = vxpose.binary.xlu0.c.b16.start [1/16] %v1662, %v1661, 128
        %1666 = vxpose.binary.xlu0.c.b16.cont [2/16] 0, 0, 128
        %1667 = vxpose.binary.xlu0.c.b16.cont [3/16] 0, 0, 128
        %1668 = vxpose.binary.xlu0.c.b16.cont [4/16] 0, 0, 128
        %1669 = vxpose.binary.xlu0.c.b16.cont [5/16] 0, 0, 128
        %1670 = vxpose.binary.xlu0.c.b16.cont [6/16] 0, 0, 128
        %1671 = vxpose.binary.xlu0.c.b16.cont [7/16] 0, 0, 128
        %1672 = vxpose.binary.xlu0.c.b16.end [8/16] 0, 0, 128
        %v1673 = vpop.trf.xlu0
        %v1674 = vpop.trf.xlu0
        %v1675 = vpop.trf.xlu0
        %v1676 = vpop.trf.xlu0
        %v1677 = vpop.trf.xlu0
        %v1678 = vpop.trf.xlu0
        %v1679 = vpop.trf.xlu0
        %v1680 = vpop.trf.xlu0
        %v1681 = vpop.trf.xlu0
        %v1682 = vpop.trf.xlu0
        %v1683 = vpop.trf.xlu0
        %v1684 = vpop.trf.xlu0
        %v1685 = vpop.trf.xlu0
        %v1686 = vpop.trf.xlu0
        %v1687 = vpop.trf.xlu0
        %v1688 = vpop.trf.xlu0
        %v1690 = vunpack.c.l.b16 %v847
        %v1691 = vunpack.c.h.b16 %v847
        %v1692 = vpack.c.b16 %v1690, %v1690
        %v1693 = vpack.c.b16 %v1691, %v1691
        %v1695 = vsel %vm888, %v1673, 0
        %v1698 = vsel %vm888, %v1675, 0
        %v1701 = vsel %vm888, %v1677, 0
        %v1704 = vsel %vm888, %v1679, 0
        %v1707 = vsel %vm888, %v1681, 0
        %v1710 = vsel %vm888, %v1683, 0
        %v1713 = vsel %vm888, %v1685, 0
        %v1716 = vsel %vm888, %v1687, 0
        %v1719 = vsel %vm888, %v1674, 0
        %v1722 = vsel %vm888, %v1676, 0
        %v1725 = vsel %vm888, %v1678, 0
        %v1728 = vsel %vm888, %v1680, 0
        %v1731 = vsel %vm888, %v1682, 0
        %v1734 = vsel %vm888, %v1684, 0
        %v1737 = vsel %vm888, %v1686, 0
        %v1740 = vsel %vm888, %v1688, 0
        %v1743 = vsel %vm937, %v1692, 0
        %v1746 = vsel %vm937, %v1693, 0
        %1748 = vmatpush.bf16.msra.mxu0 0
        %1749 = vmatpush.bf16.msra.mxu0 0
        %1750 = vmatpush.bf16.msra.mxu0 0
        %1751 = vmatpush.bf16.msra.mxu0 0
        %1752 = vmatpush.bf16.msra.mxu0 0
        %1753 = vmatpush.bf16.msra.mxu0 0
        %1754 = vmatpush.bf16.msra.mxu0 0
        %1755 = vmatpush.bf16.msra.mxu0 %v1743
        %1756 = vmatmul.bf16.gmra.mxu0 %v1695
        %v1757 = vpop.f32.mrf.mxu0
        %v1758 = vadd.f32 0.0, %v1757
        %v1759 = vpop.f32.mrf.mxu0
        %v1760 = vadd.f32 0.0, %v1759
        %1761 = vmatmul.bf16.gmra.mxu0 %v1698
        %v1762 = vpop.f32.mrf.mxu0
        %v1763 = vadd.f32 0.0, %v1762
        %v1764 = vpop.f32.mrf.mxu0
        %v1765 = vadd.f32 0.0, %v1764
        %1766 = vmatmul.bf16.gmra.mxu0 %v1701
        %v1767 = vpop.f32.mrf.mxu0
        %v1768 = vadd.f32 0.0, %v1767
        %v1769 = vpop.f32.mrf.mxu0
        %v1770 = vadd.f32 0.0, %v1769
        %1771 = vmatmul.bf16.gmra.mxu0 %v1704
        %v1772 = vpop.f32.mrf.mxu0
        %v1773 = vadd.f32 0.0, %v1772
        %v1774 = vpop.f32.mrf.mxu0
        %v1775 = vadd.f32 0.0, %v1774
        %1776 = vmatmul.bf16.gmra.mxu0 %v1707
        %v1777 = vpop.f32.mrf.mxu0
        %v1778 = vadd.f32 0.0, %v1777
        %v1779 = vpop.f32.mrf.mxu0
        %v1780 = vadd.f32 0.0, %v1779
        %1781 = vmatmul.bf16.gmra.mxu0 %v1710
        %v1782 = vpop.f32.mrf.mxu0
        %v1783 = vadd.f32 0.0, %v1782
        %v1784 = vpop.f32.mrf.mxu0
        %v1785 = vadd.f32 0.0, %v1784
        %1786 = vmatmul.bf16.gmra.mxu0 %v1713
        %v1787 = vpop.f32.mrf.mxu0
        %v1788 = vadd.f32 0.0, %v1787
        %v1789 = vpop.f32.mrf.mxu0
        %v1790 = vadd.f32 0.0, %v1789
        %1791 = vmatmul.bf16.gmra.mxu0 %v1716
        %v1792 = vpop.f32.mrf.mxu0
        %v1793 = vadd.f32 0.0, %v1792
        %v1794 = vpop.f32.mrf.mxu0
        %v1795 = vadd.f32 0.0, %v1794
        %1796 = vmatmul.bf16.gmra.mxu0 %v1719
        %v1797 = vpop.f32.mrf.mxu0
        %v1798 = vadd.f32 0.0, %v1797
        %v1799 = vpop.f32.mrf.mxu0
        %v1800 = vadd.f32 0.0, %v1799
        %1801 = vmatmul.bf16.gmra.mxu0 %v1722
        %v1802 = vpop.f32.mrf.mxu0
        %v1803 = vadd.f32 0.0, %v1802
        %v1804 = vpop.f32.mrf.mxu0
        %v1805 = vadd.f32 0.0, %v1804
        %1806 = vmatmul.bf16.gmra.mxu0 %v1725
        %v1807 = vpop.f32.mrf.mxu0
        %v1808 = vadd.f32 0.0, %v1807
        %v1809 = vpop.f32.mrf.mxu0
        %v1810 = vadd.f32 0.0, %v1809
        %1811 = vmatmul.bf16.gmra.mxu0 %v1728
        %v1812 = vpop.f32.mrf.mxu0
        %v1813 = vadd.f32 0.0, %v1812
        %v1814 = vpop.f32.mrf.mxu0
        %v1815 = vadd.f32 0.0, %v1814
        %1816 = vmatmul.bf16.gmra.mxu0 %v1731
        %v1817 = vpop.f32.mrf.mxu0
        %v1818 = vadd.f32 0.0, %v1817
        %v1819 = vpop.f32.mrf.mxu0
        %v1820 = vadd.f32 0.0, %v1819
        %1821 = vmatmul.bf16.gmra.mxu0 %v1734
        %v1822 = vpop.f32.mrf.mxu0
        %v1823 = vadd.f32 0.0, %v1822
        %v1824 = vpop.f32.mrf.mxu0
        %v1825 = vadd.f32 0.0, %v1824
        %1826 = vmatmul.bf16.gmra.mxu0 %v1737
        %v1827 = vpop.f32.mrf.mxu0
        %v1828 = vadd.f32 0.0, %v1827
        %v1829 = vpop.f32.mrf.mxu0
        %v1830 = vadd.f32 0.0, %v1829
        %1831 = vmatmul.bf16.gmra.mxu0 %v1740
        %v1832 = vpop.f32.mrf.mxu0
        %v1833 = vadd.f32 0.0, %v1832
        %v1834 = vpop.f32.mrf.mxu0
        %v1835 = vadd.f32 0.0, %v1834
        %1836 = vdwg.mxu0
        %1837 = vmatpush.bf16.msra.mxu0 0
        %1838 = vmatpush.bf16.msra.mxu0 0
        %1839 = vmatpush.bf16.msra.mxu0 0
        %1840 = vmatpush.bf16.msra.mxu0 0
        %1841 = vmatpush.bf16.msra.mxu0 0
        %1842 = vmatpush.bf16.msra.mxu0 0
        %1843 = vmatpush.bf16.msra.mxu0 0
        %1844 = vmatpush.bf16.msra.mxu0 %v1746
        %1845 = vmatmul.bf16.gmra.mxu0 %v1695
        %v1846 = vpop.f32.mrf.mxu0
        %v1847 = vadd.f32 0.0, %v1846
        %v1848 = vpop.f32.mrf.mxu0
        %v1849 = vadd.f32 0.0, %v1848
        %1850 = vmatmul.bf16.gmra.mxu0 %v1698
        %v1851 = vpop.f32.mrf.mxu0
        %v1852 = vadd.f32 0.0, %v1851
        %v1853 = vpop.f32.mrf.mxu0
        %v1854 = vadd.f32 0.0, %v1853
        %1855 = vmatmul.bf16.gmra.mxu0 %v1701
        %v1856 = vpop.f32.mrf.mxu0
        %v1857 = vadd.f32 0.0, %v1856
        %v1858 = vpop.f32.mrf.mxu0
        %v1859 = vadd.f32 0.0, %v1858
        %1860 = vmatmul.bf16.gmra.mxu0 %v1704
        %v1861 = vpop.f32.mrf.mxu0
        %v1862 = vadd.f32 0.0, %v1861
        %v1863 = vpop.f32.mrf.mxu0
        %v1864 = vadd.f32 0.0, %v1863
        %1865 = vmatmul.bf16.gmra.mxu0 %v1707
        %v1866 = vpop.f32.mrf.mxu0
        %v1867 = vadd.f32 0.0, %v1866
        %v1868 = vpop.f32.mrf.mxu0
        %v1869 = vadd.f32 0.0, %v1868
        %1870 = vmatmul.bf16.gmra.mxu0 %v1710
        %v1871 = vpop.f32.mrf.mxu0
        %v1872 = vadd.f32 0.0, %v1871
        %v1873 = vpop.f32.mrf.mxu0
        %v1874 = vadd.f32 0.0, %v1873
        %1875 = vmatmul.bf16.gmra.mxu0 %v1713
        %v1876 = vpop.f32.mrf.mxu0
        %v1877 = vadd.f32 0.0, %v1876
        %v1878 = vpop.f32.mrf.mxu0
        %v1879 = vadd.f32 0.0, %v1878
        %1880 = vmatmul.bf16.gmra.mxu0 %v1716
        %v1881 = vpop.f32.mrf.mxu0
        %v1882 = vadd.f32 0.0, %v1881
        %v1883 = vpop.f32.mrf.mxu0
        %v1884 = vadd.f32 0.0, %v1883
        %1885 = vmatmul.bf16.gmra.mxu0 %v1719
        %v1886 = vpop.f32.mrf.mxu0
        %v1887 = vadd.f32 0.0, %v1886
        %v1888 = vpop.f32.mrf.mxu0
        %v1889 = vadd.f32 0.0, %v1888
        %1890 = vmatmul.bf16.gmra.mxu0 %v1722
        %v1891 = vpop.f32.mrf.mxu0
        %v1892 = vadd.f32 0.0, %v1891
        %v1893 = vpop.f32.mrf.mxu0
        %v1894 = vadd.f32 0.0, %v1893
        %1895 = vmatmul.bf16.gmra.mxu0 %v1725
        %v1896 = vpop.f32.mrf.mxu0
        %v1897 = vadd.f32 0.0, %v1896
        %v1898 = vpop.f32.mrf.mxu0
        %v1899 = vadd.f32 0.0, %v1898
        %1900 = vmatmul.bf16.gmra.mxu0 %v1728
        %v1901 = vpop.f32.mrf.mxu0
        %v1902 = vadd.f32 0.0, %v1901
        %v1903 = vpop.f32.mrf.mxu0
        %v1904 = vadd.f32 0.0, %v1903
        %1905 = vmatmul.bf16.gmra.mxu0 %v1731
        %v1906 = vpop.f32.mrf.mxu0
        %v1907 = vadd.f32 0.0, %v1906
        %v1908 = vpop.f32.mrf.mxu0
        %v1909 = vadd.f32 0.0, %v1908
        %1910 = vmatmul.bf16.gmra.mxu0 %v1734
        %v1911 = vpop.f32.mrf.mxu0
        %v1912 = vadd.f32 0.0, %v1911
        %v1913 = vpop.f32.mrf.mxu0
        %v1914 = vadd.f32 0.0, %v1913
        %1915 = vmatmul.bf16.gmra.mxu0 %v1737
        %v1916 = vpop.f32.mrf.mxu0
        %v1917 = vadd.f32 0.0, %v1916
        %v1918 = vpop.f32.mrf.mxu0
        %v1919 = vadd.f32 0.0, %v1918
        %1920 = vmatmul.bf16.gmra.mxu0 %v1740
        %v1921 = vpop.f32.mrf.mxu0
        %v1922 = vadd.f32 0.0, %v1921
        %v1923 = vpop.f32.mrf.mxu0
        %v1924 = vadd.f32 0.0, %v1923
        %1925 = vdwg.mxu0
        %v1927 = vunpack.c.l.b16 %v840
        %v1928 = vunpack.c.h.b16 %v840
        %v1929 = vpack.c.b16 %v1927, %v1927
        %v1930 = vpack.c.b16 %v1928, %v1928
        %1933 = vxpose.binary.xlu0.c.b16.start [1/16] %v1930, %v1929, 128
        %1934 = vxpose.binary.xlu0.c.b16.cont [2/16] 0, 0, 128
        %1935 = vxpose.binary.xlu0.c.b16.cont [3/16] 0, 0, 128
        %1936 = vxpose.binary.xlu0.c.b16.cont [4/16] 0, 0, 128
        %1937 = vxpose.binary.xlu0.c.b16.cont [5/16] 0, 0, 128
        %1938 = vxpose.binary.xlu0.c.b16.cont [6/16] 0, 0, 128
        %1939 = vxpose.binary.xlu0.c.b16.cont [7/16] 0, 0, 128
        %1940 = vxpose.binary.xlu0.c.b16.end [8/16] 0, 0, 128
        %v1941 = vpop.trf.xlu0
        %v1942 = vpop.trf.xlu0
        %v1943 = vpop.trf.xlu0
        %v1944 = vpop.trf.xlu0
        %v1945 = vpop.trf.xlu0
        %v1946 = vpop.trf.xlu0
        %v1947 = vpop.trf.xlu0
        %v1948 = vpop.trf.xlu0
        %v1949 = vpop.trf.xlu0
        %v1950 = vpop.trf.xlu0
        %v1951 = vpop.trf.xlu0
        %v1952 = vpop.trf.xlu0
        %v1953 = vpop.trf.xlu0
        %v1954 = vpop.trf.xlu0
        %v1955 = vpop.trf.xlu0
        %v1956 = vpop.trf.xlu0
        %v1958 = vunpack.c.l.b16 %v848
        %v1959 = vunpack.c.h.b16 %v848
        %v1960 = vpack.c.b16 %v1958, %v1958
        %v1961 = vpack.c.b16 %v1959, %v1959
        %v1963 = vsel %vm888, %v1941, 0
        %v1966 = vsel %vm888, %v1943, 0
        %v1969 = vsel %vm888, %v1945, 0
        %v1972 = vsel %vm888, %v1947, 0
        %v1975 = vsel %vm888, %v1949, 0
        %v1978 = vsel %vm888, %v1951, 0
        %v1981 = vsel %vm888, %v1953, 0
        %v1984 = vsel %vm888, %v1955, 0
        %v1987 = vsel %vm888, %v1942, 0
        %v1990 = vsel %vm888, %v1944, 0
        %v1993 = vsel %vm888, %v1946, 0
        %v1996 = vsel %vm888, %v1948, 0
        %v1999 = vsel %vm888, %v1950, 0
        %v2002 = vsel %vm888, %v1952, 0
        %v2005 = vsel %vm888, %v1954, 0
        %v2008 = vsel %vm888, %v1956, 0
        %v2011 = vsel %vm937, %v1960, 0
        %v2014 = vsel %vm937, %v1961, 0
        %2016 = vmatpush.bf16.msra.mxu0 0
        %2017 = vmatpush.bf16.msra.mxu0 0
        %2018 = vmatpush.bf16.msra.mxu0 0
        %2019 = vmatpush.bf16.msra.mxu0 0
        %2020 = vmatpush.bf16.msra.mxu0 0
        %2021 = vmatpush.bf16.msra.mxu0 0
        %2022 = vmatpush.bf16.msra.mxu0 0
        %2023 = vmatpush.bf16.msra.mxu0 %v2011
        %2024 = vmatmul.bf16.gmra.mxu0 %v1963
        %v2025 = vpop.f32.mrf.mxu0
        %v2026 = vadd.f32 0.0, %v2025
        %v2027 = vpop.f32.mrf.mxu0
        %v2028 = vadd.f32 0.0, %v2027
        %2029 = vmatmul.bf16.gmra.mxu0 %v1966
        %v2030 = vpop.f32.mrf.mxu0
        %v2031 = vadd.f32 0.0, %v2030
        %v2032 = vpop.f32.mrf.mxu0
        %v2033 = vadd.f32 0.0, %v2032
        %2034 = vmatmul.bf16.gmra.mxu0 %v1969
        %v2035 = vpop.f32.mrf.mxu0
        %v2036 = vadd.f32 0.0, %v2035
        %v2037 = vpop.f32.mrf.mxu0
        %v2038 = vadd.f32 0.0, %v2037
        %2039 = vmatmul.bf16.gmra.mxu0 %v1972
        %v2040 = vpop.f32.mrf.mxu0
        %v2041 = vadd.f32 0.0, %v2040
        %v2042 = vpop.f32.mrf.mxu0
        %v2043 = vadd.f32 0.0, %v2042
        %2044 = vmatmul.bf16.gmra.mxu0 %v1975
        %v2045 = vpop.f32.mrf.mxu0
        %v2046 = vadd.f32 0.0, %v2045
        %v2047 = vpop.f32.mrf.mxu0
        %v2048 = vadd.f32 0.0, %v2047
        %2049 = vmatmul.bf16.gmra.mxu0 %v1978
        %v2050 = vpop.f32.mrf.mxu0
        %v2051 = vadd.f32 0.0, %v2050
        %v2052 = vpop.f32.mrf.mxu0
        %v2053 = vadd.f32 0.0, %v2052
        %2054 = vmatmul.bf16.gmra.mxu0 %v1981
        %v2055 = vpop.f32.mrf.mxu0
        %v2056 = vadd.f32 0.0, %v2055
        %v2057 = vpop.f32.mrf.mxu0
        %v2058 = vadd.f32 0.0, %v2057
        %2059 = vmatmul.bf16.gmra.mxu0 %v1984
        %v2060 = vpop.f32.mrf.mxu0
        %v2061 = vadd.f32 0.0, %v2060
        %v2062 = vpop.f32.mrf.mxu0
        %v2063 = vadd.f32 0.0, %v2062
        %2064 = vmatmul.bf16.gmra.mxu0 %v1987
        %v2065 = vpop.f32.mrf.mxu0
        %v2066 = vadd.f32 0.0, %v2065
        %v2067 = vpop.f32.mrf.mxu0
        %v2068 = vadd.f32 0.0, %v2067
        %2069 = vmatmul.bf16.gmra.mxu0 %v1990
        %v2070 = vpop.f32.mrf.mxu0
        %v2071 = vadd.f32 0.0, %v2070
        %v2072 = vpop.f32.mrf.mxu0
        %v2073 = vadd.f32 0.0, %v2072
        %2074 = vmatmul.bf16.gmra.mxu0 %v1993
        %v2075 = vpop.f32.mrf.mxu0
        %v2076 = vadd.f32 0.0, %v2075
        %v2077 = vpop.f32.mrf.mxu0
        %v2078 = vadd.f32 0.0, %v2077
        %2079 = vmatmul.bf16.gmra.mxu0 %v1996
        %v2080 = vpop.f32.mrf.mxu0
        %v2081 = vadd.f32 0.0, %v2080
        %v2082 = vpop.f32.mrf.mxu0
        %v2083 = vadd.f32 0.0, %v2082
        %2084 = vmatmul.bf16.gmra.mxu0 %v1999
        %v2085 = vpop.f32.mrf.mxu0
        %v2086 = vadd.f32 0.0, %v2085
        %v2087 = vpop.f32.mrf.mxu0
        %v2088 = vadd.f32 0.0, %v2087
        %2089 = vmatmul.bf16.gmra.mxu0 %v2002
        %v2090 = vpop.f32.mrf.mxu0
        %v2091 = vadd.f32 0.0, %v2090
        %v2092 = vpop.f32.mrf.mxu0
        %v2093 = vadd.f32 0.0, %v2092
        %2094 = vmatmul.bf16.gmra.mxu0 %v2005
        %v2095 = vpop.f32.mrf.mxu0
        %v2096 = vadd.f32 0.0, %v2095
        %v2097 = vpop.f32.mrf.mxu0
        %v2098 = vadd.f32 0.0, %v2097
        %2099 = vmatmul.bf16.gmra.mxu0 %v2008
        %v2100 = vpop.f32.mrf.mxu0
        %v2101 = vadd.f32 0.0, %v2100
        %v2102 = vpop.f32.mrf.mxu0
        %v2103 = vadd.f32 0.0, %v2102
        %2104 = vdwg.mxu0
        %2105 = vmatpush.bf16.msra.mxu0 0
        %2106 = vmatpush.bf16.msra.mxu0 0
        %2107 = vmatpush.bf16.msra.mxu0 0
        %2108 = vmatpush.bf16.msra.mxu0 0
        %2109 = vmatpush.bf16.msra.mxu0 0
        %2110 = vmatpush.bf16.msra.mxu0 0
        %2111 = vmatpush.bf16.msra.mxu0 0
        %2112 = vmatpush.bf16.msra.mxu0 %v2014
        %2113 = vmatmul.bf16.gmra.mxu0 %v1963
        %v2114 = vpop.f32.mrf.mxu0
        %v2115 = vadd.f32 0.0, %v2114
        %v2116 = vpop.f32.mrf.mxu0
        %v2117 = vadd.f32 0.0, %v2116
        %2118 = vmatmul.bf16.gmra.mxu0 %v1966
        %v2119 = vpop.f32.mrf.mxu0
        %v2120 = vadd.f32 0.0, %v2119
        %v2121 = vpop.f32.mrf.mxu0
        %v2122 = vadd.f32 0.0, %v2121
        %2123 = vmatmul.bf16.gmra.mxu0 %v1969
        %v2124 = vpop.f32.mrf.mxu0
        %v2125 = vadd.f32 0.0, %v2124
        %v2126 = vpop.f32.mrf.mxu0
        %v2127 = vadd.f32 0.0, %v2126
        %2128 = vmatmul.bf16.gmra.mxu0 %v1972
        %v2129 = vpop.f32.mrf.mxu0
        %v2130 = vadd.f32 0.0, %v2129
        %v2131 = vpop.f32.mrf.mxu0
        %v2132 = vadd.f32 0.0, %v2131
        %2133 = vmatmul.bf16.gmra.mxu0 %v1975
        %v2134 = vpop.f32.mrf.mxu0
        %v2135 = vadd.f32 0.0, %v2134
        %v2136 = vpop.f32.mrf.mxu0
        %v2137 = vadd.f32 0.0, %v2136
        %2138 = vmatmul.bf16.gmra.mxu0 %v1978
        %v2139 = vpop.f32.mrf.mxu0
        %v2140 = vadd.f32 0.0, %v2139
        %v2141 = vpop.f32.mrf.mxu0
        %v2142 = vadd.f32 0.0, %v2141
        %2143 = vmatmul.bf16.gmra.mxu0 %v1981
        %v2144 = vpop.f32.mrf.mxu0
        %v2145 = vadd.f32 0.0, %v2144
        %v2146 = vpop.f32.mrf.mxu0
        %v2147 = vadd.f32 0.0, %v2146
        %2148 = vmatmul.bf16.gmra.mxu0 %v1984
        %v2149 = vpop.f32.mrf.mxu0
        %v2150 = vadd.f32 0.0, %v2149
        %v2151 = vpop.f32.mrf.mxu0
        %v2152 = vadd.f32 0.0, %v2151
        %2153 = vmatmul.bf16.gmra.mxu0 %v1987
        %v2154 = vpop.f32.mrf.mxu0
        %v2155 = vadd.f32 0.0, %v2154
        %v2156 = vpop.f32.mrf.mxu0
        %v2157 = vadd.f32 0.0, %v2156
        %2158 = vmatmul.bf16.gmra.mxu0 %v1990
        %v2159 = vpop.f32.mrf.mxu0
        %v2160 = vadd.f32 0.0, %v2159
        %v2161 = vpop.f32.mrf.mxu0
        %v2162 = vadd.f32 0.0, %v2161
        %2163 = vmatmul.bf16.gmra.mxu0 %v1993
        %v2164 = vpop.f32.mrf.mxu0
        %v2165 = vadd.f32 0.0, %v2164
        %v2166 = vpop.f32.mrf.mxu0
        %v2167 = vadd.f32 0.0, %v2166
        %2168 = vmatmul.bf16.gmra.mxu0 %v1996
        %v2169 = vpop.f32.mrf.mxu0
        %v2170 = vadd.f32 0.0, %v2169
        %v2171 = vpop.f32.mrf.mxu0
        %v2172 = vadd.f32 0.0, %v2171
        %2173 = vmatmul.bf16.gmra.mxu0 %v1999
        %v2174 = vpop.f32.mrf.mxu0
        %v2175 = vadd.f32 0.0, %v2174
        %v2176 = vpop.f32.mrf.mxu0
        %v2177 = vadd.f32 0.0, %v2176
        %2178 = vmatmul.bf16.gmra.mxu0 %v2002
        %v2179 = vpop.f32.mrf.mxu0
        %v2180 = vadd.f32 0.0, %v2179
        %v2181 = vpop.f32.mrf.mxu0
        %v2182 = vadd.f32 0.0, %v2181
        %2183 = vmatmul.bf16.gmra.mxu0 %v2005
        %v2184 = vpop.f32.mrf.mxu0
        %v2185 = vadd.f32 0.0, %v2184
        %v2186 = vpop.f32.mrf.mxu0
        %v2187 = vadd.f32 0.0, %v2186
        %2188 = vmatmul.bf16.gmra.mxu0 %v2008
        %v2189 = vpop.f32.mrf.mxu0
        %v2190 = vadd.f32 0.0, %v2189
        %v2191 = vpop.f32.mrf.mxu0
        %v2192 = vadd.f32 0.0, %v2191
        %2193 = vdwg.mxu0
        %v2195 = vunpack.c.l.b16 %v841
        %v2196 = vunpack.c.h.b16 %v841
        %v2197 = vpack.c.b16 %v2195, %v2195
        %v2198 = vpack.c.b16 %v2196, %v2196
        %2201 = vxpose.binary.xlu0.c.b16.start [1/16] %v2198, %v2197, 128
        %2202 = vxpose.binary.xlu0.c.b16.cont [2/16] 0, 0, 128
        %2203 = vxpose.binary.xlu0.c.b16.cont [3/16] 0, 0, 128
        %2204 = vxpose.binary.xlu0.c.b16.cont [4/16] 0, 0, 128
        %2205 = vxpose.binary.xlu0.c.b16.cont [5/16] 0, 0, 128
        %2206 = vxpose.binary.xlu0.c.b16.cont [6/16] 0, 0, 128
        %2207 = vxpose.binary.xlu0.c.b16.cont [7/16] 0, 0, 128
        %2208 = vxpose.binary.xlu0.c.b16.end [8/16] 0, 0, 128
        %v2209 = vpop.trf.xlu0
        %v2210 = vpop.trf.xlu0
        %v2211 = vpop.trf.xlu0
        %v2212 = vpop.trf.xlu0
        %v2213 = vpop.trf.xlu0
        %v2214 = vpop.trf.xlu0
        %v2215 = vpop.trf.xlu0
        %v2216 = vpop.trf.xlu0
        %v2217 = vpop.trf.xlu0
        %v2218 = vpop.trf.xlu0
        %v2219 = vpop.trf.xlu0
        %v2220 = vpop.trf.xlu0
        %v2221 = vpop.trf.xlu0
        %v2222 = vpop.trf.xlu0
        %v2223 = vpop.trf.xlu0
        %v2224 = vpop.trf.xlu0
        %v2226 = vunpack.c.l.b16 %v849
        %v2227 = vunpack.c.h.b16 %v849
        %v2228 = vpack.c.b16 %v2226, %v2226
        %v2229 = vpack.c.b16 %v2227, %v2227
        %v2231 = vsel %vm888, %v2209, 0
        %v2234 = vsel %vm888, %v2211, 0
        %v2237 = vsel %vm888, %v2213, 0
        %v2240 = vsel %vm888, %v2215, 0
        %v2243 = vsel %vm888, %v2217, 0
        %v2246 = vsel %vm888, %v2219, 0
        %v2249 = vsel %vm888, %v2221, 0
        %v2252 = vsel %vm888, %v2223, 0
        %v2255 = vsel %vm888, %v2210, 0
        %v2258 = vsel %vm888, %v2212, 0
        %v2261 = vsel %vm888, %v2214, 0
        %v2264 = vsel %vm888, %v2216, 0
        %v2267 = vsel %vm888, %v2218, 0
        %v2270 = vsel %vm888, %v2220, 0
        %v2273 = vsel %vm888, %v2222, 0
        %v2276 = vsel %vm888, %v2224, 0
        %v2279 = vsel %vm937, %v2228, 0
        %v2282 = vsel %vm937, %v2229, 0
        %2284 = vmatpush.bf16.msra.mxu0 0
        %2285 = vmatpush.bf16.msra.mxu0 0
        %2286 = vmatpush.bf16.msra.mxu0 0
        %2287 = vmatpush.bf16.msra.mxu0 0
        %2288 = vmatpush.bf16.msra.mxu0 0
        %2289 = vmatpush.bf16.msra.mxu0 0
        %2290 = vmatpush.bf16.msra.mxu0 0
        %2291 = vmatpush.bf16.msra.mxu0 %v2279
        %2292 = vmatmul.bf16.gmra.mxu0 %v2231
        %v2293 = vpop.f32.mrf.mxu0
        %v2294 = vadd.f32 0.0, %v2293
        %v2295 = vpop.f32.mrf.mxu0
        %v2296 = vadd.f32 0.0, %v2295
        %2297 = vmatmul.bf16.gmra.mxu0 %v2234
        %v2298 = vpop.f32.mrf.mxu0
        %v2299 = vadd.f32 0.0, %v2298
        %v2300 = vpop.f32.mrf.mxu0
        %v2301 = vadd.f32 0.0, %v2300
        %2302 = vmatmul.bf16.gmra.mxu0 %v2237
        %v2303 = vpop.f32.mrf.mxu0
        %v2304 = vadd.f32 0.0, %v2303
        %v2305 = vpop.f32.mrf.mxu0
        %v2306 = vadd.f32 0.0, %v2305
        %2307 = vmatmul.bf16.gmra.mxu0 %v2240
        %v2308 = vpop.f32.mrf.mxu0
        %v2309 = vadd.f32 0.0, %v2308
        %v2310 = vpop.f32.mrf.mxu0
        %v2311 = vadd.f32 0.0, %v2310
        %2312 = vmatmul.bf16.gmra.mxu0 %v2243
        %v2313 = vpop.f32.mrf.mxu0
        %v2314 = vadd.f32 0.0, %v2313
        %v2315 = vpop.f32.mrf.mxu0
        %v2316 = vadd.f32 0.0, %v2315
        %2317 = vmatmul.bf16.gmra.mxu0 %v2246
        %v2318 = vpop.f32.mrf.mxu0
        %v2319 = vadd.f32 0.0, %v2318
        %v2320 = vpop.f32.mrf.mxu0
        %v2321 = vadd.f32 0.0, %v2320
        %2322 = vmatmul.bf16.gmra.mxu0 %v2249
        %v2323 = vpop.f32.mrf.mxu0
        %v2324 = vadd.f32 0.0, %v2323
        %v2325 = vpop.f32.mrf.mxu0
        %v2326 = vadd.f32 0.0, %v2325
        %2327 = vmatmul.bf16.gmra.mxu0 %v2252
        %v2328 = vpop.f32.mrf.mxu0
        %v2329 = vadd.f32 0.0, %v2328
        %v2330 = vpop.f32.mrf.mxu0
        %v2331 = vadd.f32 0.0, %v2330
        %2332 = vmatmul.bf16.gmra.mxu0 %v2255
        %v2333 = vpop.f32.mrf.mxu0
        %v2334 = vadd.f32 0.0, %v2333
        %v2335 = vpop.f32.mrf.mxu0
        %v2336 = vadd.f32 0.0, %v2335
        %2337 = vmatmul.bf16.gmra.mxu0 %v2258
        %v2338 = vpop.f32.mrf.mxu0
        %v2339 = vadd.f32 0.0, %v2338
        %v2340 = vpop.f32.mrf.mxu0
        %v2341 = vadd.f32 0.0, %v2340
        %2342 = vmatmul.bf16.gmra.mxu0 %v2261
        %v2343 = vpop.f32.mrf.mxu0
        %v2344 = vadd.f32 0.0, %v2343
        %v2345 = vpop.f32.mrf.mxu0
        %v2346 = vadd.f32 0.0, %v2345
        %2347 = vmatmul.bf16.gmra.mxu0 %v2264
        %v2348 = vpop.f32.mrf.mxu0
        %v2349 = vadd.f32 0.0, %v2348
        %v2350 = vpop.f32.mrf.mxu0
        %v2351 = vadd.f32 0.0, %v2350
        %2352 = vmatmul.bf16.gmra.mxu0 %v2267
        %v2353 = vpop.f32.mrf.mxu0
        %v2354 = vadd.f32 0.0, %v2353
        %v2355 = vpop.f32.mrf.mxu0
        %v2356 = vadd.f32 0.0, %v2355
        %2357 = vmatmul.bf16.gmra.mxu0 %v2270
        %v2358 = vpop.f32.mrf.mxu0
        %v2359 = vadd.f32 0.0, %v2358
        %v2360 = vpop.f32.mrf.mxu0
        %v2361 = vadd.f32 0.0, %v2360
        %2362 = vmatmul.bf16.gmra.mxu0 %v2273
        %v2363 = vpop.f32.mrf.mxu0
        %v2364 = vadd.f32 0.0, %v2363
        %v2365 = vpop.f32.mrf.mxu0
        %v2366 = vadd.f32 0.0, %v2365
        %2367 = vmatmul.bf16.gmra.mxu0 %v2276
        %v2368 = vpop.f32.mrf.mxu0
        %v2369 = vadd.f32 0.0, %v2368
        %v2370 = vpop.f32.mrf.mxu0
        %v2371 = vadd.f32 0.0, %v2370
        %2372 = vdwg.mxu0
        %2373 = vmatpush.bf16.msra.mxu0 0
        %2374 = vmatpush.bf16.msra.mxu0 0
        %2375 = vmatpush.bf16.msra.mxu0 0
        %2376 = vmatpush.bf16.msra.mxu0 0
        %2377 = vmatpush.bf16.msra.mxu0 0
        %2378 = vmatpush.bf16.msra.mxu0 0
        %2379 = vmatpush.bf16.msra.mxu0 0
        %2380 = vmatpush.bf16.msra.mxu0 %v2282
        %2381 = vmatmul.bf16.gmra.mxu0 %v2231
        %v2382 = vpop.f32.mrf.mxu0
        %v2383 = vadd.f32 0.0, %v2382
        %v2384 = vpop.f32.mrf.mxu0
        %v2385 = vadd.f32 0.0, %v2384
        %2386 = vmatmul.bf16.gmra.mxu0 %v2234
        %v2387 = vpop.f32.mrf.mxu0
        %v2388 = vadd.f32 0.0, %v2387
        %v2389 = vpop.f32.mrf.mxu0
        %v2390 = vadd.f32 0.0, %v2389
        %2391 = vmatmul.bf16.gmra.mxu0 %v2237
        %v2392 = vpop.f32.mrf.mxu0
        %v2393 = vadd.f32 0.0, %v2392
        %v2394 = vpop.f32.mrf.mxu0
        %v2395 = vadd.f32 0.0, %v2394
        %2396 = vmatmul.bf16.gmra.mxu0 %v2240
        %v2397 = vpop.f32.mrf.mxu0
        %v2398 = vadd.f32 0.0, %v2397
        %v2399 = vpop.f32.mrf.mxu0
        %v2400 = vadd.f32 0.0, %v2399
        %2401 = vmatmul.bf16.gmra.mxu0 %v2243
        %v2402 = vpop.f32.mrf.mxu0
        %v2403 = vadd.f32 0.0, %v2402
        %v2404 = vpop.f32.mrf.mxu0
        %v2405 = vadd.f32 0.0, %v2404
        %2406 = vmatmul.bf16.gmra.mxu0 %v2246
        %v2407 = vpop.f32.mrf.mxu0
        %v2408 = vadd.f32 0.0, %v2407
        %v2409 = vpop.f32.mrf.mxu0
        %v2410 = vadd.f32 0.0, %v2409
        %2411 = vmatmul.bf16.gmra.mxu0 %v2249
        %v2412 = vpop.f32.mrf.mxu0
        %v2413 = vadd.f32 0.0, %v2412
        %v2414 = vpop.f32.mrf.mxu0
        %v2415 = vadd.f32 0.0, %v2414
        %2416 = vmatmul.bf16.gmra.mxu0 %v2252
        %v2417 = vpop.f32.mrf.mxu0
        %v2418 = vadd.f32 0.0, %v2417
        %v2419 = vpop.f32.mrf.mxu0
        %v2420 = vadd.f32 0.0, %v2419
        %2421 = vmatmul.bf16.gmra.mxu0 %v2255
        %v2422 = vpop.f32.mrf.mxu0
        %v2423 = vadd.f32 0.0, %v2422
        %v2424 = vpop.f32.mrf.mxu0
        %v2425 = vadd.f32 0.0, %v2424
        %2426 = vmatmul.bf16.gmra.mxu0 %v2258
        %v2427 = vpop.f32.mrf.mxu0
        %v2428 = vadd.f32 0.0, %v2427
        %v2429 = vpop.f32.mrf.mxu0
        %v2430 = vadd.f32 0.0, %v2429
        %2431 = vmatmul.bf16.gmra.mxu0 %v2261
        %v2432 = vpop.f32.mrf.mxu0
        %v2433 = vadd.f32 0.0, %v2432
        %v2434 = vpop.f32.mrf.mxu0
        %v2435 = vadd.f32 0.0, %v2434
        %2436 = vmatmul.bf16.gmra.mxu0 %v2264
        %v2437 = vpop.f32.mrf.mxu0
        %v2438 = vadd.f32 0.0, %v2437
        %v2439 = vpop.f32.mrf.mxu0
        %v2440 = vadd.f32 0.0, %v2439
        %2441 = vmatmul.bf16.gmra.mxu0 %v2267
        %v2442 = vpop.f32.mrf.mxu0
        %v2443 = vadd.f32 0.0, %v2442
        %v2444 = vpop.f32.mrf.mxu0
        %v2445 = vadd.f32 0.0, %v2444
        %2446 = vmatmul.bf16.gmra.mxu0 %v2270
        %v2447 = vpop.f32.mrf.mxu0
        %v2448 = vadd.f32 0.0, %v2447
        %v2449 = vpop.f32.mrf.mxu0
        %v2450 = vadd.f32 0.0, %v2449
        %2451 = vmatmul.bf16.gmra.mxu0 %v2273
        %v2452 = vpop.f32.mrf.mxu0
        %v2453 = vadd.f32 0.0, %v2452
        %v2454 = vpop.f32.mrf.mxu0
        %v2455 = vadd.f32 0.0, %v2454
        %2456 = vmatmul.bf16.gmra.mxu0 %v2276
        %v2457 = vpop.f32.mrf.mxu0
        %v2458 = vadd.f32 0.0, %v2457
        %v2459 = vpop.f32.mrf.mxu0
        %v2460 = vadd.f32 0.0, %v2459
        %2461 = vdwg.mxu0
        %v2463 = vunpack.c.l.b16 %v842
        %v2464 = vunpack.c.h.b16 %v842
        %v2465 = vpack.c.b16 %v2463, %v2463
        %v2466 = vpack.c.b16 %v2464, %v2464
        %2469 = vxpose.binary.xlu0.c.b16.start [1/16] %v2466, %v2465, 128
        %2470 = vxpose.binary.xlu0.c.b16.cont [2/16] 0, 0, 128
        %2471 = vxpose.binary.xlu0.c.b16.cont [3/16] 0, 0, 128
        %2472 = vxpose.binary.xlu0.c.b16.cont [4/16] 0, 0, 128
        %2473 = vxpose.binary.xlu0.c.b16.cont [5/16] 0, 0, 128
        %2474 = vxpose.binary.xlu0.c.b16.cont [6/16] 0, 0, 128
        %2475 = vxpose.binary.xlu0.c.b16.cont [7/16] 0, 0, 128
        %2476 = vxpose.binary.xlu0.c.b16.end [8/16] 0, 0, 128
        %v2477 = vpop.trf.xlu0
        %v2478 = vpop.trf.xlu0
        %v2479 = vpop.trf.xlu0
        %v2480 = vpop.trf.xlu0
        %v2481 = vpop.trf.xlu0
        %v2482 = vpop.trf.xlu0
        %v2483 = vpop.trf.xlu0
        %v2484 = vpop.trf.xlu0
        %v2485 = vpop.trf.xlu0
        %v2486 = vpop.trf.xlu0
        %v2487 = vpop.trf.xlu0
        %v2488 = vpop.trf.xlu0
        %v2489 = vpop.trf.xlu0
        %v2490 = vpop.trf.xlu0
        %v2491 = vpop.trf.xlu0
        %v2492 = vpop.trf.xlu0
        %v2494 = vunpack.c.l.b16 %v850
        %v2495 = vunpack.c.h.b16 %v850
        %v2496 = vpack.c.b16 %v2494, %v2494
        %v2497 = vpack.c.b16 %v2495, %v2495
        %v2499 = vsel %vm888, %v2477, 0
        %v2502 = vsel %vm888, %v2479, 0
        %v2505 = vsel %vm888, %v2481, 0
        %v2508 = vsel %vm888, %v2483, 0
        %v2511 = vsel %vm888, %v2485, 0
        %v2514 = vsel %vm888, %v2487, 0
        %v2517 = vsel %vm888, %v2489, 0
        %v2520 = vsel %vm888, %v2491, 0
        %v2523 = vsel %vm888, %v2478, 0
        %v2526 = vsel %vm888, %v2480, 0
        %v2529 = vsel %vm888, %v2482, 0
        %v2532 = vsel %vm888, %v2484, 0
        %v2535 = vsel %vm888, %v2486, 0
        %v2538 = vsel %vm888, %v2488, 0
        %v2541 = vsel %vm888, %v2490, 0
        %v2544 = vsel %vm888, %v2492, 0
        %v2547 = vsel %vm937, %v2496, 0
        %v2550 = vsel %vm937, %v2497, 0
        %2552 = vmatpush.bf16.msra.mxu0 0
        %2553 = vmatpush.bf16.msra.mxu0 0
        %2554 = vmatpush.bf16.msra.mxu0 0
        %2555 = vmatpush.bf16.msra.mxu0 0
        %2556 = vmatpush.bf16.msra.mxu0 0
        %2557 = vmatpush.bf16.msra.mxu0 0
        %2558 = vmatpush.bf16.msra.mxu0 0
        %2559 = vmatpush.bf16.msra.mxu0 %v2547
        %2560 = vmatmul.bf16.gmra.mxu0 %v2499
        %v2561 = vpop.f32.mrf.mxu0
        %v2562 = vadd.f32 0.0, %v2561
        %v2563 = vpop.f32.mrf.mxu0
        %v2564 = vadd.f32 0.0, %v2563
        %2565 = vmatmul.bf16.gmra.mxu0 %v2502
        %v2566 = vpop.f32.mrf.mxu0
        %v2567 = vadd.f32 0.0, %v2566
        %v2568 = vpop.f32.mrf.mxu0
        %v2569 = vadd.f32 0.0, %v2568
        %2570 = vmatmul.bf16.gmra.mxu0 %v2505
        %v2571 = vpop.f32.mrf.mxu0
        %v2572 = vadd.f32 0.0, %v2571
        %v2573 = vpop.f32.mrf.mxu0
        %v2574 = vadd.f32 0.0, %v2573
        %2575 = vmatmul.bf16.gmra.mxu0 %v2508
        %v2576 = vpop.f32.mrf.mxu0
        %v2577 = vadd.f32 0.0, %v2576
        %v2578 = vpop.f32.mrf.mxu0
        %v2579 = vadd.f32 0.0, %v2578
        %2580 = vmatmul.bf16.gmra.mxu0 %v2511
        %v2581 = vpop.f32.mrf.mxu0
        %v2582 = vadd.f32 0.0, %v2581
        %v2583 = vpop.f32.mrf.mxu0
        %v2584 = vadd.f32 0.0, %v2583
        %2585 = vmatmul.bf16.gmra.mxu0 %v2514
        %v2586 = vpop.f32.mrf.mxu0
        %v2587 = vadd.f32 0.0, %v2586
        %v2588 = vpop.f32.mrf.mxu0
        %v2589 = vadd.f32 0.0, %v2588
        %2590 = vmatmul.bf16.gmra.mxu0 %v2517
        %v2591 = vpop.f32.mrf.mxu0
        %v2592 = vadd.f32 0.0, %v2591
        %v2593 = vpop.f32.mrf.mxu0
        %v2594 = vadd.f32 0.0, %v2593
        %2595 = vmatmul.bf16.gmra.mxu0 %v2520
        %v2596 = vpop.f32.mrf.mxu0
        %v2597 = vadd.f32 0.0, %v2596
        %v2598 = vpop.f32.mrf.mxu0
        %v2599 = vadd.f32 0.0, %v2598
        %2600 = vmatmul.bf16.gmra.mxu0 %v2523
        %v2601 = vpop.f32.mrf.mxu0
        %v2602 = vadd.f32 0.0, %v2601
        %v2603 = vpop.f32.mrf.mxu0
        %v2604 = vadd.f32 0.0, %v2603
        %2605 = vmatmul.bf16.gmra.mxu0 %v2526
        %v2606 = vpop.f32.mrf.mxu0
        %v2607 = vadd.f32 0.0, %v2606
        %v2608 = vpop.f32.mrf.mxu0
        %v2609 = vadd.f32 0.0, %v2608
        %2610 = vmatmul.bf16.gmra.mxu0 %v2529
        %v2611 = vpop.f32.mrf.mxu0
        %v2612 = vadd.f32 0.0, %v2611
        %v2613 = vpop.f32.mrf.mxu0
        %v2614 = vadd.f32 0.0, %v2613
        %2615 = vmatmul.bf16.gmra.mxu0 %v2532
        %v2616 = vpop.f32.mrf.mxu0
        %v2617 = vadd.f32 0.0, %v2616
        %v2618 = vpop.f32.mrf.mxu0
        %v2619 = vadd.f32 0.0, %v2618
        %2620 = vmatmul.bf16.gmra.mxu0 %v2535
        %v2621 = vpop.f32.mrf.mxu0
        %v2622 = vadd.f32 0.0, %v2621
        %v2623 = vpop.f32.mrf.mxu0
        %v2624 = vadd.f32 0.0, %v2623
        %2625 = vmatmul.bf16.gmra.mxu0 %v2538
        %v2626 = vpop.f32.mrf.mxu0
        %v2627 = vadd.f32 0.0, %v2626
        %v2628 = vpop.f32.mrf.mxu0
        %v2629 = vadd.f32 0.0, %v2628
        %2630 = vmatmul.bf16.gmra.mxu0 %v2541
        %v2631 = vpop.f32.mrf.mxu0
        %v2632 = vadd.f32 0.0, %v2631
        %v2633 = vpop.f32.mrf.mxu0
        %v2634 = vadd.f32 0.0, %v2633
        %2635 = vmatmul.bf16.gmra.mxu0 %v2544
        %v2636 = vpop.f32.mrf.mxu0
        %v2637 = vadd.f32 0.0, %v2636
        %v2638 = vpop.f32.mrf.mxu0
        %v2639 = vadd.f32 0.0, %v2638
        %2640 = vdwg.mxu0
        %2641 = vmatpush.bf16.msra.mxu0 0
        %2642 = vmatpush.bf16.msra.mxu0 0
        %2643 = vmatpush.bf16.msra.mxu0 0
        %2644 = vmatpush.bf16.msra.mxu0 0
        %2645 = vmatpush.bf16.msra.mxu0 0
        %2646 = vmatpush.bf16.msra.mxu0 0
        %2647 = vmatpush.bf16.msra.mxu0 0
        %2648 = vmatpush.bf16.msra.mxu0 %v2550
        %2649 = vmatmul.bf16.gmra.mxu0 %v2499
        %v2650 = vpop.f32.mrf.mxu0
        %v2651 = vadd.f32 0.0, %v2650
        %v2652 = vpop.f32.mrf.mxu0
        %v2653 = vadd.f32 0.0, %v2652
        %2654 = vmatmul.bf16.gmra.mxu0 %v2502
        %v2655 = vpop.f32.mrf.mxu0
        %v2656 = vadd.f32 0.0, %v2655
        %v2657 = vpop.f32.mrf.mxu0
        %v2658 = vadd.f32 0.0, %v2657
        %2659 = vmatmul.bf16.gmra.mxu0 %v2505
        %v2660 = vpop.f32.mrf.mxu0
        %v2661 = vadd.f32 0.0, %v2660
        %v2662 = vpop.f32.mrf.mxu0
        %v2663 = vadd.f32 0.0, %v2662
        %2664 = vmatmul.bf16.gmra.mxu0 %v2508
        %v2665 = vpop.f32.mrf.mxu0
        %v2666 = vadd.f32 0.0, %v2665
        %v2667 = vpop.f32.mrf.mxu0
        %v2668 = vadd.f32 0.0, %v2667
        %2669 = vmatmul.bf16.gmra.mxu0 %v2511
        %v2670 = vpop.f32.mrf.mxu0
        %v2671 = vadd.f32 0.0, %v2670
        %v2672 = vpop.f32.mrf.mxu0
        %v2673 = vadd.f32 0.0, %v2672
        %2674 = vmatmul.bf16.gmra.mxu0 %v2514
        %v2675 = vpop.f32.mrf.mxu0
        %v2676 = vadd.f32 0.0, %v2675
        %v2677 = vpop.f32.mrf.mxu0
        %v2678 = vadd.f32 0.0, %v2677
        %2679 = vmatmul.bf16.gmra.mxu0 %v2517
        %v2680 = vpop.f32.mrf.mxu0
        %v2681 = vadd.f32 0.0, %v2680
        %v2682 = vpop.f32.mrf.mxu0
        %v2683 = vadd.f32 0.0, %v2682
        %2684 = vmatmul.bf16.gmra.mxu0 %v2520
        %v2685 = vpop.f32.mrf.mxu0
        %v2686 = vadd.f32 0.0, %v2685
        %v2687 = vpop.f32.mrf.mxu0
        %v2688 = vadd.f32 0.0, %v2687
        %2689 = vmatmul.bf16.gmra.mxu0 %v2523
        %v2690 = vpop.f32.mrf.mxu0
        %v2691 = vadd.f32 0.0, %v2690
        %v2692 = vpop.f32.mrf.mxu0
        %v2693 = vadd.f32 0.0, %v2692
        %2694 = vmatmul.bf16.gmra.mxu0 %v2526
        %v2695 = vpop.f32.mrf.mxu0
        %v2696 = vadd.f32 0.0, %v2695
        %v2697 = vpop.f32.mrf.mxu0
        %v2698 = vadd.f32 0.0, %v2697
        %2699 = vmatmul.bf16.gmra.mxu0 %v2529
        %v2700 = vpop.f32.mrf.mxu0
        %v2701 = vadd.f32 0.0, %v2700
        %v2702 = vpop.f32.mrf.mxu0
        %v2703 = vadd.f32 0.0, %v2702
        %2704 = vmatmul.bf16.gmra.mxu0 %v2532
        %v2705 = vpop.f32.mrf.mxu0
        %v2706 = vadd.f32 0.0, %v2705
        %v2707 = vpop.f32.mrf.mxu0
        %v2708 = vadd.f32 0.0, %v2707
        %2709 = vmatmul.bf16.gmra.mxu0 %v2535
        %v2710 = vpop.f32.mrf.mxu0
        %v2711 = vadd.f32 0.0, %v2710
        %v2712 = vpop.f32.mrf.mxu0
        %v2713 = vadd.f32 0.0, %v2712
        %2714 = vmatmul.bf16.gmra.mxu0 %v2538
        %v2715 = vpop.f32.mrf.mxu0
        %v2716 = vadd.f32 0.0, %v2715
        %v2717 = vpop.f32.mrf.mxu0
        %v2718 = vadd.f32 0.0, %v2717
        %2719 = vmatmul.bf16.gmra.mxu0 %v2541
        %v2720 = vpop.f32.mrf.mxu0
        %v2721 = vadd.f32 0.0, %v2720
        %v2722 = vpop.f32.mrf.mxu0
        %v2723 = vadd.f32 0.0, %v2722
        %2724 = vmatmul.bf16.gmra.mxu0 %v2544
        %v2725 = vpop.f32.mrf.mxu0
        %v2726 = vadd.f32 0.0, %v2725
        %v2727 = vpop.f32.mrf.mxu0
        %v2728 = vadd.f32 0.0, %v2727
        %2729 = vdwg.mxu0
        %v2731 = vunpack.c.l.b16 %v843
        %v2732 = vunpack.c.h.b16 %v843
        %v2733 = vpack.c.b16 %v2731, %v2731
        %v2734 = vpack.c.b16 %v2732, %v2732
        %2737 = vxpose.binary.xlu0.c.b16.start [1/16] %v2734, %v2733, 128
        %2738 = vxpose.binary.xlu0.c.b16.cont [2/16] 0, 0, 128
        %2739 = vxpose.binary.xlu0.c.b16.cont [3/16] 0, 0, 128
        %2740 = vxpose.binary.xlu0.c.b16.cont [4/16] 0, 0, 128
        %2741 = vxpose.binary.xlu0.c.b16.cont [5/16] 0, 0, 128
        %2742 = vxpose.binary.xlu0.c.b16.cont [6/16] 0, 0, 128
        %2743 = vxpose.binary.xlu0.c.b16.cont [7/16] 0, 0, 128
        %2744 = vxpose.binary.xlu0.c.b16.end [8/16] 0, 0, 128
        %v2745 = vpop.trf.xlu0
        %v2746 = vpop.trf.xlu0
        %v2747 = vpop.trf.xlu0
        %v2748 = vpop.trf.xlu0
        %v2749 = vpop.trf.xlu0
        %v2750 = vpop.trf.xlu0
        %v2751 = vpop.trf.xlu0
        %v2752 = vpop.trf.xlu0
        %v2753 = vpop.trf.xlu0
        %v2754 = vpop.trf.xlu0
        %v2755 = vpop.trf.xlu0
        %v2756 = vpop.trf.xlu0
        %v2757 = vpop.trf.xlu0
        %v2758 = vpop.trf.xlu0
        %v2759 = vpop.trf.xlu0
        %v2760 = vpop.trf.xlu0
        %v2762 = vunpack.c.l.b16 %v851
        %v2763 = vunpack.c.h.b16 %v851
        %v2764 = vpack.c.b16 %v2762, %v2762
        %v2765 = vpack.c.b16 %v2763, %v2763
        %v2767 = vsel %vm888, %v2745, 0
        %v2770 = vsel %vm888, %v2747, 0
        %v2773 = vsel %vm888, %v2749, 0
        %v2776 = vsel %vm888, %v2751, 0
        %v2779 = vsel %vm888, %v2753, 0
        %v2782 = vsel %vm888, %v2755, 0
        %v2785 = vsel %vm888, %v2757, 0
        %v2788 = vsel %vm888, %v2759, 0
        %v2791 = vsel %vm888, %v2746, 0
        %v2794 = vsel %vm888, %v2748, 0
        %v2797 = vsel %vm888, %v2750, 0
        %v2800 = vsel %vm888, %v2752, 0
        %v2803 = vsel %vm888, %v2754, 0
        %v2806 = vsel %vm888, %v2756, 0
        %v2809 = vsel %vm888, %v2758, 0
        %v2812 = vsel %vm888, %v2760, 0
        %v2815 = vsel %vm937, %v2764, 0
        %v2818 = vsel %vm937, %v2765, 0
        %2820 = vmatpush.bf16.msra.mxu0 0
        %2821 = vmatpush.bf16.msra.mxu0 0
        %2822 = vmatpush.bf16.msra.mxu0 0
        %2823 = vmatpush.bf16.msra.mxu0 0
        %2824 = vmatpush.bf16.msra.mxu0 0
        %2825 = vmatpush.bf16.msra.mxu0 0
        %2826 = vmatpush.bf16.msra.mxu0 0
        %2827 = vmatpush.bf16.msra.mxu0 %v2815
        %2828 = vmatmul.bf16.gmra.mxu0 %v2767
        %v2829 = vpop.f32.mrf.mxu0
        %v2830 = vadd.f32 0.0, %v2829
        %v2831 = vpop.f32.mrf.mxu0
        %v2832 = vadd.f32 0.0, %v2831
        %2833 = vmatmul.bf16.gmra.mxu0 %v2770
        %v2834 = vpop.f32.mrf.mxu0
        %v2835 = vadd.f32 0.0, %v2834
        %v2836 = vpop.f32.mrf.mxu0
        %v2837 = vadd.f32 0.0, %v2836
        %2838 = vmatmul.bf16.gmra.mxu0 %v2773
        %v2839 = vpop.f32.mrf.mxu0
        %v2840 = vadd.f32 0.0, %v2839
        %v2841 = vpop.f32.mrf.mxu0
        %v2842 = vadd.f32 0.0, %v2841
        %2843 = vmatmul.bf16.gmra.mxu0 %v2776
        %v2844 = vpop.f32.mrf.mxu0
        %v2845 = vadd.f32 0.0, %v2844
        %v2846 = vpop.f32.mrf.mxu0
        %v2847 = vadd.f32 0.0, %v2846
        %2848 = vmatmul.bf16.gmra.mxu0 %v2779
        %v2849 = vpop.f32.mrf.mxu0
        %v2850 = vadd.f32 0.0, %v2849
        %v2851 = vpop.f32.mrf.mxu0
        %v2852 = vadd.f32 0.0, %v2851
        %2853 = vmatmul.bf16.gmra.mxu0 %v2782
        %v2854 = vpop.f32.mrf.mxu0
        %v2855 = vadd.f32 0.0, %v2854
        %v2856 = vpop.f32.mrf.mxu0
        %v2857 = vadd.f32 0.0, %v2856
        %2858 = vmatmul.bf16.gmra.mxu0 %v2785
        %v2859 = vpop.f32.mrf.mxu0
        %v2860 = vadd.f32 0.0, %v2859
        %v2861 = vpop.f32.mrf.mxu0
        %v2862 = vadd.f32 0.0, %v2861
        %2863 = vmatmul.bf16.gmra.mxu0 %v2788
        %v2864 = vpop.f32.mrf.mxu0
        %v2865 = vadd.f32 0.0, %v2864
        %v2866 = vpop.f32.mrf.mxu0
        %v2867 = vadd.f32 0.0, %v2866
        %2868 = vmatmul.bf16.gmra.mxu0 %v2791
        %v2869 = vpop.f32.mrf.mxu0
        %v2870 = vadd.f32 0.0, %v2869
        %v2871 = vpop.f32.mrf.mxu0
        %v2872 = vadd.f32 0.0, %v2871
        %2873 = vmatmul.bf16.gmra.mxu0 %v2794
        %v2874 = vpop.f32.mrf.mxu0
        %v2875 = vadd.f32 0.0, %v2874
        %v2876 = vpop.f32.mrf.mxu0
        %v2877 = vadd.f32 0.0, %v2876
        %2878 = vmatmul.bf16.gmra.mxu0 %v2797
        %v2879 = vpop.f32.mrf.mxu0
        %v2880 = vadd.f32 0.0, %v2879
        %v2881 = vpop.f32.mrf.mxu0
        %v2882 = vadd.f32 0.0, %v2881
        %2883 = vmatmul.bf16.gmra.mxu0 %v2800
        %v2884 = vpop.f32.mrf.mxu0
        %v2885 = vadd.f32 0.0, %v2884
        %v2886 = vpop.f32.mrf.mxu0
        %v2887 = vadd.f32 0.0, %v2886
        %2888 = vmatmul.bf16.gmra.mxu0 %v2803
        %v2889 = vpop.f32.mrf.mxu0
        %v2890 = vadd.f32 0.0, %v2889
        %v2891 = vpop.f32.mrf.mxu0
        %v2892 = vadd.f32 0.0, %v2891
        %2893 = vmatmul.bf16.gmra.mxu0 %v2806
        %v2894 = vpop.f32.mrf.mxu0
        %v2895 = vadd.f32 0.0, %v2894
        %v2896 = vpop.f32.mrf.mxu0
        %v2897 = vadd.f32 0.0, %v2896
        %2898 = vmatmul.bf16.gmra.mxu0 %v2809
        %v2899 = vpop.f32.mrf.mxu0
        %v2900 = vadd.f32 0.0, %v2899
        %v2901 = vpop.f32.mrf.mxu0
        %v2902 = vadd.f32 0.0, %v2901
        %2903 = vmatmul.bf16.gmra.mxu0 %v2812
        %v2904 = vpop.f32.mrf.mxu0
        %v2905 = vadd.f32 0.0, %v2904
        %v2906 = vpop.f32.mrf.mxu0
        %v2907 = vadd.f32 0.0, %v2906
        %2908 = vdwg.mxu0
        %2909 = vmatpush.bf16.msra.mxu0 0
        %2910 = vmatpush.bf16.msra.mxu0 0
        %2911 = vmatpush.bf16.msra.mxu0 0
        %2912 = vmatpush.bf16.msra.mxu0 0
        %2913 = vmatpush.bf16.msra.mxu0 0
        %2914 = vmatpush.bf16.msra.mxu0 0
        %2915 = vmatpush.bf16.msra.mxu0 0
        %2916 = vmatpush.bf16.msra.mxu0 %v2818
        %2917 = vmatmul.bf16.gmra.mxu0 %v2767
        %v2918 = vpop.f32.mrf.mxu0
        %v2919 = vadd.f32 0.0, %v2918
        %v2920 = vpop.f32.mrf.mxu0
        %v2921 = vadd.f32 0.0, %v2920
        %2922 = vmatmul.bf16.gmra.mxu0 %v2770
        %v2923 = vpop.f32.mrf.mxu0
        %v2924 = vadd.f32 0.0, %v2923
        %v2925 = vpop.f32.mrf.mxu0
        %v2926 = vadd.f32 0.0, %v2925
        %2927 = vmatmul.bf16.gmra.mxu0 %v2773
        %v2928 = vpop.f32.mrf.mxu0
        %v2929 = vadd.f32 0.0, %v2928
        %v2930 = vpop.f32.mrf.mxu0
        %v2931 = vadd.f32 0.0, %v2930
        %2932 = vmatmul.bf16.gmra.mxu0 %v2776
        %v2933 = vpop.f32.mrf.mxu0
        %v2934 = vadd.f32 0.0, %v2933
        %v2935 = vpop.f32.mrf.mxu0
        %v2936 = vadd.f32 0.0, %v2935
        %2937 = vmatmul.bf16.gmra.mxu0 %v2779
        %v2938 = vpop.f32.mrf.mxu0
        %v2939 = vadd.f32 0.0, %v2938
        %v2940 = vpop.f32.mrf.mxu0
        %v2941 = vadd.f32 0.0, %v2940
        %2942 = vmatmul.bf16.gmra.mxu0 %v2782
        %v2943 = vpop.f32.mrf.mxu0
        %v2944 = vadd.f32 0.0, %v2943
        %v2945 = vpop.f32.mrf.mxu0
        %v2946 = vadd.f32 0.0, %v2945
        %2947 = vmatmul.bf16.gmra.mxu0 %v2785
        %v2948 = vpop.f32.mrf.mxu0
        %v2949 = vadd.f32 0.0, %v2948
        %v2950 = vpop.f32.mrf.mxu0
        %v2951 = vadd.f32 0.0, %v2950
        %2952 = vmatmul.bf16.gmra.mxu0 %v2788
        %v2953 = vpop.f32.mrf.mxu0
        %v2954 = vadd.f32 0.0, %v2953
        %v2955 = vpop.f32.mrf.mxu0
        %v2956 = vadd.f32 0.0, %v2955
        %2957 = vmatmul.bf16.gmra.mxu0 %v2791
        %v2958 = vpop.f32.mrf.mxu0
        %v2959 = vadd.f32 0.0, %v2958
        %v2960 = vpop.f32.mrf.mxu0
        %v2961 = vadd.f32 0.0, %v2960
        %2962 = vmatmul.bf16.gmra.mxu0 %v2794
        %v2963 = vpop.f32.mrf.mxu0
        %v2964 = vadd.f32 0.0, %v2963
        %v2965 = vpop.f32.mrf.mxu0
        %v2966 = vadd.f32 0.0, %v2965
        %2967 = vmatmul.bf16.gmra.mxu0 %v2797
        %v2968 = vpop.f32.mrf.mxu0
        %v2969 = vadd.f32 0.0, %v2968
        %v2970 = vpop.f32.mrf.mxu0
        %v2971 = vadd.f32 0.0, %v2970
        %2972 = vmatmul.bf16.gmra.mxu0 %v2800
        %v2973 = vpop.f32.mrf.mxu0
        %v2974 = vadd.f32 0.0, %v2973
        %v2975 = vpop.f32.mrf.mxu0
        %v2976 = vadd.f32 0.0, %v2975
        %2977 = vmatmul.bf16.gmra.mxu0 %v2803
        %v2978 = vpop.f32.mrf.mxu0
        %v2979 = vadd.f32 0.0, %v2978
        %v2980 = vpop.f32.mrf.mxu0
        %v2981 = vadd.f32 0.0, %v2980
        %2982 = vmatmul.bf16.gmra.mxu0 %v2806
        %v2983 = vpop.f32.mrf.mxu0
        %v2984 = vadd.f32 0.0, %v2983
        %v2985 = vpop.f32.mrf.mxu0
        %v2986 = vadd.f32 0.0, %v2985
        %2987 = vmatmul.bf16.gmra.mxu0 %v2809
        %v2988 = vpop.f32.mrf.mxu0
        %v2989 = vadd.f32 0.0, %v2988
        %v2990 = vpop.f32.mrf.mxu0
        %v2991 = vadd.f32 0.0, %v2990
        %2992 = vmatmul.bf16.gmra.mxu0 %v2812
        %v2993 = vpop.f32.mrf.mxu0
        %v2994 = vadd.f32 0.0, %v2993
        %v2995 = vpop.f32.mrf.mxu0
        %v2996 = vadd.f32 0.0, %v2995
        %2997 = vdwg.mxu0
        %v2998 = vmax.f32 %v954, %v1043
        %2999 = vmax.xlane.f32.xlu0 %v2998
        %v3000 = vpop.xlane.xlu0 %2999
        %v3001 = vmax.f32 %v956, %v1045
        %3002 = vmax.xlane.f32.xlu0 %v3001
        %v3003 = vpop.xlane.xlu0 %3002
        %v3004 = vmax.f32 %v959, %v1048
        %3005 = vmax.xlane.f32.xlu0 %v3004
        %v3006 = vpop.xlane.xlu0 %3005
        %v3007 = vmax.f32 %v961, %v1050
        %3008 = vmax.xlane.f32.xlu0 %v3007
        %v3009 = vpop.xlane.xlu0 %3008
        %v3010 = vmax.f32 %v964, %v1053
        %3011 = vmax.xlane.f32.xlu0 %v3010
        %v3012 = vpop.xlane.xlu0 %3011
        %v3013 = vmax.f32 %v966, %v1055
        %3014 = vmax.xlane.f32.xlu0 %v3013
        %v3015 = vpop.xlane.xlu0 %3014
        %v3016 = vmax.f32 %v969, %v1058
        %3017 = vmax.xlane.f32.xlu0 %v3016
        %v3018 = vpop.xlane.xlu0 %3017
        %v3019 = vmax.f32 %v971, %v1060
        %3020 = vmax.xlane.f32.xlu0 %v3019
        %v3021 = vpop.xlane.xlu0 %3020
        %v3022 = vmax.f32 %v974, %v1063
        %3023 = vmax.xlane.f32.xlu0 %v3022
        %v3024 = vpop.xlane.xlu0 %3023
        %v3025 = vmax.f32 %v976, %v1065
        %3026 = vmax.xlane.f32.xlu0 %v3025
        %v3027 = vpop.xlane.xlu0 %3026
        %v3028 = vmax.f32 %v979, %v1068
        %3029 = vmax.xlane.f32.xlu0 %v3028
        %v3030 = vpop.xlane.xlu0 %3029
        %v3031 = vmax.f32 %v981, %v1070
        %3032 = vmax.xlane.f32.xlu0 %v3031
        %v3033 = vpop.xlane.xlu0 %3032
        %v3034 = vmax.f32 %v984, %v1073
        %3035 = vmax.xlane.f32.xlu0 %v3034
        %v3036 = vpop.xlane.xlu0 %3035
        %v3037 = vmax.f32 %v986, %v1075
        %3038 = vmax.xlane.f32.xlu0 %v3037
        %v3039 = vpop.xlane.xlu0 %3038
        %v3040 = vmax.f32 %v989, %v1078
        %3041 = vmax.xlane.f32.xlu0 %v3040
        %v3042 = vpop.xlane.xlu0 %3041
        %v3043 = vmax.f32 %v991, %v1080
        %3044 = vmax.xlane.f32.xlu0 %v3043
        %v3045 = vpop.xlane.xlu0 %3044
        %v3046 = vmax.f32 %v994, %v1083
        %3047 = vmax.xlane.f32.xlu0 %v3046
        %v3048 = vpop.xlane.xlu0 %3047
        %v3049 = vmax.f32 %v996, %v1085
        %3050 = vmax.xlane.f32.xlu0 %v3049
        %v3051 = vpop.xlane.xlu0 %3050
        %v3052 = vmax.f32 %v999, %v1088
        %3053 = vmax.xlane.f32.xlu0 %v3052
        %v3054 = vpop.xlane.xlu0 %3053
        %v3055 = vmax.f32 %v1001, %v1090
        %3056 = vmax.xlane.f32.xlu0 %v3055
        %v3057 = vpop.xlane.xlu0 %3056
        %v3058 = vmax.f32 %v1004, %v1093
        %3059 = vmax.xlane.f32.xlu0 %v3058
        %v3060 = vpop.xlane.xlu0 %3059
        %v3061 = vmax.f32 %v1006, %v1095
        %3062 = vmax.xlane.f32.xlu0 %v3061
        %v3063 = vpop.xlane.xlu0 %3062
        %v3064 = vmax.f32 %v1009, %v1098
        %3065 = vmax.xlane.f32.xlu0 %v3064
        %v3066 = vpop.xlane.xlu0 %3065
        %v3067 = vmax.f32 %v1011, %v1100
        %3068 = vmax.xlane.f32.xlu0 %v3067
        %v3069 = vpop.xlane.xlu0 %3068
        %v3070 = vmax.f32 %v1014, %v1103
        %3071 = vmax.xlane.f32.xlu0 %v3070
        %v3072 = vpop.xlane.xlu0 %3071
        %v3073 = vmax.f32 %v1016, %v1105
        %3074 = vmax.xlane.f32.xlu0 %v3073
        %v3075 = vpop.xlane.xlu0 %3074
        %v3076 = vmax.f32 %v1019, %v1108
        %3077 = vmax.xlane.f32.xlu0 %v3076
        %v3078 = vpop.xlane.xlu0 %3077
        %v3079 = vmax.f32 %v1021, %v1110
        %3080 = vmax.xlane.f32.xlu0 %v3079
        %v3081 = vpop.xlane.xlu0 %3080
        %v3082 = vmax.f32 %v1024, %v1113
        %3083 = vmax.xlane.f32.xlu0 %v3082
        %v3084 = vpop.xlane.xlu0 %3083
        %v3085 = vmax.f32 %v1026, %v1115
        %3086 = vmax.xlane.f32.xlu0 %v3085
        %v3087 = vpop.xlane.xlu0 %3086
        %v3088 = vmax.f32 %v1029, %v1118
        %3089 = vmax.xlane.f32.xlu0 %v3088
        %v3090 = vpop.xlane.xlu0 %3089
        %v3091 = vmax.f32 %v1031, %v1120
        %3092 = vmax.xlane.f32.xlu0 %v3091
        %v3093 = vpop.xlane.xlu0 %3092
        %v3094 = vmax.f32 %v1222, %v1311
        %3095 = vmax.xlane.f32.xlu0 %v3094
        %v3096 = vpop.xlane.xlu0 %3095
        %v3097 = vmax.f32 %v1224, %v1313
        %3098 = vmax.xlane.f32.xlu0 %v3097
        %v3099 = vpop.xlane.xlu0 %3098
        %v3100 = vmax.f32 %v1227, %v1316
        %3101 = vmax.xlane.f32.xlu0 %v3100
        %v3102 = vpop.xlane.xlu0 %3101
        %v3103 = vmax.f32 %v1229, %v1318
        %3104 = vmax.xlane.f32.xlu0 %v3103
        %v3105 = vpop.xlane.xlu0 %3104
        %v3106 = vmax.f32 %v1232, %v1321
        %3107 = vmax.xlane.f32.xlu0 %v3106
        %v3108 = vpop.xlane.xlu0 %3107
        %v3109 = vmax.f32 %v1234, %v1323
        %3110 = vmax.xlane.f32.xlu0 %v3109
        %v3111 = vpop.xlane.xlu0 %3110
        %v3112 = vmax.f32 %v1237, %v1326
        %3113 = vmax.xlane.f32.xlu0 %v3112
        %v3114 = vpop.xlane.xlu0 %3113
        %v3115 = vmax.f32 %v1239, %v1328
        %3116 = vmax.xlane.f32.xlu0 %v3115
        %v3117 = vpop.xlane.xlu0 %3116
        %v3118 = vmax.f32 %v1242, %v1331
        %3119 = vmax.xlane.f32.xlu0 %v3118
        %v3120 = vpop.xlane.xlu0 %3119
        %v3121 = vmax.f32 %v1244, %v1333
        %3122 = vmax.xlane.f32.xlu0 %v3121
        %v3123 = vpop.xlane.xlu0 %3122
        %v3124 = vmax.f32 %v1247, %v1336
        %3125 = vmax.xlane.f32.xlu0 %v3124
        %v3126 = vpop.xlane.xlu0 %3125
        %v3127 = vmax.f32 %v1249, %v1338
        %3128 = vmax.xlane.f32.xlu0 %v3127
        %v3129 = vpop.xlane.xlu0 %3128
        %v3130 = vmax.f32 %v1252, %v1341
        %3131 = vmax.xlane.f32.xlu0 %v3130
        %v3132 = vpop.xlane.xlu0 %3131
        %v3133 = vmax.f32 %v1254, %v1343
        %3134 = vmax.xlane.f32.xlu0 %v3133
        %v3135 = vpop.xlane.xlu0 %3134
        %v3136 = vmax.f32 %v1257, %v1346
        %3137 = vmax.xlane.f32.xlu0 %v3136
        %v3138 = vpop.xlane.xlu0 %3137
        %v3139 = vmax.f32 %v1259, %v1348
        %3140 = vmax.xlane.f32.xlu0 %v3139
        %v3141 = vpop.xlane.xlu0 %3140
        %v3142 = vmax.f32 %v1262, %v1351
        %3143 = vmax.xlane.f32.xlu0 %v3142
        %v3144 = vpop.xlane.xlu0 %3143
        %v3145 = vmax.f32 %v1264, %v1353
        %3146 = vmax.xlane.f32.xlu0 %v3145
        %v3147 = vpop.xlane.xlu0 %3146
        %v3148 = vmax.f32 %v1267, %v1356
        %3149 = vmax.xlane.f32.xlu0 %v3148
        %v3150 = vpop.xlane.xlu0 %3149
        %v3151 = vmax.f32 %v1269, %v1358
        %3152 = vmax.xlane.f32.xlu0 %v3151
        %v3153 = vpop.xlane.xlu0 %3152
        %v3154 = vmax.f32 %v1272, %v1361
        %3155 = vmax.xlane.f32.xlu0 %v3154
        %v3156 = vpop.xlane.xlu0 %3155
        %v3157 = vmax.f32 %v1274, %v1363
        %3158 = vmax.xlane.f32.xlu0 %v3157
        %v3159 = vpop.xlane.xlu0 %3158
        %v3160 = vmax.f32 %v1277, %v1366
        %3161 = vmax.xlane.f32.xlu0 %v3160
        %v3162 = vpop.xlane.xlu0 %3161
        %v3163 = vmax.f32 %v1279, %v1368
        %3164 = vmax.xlane.f32.xlu0 %v3163
        %v3165 = vpop.xlane.xlu0 %3164
        %v3166 = vmax.f32 %v1282, %v1371
        %3167 = vmax.xlane.f32.xlu0 %v3166
        %v3168 = vpop.xlane.xlu0 %3167
        %v3169 = vmax.f32 %v1284, %v1373
        %3170 = vmax.xlane.f32.xlu0 %v3169
        %v3171 = vpop.xlane.xlu0 %3170
        %v3172 = vmax.f32 %v1287, %v1376
        %3173 = vmax.xlane.f32.xlu0 %v3172
        %v3174 = vpop.xlane.xlu0 %3173
        %v3175 = vmax.f32 %v1289, %v1378
        %3176 = vmax.xlane.f32.xlu0 %v3175
        %v3177 = vpop.xlane.xlu0 %3176
        %v3178 = vmax.f32 %v1292, %v1381
        %3179 = vmax.xlane.f32.xlu0 %v3178
        %v3180 = vpop.xlane.xlu0 %3179
        %v3181 = vmax.f32 %v1294, %v1383
        %3182 = vmax.xlane.f32.xlu0 %v3181
        %v3183 = vpop.xlane.xlu0 %3182
        %v3184 = vmax.f32 %v1297, %v1386
        %3185 = vmax.xlane.f32.xlu0 %v3184
        %v3186 = vpop.xlane.xlu0 %3185
        %v3187 = vmax.f32 %v1299, %v1388
        %3188 = vmax.xlane.f32.xlu0 %v3187
        %v3189 = vpop.xlane.xlu0 %3188
        %v3190 = vmax.f32 %v1490, %v1579
        %3191 = vmax.xlane.f32.xlu0 %v3190
        %v3192 = vpop.xlane.xlu0 %3191
        %v3193 = vmax.f32 %v1492, %v1581
        %3194 = vmax.xlane.f32.xlu0 %v3193
        %v3195 = vpop.xlane.xlu0 %3194
        %v3196 = vmax.f32 %v1495, %v1584
        %3197 = vmax.xlane.f32.xlu0 %v3196
        %v3198 = vpop.xlane.xlu0 %3197
        %v3199 = vmax.f32 %v1497, %v1586
        %3200 = vmax.xlane.f32.xlu0 %v3199
        %v3201 = vpop.xlane.xlu0 %3200
        %v3202 = vmax.f32 %v1500, %v1589
        %3203 = vmax.xlane.f32.xlu0 %v3202
        %v3204 = vpop.xlane.xlu0 %3203
        %v3205 = vmax.f32 %v1502, %v1591
        %3206 = vmax.xlane.f32.xlu0 %v3205
        %v3207 = vpop.xlane.xlu0 %3206
        %v3208 = vmax.f32 %v1505, %v1594
        %3209 = vmax.xlane.f32.xlu0 %v3208
        %v3210 = vpop.xlane.xlu0 %3209
        %v3211 = vmax.f32 %v1507, %v1596
        %3212 = vmax.xlane.f32.xlu0 %v3211
        %v3213 = vpop.xlane.xlu0 %3212
        %v3214 = vmax.f32 %v1510, %v1599
        %3215 = vmax.xlane.f32.xlu0 %v3214
        %v3216 = vpop.xlane.xlu0 %3215
        %v3217 = vmax.f32 %v1512, %v1601
        %3218 = vmax.xlane.f32.xlu0 %v3217
        %v3219 = vpop.xlane.xlu0 %3218
        %v3220 = vmax.f32 %v1515, %v1604
        %3221 = vmax.xlane.f32.xlu0 %v3220
        %v3222 = vpop.xlane.xlu0 %3221
        %v3223 = vmax.f32 %v1517, %v1606
        %3224 = vmax.xlane.f32.xlu0 %v3223
        %v3225 = vpop.xlane.xlu0 %3224
        %v3226 = vmax.f32 %v1520, %v1609
        %3227 = vmax.xlane.f32.xlu0 %v3226
        %v3228 = vpop.xlane.xlu0 %3227
        %v3229 = vmax.f32 %v1522, %v1611
        %3230 = vmax.xlane.f32.xlu0 %v3229
        %v3231 = vpop.xlane.xlu0 %3230
        %v3232 = vmax.f32 %v1525, %v1614
        %3233 = vmax.xlane.f32.xlu0 %v3232
        %v3234 = vpop.xlane.xlu0 %3233
        %v3235 = vmax.f32 %v1527, %v1616
        %3236 = vmax.xlane.f32.xlu0 %v3235
        %v3237 = vpop.xlane.xlu0 %3236
        %v3238 = vmax.f32 %v1530, %v1619
        %3239 = vmax.xlane.f32.xlu0 %v3238
        %v3240 = vpop.xlane.xlu0 %3239
        %v3241 = vmax.f32 %v1532, %v1621
        %3242 = vmax.xlane.f32.xlu0 %v3241
        %v3243 = vpop.xlane.xlu0 %3242
        %v3244 = vmax.f32 %v1535, %v1624
        %3245 = vmax.xlane.f32.xlu0 %v3244
        %v3246 = vpop.xlane.xlu0 %3245
        %v3247 = vmax.f32 %v1537, %v1626
        %3248 = vmax.xlane.f32.xlu0 %v3247
        %v3249 = vpop.xlane.xlu0 %3248
        %v3250 = vmax.f32 %v1540, %v1629
        %3251 = vmax.xlane.f32.xlu0 %v3250
        %v3252 = vpop.xlane.xlu0 %3251
        %v3253 = vmax.f32 %v1542, %v1631
        %3254 = vmax.xlane.f32.xlu0 %v3253
        %v3255 = vpop.xlane.xlu0 %3254
        %v3256 = vmax.f32 %v1545, %v1634
        %3257 = vmax.xlane.f32.xlu0 %v3256
        %v3258 = vpop.xlane.xlu0 %3257
        %v3259 = vmax.f32 %v1547, %v1636
        %3260 = vmax.xlane.f32.xlu0 %v3259
        %v3261 = vpop.xlane.xlu0 %3260
        %v3262 = vmax.f32 %v1550, %v1639
        %3263 = vmax.xlane.f32.xlu0 %v3262
        %v3264 = vpop.xlane.xlu0 %3263
        %v3265 = vmax.f32 %v1552, %v1641
        %3266 = vmax.xlane.f32.xlu0 %v3265
        %v3267 = vpop.xlane.xlu0 %3266
        %v3268 = vmax.f32 %v1555, %v1644
        %3269 = vmax.xlane.f32.xlu0 %v3268
        %v3270 = vpop.xlane.xlu0 %3269
        %v3271 = vmax.f32 %v1557, %v1646
        %3272 = vmax.xlane.f32.xlu0 %v3271
        %v3273 = vpop.xlane.xlu0 %3272
        %v3274 = vmax.f32 %v1560, %v1649
        %3275 = vmax.xlane.f32.xlu0 %v3274
        %v3276 = vpop.xlane.xlu0 %3275
        %v3277 = vmax.f32 %v1562, %v1651
        %3278 = vmax.xlane.f32.xlu0 %v3277
        %v3279 = vpop.xlane.xlu0 %3278
        %v3280 = vmax.f32 %v1565, %v1654
        %3281 = vmax.xlane.f32.xlu0 %v3280
        %v3282 = vpop.xlane.xlu0 %3281
        %v3283 = vmax.f32 %v1567, %v1656
        %3284 = vmax.xlane.f32.xlu0 %v3283
        %v3285 = vpop.xlane.xlu0 %3284
        %v3286 = vmax.f32 %v1758, %v1847
        %3287 = vmax.xlane.f32.xlu0 %v3286
        %v3288 = vpop.xlane.xlu0 %3287
        %v3289 = vmax.f32 %v1760, %v1849
        %3290 = vmax.xlane.f32.xlu0 %v3289
        %v3291 = vpop.xlane.xlu0 %3290
        %v3292 = vmax.f32 %v1763, %v1852
        %3293 = vmax.xlane.f32.xlu0 %v3292
        %v3294 = vpop.xlane.xlu0 %3293
        %v3295 = vmax.f32 %v1765, %v1854
        %3296 = vmax.xlane.f32.xlu0 %v3295
        %v3297 = vpop.xlane.xlu0 %3296
        %v3298 = vmax.f32 %v1768, %v1857
        %3299 = vmax.xlane.f32.xlu0 %v3298
        %v3300 = vpop.xlane.xlu0 %3299
        %v3301 = vmax.f32 %v1770, %v1859
        %3302 = vmax.xlane.f32.xlu0 %v3301
        %v3303 = vpop.xlane.xlu0 %3302
        %v3304 = vmax.f32 %v1773, %v1862
        %3305 = vmax.xlane.f32.xlu0 %v3304
        %v3306 = vpop.xlane.xlu0 %3305
        %v3307 = vmax.f32 %v1775, %v1864
        %3308 = vmax.xlane.f32.xlu0 %v3307
        %v3309 = vpop.xlane.xlu0 %3308
        %v3310 = vmax.f32 %v1778, %v1867
        %3311 = vmax.xlane.f32.xlu0 %v3310
        %v3312 = vpop.xlane.xlu0 %3311
        %v3313 = vmax.f32 %v1780, %v1869
        %3314 = vmax.xlane.f32.xlu0 %v3313
        %v3315 = vpop.xlane.xlu0 %3314
        %v3316 = vmax.f32 %v1783, %v1872
        %3317 = vmax.xlane.f32.xlu0 %v3316
        %v3318 = vpop.xlane.xlu0 %3317
        %v3319 = vmax.f32 %v1785, %v1874
        %3320 = vmax.xlane.f32.xlu0 %v3319
        %v3321 = vpop.xlane.xlu0 %3320
        %v3322 = vmax.f32 %v1788, %v1877
        %3323 = vmax.xlane.f32.xlu0 %v3322
        %v3324 = vpop.xlane.xlu0 %3323
        %v3325 = vmax.f32 %v1790, %v1879
        %3326 = vmax.xlane.f32.xlu0 %v3325
        %v3327 = vpop.xlane.xlu0 %3326
        %v3328 = vmax.f32 %v1793, %v1882
        %3329 = vmax.xlane.f32.xlu0 %v3328
        %v3330 = vpop.xlane.xlu0 %3329
        %v3331 = vmax.f32 %v1795, %v1884
        %3332 = vmax.xlane.f32.xlu0 %v3331
        %v3333 = vpop.xlane.xlu0 %3332
        %v3334 = vmax.f32 %v1798, %v1887
        %3335 = vmax.xlane.f32.xlu0 %v3334
        %v3336 = vpop.xlane.xlu0 %3335
        %v3337 = vmax.f32 %v1800, %v1889
        %3338 = vmax.xlane.f32.xlu0 %v3337
        %v3339 = vpop.xlane.xlu0 %3338
        %v3340 = vmax.f32 %v1803, %v1892
        %3341 = vmax.xlane.f32.xlu0 %v3340
        %v3342 = vpop.xlane.xlu0 %3341
        %v3343 = vmax.f32 %v1805, %v1894
        %3344 = vmax.xlane.f32.xlu0 %v3343
        %v3345 = vpop.xlane.xlu0 %3344
        %v3346 = vmax.f32 %v1808, %v1897
        %3347 = vmax.xlane.f32.xlu0 %v3346
        %v3348 = vpop.xlane.xlu0 %3347
        %v3349 = vmax.f32 %v1810, %v1899
        %3350 = vmax.xlane.f32.xlu0 %v3349
        %v3351 = vpop.xlane.xlu0 %3350
        %v3352 = vmax.f32 %v1813, %v1902
        %3353 = vmax.xlane.f32.xlu0 %v3352
        %v3354 = vpop.xlane.xlu0 %3353
        %v3355 = vmax.f32 %v1815, %v1904
        %3356 = vmax.xlane.f32.xlu0 %v3355
        %v3357 = vpop.xlane.xlu0 %3356
        %v3358 = vmax.f32 %v1818, %v1907
        %3359 = vmax.xlane.f32.xlu0 %v3358
        %v3360 = vpop.xlane.xlu0 %3359
        %v3361 = vmax.f32 %v1820, %v1909
        %3362 = vmax.xlane.f32.xlu0 %v3361
        %v3363 = vpop.xlane.xlu0 %3362
        %v3364 = vmax.f32 %v1823, %v1912
        %3365 = vmax.xlane.f32.xlu0 %v3364
        %v3366 = vpop.xlane.xlu0 %3365
        %v3367 = vmax.f32 %v1825, %v1914
        %3368 = vmax.xlane.f32.xlu0 %v3367
        %v3369 = vpop.xlane.xlu0 %3368
        %v3370 = vmax.f32 %v1828, %v1917
        %3371 = vmax.xlane.f32.xlu0 %v3370
        %v3372 = vpop.xlane.xlu0 %3371
        %v3373 = vmax.f32 %v1830, %v1919
        %3374 = vmax.xlane.f32.xlu0 %v3373
        %v3375 = vpop.xlane.xlu0 %3374
        %v3376 = vmax.f32 %v1833, %v1922
        %3377 = vmax.xlane.f32.xlu0 %v3376
        %v3378 = vpop.xlane.xlu0 %3377
        %v3379 = vmax.f32 %v1835, %v1924
        %3380 = vmax.xlane.f32.xlu0 %v3379
        %v3381 = vpop.xlane.xlu0 %3380
        %v3382 = vmax.f32 %v2026, %v2115
        %3383 = vmax.xlane.f32.xlu0 %v3382
        %v3384 = vpop.xlane.xlu0 %3383
        %v3385 = vmax.f32 %v2028, %v2117
        %3386 = vmax.xlane.f32.xlu0 %v3385
        %v3387 = vpop.xlane.xlu0 %3386
        %v3388 = vmax.f32 %v2031, %v2120
        %3389 = vmax.xlane.f32.xlu0 %v3388
        %v3390 = vpop.xlane.xlu0 %3389
        %v3391 = vmax.f32 %v2033, %v2122
        %3392 = vmax.xlane.f32.xlu0 %v3391
        %v3393 = vpop.xlane.xlu0 %3392
        %v3394 = vmax.f32 %v2036, %v2125
        %3395 = vmax.xlane.f32.xlu0 %v3394
        %v3396 = vpop.xlane.xlu0 %3395
        %v3397 = vmax.f32 %v2038, %v2127
        %3398 = vmax.xlane.f32.xlu0 %v3397
        %v3399 = vpop.xlane.xlu0 %3398
        %v3400 = vmax.f32 %v2041, %v2130
        %3401 = vmax.xlane.f32.xlu0 %v3400
        %v3402 = vpop.xlane.xlu0 %3401
        %v3403 = vmax.f32 %v2043, %v2132
        %3404 = vmax.xlane.f32.xlu0 %v3403
        %v3405 = vpop.xlane.xlu0 %3404
        %v3406 = vmax.f32 %v2046, %v2135
        %3407 = vmax.xlane.f32.xlu0 %v3406
        %v3408 = vpop.xlane.xlu0 %3407
        %v3409 = vmax.f32 %v2048, %v2137
        %3410 = vmax.xlane.f32.xlu0 %v3409
        %v3411 = vpop.xlane.xlu0 %3410
        %v3412 = vmax.f32 %v2051, %v2140
        %3413 = vmax.xlane.f32.xlu0 %v3412
        %v3414 = vpop.xlane.xlu0 %3413
        %v3415 = vmax.f32 %v2053, %v2142
        %3416 = vmax.xlane.f32.xlu0 %v3415
        %v3417 = vpop.xlane.xlu0 %3416
        %v3418 = vmax.f32 %v2056, %v2145
        %3419 = vmax.xlane.f32.xlu0 %v3418
        %v3420 = vpop.xlane.xlu0 %3419
        %v3421 = vmax.f32 %v2058, %v2147
        %3422 = vmax.xlane.f32.xlu0 %v3421
        %v3423 = vpop.xlane.xlu0 %3422
        %v3424 = vmax.f32 %v2061, %v2150
        %3425 = vmax.xlane.f32.xlu0 %v3424
        %v3426 = vpop.xlane.xlu0 %3425
        %v3427 = vmax.f32 %v2063, %v2152
        %3428 = vmax.xlane.f32.xlu0 %v3427
        %v3429 = vpop.xlane.xlu0 %3428
        %v3430 = vmax.f32 %v2066, %v2155
        %3431 = vmax.xlane.f32.xlu0 %v3430
        %v3432 = vpop.xlane.xlu0 %3431
        %v3433 = vmax.f32 %v2068, %v2157
        %3434 = vmax.xlane.f32.xlu0 %v3433
        %v3435 = vpop.xlane.xlu0 %3434
        %v3436 = vmax.f32 %v2071, %v2160
        %3437 = vmax.xlane.f32.xlu0 %v3436
        %v3438 = vpop.xlane.xlu0 %3437
        %v3439 = vmax.f32 %v2073, %v2162
        %3440 = vmax.xlane.f32.xlu0 %v3439
        %v3441 = vpop.xlane.xlu0 %3440
        %v3442 = vmax.f32 %v2076, %v2165
        %3443 = vmax.xlane.f32.xlu0 %v3442
        %v3444 = vpop.xlane.xlu0 %3443
        %v3445 = vmax.f32 %v2078, %v2167
        %3446 = vmax.xlane.f32.xlu0 %v3445
        %v3447 = vpop.xlane.xlu0 %3446
        %v3448 = vmax.f32 %v2081, %v2170
        %3449 = vmax.xlane.f32.xlu0 %v3448
        %v3450 = vpop.xlane.xlu0 %3449
        %v3451 = vmax.f32 %v2083, %v2172
        %3452 = vmax.xlane.f32.xlu0 %v3451
        %v3453 = vpop.xlane.xlu0 %3452
        %v3454 = vmax.f32 %v2086, %v2175
        %3455 = vmax.xlane.f32.xlu0 %v3454
        %v3456 = vpop.xlane.xlu0 %3455
        %v3457 = vmax.f32 %v2088, %v2177
        %3458 = vmax.xlane.f32.xlu0 %v3457
        %v3459 = vpop.xlane.xlu0 %3458
        %v3460 = vmax.f32 %v2091, %v2180
        %3461 = vmax.xlane.f32.xlu0 %v3460
        %v3462 = vpop.xlane.xlu0 %3461
        %v3463 = vmax.f32 %v2093, %v2182
        %3464 = vmax.xlane.f32.xlu0 %v3463
        %v3465 = vpop.xlane.xlu0 %3464
        %v3466 = vmax.f32 %v2096, %v2185
        %3467 = vmax.xlane.f32.xlu0 %v3466
        %v3468 = vpop.xlane.xlu0 %3467
        %v3469 = vmax.f32 %v2098, %v2187
        %3470 = vmax.xlane.f32.xlu0 %v3469
        %v3471 = vpop.xlane.xlu0 %3470
        %v3472 = vmax.f32 %v2101, %v2190
        %3473 = vmax.xlane.f32.xlu0 %v3472
        %v3474 = vpop.xlane.xlu0 %3473
        %v3475 = vmax.f32 %v2103, %v2192
        %3476 = vmax.xlane.f32.xlu0 %v3475
        %v3477 = vpop.xlane.xlu0 %3476
        %v3478 = vmax.f32 %v2294, %v2383
        %3479 = vmax.xlane.f32.xlu0 %v3478
        %v3480 = vpop.xlane.xlu0 %3479
        %v3481 = vmax.f32 %v2296, %v2385
        %3482 = vmax.xlane.f32.xlu0 %v3481
        %v3483 = vpop.xlane.xlu0 %3482
        %v3484 = vmax.f32 %v2299, %v2388
        %3485 = vmax.xlane.f32.xlu0 %v3484
        %v3486 = vpop.xlane.xlu0 %3485
        %v3487 = vmax.f32 %v2301, %v2390
        %3488 = vmax.xlane.f32.xlu0 %v3487
        %v3489 = vpop.xlane.xlu0 %3488
        %v3490 = vmax.f32 %v2304, %v2393
        %3491 = vmax.xlane.f32.xlu0 %v3490
        %v3492 = vpop.xlane.xlu0 %3491
        %v3493 = vmax.f32 %v2306, %v2395
        %3494 = vmax.xlane.f32.xlu0 %v3493
        %v3495 = vpop.xlane.xlu0 %3494
        %v3496 = vmax.f32 %v2309, %v2398
        %3497 = vmax.xlane.f32.xlu0 %v3496
        %v3498 = vpop.xlane.xlu0 %3497
        %v3499 = vmax.f32 %v2311, %v2400
        %3500 = vmax.xlane.f32.xlu0 %v3499
        %v3501 = vpop.xlane.xlu0 %3500
        %v3502 = vmax.f32 %v2314, %v2403
        %3503 = vmax.xlane.f32.xlu0 %v3502
        %v3504 = vpop.xlane.xlu0 %3503
        %v3505 = vmax.f32 %v2316, %v2405
        %3506 = vmax.xlane.f32.xlu0 %v3505
        %v3507 = vpop.xlane.xlu0 %3506
        %v3508 = vmax.f32 %v2319, %v2408
        %3509 = vmax.xlane.f32.xlu0 %v3508
        %v3510 = vpop.xlane.xlu0 %3509
        %v3511 = vmax.f32 %v2321, %v2410
        %3512 = vmax.xlane.f32.xlu0 %v3511
        %v3513 = vpop.xlane.xlu0 %3512
        %v3514 = vmax.f32 %v2324, %v2413
        %3515 = vmax.xlane.f32.xlu0 %v3514
        %v3516 = vpop.xlane.xlu0 %3515
        %v3517 = vmax.f32 %v2326, %v2415
        %3518 = vmax.xlane.f32.xlu0 %v3517
        %v3519 = vpop.xlane.xlu0 %3518
        %v3520 = vmax.f32 %v2329, %v2418
        %3521 = vmax.xlane.f32.xlu0 %v3520
        %v3522 = vpop.xlane.xlu0 %3521
        %v3523 = vmax.f32 %v2331, %v2420
        %3524 = vmax.xlane.f32.xlu0 %v3523
        %v3525 = vpop.xlane.xlu0 %3524
        %v3526 = vmax.f32 %v2334, %v2423
        %3527 = vmax.xlane.f32.xlu0 %v3526
        %v3528 = vpop.xlane.xlu0 %3527
        %v3529 = vmax.f32 %v2336, %v2425
        %3530 = vmax.xlane.f32.xlu0 %v3529
        %v3531 = vpop.xlane.xlu0 %3530
        %v3532 = vmax.f32 %v2339, %v2428
        %3533 = vmax.xlane.f32.xlu0 %v3532
        %v3534 = vpop.xlane.xlu0 %3533
        %v3535 = vmax.f32 %v2341, %v2430
        %3536 = vmax.xlane.f32.xlu0 %v3535
        %v3537 = vpop.xlane.xlu0 %3536
        %v3538 = vmax.f32 %v2344, %v2433
        %3539 = vmax.xlane.f32.xlu0 %v3538
        %v3540 = vpop.xlane.xlu0 %3539
        %v3541 = vmax.f32 %v2346, %v2435
        %3542 = vmax.xlane.f32.xlu0 %v3541
        %v3543 = vpop.xlane.xlu0 %3542
        %v3544 = vmax.f32 %v2349, %v2438
        %3545 = vmax.xlane.f32.xlu0 %v3544
        %v3546 = vpop.xlane.xlu0 %3545
        %v3547 = vmax.f32 %v2351, %v2440
        %3548 = vmax.xlane.f32.xlu0 %v3547
        %v3549 = vpop.xlane.xlu0 %3548
        %v3550 = vmax.f32 %v2354, %v2443
        %3551 = vmax.xlane.f32.xlu0 %v3550
        %v3552 = vpop.xlane.xlu0 %3551
        %v3553 = vmax.f32 %v2356, %v2445
        %3554 = vmax.xlane.f32.xlu0 %v3553
        %v3555 = vpop.xlane.xlu0 %3554
        %v3556 = vmax.f32 %v2359, %v2448
        %3557 = vmax.xlane.f32.xlu0 %v3556
        %v3558 = vpop.xlane.xlu0 %3557
        %v3559 = vmax.f32 %v2361, %v2450
        %3560 = vmax.xlane.f32.xlu0 %v3559
        %v3561 = vpop.xlane.xlu0 %3560
        %v3562 = vmax.f32 %v2364, %v2453
        %3563 = vmax.xlane.f32.xlu0 %v3562
        %v3564 = vpop.xlane.xlu0 %3563
        %v3565 = vmax.f32 %v2366, %v2455
        %3566 = vmax.xlane.f32.xlu0 %v3565
        %v3567 = vpop.xlane.xlu0 %3566
        %v3568 = vmax.f32 %v2369, %v2458
        %3569 = vmax.xlane.f32.xlu0 %v3568
        %v3570 = vpop.xlane.xlu0 %3569
        %v3571 = vmax.f32 %v2371, %v2460
        %3572 = vmax.xlane.f32.xlu0 %v3571
        %v3573 = vpop.xlane.xlu0 %3572
        %v3574 = vmax.f32 %v2562, %v2651
        %3575 = vmax.xlane.f32.xlu0 %v3574
        %v3576 = vpop.xlane.xlu0 %3575
        %v3577 = vmax.f32 %v2564, %v2653
        %3578 = vmax.xlane.f32.xlu0 %v3577
        %v3579 = vpop.xlane.xlu0 %3578
        %v3580 = vmax.f32 %v2567, %v2656
        %3581 = vmax.xlane.f32.xlu0 %v3580
        %v3582 = vpop.xlane.xlu0 %3581
        %v3583 = vmax.f32 %v2569, %v2658
        %3584 = vmax.xlane.f32.xlu0 %v3583
        %v3585 = vpop.xlane.xlu0 %3584
        %v3586 = vmax.f32 %v2572, %v2661
        %3587 = vmax.xlane.f32.xlu0 %v3586
        %v3588 = vpop.xlane.xlu0 %3587
        %v3589 = vmax.f32 %v2574, %v2663
        %3590 = vmax.xlane.f32.xlu0 %v3589
        %v3591 = vpop.xlane.xlu0 %3590
        %v3592 = vmax.f32 %v2577, %v2666
        %3593 = vmax.xlane.f32.xlu0 %v3592
        %v3594 = vpop.xlane.xlu0 %3593
        %v3595 = vmax.f32 %v2579, %v2668
        %3596 = vmax.xlane.f32.xlu0 %v3595
        %v3597 = vpop.xlane.xlu0 %3596
        %v3598 = vmax.f32 %v2582, %v2671
        %3599 = vmax.xlane.f32.xlu0 %v3598
        %v3600 = vpop.xlane.xlu0 %3599
        %v3601 = vmax.f32 %v2584, %v2673
        %3602 = vmax.xlane.f32.xlu0 %v3601
        %v3603 = vpop.xlane.xlu0 %3602
        %v3604 = vmax.f32 %v2587, %v2676
        %3605 = vmax.xlane.f32.xlu0 %v3604
        %v3606 = vpop.xlane.xlu0 %3605
        %v3607 = vmax.f32 %v2589, %v2678
        %3608 = vmax.xlane.f32.xlu0 %v3607
        %v3609 = vpop.xlane.xlu0 %3608
        %v3610 = vmax.f32 %v2592, %v2681
        %3611 = vmax.xlane.f32.xlu0 %v3610
        %v3612 = vpop.xlane.xlu0 %3611
        %v3613 = vmax.f32 %v2594, %v2683
        %3614 = vmax.xlane.f32.xlu0 %v3613
        %v3615 = vpop.xlane.xlu0 %3614
        %v3616 = vmax.f32 %v2597, %v2686
        %3617 = vmax.xlane.f32.xlu0 %v3616
        %v3618 = vpop.xlane.xlu0 %3617
        %v3619 = vmax.f32 %v2599, %v2688
        %3620 = vmax.xlane.f32.xlu0 %v3619
        %v3621 = vpop.xlane.xlu0 %3620
        %v3622 = vmax.f32 %v2602, %v2691
        %3623 = vmax.xlane.f32.xlu0 %v3622
        %v3624 = vpop.xlane.xlu0 %3623
        %v3625 = vmax.f32 %v2604, %v2693
        %3626 = vmax.xlane.f32.xlu0 %v3625
        %v3627 = vpop.xlane.xlu0 %3626
        %v3628 = vmax.f32 %v2607, %v2696
        %3629 = vmax.xlane.f32.xlu0 %v3628
        %v3630 = vpop.xlane.xlu0 %3629
        %v3631 = vmax.f32 %v2609, %v2698
        %3632 = vmax.xlane.f32.xlu0 %v3631
        %v3633 = vpop.xlane.xlu0 %3632
        %v3634 = vmax.f32 %v2612, %v2701
        %3635 = vmax.xlane.f32.xlu0 %v3634
        %v3636 = vpop.xlane.xlu0 %3635
        %v3637 = vmax.f32 %v2614, %v2703
        %3638 = vmax.xlane.f32.xlu0 %v3637
        %v3639 = vpop.xlane.xlu0 %3638
        %v3640 = vmax.f32 %v2617, %v2706
        %3641 = vmax.xlane.f32.xlu0 %v3640
        %v3642 = vpop.xlane.xlu0 %3641
        %v3643 = vmax.f32 %v2619, %v2708
        %3644 = vmax.xlane.f32.xlu0 %v3643
        %v3645 = vpop.xlane.xlu0 %3644
        %v3646 = vmax.f32 %v2622, %v2711
        %3647 = vmax.xlane.f32.xlu0 %v3646
        %v3648 = vpop.xlane.xlu0 %3647
        %v3649 = vmax.f32 %v2624, %v2713
        %3650 = vmax.xlane.f32.xlu0 %v3649
        %v3651 = vpop.xlane.xlu0 %3650
        %v3652 = vmax.f32 %v2627, %v2716
        %3653 = vmax.xlane.f32.xlu0 %v3652
        %v3654 = vpop.xlane.xlu0 %3653
        %v3655 = vmax.f32 %v2629, %v2718
        %3656 = vmax.xlane.f32.xlu0 %v3655
        %v3657 = vpop.xlane.xlu0 %3656
        %v3658 = vmax.f32 %v2632, %v2721
        %3659 = vmax.xlane.f32.xlu0 %v3658
        %v3660 = vpop.xlane.xlu0 %3659
        %v3661 = vmax.f32 %v2634, %v2723
        %3662 = vmax.xlane.f32.xlu0 %v3661
        %v3663 = vpop.xlane.xlu0 %3662
        %v3664 = vmax.f32 %v2637, %v2726
        %3665 = vmax.xlane.f32.xlu0 %v3664
        %v3666 = vpop.xlane.xlu0 %3665
        %v3667 = vmax.f32 %v2639, %v2728
        %3668 = vmax.xlane.f32.xlu0 %v3667
        %v3669 = vpop.xlane.xlu0 %3668
        %v3670 = vmax.f32 %v2830, %v2919
        %3671 = vmax.xlane.f32.xlu0 %v3670
        %v3672 = vpop.xlane.xlu0 %3671
        %v3673 = vmax.f32 %v2832, %v2921
        %3674 = vmax.xlane.f32.xlu0 %v3673
        %v3675 = vpop.xlane.xlu0 %3674
        %v3676 = vmax.f32 %v2835, %v2924
        %3677 = vmax.xlane.f32.xlu0 %v3676
        %v3678 = vpop.xlane.xlu0 %3677
        %v3679 = vmax.f32 %v2837, %v2926
        %3680 = vmax.xlane.f32.xlu0 %v3679
        %v3681 = vpop.xlane.xlu0 %3680
        %v3682 = vmax.f32 %v2840, %v2929
        %3683 = vmax.xlane.f32.xlu0 %v3682
        %v3684 = vpop.xlane.xlu0 %3683
        %v3685 = vmax.f32 %v2842, %v2931
        %3686 = vmax.xlane.f32.xlu0 %v3685
        %v3687 = vpop.xlane.xlu0 %3686
        %v3688 = vmax.f32 %v2845, %v2934
        %3689 = vmax.xlane.f32.xlu0 %v3688
        %v3690 = vpop.xlane.xlu0 %3689
        %v3691 = vmax.f32 %v2847, %v2936
        %3692 = vmax.xlane.f32.xlu0 %v3691
        %v3693 = vpop.xlane.xlu0 %3692
        %v3694 = vmax.f32 %v2850, %v2939
        %3695 = vmax.xlane.f32.xlu0 %v3694
        %v3696 = vpop.xlane.xlu0 %3695
        %v3697 = vmax.f32 %v2852, %v2941
        %3698 = vmax.xlane.f32.xlu0 %v3697
        %v3699 = vpop.xlane.xlu0 %3698
        %v3700 = vmax.f32 %v2855, %v2944
        %3701 = vmax.xlane.f32.xlu0 %v3700
        %v3702 = vpop.xlane.xlu0 %3701
        %v3703 = vmax.f32 %v2857, %v2946
        %3704 = vmax.xlane.f32.xlu0 %v3703
        %v3705 = vpop.xlane.xlu0 %3704
        %v3706 = vmax.f32 %v2860, %v2949
        %3707 = vmax.xlane.f32.xlu0 %v3706
        %v3708 = vpop.xlane.xlu0 %3707
        %v3709 = vmax.f32 %v2862, %v2951
        %3710 = vmax.xlane.f32.xlu0 %v3709
        %v3711 = vpop.xlane.xlu0 %3710
        %v3712 = vmax.f32 %v2865, %v2954
        %3713 = vmax.xlane.f32.xlu0 %v3712
        %v3714 = vpop.xlane.xlu0 %3713
        %v3715 = vmax.f32 %v2867, %v2956
        %3716 = vmax.xlane.f32.xlu0 %v3715
        %v3717 = vpop.xlane.xlu0 %3716
        %v3718 = vmax.f32 %v2870, %v2959
        %3719 = vmax.xlane.f32.xlu0 %v3718
        %v3720 = vpop.xlane.xlu0 %3719
        %v3721 = vmax.f32 %v2872, %v2961
        %3722 = vmax.xlane.f32.xlu0 %v3721
        %v3723 = vpop.xlane.xlu0 %3722
        %v3724 = vmax.f32 %v2875, %v2964
        %3725 = vmax.xlane.f32.xlu0 %v3724
        %v3726 = vpop.xlane.xlu0 %3725
        %v3727 = vmax.f32 %v2877, %v2966
        %3728 = vmax.xlane.f32.xlu0 %v3727
        %v3729 = vpop.xlane.xlu0 %3728
        %v3730 = vmax.f32 %v2880, %v2969
        %3731 = vmax.xlane.f32.xlu0 %v3730
        %v3732 = vpop.xlane.xlu0 %3731
        %v3733 = vmax.f32 %v2882, %v2971
        %3734 = vmax.xlane.f32.xlu0 %v3733
        %v3735 = vpop.xlane.xlu0 %3734
        %v3736 = vmax.f32 %v2885, %v2974
        %3737 = vmax.xlane.f32.xlu0 %v3736
        %v3738 = vpop.xlane.xlu0 %3737
        %v3739 = vmax.f32 %v2887, %v2976
        %3740 = vmax.xlane.f32.xlu0 %v3739
        %v3741 = vpop.xlane.xlu0 %3740
        %v3742 = vmax.f32 %v2890, %v2979
        %3743 = vmax.xlane.f32.xlu0 %v3742
        %v3744 = vpop.xlane.xlu0 %3743
        %v3745 = vmax.f32 %v2892, %v2981
        %3746 = vmax.xlane.f32.xlu0 %v3745
        %v3747 = vpop.xlane.xlu0 %3746
        %v3748 = vmax.f32 %v2895, %v2984
        %3749 = vmax.xlane.f32.xlu0 %v3748
        %v3750 = vpop.xlane.xlu0 %3749
        %v3751 = vmax.f32 %v2897, %v2986
        %3752 = vmax.xlane.f32.xlu0 %v3751
        %v3753 = vpop.xlane.xlu0 %3752
        %v3754 = vmax.f32 %v2900, %v2989
        %3755 = vmax.xlane.f32.xlu0 %v3754
        %v3756 = vpop.xlane.xlu0 %3755
        %v3757 = vmax.f32 %v2902, %v2991
        %3758 = vmax.xlane.f32.xlu0 %v3757
        %v3759 = vpop.xlane.xlu0 %3758
        %v3760 = vmax.f32 %v2905, %v2994
        %3761 = vmax.xlane.f32.xlu0 %v3760
        %v3762 = vpop.xlane.xlu0 %3761
        %v3763 = vmax.f32 %v2907, %v2996
        %3764 = vmax.xlane.f32.xlu0 %v3763
        %v3765 = vpop.xlane.xlu0 %3764
        %v3766 = vsub.f32 %v954, %v3000
        %v3767 = vsub.f32 %v1043, %v3000
        %v3768 = vsub.f32 %v956, %v3003
        %v3769 = vsub.f32 %v1045, %v3003
        %v3770 = vsub.f32 %v959, %v3006
        %v3771 = vsub.f32 %v1048, %v3006
        %v3772 = vsub.f32 %v961, %v3009
        %v3773 = vsub.f32 %v1050, %v3009
        %v3774 = vsub.f32 %v964, %v3012
        %v3775 = vsub.f32 %v1053, %v3012
        %v3776 = vsub.f32 %v966, %v3015
        %v3777 = vsub.f32 %v1055, %v3015
        %v3778 = vsub.f32 %v969, %v3018
        %v3779 = vsub.f32 %v1058, %v3018
        %v3780 = vsub.f32 %v971, %v3021
        %v3781 = vsub.f32 %v1060, %v3021
        %v3782 = vsub.f32 %v974, %v3024
        %v3783 = vsub.f32 %v1063, %v3024
        %v3784 = vsub.f32 %v976, %v3027
        %v3785 = vsub.f32 %v1065, %v3027
        %v3786 = vsub.f32 %v979, %v3030
        %v3787 = vsub.f32 %v1068, %v3030
        %v3788 = vsub.f32 %v981, %v3033
        %v3789 = vsub.f32 %v1070, %v3033
        %v3790 = vsub.f32 %v984, %v3036
        %v3791 = vsub.f32 %v1073, %v3036
        %v3792 = vsub.f32 %v986, %v3039
        %v3793 = vsub.f32 %v1075, %v3039
        %v3794 = vsub.f32 %v989, %v3042
        %v3795 = vsub.f32 %v1078, %v3042
        %v3796 = vsub.f32 %v991, %v3045
        %v3797 = vsub.f32 %v1080, %v3045
        %v3798 = vsub.f32 %v994, %v3048
        %v3799 = vsub.f32 %v1083, %v3048
        %v3800 = vsub.f32 %v996, %v3051
        %v3801 = vsub.f32 %v1085, %v3051
        %v3802 = vsub.f32 %v999, %v3054
        %v3803 = vsub.f32 %v1088, %v3054
        %v3804 = vsub.f32 %v1001, %v3057
        %v3805 = vsub.f32 %v1090, %v3057
        %v3806 = vsub.f32 %v1004, %v3060
        %v3807 = vsub.f32 %v1093, %v3060
        %v3808 = vsub.f32 %v1006, %v3063
        %v3809 = vsub.f32 %v1095, %v3063
        %v3810 = vsub.f32 %v1009, %v3066
        %v3811 = vsub.f32 %v1098, %v3066
        %v3812 = vsub.f32 %v1011, %v3069
        %v3813 = vsub.f32 %v1100, %v3069
        %v3814 = vsub.f32 %v1014, %v3072
        %v3815 = vsub.f32 %v1103, %v3072
        %v3816 = vsub.f32 %v1016, %v3075
        %v3817 = vsub.f32 %v1105, %v3075
        %v3818 = vsub.f32 %v1019, %v3078
        %v3819 = vsub.f32 %v1108, %v3078
        %v3820 = vsub.f32 %v1021, %v3081
        %v3821 = vsub.f32 %v1110, %v3081
        %v3822 = vsub.f32 %v1024, %v3084
        %v3823 = vsub.f32 %v1113, %v3084
        %v3824 = vsub.f32 %v1026, %v3087
        %v3825 = vsub.f32 %v1115, %v3087
        %v3826 = vsub.f32 %v1029, %v3090
        %v3827 = vsub.f32 %v1118, %v3090
        %v3828 = vsub.f32 %v1031, %v3093
        %v3829 = vsub.f32 %v1120, %v3093
        %v3830 = vsub.f32 %v1222, %v3096
        %v3831 = vsub.f32 %v1311, %v3096
        %v3832 = vsub.f32 %v1224, %v3099
        %v3833 = vsub.f32 %v1313, %v3099
        %v3834 = vsub.f32 %v1227, %v3102
        %v3835 = vsub.f32 %v1316, %v3102
        %v3836 = vsub.f32 %v1229, %v3105
        %v3837 = vsub.f32 %v1318, %v3105
        %v3838 = vsub.f32 %v1232, %v3108
        %v3839 = vsub.f32 %v1321, %v3108
        %v3840 = vsub.f32 %v1234, %v3111
        %v3841 = vsub.f32 %v1323, %v3111
        %v3842 = vsub.f32 %v1237, %v3114
        %v3843 = vsub.f32 %v1326, %v3114
        %v3844 = vsub.f32 %v1239, %v3117
        %v3845 = vsub.f32 %v1328, %v3117
        %v3846 = vsub.f32 %v1242, %v3120
        %v3847 = vsub.f32 %v1331, %v3120
        %v3848 = vsub.f32 %v1244, %v3123
        %v3849 = vsub.f32 %v1333, %v3123
        %v3850 = vsub.f32 %v1247, %v3126
        %v3851 = vsub.f32 %v1336, %v3126
        %v3852 = vsub.f32 %v1249, %v3129
        %v3853 = vsub.f32 %v1338, %v3129
        %v3854 = vsub.f32 %v1252, %v3132
        %v3855 = vsub.f32 %v1341, %v3132
        %v3856 = vsub.f32 %v1254, %v3135
        %v3857 = vsub.f32 %v1343, %v3135
        %v3858 = vsub.f32 %v1257, %v3138
        %v3859 = vsub.f32 %v1346, %v3138
        %v3860 = vsub.f32 %v1259, %v3141
        %v3861 = vsub.f32 %v1348, %v3141
        %v3862 = vsub.f32 %v1262, %v3144
        %v3863 = vsub.f32 %v1351, %v3144
        %v3864 = vsub.f32 %v1264, %v3147
        %v3865 = vsub.f32 %v1353, %v3147
        %v3866 = vsub.f32 %v1267, %v3150
        %v3867 = vsub.f32 %v1356, %v3150
        %v3868 = vsub.f32 %v1269, %v3153
        %v3869 = vsub.f32 %v1358, %v3153
        %v3870 = vsub.f32 %v1272, %v3156
        %v3871 = vsub.f32 %v1361, %v3156
        %v3872 = vsub.f32 %v1274, %v3159
        %v3873 = vsub.f32 %v1363, %v3159
        %v3874 = vsub.f32 %v1277, %v3162
        %v3875 = vsub.f32 %v1366, %v3162
        %v3876 = vsub.f32 %v1279, %v3165
        %v3877 = vsub.f32 %v1368, %v3165
        %v3878 = vsub.f32 %v1282, %v3168
        %v3879 = vsub.f32 %v1371, %v3168
        %v3880 = vsub.f32 %v1284, %v3171
        %v3881 = vsub.f32 %v1373, %v3171
        %v3882 = vsub.f32 %v1287, %v3174
        %v3883 = vsub.f32 %v1376, %v3174
        %v3884 = vsub.f32 %v1289, %v3177
        %v3885 = vsub.f32 %v1378, %v3177
        %v3886 = vsub.f32 %v1292, %v3180
        %v3887 = vsub.f32 %v1381, %v3180
        %v3888 = vsub.f32 %v1294, %v3183
        %v3889 = vsub.f32 %v1383, %v3183
        %v3890 = vsub.f32 %v1297, %v3186
        %v3891 = vsub.f32 %v1386, %v3186
        %v3892 = vsub.f32 %v1299, %v3189
        %v3893 = vsub.f32 %v1388, %v3189
        %v3894 = vsub.f32 %v1490, %v3192
        %v3895 = vsub.f32 %v1579, %v3192
        %v3896 = vsub.f32 %v1492, %v3195
        %v3897 = vsub.f32 %v1581, %v3195
        %v3898 = vsub.f32 %v1495, %v3198
        %v3899 = vsub.f32 %v1584, %v3198
        %v3900 = vsub.f32 %v1497, %v3201
        %v3901 = vsub.f32 %v1586, %v3201
        %v3902 = vsub.f32 %v1500, %v3204
        %v3903 = vsub.f32 %v1589, %v3204
        %v3904 = vsub.f32 %v1502, %v3207
        %v3905 = vsub.f32 %v1591, %v3207
        %v3906 = vsub.f32 %v1505, %v3210
        %v3907 = vsub.f32 %v1594, %v3210
        %v3908 = vsub.f32 %v1507, %v3213
        %v3909 = vsub.f32 %v1596, %v3213
        %v3910 = vsub.f32 %v1510, %v3216
        %v3911 = vsub.f32 %v1599, %v3216
        %v3912 = vsub.f32 %v1512, %v3219
        %v3913 = vsub.f32 %v1601, %v3219
        %v3914 = vsub.f32 %v1515, %v3222
        %v3915 = vsub.f32 %v1604, %v3222
        %v3916 = vsub.f32 %v1517, %v3225
        %v3917 = vsub.f32 %v1606, %v3225
        %v3918 = vsub.f32 %v1520, %v3228
        %v3919 = vsub.f32 %v1609, %v3228
        %v3920 = vsub.f32 %v1522, %v3231
        %v3921 = vsub.f32 %v1611, %v3231
        %v3922 = vsub.f32 %v1525, %v3234
        %v3923 = vsub.f32 %v1614, %v3234
        %v3924 = vsub.f32 %v1527, %v3237
        %v3925 = vsub.f32 %v1616, %v3237
        %v3926 = vsub.f32 %v1530, %v3240
        %v3927 = vsub.f32 %v1619, %v3240
        %v3928 = vsub.f32 %v1532, %v3243
        %v3929 = vsub.f32 %v1621, %v3243
        %v3930 = vsub.f32 %v1535, %v3246
        %v3931 = vsub.f32 %v1624, %v3246
        %v3932 = vsub.f32 %v1537, %v3249
        %v3933 = vsub.f32 %v1626, %v3249
        %v3934 = vsub.f32 %v1540, %v3252
        %v3935 = vsub.f32 %v1629, %v3252
        %v3936 = vsub.f32 %v1542, %v3255
        %v3937 = vsub.f32 %v1631, %v3255
        %v3938 = vsub.f32 %v1545, %v3258
        %v3939 = vsub.f32 %v1634, %v3258
        %v3940 = vsub.f32 %v1547, %v3261
        %v3941 = vsub.f32 %v1636, %v3261
        %v3942 = vsub.f32 %v1550, %v3264
        %v3943 = vsub.f32 %v1639, %v3264
        %v3944 = vsub.f32 %v1552, %v3267
        %v3945 = vsub.f32 %v1641, %v3267
        %v3946 = vsub.f32 %v1555, %v3270
        %v3947 = vsub.f32 %v1644, %v3270
        %v3948 = vsub.f32 %v1557, %v3273
        %v3949 = vsub.f32 %v1646, %v3273
        %v3950 = vsub.f32 %v1560, %v3276
        %v3951 = vsub.f32 %v1649, %v3276
        %v3952 = vsub.f32 %v1562, %v3279
        %v3953 = vsub.f32 %v1651, %v3279
        %v3954 = vsub.f32 %v1565, %v3282
        %v3955 = vsub.f32 %v1654, %v3282
        %v3956 = vsub.f32 %v1567, %v3285
        %v3957 = vsub.f32 %v1656, %v3285
        %v3958 = vsub.f32 %v1758, %v3288
        %v3959 = vsub.f32 %v1847, %v3288
        %v3960 = vsub.f32 %v1760, %v3291
        %v3961 = vsub.f32 %v1849, %v3291
        %v3962 = vsub.f32 %v1763, %v3294
        %v3963 = vsub.f32 %v1852, %v3294
        %v3964 = vsub.f32 %v1765, %v3297
        %v3965 = vsub.f32 %v1854, %v3297
        %v3966 = vsub.f32 %v1768, %v3300
        %v3967 = vsub.f32 %v1857, %v3300
        %v3968 = vsub.f32 %v1770, %v3303
        %v3969 = vsub.f32 %v1859, %v3303
        %v3970 = vsub.f32 %v1773, %v3306
        %v3971 = vsub.f32 %v1862, %v3306
        %v3972 = vsub.f32 %v1775, %v3309
        %v3973 = vsub.f32 %v1864, %v3309
        %v3974 = vsub.f32 %v1778, %v3312
        %v3975 = vsub.f32 %v1867, %v3312
        %v3976 = vsub.f32 %v1780, %v3315
        %v3977 = vsub.f32 %v1869, %v3315
        %v3978 = vsub.f32 %v1783, %v3318
        %v3979 = vsub.f32 %v1872, %v3318
        %v3980 = vsub.f32 %v1785, %v3321
        %v3981 = vsub.f32 %v1874, %v3321
        %v3982 = vsub.f32 %v1788, %v3324
        %v3983 = vsub.f32 %v1877, %v3324
        %v3984 = vsub.f32 %v1790, %v3327
        %v3985 = vsub.f32 %v1879, %v3327
        %v3986 = vsub.f32 %v1793, %v3330
        %v3987 = vsub.f32 %v1882, %v3330
        %v3988 = vsub.f32 %v1795, %v3333
        %v3989 = vsub.f32 %v1884, %v3333
        %v3990 = vsub.f32 %v1798, %v3336
        %v3991 = vsub.f32 %v1887, %v3336
        %v3992 = vsub.f32 %v1800, %v3339
        %v3993 = vsub.f32 %v1889, %v3339
        %v3994 = vsub.f32 %v1803, %v3342
        %v3995 = vsub.f32 %v1892, %v3342
        %v3996 = vsub.f32 %v1805, %v3345
        %v3997 = vsub.f32 %v1894, %v3345
        %v3998 = vsub.f32 %v1808, %v3348
        %v3999 = vsub.f32 %v1897, %v3348
        %v4000 = vsub.f32 %v1810, %v3351
        %v4001 = vsub.f32 %v1899, %v3351
        %v4002 = vsub.f32 %v1813, %v3354
        %v4003 = vsub.f32 %v1902, %v3354
        %v4004 = vsub.f32 %v1815, %v3357
        %v4005 = vsub.f32 %v1904, %v3357
        %v4006 = vsub.f32 %v1818, %v3360
        %v4007 = vsub.f32 %v1907, %v3360
        %v4008 = vsub.f32 %v1820, %v3363
        %v4009 = vsub.f32 %v1909, %v3363
        %v4010 = vsub.f32 %v1823, %v3366
        %v4011 = vsub.f32 %v1912, %v3366
        %v4012 = vsub.f32 %v1825, %v3369
        %v4013 = vsub.f32 %v1914, %v3369
        %v4014 = vsub.f32 %v1828, %v3372
        %v4015 = vsub.f32 %v1917, %v3372
        %v4016 = vsub.f32 %v1830, %v3375
        %v4017 = vsub.f32 %v1919, %v3375
        %v4018 = vsub.f32 %v1833, %v3378
        %v4019 = vsub.f32 %v1922, %v3378
        %v4020 = vsub.f32 %v1835, %v3381
        %v4021 = vsub.f32 %v1924, %v3381
        %v4022 = vsub.f32 %v2026, %v3384
        %v4023 = vsub.f32 %v2115, %v3384
        %v4024 = vsub.f32 %v2028, %v3387
        %v4025 = vsub.f32 %v2117, %v3387
        %v4026 = vsub.f32 %v2031, %v3390
        %v4027 = vsub.f32 %v2120, %v3390
        %v4028 = vsub.f32 %v2033, %v3393
        %v4029 = vsub.f32 %v2122, %v3393
        %v4030 = vsub.f32 %v2036, %v3396
        %v4031 = vsub.f32 %v2125, %v3396
        %v4032 = vsub.f32 %v2038, %v3399
        %v4033 = vsub.f32 %v2127, %v3399
        %v4034 = vsub.f32 %v2041, %v3402
        %v4035 = vsub.f32 %v2130, %v3402
        %v4036 = vsub.f32 %v2043, %v3405
        %v4037 = vsub.f32 %v2132, %v3405
        %v4038 = vsub.f32 %v2046, %v3408
        %v4039 = vsub.f32 %v2135, %v3408
        %v4040 = vsub.f32 %v2048, %v3411
        %v4041 = vsub.f32 %v2137, %v3411
        %v4042 = vsub.f32 %v2051, %v3414
        %v4043 = vsub.f32 %v2140, %v3414
        %v4044 = vsub.f32 %v2053, %v3417
        %v4045 = vsub.f32 %v2142, %v3417
        %v4046 = vsub.f32 %v2056, %v3420
        %v4047 = vsub.f32 %v2145, %v3420
        %v4048 = vsub.f32 %v2058, %v3423
        %v4049 = vsub.f32 %v2147, %v3423
        %v4050 = vsub.f32 %v2061, %v3426
        %v4051 = vsub.f32 %v2150, %v3426
        %v4052 = vsub.f32 %v2063, %v3429
        %v4053 = vsub.f32 %v2152, %v3429
        %v4054 = vsub.f32 %v2066, %v3432
        %v4055 = vsub.f32 %v2155, %v3432
        %v4056 = vsub.f32 %v2068, %v3435
        %v4057 = vsub.f32 %v2157, %v3435
        %v4058 = vsub.f32 %v2071, %v3438
        %v4059 = vsub.f32 %v2160, %v3438
        %v4060 = vsub.f32 %v2073, %v3441
        %v4061 = vsub.f32 %v2162, %v3441
        %v4062 = vsub.f32 %v2076, %v3444
        %v4063 = vsub.f32 %v2165, %v3444
        %v4064 = vsub.f32 %v2078, %v3447
        %v4065 = vsub.f32 %v2167, %v3447
        %v4066 = vsub.f32 %v2081, %v3450
        %v4067 = vsub.f32 %v2170, %v3450
        %v4068 = vsub.f32 %v2083, %v3453
        %v4069 = vsub.f32 %v2172, %v3453
        %v4070 = vsub.f32 %v2086, %v3456
        %v4071 = vsub.f32 %v2175, %v3456
        %v4072 = vsub.f32 %v2088, %v3459
        %v4073 = vsub.f32 %v2177, %v3459
        %v4074 = vsub.f32 %v2091, %v3462
        %v4075 = vsub.f32 %v2180, %v3462
        %v4076 = vsub.f32 %v2093, %v3465
        %v4077 = vsub.f32 %v2182, %v3465
        %v4078 = vsub.f32 %v2096, %v3468
        %v4079 = vsub.f32 %v2185, %v3468
        %v4080 = vsub.f32 %v2098, %v3471
        %v4081 = vsub.f32 %v2187, %v3471
        %v4082 = vsub.f32 %v2101, %v3474
        %v4083 = vsub.f32 %v2190, %v3474
        %v4084 = vsub.f32 %v2103, %v3477
        %v4085 = vsub.f32 %v2192, %v3477
        %v4086 = vsub.f32 %v2294, %v3480
        %v4087 = vsub.f32 %v2383, %v3480
        %v4088 = vsub.f32 %v2296, %v3483
        %v4089 = vsub.f32 %v2385, %v3483
        %v4090 = vsub.f32 %v2299, %v3486
        %v4091 = vsub.f32 %v2388, %v3486
        %v4092 = vsub.f32 %v2301, %v3489
        %v4093 = vsub.f32 %v2390, %v3489
        %v4094 = vsub.f32 %v2304, %v3492
        %v4095 = vsub.f32 %v2393, %v3492
        %v4096 = vsub.f32 %v2306, %v3495
        %v4097 = vsub.f32 %v2395, %v3495
        %v4098 = vsub.f32 %v2309, %v3498
        %v4099 = vsub.f32 %v2398, %v3498
        %v4100 = vsub.f32 %v2311, %v3501
        %v4101 = vsub.f32 %v2400, %v3501
        %v4102 = vsub.f32 %v2314, %v3504
        %v4103 = vsub.f32 %v2403, %v3504
        %v4104 = vsub.f32 %v2316, %v3507
        %v4105 = vsub.f32 %v2405, %v3507
        %v4106 = vsub.f32 %v2319, %v3510
        %v4107 = vsub.f32 %v2408, %v3510
        %v4108 = vsub.f32 %v2321, %v3513
        %v4109 = vsub.f32 %v2410, %v3513
        %v4110 = vsub.f32 %v2324, %v3516
        %v4111 = vsub.f32 %v2413, %v3516
        %v4112 = vsub.f32 %v2326, %v3519
        %v4113 = vsub.f32 %v2415, %v3519
        %v4114 = vsub.f32 %v2329, %v3522
        %v4115 = vsub.f32 %v2418, %v3522
        %v4116 = vsub.f32 %v2331, %v3525
        %v4117 = vsub.f32 %v2420, %v3525
        %v4118 = vsub.f32 %v2334, %v3528
        %v4119 = vsub.f32 %v2423, %v3528
        %v4120 = vsub.f32 %v2336, %v3531
        %v4121 = vsub.f32 %v2425, %v3531
        %v4122 = vsub.f32 %v2339, %v3534
        %v4123 = vsub.f32 %v2428, %v3534
        %v4124 = vsub.f32 %v2341, %v3537
        %v4125 = vsub.f32 %v2430, %v3537
        %v4126 = vsub.f32 %v2344, %v3540
        %v4127 = vsub.f32 %v2433, %v3540
        %v4128 = vsub.f32 %v2346, %v3543
        %v4129 = vsub.f32 %v2435, %v3543
        %v4130 = vsub.f32 %v2349, %v3546
        %v4131 = vsub.f32 %v2438, %v3546
        %v4132 = vsub.f32 %v2351, %v3549
        %v4133 = vsub.f32 %v2440, %v3549
        %v4134 = vsub.f32 %v2354, %v3552
        %v4135 = vsub.f32 %v2443, %v3552
        %v4136 = vsub.f32 %v2356, %v3555
        %v4137 = vsub.f32 %v2445, %v3555
        %v4138 = vsub.f32 %v2359, %v3558
        %v4139 = vsub.f32 %v2448, %v3558
        %v4140 = vsub.f32 %v2361, %v3561
        %v4141 = vsub.f32 %v2450, %v3561
        %v4142 = vsub.f32 %v2364, %v3564
        %v4143 = vsub.f32 %v2453, %v3564
        %v4144 = vsub.f32 %v2366, %v3567
        %v4145 = vsub.f32 %v2455, %v3567
        %v4146 = vsub.f32 %v2369, %v3570
        %v4147 = vsub.f32 %v2458, %v3570
        %v4148 = vsub.f32 %v2371, %v3573
        %v4149 = vsub.f32 %v2460, %v3573
        %v4150 = vsub.f32 %v2562, %v3576
        %v4151 = vsub.f32 %v2651, %v3576
        %v4152 = vsub.f32 %v2564, %v3579
        %v4153 = vsub.f32 %v2653, %v3579
        %v4154 = vsub.f32 %v2567, %v3582
        %v4155 = vsub.f32 %v2656, %v3582
        %v4156 = vsub.f32 %v2569, %v3585
        %v4157 = vsub.f32 %v2658, %v3585
        %v4158 = vsub.f32 %v2572, %v3588
        %v4159 = vsub.f32 %v2661, %v3588
        %v4160 = vsub.f32 %v2574, %v3591
        %v4161 = vsub.f32 %v2663, %v3591
        %v4162 = vsub.f32 %v2577, %v3594
        %v4163 = vsub.f32 %v2666, %v3594
        %v4164 = vsub.f32 %v2579, %v3597
        %v4165 = vsub.f32 %v2668, %v3597
        %v4166 = vsub.f32 %v2582, %v3600
        %v4167 = vsub.f32 %v2671, %v3600
        %v4168 = vsub.f32 %v2584, %v3603
        %v4169 = vsub.f32 %v2673, %v3603
        %v4170 = vsub.f32 %v2587, %v3606
        %v4171 = vsub.f32 %v2676, %v3606
        %v4172 = vsub.f32 %v2589, %v3609
        %v4173 = vsub.f32 %v2678, %v3609
        %v4174 = vsub.f32 %v2592, %v3612
        %v4175 = vsub.f32 %v2681, %v3612
        %v4176 = vsub.f32 %v2594, %v3615
        %v4177 = vsub.f32 %v2683, %v3615
        %v4178 = vsub.f32 %v2597, %v3618
        %v4179 = vsub.f32 %v2686, %v3618
        %v4180 = vsub.f32 %v2599, %v3621
        %v4181 = vsub.f32 %v2688, %v3621
        %v4182 = vsub.f32 %v2602, %v3624
        %v4183 = vsub.f32 %v2691, %v3624
        %v4184 = vsub.f32 %v2604, %v3627
        %v4185 = vsub.f32 %v2693, %v3627
        %v4186 = vsub.f32 %v2607, %v3630
        %v4187 = vsub.f32 %v2696, %v3630
        %v4188 = vsub.f32 %v2609, %v3633
        %v4189 = vsub.f32 %v2698, %v3633
        %v4190 = vsub.f32 %v2612, %v3636
        %v4191 = vsub.f32 %v2701, %v3636
        %v4192 = vsub.f32 %v2614, %v3639
        %v4193 = vsub.f32 %v2703, %v3639
        %v4194 = vsub.f32 %v2617, %v3642
        %v4195 = vsub.f32 %v2706, %v3642
        %v4196 = vsub.f32 %v2619, %v3645
        %v4197 = vsub.f32 %v2708, %v3645
        %v4198 = vsub.f32 %v2622, %v3648
        %v4199 = vsub.f32 %v2711, %v3648
        %v4200 = vsub.f32 %v2624, %v3651
        %v4201 = vsub.f32 %v2713, %v3651
        %v4202 = vsub.f32 %v2627, %v3654
        %v4203 = vsub.f32 %v2716, %v3654
        %v4204 = vsub.f32 %v2629, %v3657
        %v4205 = vsub.f32 %v2718, %v3657
        %v4206 = vsub.f32 %v2632, %v3660
        %v4207 = vsub.f32 %v2721, %v3660
        %v4208 = vsub.f32 %v2634, %v3663
        %v4209 = vsub.f32 %v2723, %v3663
        %v4210 = vsub.f32 %v2637, %v3666
        %v4211 = vsub.f32 %v2726, %v3666
        %v4212 = vsub.f32 %v2639, %v3669
        %v4213 = vsub.f32 %v2728, %v3669
        %v4214 = vsub.f32 %v2830, %v3672
        %v4215 = vsub.f32 %v2919, %v3672
        %v4216 = vsub.f32 %v2832, %v3675
        %v4217 = vsub.f32 %v2921, %v3675
        %v4218 = vsub.f32 %v2835, %v3678
        %v4219 = vsub.f32 %v2924, %v3678
        %v4220 = vsub.f32 %v2837, %v3681
        %v4221 = vsub.f32 %v2926, %v3681
        %v4222 = vsub.f32 %v2840, %v3684
        %v4223 = vsub.f32 %v2929, %v3684
        %v4224 = vsub.f32 %v2842, %v3687
        %v4225 = vsub.f32 %v2931, %v3687
        %v4226 = vsub.f32 %v2845, %v3690
        %v4227 = vsub.f32 %v2934, %v3690
        %v4228 = vsub.f32 %v2847, %v3693
        %v4229 = vsub.f32 %v2936, %v3693
        %v4230 = vsub.f32 %v2850, %v3696
        %v4231 = vsub.f32 %v2939, %v3696
        %v4232 = vsub.f32 %v2852, %v3699
        %v4233 = vsub.f32 %v2941, %v3699
        %v4234 = vsub.f32 %v2855, %v3702
        %v4235 = vsub.f32 %v2944, %v3702
        %v4236 = vsub.f32 %v2857, %v3705
        %v4237 = vsub.f32 %v2946, %v3705
        %v4238 = vsub.f32 %v2860, %v3708
        %v4239 = vsub.f32 %v2949, %v3708
        %v4240 = vsub.f32 %v2862, %v3711
        %v4241 = vsub.f32 %v2951, %v3711
        %v4242 = vsub.f32 %v2865, %v3714
        %v4243 = vsub.f32 %v2954, %v3714
        %v4244 = vsub.f32 %v2867, %v3717
        %v4245 = vsub.f32 %v2956, %v3717
        %v4246 = vsub.f32 %v2870, %v3720
        %v4247 = vsub.f32 %v2959, %v3720
        %v4248 = vsub.f32 %v2872, %v3723
        %v4249 = vsub.f32 %v2961, %v3723
        %v4250 = vsub.f32 %v2875, %v3726
        %v4251 = vsub.f32 %v2964, %v3726
        %v4252 = vsub.f32 %v2877, %v3729
        %v4253 = vsub.f32 %v2966, %v3729
        %v4254 = vsub.f32 %v2880, %v3732
        %v4255 = vsub.f32 %v2969, %v3732
        %v4256 = vsub.f32 %v2882, %v3735
        %v4257 = vsub.f32 %v2971, %v3735
        %v4258 = vsub.f32 %v2885, %v3738
        %v4259 = vsub.f32 %v2974, %v3738
        %v4260 = vsub.f32 %v2887, %v3741
        %v4261 = vsub.f32 %v2976, %v3741
        %v4262 = vsub.f32 %v2890, %v3744
        %v4263 = vsub.f32 %v2979, %v3744
        %v4264 = vsub.f32 %v2892, %v3747
        %v4265 = vsub.f32 %v2981, %v3747
        %v4266 = vsub.f32 %v2895, %v3750
        %v4267 = vsub.f32 %v2984, %v3750
        %v4268 = vsub.f32 %v2897, %v3753
        %v4269 = vsub.f32 %v2986, %v3753
        %v4270 = vsub.f32 %v2900, %v3756
        %v4271 = vsub.f32 %v2989, %v3756
        %v4272 = vsub.f32 %v2902, %v3759
        %v4273 = vsub.f32 %v2991, %v3759
        %v4274 = vsub.f32 %v2905, %v3762
        %v4275 = vsub.f32 %v2994, %v3762
        %v4276 = vsub.f32 %v2907, %v3765
        %v4277 = vsub.f32 %v2996, %v3765
        %v4278 = vmul.f32 %v3766, 1.442695
        %v4279 = vpow.pop %v4278
        %v4280 = vmul.f32 %v3767, 1.442695
        %v4281 = vpow.pop %v4280
        %v4282 = vmul.f32 %v3768, 1.442695
        %v4283 = vpow.pop %v4282
        %v4284 = vmul.f32 %v3769, 1.442695
        %v4285 = vpow.pop %v4284
        %v4286 = vmul.f32 %v3770, 1.442695
        %v4287 = vpow.pop %v4286
        %v4288 = vmul.f32 %v3771, 1.442695
        %v4289 = vpow.pop %v4288
        %v4290 = vmul.f32 %v3772, 1.442695
        %v4291 = vpow.pop %v4290
        %v4292 = vmul.f32 %v3773, 1.442695
        %v4293 = vpow.pop %v4292
        %v4294 = vmul.f32 %v3774, 1.442695
        %v4295 = vpow.pop %v4294
        %v4296 = vmul.f32 %v3775, 1.442695
        %v4297 = vpow.pop %v4296
        %v4298 = vmul.f32 %v3776, 1.442695
        %v4299 = vpow.pop %v4298
        %v4300 = vmul.f32 %v3777, 1.442695
        %v4301 = vpow.pop %v4300
        %v4302 = vmul.f32 %v3778, 1.442695
        %v4303 = vpow.pop %v4302
        %v4304 = vmul.f32 %v3779, 1.442695
        %v4305 = vpow.pop %v4304
        %v4306 = vmul.f32 %v3780, 1.442695
        %v4307 = vpow.pop %v4306
        %v4308 = vmul.f32 %v3781, 1.442695
        %v4309 = vpow.pop %v4308
        %v4310 = vmul.f32 %v3782, 1.442695
        %v4311 = vpow.pop %v4310
        %v4312 = vmul.f32 %v3783, 1.442695
        %v4313 = vpow.pop %v4312
        %v4314 = vmul.f32 %v3784, 1.442695
        %v4315 = vpow.pop %v4314
        %v4316 = vmul.f32 %v3785, 1.442695
        %v4317 = vpow.pop %v4316
        %v4318 = vmul.f32 %v3786, 1.442695
        %v4319 = vpow.pop %v4318
        %v4320 = vmul.f32 %v3787, 1.442695
        %v4321 = vpow.pop %v4320
        %v4322 = vmul.f32 %v3788, 1.442695
        %v4323 = vpow.pop %v4322
        %v4324 = vmul.f32 %v3789, 1.442695
        %v4325 = vpow.pop %v4324
        %v4326 = vmul.f32 %v3790, 1.442695
        %v4327 = vpow.pop %v4326
        %v4328 = vmul.f32 %v3791, 1.442695
        %v4329 = vpow.pop %v4328
        %v4330 = vmul.f32 %v3792, 1.442695
        %v4331 = vpow.pop %v4330
        %v4332 = vmul.f32 %v3793, 1.442695
        %v4333 = vpow.pop %v4332
        %v4334 = vmul.f32 %v3794, 1.442695
        %v4335 = vpow.pop %v4334
        %v4336 = vmul.f32 %v3795, 1.442695
        %v4337 = vpow.pop %v4336
        %v4338 = vmul.f32 %v3796, 1.442695
        %v4339 = vpow.pop %v4338
        %v4340 = vmul.f32 %v3797, 1.442695
        %v4341 = vpow.pop %v4340
        %v4342 = vmul.f32 %v3798, 1.442695
        %v4343 = vpow.pop %v4342
        %v4344 = vmul.f32 %v3799, 1.442695
        %v4345 = vpow.pop %v4344
        %v4346 = vmul.f32 %v3800, 1.442695
        %v4347 = vpow.pop %v4346
        %v4348 = vmul.f32 %v3801, 1.442695
        %v4349 = vpow.pop %v4348
        %v4350 = vmul.f32 %v3802, 1.442695
        %v4351 = vpow.pop %v4350
        %v4352 = vmul.f32 %v3803, 1.442695
        %v4353 = vpow.pop %v4352
        %v4354 = vmul.f32 %v3804, 1.442695
        %v4355 = vpow.pop %v4354
        %v4356 = vmul.f32 %v3805, 1.442695
        %v4357 = vpow.pop %v4356
        %v4358 = vmul.f32 %v3806, 1.442695
        %v4359 = vpow.pop %v4358
        %v4360 = vmul.f32 %v3807, 1.442695
        %v4361 = vpow.pop %v4360
        %v4362 = vmul.f32 %v3808, 1.442695
        %v4363 = vpow.pop %v4362
        %v4364 = vmul.f32 %v3809, 1.442695
        %v4365 = vpow.pop %v4364
        %v4366 = vmul.f32 %v3810, 1.442695
        %v4367 = vpow.pop %v4366
        %v4368 = vmul.f32 %v3811, 1.442695
        %v4369 = vpow.pop %v4368
        %v4370 = vmul.f32 %v3812, 1.442695
        %v4371 = vpow.pop %v4370
        %v4372 = vmul.f32 %v3813, 1.442695
        %v4373 = vpow.pop %v4372
        %v4374 = vmul.f32 %v3814, 1.442695
        %v4375 = vpow.pop %v4374
        %v4376 = vmul.f32 %v3815, 1.442695
        %v4377 = vpow.pop %v4376
        %v4378 = vmul.f32 %v3816, 1.442695
        %v4379 = vpow.pop %v4378
        %v4380 = vmul.f32 %v3817, 1.442695
        %v4381 = vpow.pop %v4380
        %v4382 = vmul.f32 %v3818, 1.442695
        %v4383 = vpow.pop %v4382
        %v4384 = vmul.f32 %v3819, 1.442695
        %v4385 = vpow.pop %v4384
        %v4386 = vmul.f32 %v3820, 1.442695
        %v4387 = vpow.pop %v4386
        %v4388 = vmul.f32 %v3821, 1.442695
        %v4389 = vpow.pop %v4388
        %v4390 = vmul.f32 %v3822, 1.442695
        %v4391 = vpow.pop %v4390
        %v4392 = vmul.f32 %v3823, 1.442695
        %v4393 = vpow.pop %v4392
        %v4394 = vmul.f32 %v3824, 1.442695
        %v4395 = vpow.pop %v4394
        %v4396 = vmul.f32 %v3825, 1.442695
        %v4397 = vpow.pop %v4396
        %v4398 = vmul.f32 %v3826, 1.442695
        %v4399 = vpow.pop %v4398
        %v4400 = vmul.f32 %v3827, 1.442695
        %v4401 = vpow.pop %v4400
        %v4402 = vmul.f32 %v3828, 1.442695
        %v4403 = vpow.pop %v4402
        %v4404 = vmul.f32 %v3829, 1.442695
        %v4405 = vpow.pop %v4404
        %v4406 = vmul.f32 %v3830, 1.442695
        %v4407 = vpow.pop %v4406
        %v4408 = vmul.f32 %v3831, 1.442695
        %v4409 = vpow.pop %v4408
        %v4410 = vmul.f32 %v3832, 1.442695
        %v4411 = vpow.pop %v4410
        %v4412 = vmul.f32 %v3833, 1.442695
        %v4413 = vpow.pop %v4412
        %v4414 = vmul.f32 %v3834, 1.442695
        %v4415 = vpow.pop %v4414
        %v4416 = vmul.f32 %v3835, 1.442695
        %v4417 = vpow.pop %v4416
        %v4418 = vmul.f32 %v3836, 1.442695
        %v4419 = vpow.pop %v4418
        %v4420 = vmul.f32 %v3837, 1.442695
        %v4421 = vpow.pop %v4420
        %v4422 = vmul.f32 %v3838, 1.442695
        %v4423 = vpow.pop %v4422
        %v4424 = vmul.f32 %v3839, 1.442695
        %v4425 = vpow.pop %v4424
        %v4426 = vmul.f32 %v3840, 1.442695
        %v4427 = vpow.pop %v4426
        %v4428 = vmul.f32 %v3841, 1.442695
        %v4429 = vpow.pop %v4428
        %v4430 = vmul.f32 %v3842, 1.442695
        %v4431 = vpow.pop %v4430
        %v4432 = vmul.f32 %v3843, 1.442695
        %v4433 = vpow.pop %v4432
        %v4434 = vmul.f32 %v3844, 1.442695
        %v4435 = vpow.pop %v4434
        %v4436 = vmul.f32 %v3845, 1.442695
        %v4437 = vpow.pop %v4436
        %v4438 = vmul.f32 %v3846, 1.442695
        %v4439 = vpow.pop %v4438
        %v4440 = vmul.f32 %v3847, 1.442695
        %v4441 = vpow.pop %v4440
        %v4442 = vmul.f32 %v3848, 1.442695
        %v4443 = vpow.pop %v4442
        %v4444 = vmul.f32 %v3849, 1.442695
        %v4445 = vpow.pop %v4444
        %v4446 = vmul.f32 %v3850, 1.442695
        %v4447 = vpow.pop %v4446
        %v4448 = vmul.f32 %v3851, 1.442695
        %v4449 = vpow.pop %v4448
        %v4450 = vmul.f32 %v3852, 1.442695
        %v4451 = vpow.pop %v4450
        %v4452 = vmul.f32 %v3853, 1.442695
        %v4453 = vpow.pop %v4452
        %v4454 = vmul.f32 %v3854, 1.442695
        %v4455 = vpow.pop %v4454
        %v4456 = vmul.f32 %v3855, 1.442695
        %v4457 = vpow.pop %v4456
        %v4458 = vmul.f32 %v3856, 1.442695
        %v4459 = vpow.pop %v4458
        %v4460 = vmul.f32 %v3857, 1.442695
        %v4461 = vpow.pop %v4460
        %v4462 = vmul.f32 %v3858, 1.442695
        %v4463 = vpow.pop %v4462
        %v4464 = vmul.f32 %v3859, 1.442695
        %v4465 = vpow.pop %v4464
        %v4466 = vmul.f32 %v3860, 1.442695
        %v4467 = vpow.pop %v4466
        %v4468 = vmul.f32 %v3861, 1.442695
        %v4469 = vpow.pop %v4468
        %v4470 = vmul.f32 %v3862, 1.442695
        %v4471 = vpow.pop %v4470
        %v4472 = vmul.f32 %v3863, 1.442695
        %v4473 = vpow.pop %v4472
        %v4474 = vmul.f32 %v3864, 1.442695
        %v4475 = vpow.pop %v4474
        %v4476 = vmul.f32 %v3865, 1.442695
        %v4477 = vpow.pop %v4476
        %v4478 = vmul.f32 %v3866, 1.442695
        %v4479 = vpow.pop %v4478
        %v4480 = vmul.f32 %v3867, 1.442695
        %v4481 = vpow.pop %v4480
        %v4482 = vmul.f32 %v3868, 1.442695
        %v4483 = vpow.pop %v4482
        %v4484 = vmul.f32 %v3869, 1.442695
        %v4485 = vpow.pop %v4484
        %v4486 = vmul.f32 %v3870, 1.442695
        %v4487 = vpow.pop %v4486
        %v4488 = vmul.f32 %v3871, 1.442695
        %v4489 = vpow.pop %v4488
        %v4490 = vmul.f32 %v3872, 1.442695
        %v4491 = vpow.pop %v4490
        %v4492 = vmul.f32 %v3873, 1.442695
        %v4493 = vpow.pop %v4492
        %v4494 = vmul.f32 %v3874, 1.442695
        %v4495 = vpow.pop %v4494
        %v4496 = vmul.f32 %v3875, 1.442695
        %v4497 = vpow.pop %v4496
        %v4498 = vmul.f32 %v3876, 1.442695
        %v4499 = vpow.pop %v4498
        %v4500 = vmul.f32 %v3877, 1.442695
        %v4501 = vpow.pop %v4500
        %v4502 = vmul.f32 %v3878, 1.442695
        %v4503 = vpow.pop %v4502
        %v4504 = vmul.f32 %v3879, 1.442695
        %v4505 = vpow.pop %v4504
        %v4506 = vmul.f32 %v3880, 1.442695
        %v4507 = vpow.pop %v4506
        %v4508 = vmul.f32 %v3881, 1.442695
        %v4509 = vpow.pop %v4508
        %v4510 = vmul.f32 %v3882, 1.442695
        %v4511 = vpow.pop %v4510
        %v4512 = vmul.f32 %v3883, 1.442695
        %v4513 = vpow.pop %v4512
        %v4514 = vmul.f32 %v3884, 1.442695
        %v4515 = vpow.pop %v4514
        %v4516 = vmul.f32 %v3885, 1.442695
        %v4517 = vpow.pop %v4516
        %v4518 = vmul.f32 %v3886, 1.442695
        %v4519 = vpow.pop %v4518
        %v4520 = vmul.f32 %v3887, 1.442695
        %v4521 = vpow.pop %v4520
        %v4522 = vmul.f32 %v3888, 1.442695
        %v4523 = vpow.pop %v4522
        %v4524 = vmul.f32 %v3889, 1.442695
        %v4525 = vpow.pop %v4524
        %v4526 = vmul.f32 %v3890, 1.442695
        %v4527 = vpow.pop %v4526
        %v4528 = vmul.f32 %v3891, 1.442695
        %v4529 = vpow.pop %v4528
        %v4530 = vmul.f32 %v3892, 1.442695
        %v4531 = vpow.pop %v4530
        %v4532 = vmul.f32 %v3893, 1.442695
        %v4533 = vpow.pop %v4532
        %v4534 = vmul.f32 %v3894, 1.442695
        %v4535 = vpow.pop %v4534
        %v4536 = vmul.f32 %v3895, 1.442695
        %v4537 = vpow.pop %v4536
        %v4538 = vmul.f32 %v3896, 1.442695
        %v4539 = vpow.pop %v4538
        %v4540 = vmul.f32 %v3897, 1.442695
        %v4541 = vpow.pop %v4540
        %v4542 = vmul.f32 %v3898, 1.442695
        %v4543 = vpow.pop %v4542
        %v4544 = vmul.f32 %v3899, 1.442695
        %v4545 = vpow.pop %v4544
        %v4546 = vmul.f32 %v3900, 1.442695
        %v4547 = vpow.pop %v4546
        %v4548 = vmul.f32 %v3901, 1.442695
        %v4549 = vpow.pop %v4548
        %v4550 = vmul.f32 %v3902, 1.442695
        %v4551 = vpow.pop %v4550
        %v4552 = vmul.f32 %v3903, 1.442695
        %v4553 = vpow.pop %v4552
        %v4554 = vmul.f32 %v3904, 1.442695
        %v4555 = vpow.pop %v4554
        %v4556 = vmul.f32 %v3905, 1.442695
        %v4557 = vpow.pop %v4556
        %v4558 = vmul.f32 %v3906, 1.442695
        %v4559 = vpow.pop %v4558
        %v4560 = vmul.f32 %v3907, 1.442695
        %v4561 = vpow.pop %v4560
        %v4562 = vmul.f32 %v3908, 1.442695
        %v4563 = vpow.pop %v4562
        %v4564 = vmul.f32 %v3909, 1.442695
        %v4565 = vpow.pop %v4564
        %v4566 = vmul.f32 %v3910, 1.442695
        %v4567 = vpow.pop %v4566
        %v4568 = vmul.f32 %v3911, 1.442695
        %v4569 = vpow.pop %v4568
        %v4570 = vmul.f32 %v3912, 1.442695
        %v4571 = vpow.pop %v4570
        %v4572 = vmul.f32 %v3913, 1.442695
        %v4573 = vpow.pop %v4572
        %v4574 = vmul.f32 %v3914, 1.442695
        %v4575 = vpow.pop %v4574
        %v4576 = vmul.f32 %v3915, 1.442695
        %v4577 = vpow.pop %v4576
        %v4578 = vmul.f32 %v3916, 1.442695
        %v4579 = vpow.pop %v4578
        %v4580 = vmul.f32 %v3917, 1.442695
        %v4581 = vpow.pop %v4580
        %v4582 = vmul.f32 %v3918, 1.442695
        %v4583 = vpow.pop %v4582
        %v4584 = vmul.f32 %v3919, 1.442695
        %v4585 = vpow.pop %v4584
        %v4586 = vmul.f32 %v3920, 1.442695
        %v4587 = vpow.pop %v4586
        %v4588 = vmul.f32 %v3921, 1.442695
        %v4589 = vpow.pop %v4588
        %v4590 = vmul.f32 %v3922, 1.442695
        %v4591 = vpow.pop %v4590
        %v4592 = vmul.f32 %v3923, 1.442695
        %v4593 = vpow.pop %v4592
        %v4594 = vmul.f32 %v3924, 1.442695
        %v4595 = vpow.pop %v4594
        %v4596 = vmul.f32 %v3925, 1.442695
        %v4597 = vpow.pop %v4596
        %v4598 = vmul.f32 %v3926, 1.442695
        %v4599 = vpow.pop %v4598
        %v4600 = vmul.f32 %v3927, 1.442695
        %v4601 = vpow.pop %v4600
        %v4602 = vmul.f32 %v3928, 1.442695
        %v4603 = vpow.pop %v4602
        %v4604 = vmul.f32 %v3929, 1.442695
        %v4605 = vpow.pop %v4604
        %v4606 = vmul.f32 %v3930, 1.442695
        %v4607 = vpow.pop %v4606
        %v4608 = vmul.f32 %v3931, 1.442695
        %v4609 = vpow.pop %v4608
        %v4610 = vmul.f32 %v3932, 1.442695
        %v4611 = vpow.pop %v4610
        %v4612 = vmul.f32 %v3933, 1.442695
        %v4613 = vpow.pop %v4612
        %v4614 = vmul.f32 %v3934, 1.442695
        %v4615 = vpow.pop %v4614
        %v4616 = vmul.f32 %v3935, 1.442695
        %v4617 = vpow.pop %v4616
        %v4618 = vmul.f32 %v3936, 1.442695
        %v4619 = vpow.pop %v4618
        %v4620 = vmul.f32 %v3937, 1.442695
        %v4621 = vpow.pop %v4620
        %v4622 = vmul.f32 %v3938, 1.442695
        %v4623 = vpow.pop %v4622
        %v4624 = vmul.f32 %v3939, 1.442695
        %v4625 = vpow.pop %v4624
        %v4626 = vmul.f32 %v3940, 1.442695
        %v4627 = vpow.pop %v4626
        %v4628 = vmul.f32 %v3941, 1.442695
        %v4629 = vpow.pop %v4628
        %v4630 = vmul.f32 %v3942, 1.442695
        %v4631 = vpow.pop %v4630
        %v4632 = vmul.f32 %v3943, 1.442695
        %v4633 = vpow.pop %v4632
        %v4634 = vmul.f32 %v3944, 1.442695
        %v4635 = vpow.pop %v4634
        %v4636 = vmul.f32 %v3945, 1.442695
        %v4637 = vpow.pop %v4636
        %v4638 = vmul.f32 %v3946, 1.442695
        %v4639 = vpow.pop %v4638
        %v4640 = vmul.f32 %v3947, 1.442695
        %v4641 = vpow.pop %v4640
        %v4642 = vmul.f32 %v3948, 1.442695
        %v4643 = vpow.pop %v4642
        %v4644 = vmul.f32 %v3949, 1.442695
        %v4645 = vpow.pop %v4644
        %v4646 = vmul.f32 %v3950, 1.442695
        %v4647 = vpow.pop %v4646
        %v4648 = vmul.f32 %v3951, 1.442695
        %v4649 = vpow.pop %v4648
        %v4650 = vmul.f32 %v3952, 1.442695
        %v4651 = vpow.pop %v4650
        %v4652 = vmul.f32 %v3953, 1.442695
        %v4653 = vpow.pop %v4652
        %v4654 = vmul.f32 %v3954, 1.442695
        %v4655 = vpow.pop %v4654
        %v4656 = vmul.f32 %v3955, 1.442695
        %v4657 = vpow.pop %v4656
        %v4658 = vmul.f32 %v3956, 1.442695
        %v4659 = vpow.pop %v4658
        %v4660 = vmul.f32 %v3957, 1.442695
        %v4661 = vpow.pop %v4660
        %v4662 = vmul.f32 %v3958, 1.442695
        %v4663 = vpow.pop %v4662
        %v4664 = vmul.f32 %v3959, 1.442695
        %v4665 = vpow.pop %v4664
        %v4666 = vmul.f32 %v3960, 1.442695
        %v4667 = vpow.pop %v4666
        %v4668 = vmul.f32 %v3961, 1.442695
        %v4669 = vpow.pop %v4668
        %v4670 = vmul.f32 %v3962, 1.442695
        %v4671 = vpow.pop %v4670
        %v4672 = vmul.f32 %v3963, 1.442695
        %v4673 = vpow.pop %v4672
        %v4674 = vmul.f32 %v3964, 1.442695
        %v4675 = vpow.pop %v4674
        %v4676 = vmul.f32 %v3965, 1.442695
        %v4677 = vpow.pop %v4676
        %v4678 = vmul.f32 %v3966, 1.442695
        %v4679 = vpow.pop %v4678
        %v4680 = vmul.f32 %v3967, 1.442695
        %v4681 = vpow.pop %v4680
        %v4682 = vmul.f32 %v3968, 1.442695
        %v4683 = vpow.pop %v4682
        %v4684 = vmul.f32 %v3969, 1.442695
        %v4685 = vpow.pop %v4684
        %v4686 = vmul.f32 %v3970, 1.442695
        %v4687 = vpow.pop %v4686
        %v4688 = vmul.f32 %v3971, 1.442695
        %v4689 = vpow.pop %v4688
        %v4690 = vmul.f32 %v3972, 1.442695
        %v4691 = vpow.pop %v4690
        %v4692 = vmul.f32 %v3973, 1.442695
        %v4693 = vpow.pop %v4692
        %v4694 = vmul.f32 %v3974, 1.442695
        %v4695 = vpow.pop %v4694
        %v4696 = vmul.f32 %v3975, 1.442695
        %v4697 = vpow.pop %v4696
        %v4698 = vmul.f32 %v3976, 1.442695
        %v4699 = vpow.pop %v4698
        %v4700 = vmul.f32 %v3977, 1.442695
        %v4701 = vpow.pop %v4700
        %v4702 = vmul.f32 %v3978, 1.442695
        %v4703 = vpow.pop %v4702
        %v4704 = vmul.f32 %v3979, 1.442695
        %v4705 = vpow.pop %v4704
        %v4706 = vmul.f32 %v3980, 1.442695
        %v4707 = vpow.pop %v4706
        %v4708 = vmul.f32 %v3981, 1.442695
        %v4709 = vpow.pop %v4708
        %v4710 = vmul.f32 %v3982, 1.442695
        %v4711 = vpow.pop %v4710
        %v4712 = vmul.f32 %v3983, 1.442695
        %v4713 = vpow.pop %v4712
        %v4714 = vmul.f32 %v3984, 1.442695
        %v4715 = vpow.pop %v4714
        %v4716 = vmul.f32 %v3985, 1.442695
        %v4717 = vpow.pop %v4716
        %v4718 = vmul.f32 %v3986, 1.442695
        %v4719 = vpow.pop %v4718
        %v4720 = vmul.f32 %v3987, 1.442695
        %v4721 = vpow.pop %v4720
        %v4722 = vmul.f32 %v3988, 1.442695
        %v4723 = vpow.pop %v4722
        %v4724 = vmul.f32 %v3989, 1.442695
        %v4725 = vpow.pop %v4724
        %v4726 = vmul.f32 %v3990, 1.442695
        %v4727 = vpow.pop %v4726
        %v4728 = vmul.f32 %v3991, 1.442695
        %v4729 = vpow.pop %v4728
        %v4730 = vmul.f32 %v3992, 1.442695
        %v4731 = vpow.pop %v4730
        %v4732 = vmul.f32 %v3993, 1.442695
        %v4733 = vpow.pop %v4732
        %v4734 = vmul.f32 %v3994, 1.442695
        %v4735 = vpow.pop %v4734
        %v4736 = vmul.f32 %v3995, 1.442695
        %v4737 = vpow.pop %v4736
        %v4738 = vmul.f32 %v3996, 1.442695
        %v4739 = vpow.pop %v4738
        %v4740 = vmul.f32 %v3997, 1.442695
        %v4741 = vpow.pop %v4740
        %v4742 = vmul.f32 %v3998, 1.442695
        %v4743 = vpow.pop %v4742
        %v4744 = vmul.f32 %v3999, 1.442695
        %v4745 = vpow.pop %v4744
        %v4746 = vmul.f32 %v4000, 1.442695
        %v4747 = vpow.pop %v4746
        %v4748 = vmul.f32 %v4001, 1.442695
        %v4749 = vpow.pop %v4748
        %v4750 = vmul.f32 %v4002, 1.442695
        %v4751 = vpow.pop %v4750
        %v4752 = vmul.f32 %v4003, 1.442695
        %v4753 = vpow.pop %v4752
        %v4754 = vmul.f32 %v4004, 1.442695
        %v4755 = vpow.pop %v4754
        %v4756 = vmul.f32 %v4005, 1.442695
        %v4757 = vpow.pop %v4756
        %v4758 = vmul.f32 %v4006, 1.442695
        %v4759 = vpow.pop %v4758
        %v4760 = vmul.f32 %v4007, 1.442695
        %v4761 = vpow.pop %v4760
        %v4762 = vmul.f32 %v4008, 1.442695
        %v4763 = vpow.pop %v4762
        %v4764 = vmul.f32 %v4009, 1.442695
        %v4765 = vpow.pop %v4764
        %v4766 = vmul.f32 %v4010, 1.442695
        %v4767 = vpow.pop %v4766
        %v4768 = vmul.f32 %v4011, 1.442695
        %v4769 = vpow.pop %v4768
        %v4770 = vmul.f32 %v4012, 1.442695
        %v4771 = vpow.pop %v4770
        %v4772 = vmul.f32 %v4013, 1.442695
        %v4773 = vpow.pop %v4772
        %v4774 = vmul.f32 %v4014, 1.442695
        %v4775 = vpow.pop %v4774
        %v4776 = vmul.f32 %v4015, 1.442695
        %v4777 = vpow.pop %v4776
        %v4778 = vmul.f32 %v4016, 1.442695
        %v4779 = vpow.pop %v4778
        %v4780 = vmul.f32 %v4017, 1.442695
        %v4781 = vpow.pop %v4780
        %v4782 = vmul.f32 %v4018, 1.442695
        %v4783 = vpow.pop %v4782
        %v4784 = vmul.f32 %v4019, 1.442695
        %v4785 = vpow.pop %v4784
        %v4786 = vmul.f32 %v4020, 1.442695
        %v4787 = vpow.pop %v4786
        %v4788 = vmul.f32 %v4021, 1.442695
        %v4789 = vpow.pop %v4788
        %v4790 = vmul.f32 %v4022, 1.442695
        %v4791 = vpow.pop %v4790
        %v4792 = vmul.f32 %v4023, 1.442695
        %v4793 = vpow.pop %v4792
        %v4794 = vmul.f32 %v4024, 1.442695
        %v4795 = vpow.pop %v4794
        %v4796 = vmul.f32 %v4025, 1.442695
        %v4797 = vpow.pop %v4796
        %v4798 = vmul.f32 %v4026, 1.442695
        %v4799 = vpow.pop %v4798
        %v4800 = vmul.f32 %v4027, 1.442695
        %v4801 = vpow.pop %v4800
        %v4802 = vmul.f32 %v4028, 1.442695
        %v4803 = vpow.pop %v4802
        %v4804 = vmul.f32 %v4029, 1.442695
        %v4805 = vpow.pop %v4804
        %v4806 = vmul.f32 %v4030, 1.442695
        %v4807 = vpow.pop %v4806
        %v4808 = vmul.f32 %v4031, 1.442695
        %v4809 = vpow.pop %v4808
        %v4810 = vmul.f32 %v4032, 1.442695
        %v4811 = vpow.pop %v4810
        %v4812 = vmul.f32 %v4033, 1.442695
        %v4813 = vpow.pop %v4812
        %v4814 = vmul.f32 %v4034, 1.442695
        %v4815 = vpow.pop %v4814
        %v4816 = vmul.f32 %v4035, 1.442695
        %v4817 = vpow.pop %v4816
        %v4818 = vmul.f32 %v4036, 1.442695
        %v4819 = vpow.pop %v4818
        %v4820 = vmul.f32 %v4037, 1.442695
        %v4821 = vpow.pop %v4820
        %v4822 = vmul.f32 %v4038, 1.442695
        %v4823 = vpow.pop %v4822
        %v4824 = vmul.f32 %v4039, 1.442695
        %v4825 = vpow.pop %v4824
        %v4826 = vmul.f32 %v4040, 1.442695
        %v4827 = vpow.pop %v4826
        %v4828 = vmul.f32 %v4041, 1.442695
        %v4829 = vpow.pop %v4828
        %v4830 = vmul.f32 %v4042, 1.442695
        %v4831 = vpow.pop %v4830
        %v4832 = vmul.f32 %v4043, 1.442695
        %v4833 = vpow.pop %v4832
        %v4834 = vmul.f32 %v4044, 1.442695
        %v4835 = vpow.pop %v4834
        %v4836 = vmul.f32 %v4045, 1.442695
        %v4837 = vpow.pop %v4836
        %v4838 = vmul.f32 %v4046, 1.442695
        %v4839 = vpow.pop %v4838
        %v4840 = vmul.f32 %v4047, 1.442695
        %v4841 = vpow.pop %v4840
        %v4842 = vmul.f32 %v4048, 1.442695
        %v4843 = vpow.pop %v4842
        %v4844 = vmul.f32 %v4049, 1.442695
        %v4845 = vpow.pop %v4844
        %v4846 = vmul.f32 %v4050, 1.442695
        %v4847 = vpow.pop %v4846
        %v4848 = vmul.f32 %v4051, 1.442695
        %v4849 = vpow.pop %v4848
        %v4850 = vmul.f32 %v4052, 1.442695
        %v4851 = vpow.pop %v4850
        %v4852 = vmul.f32 %v4053, 1.442695
        %v4853 = vpow.pop %v4852
        %v4854 = vmul.f32 %v4054, 1.442695
        %v4855 = vpow.pop %v4854
        %v4856 = vmul.f32 %v4055, 1.442695
        %v4857 = vpow.pop %v4856
        %v4858 = vmul.f32 %v4056, 1.442695
        %v4859 = vpow.pop %v4858
        %v4860 = vmul.f32 %v4057, 1.442695
        %v4861 = vpow.pop %v4860
        %v4862 = vmul.f32 %v4058, 1.442695
        %v4863 = vpow.pop %v4862
        %v4864 = vmul.f32 %v4059, 1.442695
        %v4865 = vpow.pop %v4864
        %v4866 = vmul.f32 %v4060, 1.442695
        %v4867 = vpow.pop %v4866
        %v4868 = vmul.f32 %v4061, 1.442695
        %v4869 = vpow.pop %v4868
        %v4870 = vmul.f32 %v4062, 1.442695
        %v4871 = vpow.pop %v4870
        %v4872 = vmul.f32 %v4063, 1.442695
        %v4873 = vpow.pop %v4872
        %v4874 = vmul.f32 %v4064, 1.442695
        %v4875 = vpow.pop %v4874
        %v4876 = vmul.f32 %v4065, 1.442695
        %v4877 = vpow.pop %v4876
        %v4878 = vmul.f32 %v4066, 1.442695
        %v4879 = vpow.pop %v4878
        %v4880 = vmul.f32 %v4067, 1.442695
        %v4881 = vpow.pop %v4880
        %v4882 = vmul.f32 %v4068, 1.442695
        %v4883 = vpow.pop %v4882
        %v4884 = vmul.f32 %v4069, 1.442695
        %v4885 = vpow.pop %v4884
        %v4886 = vmul.f32 %v4070, 1.442695
        %v4887 = vpow.pop %v4886
        %v4888 = vmul.f32 %v4071, 1.442695
        %v4889 = vpow.pop %v4888
        %v4890 = vmul.f32 %v4072, 1.442695
        %v4891 = vpow.pop %v4890
        %v4892 = vmul.f32 %v4073, 1.442695
        %v4893 = vpow.pop %v4892
        %v4894 = vmul.f32 %v4074, 1.442695
        %v4895 = vpow.pop %v4894
        %v4896 = vmul.f32 %v4075, 1.442695
        %v4897 = vpow.pop %v4896
        %v4898 = vmul.f32 %v4076, 1.442695
        %v4899 = vpow.pop %v4898
        %v4900 = vmul.f32 %v4077, 1.442695
        %v4901 = vpow.pop %v4900
        %v4902 = vmul.f32 %v4078, 1.442695
        %v4903 = vpow.pop %v4902
        %v4904 = vmul.f32 %v4079, 1.442695
        %v4905 = vpow.pop %v4904
        %v4906 = vmul.f32 %v4080, 1.442695
        %v4907 = vpow.pop %v4906
        %v4908 = vmul.f32 %v4081, 1.442695
        %v4909 = vpow.pop %v4908
        %v4910 = vmul.f32 %v4082, 1.442695
        %v4911 = vpow.pop %v4910
        %v4912 = vmul.f32 %v4083, 1.442695
        %v4913 = vpow.pop %v4912
        %v4914 = vmul.f32 %v4084, 1.442695
        %v4915 = vpow.pop %v4914
        %v4916 = vmul.f32 %v4085, 1.442695
        %v4917 = vpow.pop %v4916
        %v4918 = vmul.f32 %v4086, 1.442695
        %v4919 = vpow.pop %v4918
        %v4920 = vmul.f32 %v4087, 1.442695
        %v4921 = vpow.pop %v4920
        %v4922 = vmul.f32 %v4088, 1.442695
        %v4923 = vpow.pop %v4922
        %v4924 = vmul.f32 %v4089, 1.442695
        %v4925 = vpow.pop %v4924
        %v4926 = vmul.f32 %v4090, 1.442695
        %v4927 = vpow.pop %v4926
        %v4928 = vmul.f32 %v4091, 1.442695
        %v4929 = vpow.pop %v4928
        %v4930 = vmul.f32 %v4092, 1.442695
        %v4931 = vpow.pop %v4930
        %v4932 = vmul.f32 %v4093, 1.442695
        %v4933 = vpow.pop %v4932
        %v4934 = vmul.f32 %v4094, 1.442695
        %v4935 = vpow.pop %v4934
        %v4936 = vmul.f32 %v4095, 1.442695
        %v4937 = vpow.pop %v4936
        %v4938 = vmul.f32 %v4096, 1.442695
        %v4939 = vpow.pop %v4938
        %v4940 = vmul.f32 %v4097, 1.442695
        %v4941 = vpow.pop %v4940
        %v4942 = vmul.f32 %v4098, 1.442695
        %v4943 = vpow.pop %v4942
        %v4944 = vmul.f32 %v4099, 1.442695
        %v4945 = vpow.pop %v4944
        %v4946 = vmul.f32 %v4100, 1.442695
        %v4947 = vpow.pop %v4946
        %v4948 = vmul.f32 %v4101, 1.442695
        %v4949 = vpow.pop %v4948
        %v4950 = vmul.f32 %v4102, 1.442695
        %v4951 = vpow.pop %v4950
        %v4952 = vmul.f32 %v4103, 1.442695
        %v4953 = vpow.pop %v4952
        %v4954 = vmul.f32 %v4104, 1.442695
        %v4955 = vpow.pop %v4954
        %v4956 = vmul.f32 %v4105, 1.442695
        %v4957 = vpow.pop %v4956
        %v4958 = vmul.f32 %v4106, 1.442695
        %v4959 = vpow.pop %v4958
        %v4960 = vmul.f32 %v4107, 1.442695
        %v4961 = vpow.pop %v4960
        %v4962 = vmul.f32 %v4108, 1.442695
        %v4963 = vpow.pop %v4962
        %v4964 = vmul.f32 %v4109, 1.442695
        %v4965 = vpow.pop %v4964
        %v4966 = vmul.f32 %v4110, 1.442695
        %v4967 = vpow.pop %v4966
        %v4968 = vmul.f32 %v4111, 1.442695
        %v4969 = vpow.pop %v4968
        %v4970 = vmul.f32 %v4112, 1.442695
        %v4971 = vpow.pop %v4970
        %v4972 = vmul.f32 %v4113, 1.442695
        %v4973 = vpow.pop %v4972
        %v4974 = vmul.f32 %v4114, 1.442695
        %v4975 = vpow.pop %v4974
        %v4976 = vmul.f32 %v4115, 1.442695
        %v4977 = vpow.pop %v4976
        %v4978 = vmul.f32 %v4116, 1.442695
        %v4979 = vpow.pop %v4978
        %v4980 = vmul.f32 %v4117, 1.442695
        %v4981 = vpow.pop %v4980
        %v4982 = vmul.f32 %v4118, 1.442695
        %v4983 = vpow.pop %v4982
        %v4984 = vmul.f32 %v4119, 1.442695
        %v4985 = vpow.pop %v4984
        %v4986 = vmul.f32 %v4120, 1.442695
        %v4987 = vpow.pop %v4986
        %v4988 = vmul.f32 %v4121, 1.442695
        %v4989 = vpow.pop %v4988
        %v4990 = vmul.f32 %v4122, 1.442695
        %v4991 = vpow.pop %v4990
        %v4992 = vmul.f32 %v4123, 1.442695
        %v4993 = vpow.pop %v4992
        %v4994 = vmul.f32 %v4124, 1.442695
        %v4995 = vpow.pop %v4994
        %v4996 = vmul.f32 %v4125, 1.442695
        %v4997 = vpow.pop %v4996
        %v4998 = vmul.f32 %v4126, 1.442695
        %v4999 = vpow.pop %v4998
        %v5000 = vmul.f32 %v4127, 1.442695
        %v5001 = vpow.pop %v5000
        %v5002 = vmul.f32 %v4128, 1.442695
        %v5003 = vpow.pop %v5002
        %v5004 = vmul.f32 %v4129, 1.442695
        %v5005 = vpow.pop %v5004
        %v5006 = vmul.f32 %v4130, 1.442695
        %v5007 = vpow.pop %v5006
        %v5008 = vmul.f32 %v4131, 1.442695
        %v5009 = vpow.pop %v5008
        %v5010 = vmul.f32 %v4132, 1.442695
        %v5011 = vpow.pop %v5010
        %v5012 = vmul.f32 %v4133, 1.442695
        %v5013 = vpow.pop %v5012
        %v5014 = vmul.f32 %v4134, 1.442695
        %v5015 = vpow.pop %v5014
        %v5016 = vmul.f32 %v4135, 1.442695
        %v5017 = vpow.pop %v5016
        %v5018 = vmul.f32 %v4136, 1.442695
        %v5019 = vpow.pop %v5018
        %v5020 = vmul.f32 %v4137, 1.442695
        %v5021 = vpow.pop %v5020
        %v5022 = vmul.f32 %v4138, 1.442695
        %v5023 = vpow.pop %v5022
        %v5024 = vmul.f32 %v4139, 1.442695
        %v5025 = vpow.pop %v5024
        %v5026 = vmul.f32 %v4140, 1.442695
        %v5027 = vpow.pop %v5026
        %v5028 = vmul.f32 %v4141, 1.442695
        %v5029 = vpow.pop %v5028
        %v5030 = vmul.f32 %v4142, 1.442695
        %v5031 = vpow.pop %v5030
        %v5032 = vmul.f32 %v4143, 1.442695
        %v5033 = vpow.pop %v5032
        %v5034 = vmul.f32 %v4144, 1.442695
        %v5035 = vpow.pop %v5034
        %v5036 = vmul.f32 %v4145, 1.442695
        %v5037 = vpow.pop %v5036
        %v5038 = vmul.f32 %v4146, 1.442695
        %v5039 = vpow.pop %v5038
        %v5040 = vmul.f32 %v4147, 1.442695
        %v5041 = vpow.pop %v5040
        %v5042 = vmul.f32 %v4148, 1.442695
        %v5043 = vpow.pop %v5042
        %v5044 = vmul.f32 %v4149, 1.442695
        %v5045 = vpow.pop %v5044
        %v5046 = vmul.f32 %v4150, 1.442695
        %v5047 = vpow.pop %v5046
        %v5048 = vmul.f32 %v4151, 1.442695
        %v5049 = vpow.pop %v5048
        %v5050 = vmul.f32 %v4152, 1.442695
        %v5051 = vpow.pop %v5050
        %v5052 = vmul.f32 %v4153, 1.442695
        %v5053 = vpow.pop %v5052
        %v5054 = vmul.f32 %v4154, 1.442695
        %v5055 = vpow.pop %v5054
        %v5056 = vmul.f32 %v4155, 1.442695
        %v5057 = vpow.pop %v5056
        %v5058 = vmul.f32 %v4156, 1.442695
        %v5059 = vpow.pop %v5058
        %v5060 = vmul.f32 %v4157, 1.442695
        %v5061 = vpow.pop %v5060
        %v5062 = vmul.f32 %v4158, 1.442695
        %v5063 = vpow.pop %v5062
        %v5064 = vmul.f32 %v4159, 1.442695
        %v5065 = vpow.pop %v5064
        %v5066 = vmul.f32 %v4160, 1.442695
        %v5067 = vpow.pop %v5066
        %v5068 = vmul.f32 %v4161, 1.442695
        %v5069 = vpow.pop %v5068
        %v5070 = vmul.f32 %v4162, 1.442695
        %v5071 = vpow.pop %v5070
        %v5072 = vmul.f32 %v4163, 1.442695
        %v5073 = vpow.pop %v5072
        %v5074 = vmul.f32 %v4164, 1.442695
        %v5075 = vpow.pop %v5074
        %v5076 = vmul.f32 %v4165, 1.442695
        %v5077 = vpow.pop %v5076
        %v5078 = vmul.f32 %v4166, 1.442695
        %v5079 = vpow.pop %v5078
        %v5080 = vmul.f32 %v4167, 1.442695
        %v5081 = vpow.pop %v5080
        %v5082 = vmul.f32 %v4168, 1.442695
        %v5083 = vpow.pop %v5082
        %v5084 = vmul.f32 %v4169, 1.442695
        %v5085 = vpow.pop %v5084
        %v5086 = vmul.f32 %v4170, 1.442695
        %v5087 = vpow.pop %v5086
        %v5088 = vmul.f32 %v4171, 1.442695
        %v5089 = vpow.pop %v5088
        %v5090 = vmul.f32 %v4172, 1.442695
        %v5091 = vpow.pop %v5090
        %v5092 = vmul.f32 %v4173, 1.442695
        %v5093 = vpow.pop %v5092
        %v5094 = vmul.f32 %v4174, 1.442695
        %v5095 = vpow.pop %v5094
        %v5096 = vmul.f32 %v4175, 1.442695
        %v5097 = vpow.pop %v5096
        %v5098 = vmul.f32 %v4176, 1.442695
        %v5099 = vpow.pop %v5098
        %v5100 = vmul.f32 %v4177, 1.442695
        %v5101 = vpow.pop %v5100
        %v5102 = vmul.f32 %v4178, 1.442695
        %v5103 = vpow.pop %v5102
        %v5104 = vmul.f32 %v4179, 1.442695
        %v5105 = vpow.pop %v5104
        %v5106 = vmul.f32 %v4180, 1.442695
        %v5107 = vpow.pop %v5106
        %v5108 = vmul.f32 %v4181, 1.442695
        %v5109 = vpow.pop %v5108
        %v5110 = vmul.f32 %v4182, 1.442695
        %v5111 = vpow.pop %v5110
        %v5112 = vmul.f32 %v4183, 1.442695
        %v5113 = vpow.pop %v5112
        %v5114 = vmul.f32 %v4184, 1.442695
        %v5115 = vpow.pop %v5114
        %v5116 = vmul.f32 %v4185, 1.442695
        %v5117 = vpow.pop %v5116
        %v5118 = vmul.f32 %v4186, 1.442695
        %v5119 = vpow.pop %v5118
        %v5120 = vmul.f32 %v4187, 1.442695
        %v5121 = vpow.pop %v5120
        %v5122 = vmul.f32 %v4188, 1.442695
        %v5123 = vpow.pop %v5122
        %v5124 = vmul.f32 %v4189, 1.442695
        %v5125 = vpow.pop %v5124
        %v5126 = vmul.f32 %v4190, 1.442695
        %v5127 = vpow.pop %v5126
        %v5128 = vmul.f32 %v4191, 1.442695
        %v5129 = vpow.pop %v5128
        %v5130 = vmul.f32 %v4192, 1.442695
        %v5131 = vpow.pop %v5130
        %v5132 = vmul.f32 %v4193, 1.442695
        %v5133 = vpow.pop %v5132
        %v5134 = vmul.f32 %v4194, 1.442695
        %v5135 = vpow.pop %v5134
        %v5136 = vmul.f32 %v4195, 1.442695
        %v5137 = vpow.pop %v5136
        %v5138 = vmul.f32 %v4196, 1.442695
        %v5139 = vpow.pop %v5138
        %v5140 = vmul.f32 %v4197, 1.442695
        %v5141 = vpow.pop %v5140
        %v5142 = vmul.f32 %v4198, 1.442695
        %v5143 = vpow.pop %v5142
        %v5144 = vmul.f32 %v4199, 1.442695
        %v5145 = vpow.pop %v5144
        %v5146 = vmul.f32 %v4200, 1.442695
        %v5147 = vpow.pop %v5146
        %v5148 = vmul.f32 %v4201, 1.442695
        %v5149 = vpow.pop %v5148
        %v5150 = vmul.f32 %v4202, 1.442695
        %v5151 = vpow.pop %v5150
        %v5152 = vmul.f32 %v4203, 1.442695
        %v5153 = vpow.pop %v5152
        %v5154 = vmul.f32 %v4204, 1.442695
        %v5155 = vpow.pop %v5154
        %v5156 = vmul.f32 %v4205, 1.442695
        %v5157 = vpow.pop %v5156
        %v5158 = vmul.f32 %v4206, 1.442695
        %v5159 = vpow.pop %v5158
        %v5160 = vmul.f32 %v4207, 1.442695
        %v5161 = vpow.pop %v5160
        %v5162 = vmul.f32 %v4208, 1.442695
        %v5163 = vpow.pop %v5162
        %v5164 = vmul.f32 %v4209, 1.442695
        %v5165 = vpow.pop %v5164
        %v5166 = vmul.f32 %v4210, 1.442695
        %v5167 = vpow.pop %v5166
        %v5168 = vmul.f32 %v4211, 1.442695
        %v5169 = vpow.pop %v5168
        %v5170 = vmul.f32 %v4212, 1.442695
        %v5171 = vpow.pop %v5170
        %v5172 = vmul.f32 %v4213, 1.442695
        %v5173 = vpow.pop %v5172
        %v5174 = vmul.f32 %v4214, 1.442695
        %v5175 = vpow.pop %v5174
        %v5176 = vmul.f32 %v4215, 1.442695
        %v5177 = vpow.pop %v5176
        %v5178 = vmul.f32 %v4216, 1.442695
        %v5179 = vpow.pop %v5178
        %v5180 = vmul.f32 %v4217, 1.442695
        %v5181 = vpow.pop %v5180
        %v5182 = vmul.f32 %v4218, 1.442695
        %v5183 = vpow.pop %v5182
        %v5184 = vmul.f32 %v4219, 1.442695
        %v5185 = vpow.pop %v5184
        %v5186 = vmul.f32 %v4220, 1.442695
        %v5187 = vpow.pop %v5186
        %v5188 = vmul.f32 %v4221, 1.442695
        %v5189 = vpow.pop %v5188
        %v5190 = vmul.f32 %v4222, 1.442695
        %v5191 = vpow.pop %v5190
        %v5192 = vmul.f32 %v4223, 1.442695
        %v5193 = vpow.pop %v5192
        %v5194 = vmul.f32 %v4224, 1.442695
        %v5195 = vpow.pop %v5194
        %v5196 = vmul.f32 %v4225, 1.442695
        %v5197 = vpow.pop %v5196
        %v5198 = vmul.f32 %v4226, 1.442695
        %v5199 = vpow.pop %v5198
        %v5200 = vmul.f32 %v4227, 1.442695
        %v5201 = vpow.pop %v5200
        %v5202 = vmul.f32 %v4228, 1.442695
        %v5203 = vpow.pop %v5202
        %v5204 = vmul.f32 %v4229, 1.442695
        %v5205 = vpow.pop %v5204
        %v5206 = vmul.f32 %v4230, 1.442695
        %v5207 = vpow.pop %v5206
        %v5208 = vmul.f32 %v4231, 1.442695
        %v5209 = vpow.pop %v5208
        %v5210 = vmul.f32 %v4232, 1.442695
        %v5211 = vpow.pop %v5210
        %v5212 = vmul.f32 %v4233, 1.442695
        %v5213 = vpow.pop %v5212
        %v5214 = vmul.f32 %v4234, 1.442695
        %v5215 = vpow.pop %v5214
        %v5216 = vmul.f32 %v4235, 1.442695
        %v5217 = vpow.pop %v5216
        %v5218 = vmul.f32 %v4236, 1.442695
        %v5219 = vpow.pop %v5218
        %v5220 = vmul.f32 %v4237, 1.442695
        %v5221 = vpow.pop %v5220
        %v5222 = vmul.f32 %v4238, 1.442695
        %v5223 = vpow.pop %v5222
        %v5224 = vmul.f32 %v4239, 1.442695
        %v5225 = vpow.pop %v5224
        %v5226 = vmul.f32 %v4240, 1.442695
        %v5227 = vpow.pop %v5226
        %v5228 = vmul.f32 %v4241, 1.442695
        %v5229 = vpow.pop %v5228
        %v5230 = vmul.f32 %v4242, 1.442695
        %v5231 = vpow.pop %v5230
        %v5232 = vmul.f32 %v4243, 1.442695
        %v5233 = vpow.pop %v5232
        %v5234 = vmul.f32 %v4244, 1.442695
        %v5235 = vpow.pop %v5234
        %v5236 = vmul.f32 %v4245, 1.442695
        %v5237 = vpow.pop %v5236
        %v5238 = vmul.f32 %v4246, 1.442695
        %v5239 = vpow.pop %v5238
        %v5240 = vmul.f32 %v4247, 1.442695
        %v5241 = vpow.pop %v5240
        %v5242 = vmul.f32 %v4248, 1.442695
        %v5243 = vpow.pop %v5242
        %v5244 = vmul.f32 %v4249, 1.442695
        %v5245 = vpow.pop %v5244
        %v5246 = vmul.f32 %v4250, 1.442695
        %v5247 = vpow.pop %v5246
        %v5248 = vmul.f32 %v4251, 1.442695
        %v5249 = vpow.pop %v5248
        %v5250 = vmul.f32 %v4252, 1.442695
        %v5251 = vpow.pop %v5250
        %v5252 = vmul.f32 %v4253, 1.442695
        %v5253 = vpow.pop %v5252
        %v5254 = vmul.f32 %v4254, 1.442695
        %v5255 = vpow.pop %v5254
        %v5256 = vmul.f32 %v4255, 1.442695
        %v5257 = vpow.pop %v5256
        %v5258 = vmul.f32 %v4256, 1.442695
        %v5259 = vpow.pop %v5258
        %v5260 = vmul.f32 %v4257, 1.442695
        %v5261 = vpow.pop %v5260
        %v5262 = vmul.f32 %v4258, 1.442695
        %v5263 = vpow.pop %v5262
        %v5264 = vmul.f32 %v4259, 1.442695
        %v5265 = vpow.pop %v5264
        %v5266 = vmul.f32 %v4260, 1.442695
        %v5267 = vpow.pop %v5266
        %v5268 = vmul.f32 %v4261, 1.442695
        %v5269 = vpow.pop %v5268
        %v5270 = vmul.f32 %v4262, 1.442695
        %v5271 = vpow.pop %v5270
        %v5272 = vmul.f32 %v4263, 1.442695
        %v5273 = vpow.pop %v5272
        %v5274 = vmul.f32 %v4264, 1.442695
        %v5275 = vpow.pop %v5274
        %v5276 = vmul.f32 %v4265, 1.442695
        %v5277 = vpow.pop %v5276
        %v5278 = vmul.f32 %v4266, 1.442695
        %v5279 = vpow.pop %v5278
        %v5280 = vmul.f32 %v4267, 1.442695
        %v5281 = vpow.pop %v5280
        %v5282 = vmul.f32 %v4268, 1.442695
        %v5283 = vpow.pop %v5282
        %v5284 = vmul.f32 %v4269, 1.442695
        %v5285 = vpow.pop %v5284
        %v5286 = vmul.f32 %v4270, 1.442695
        %v5287 = vpow.pop %v5286
        %v5288 = vmul.f32 %v4271, 1.442695
        %v5289 = vpow.pop %v5288
        %v5290 = vmul.f32 %v4272, 1.442695
        %v5291 = vpow.pop %v5290
        %v5292 = vmul.f32 %v4273, 1.442695
        %v5293 = vpow.pop %v5292
        %v5294 = vmul.f32 %v4274, 1.442695
        %v5295 = vpow.pop %v5294
        %v5296 = vmul.f32 %v4275, 1.442695
        %v5297 = vpow.pop %v5296
        %v5298 = vmul.f32 %v4276, 1.442695
        %v5299 = vpow.pop %v5298
        %v5300 = vmul.f32 %v4277, 1.442695
        %v5301 = vpow.pop %v5300
        %v5302 = vpack.c.bf16 %v4281, %v4279
        %v5303 = vpack.c.bf16 %v4285, %v4283
        %v5304 = vpack.c.bf16 %v4289, %v4287
        %v5305 = vpack.c.bf16 %v4293, %v4291
        %v5306 = vpack.c.bf16 %v4297, %v4295
        %v5307 = vpack.c.bf16 %v4301, %v4299
        %v5308 = vpack.c.bf16 %v4305, %v4303
        %v5309 = vpack.c.bf16 %v4309, %v4307
        %v5310 = vpack.c.bf16 %v4313, %v4311
        %v5311 = vpack.c.bf16 %v4317, %v4315
        %v5312 = vpack.c.bf16 %v4321, %v4319
        %v5313 = vpack.c.bf16 %v4325, %v4323
        %v5314 = vpack.c.bf16 %v4329, %v4327
        %v5315 = vpack.c.bf16 %v4333, %v4331
        %v5316 = vpack.c.bf16 %v4337, %v4335
        %v5317 = vpack.c.bf16 %v4341, %v4339
        %v5318 = vpack.c.bf16 %v4345, %v4343
        %v5319 = vpack.c.bf16 %v4349, %v4347
        %v5320 = vpack.c.bf16 %v4353, %v4351
        %v5321 = vpack.c.bf16 %v4357, %v4355
        %v5322 = vpack.c.bf16 %v4361, %v4359
        %v5323 = vpack.c.bf16 %v4365, %v4363
        %v5324 = vpack.c.bf16 %v4369, %v4367
        %v5325 = vpack.c.bf16 %v4373, %v4371
        %v5326 = vpack.c.bf16 %v4377, %v4375
        %v5327 = vpack.c.bf16 %v4381, %v4379
        %v5328 = vpack.c.bf16 %v4385, %v4383
        %v5329 = vpack.c.bf16 %v4389, %v4387
        %v5330 = vpack.c.bf16 %v4393, %v4391
        %v5331 = vpack.c.bf16 %v4397, %v4395
        %v5332 = vpack.c.bf16 %v4401, %v4399
        %v5333 = vpack.c.bf16 %v4405, %v4403
        %v5334 = vpack.c.bf16 %v4409, %v4407
        %v5335 = vpack.c.bf16 %v4413, %v4411
        %v5336 = vpack.c.bf16 %v4417, %v4415
        %v5337 = vpack.c.bf16 %v4421, %v4419
        %v5338 = vpack.c.bf16 %v4425, %v4423
        %v5339 = vpack.c.bf16 %v4429, %v4427
        %v5340 = vpack.c.bf16 %v4433, %v4431
        %v5341 = vpack.c.bf16 %v4437, %v4435
        %v5342 = vpack.c.bf16 %v4441, %v4439
        %v5343 = vpack.c.bf16 %v4445, %v4443
        %v5344 = vpack.c.bf16 %v4449, %v4447
        %v5345 = vpack.c.bf16 %v4453, %v4451
        %v5346 = vpack.c.bf16 %v4457, %v4455
        %v5347 = vpack.c.bf16 %v4461, %v4459
        %v5348 = vpack.c.bf16 %v4465, %v4463
        %v5349 = vpack.c.bf16 %v4469, %v4467
        %v5350 = vpack.c.bf16 %v4473, %v4471
        %v5351 = vpack.c.bf16 %v4477, %v4475
        %v5352 = vpack.c.bf16 %v4481, %v4479
        %v5353 = vpack.c.bf16 %v4485, %v4483
        %v5354 = vpack.c.bf16 %v4489, %v4487
        %v5355 = vpack.c.bf16 %v4493, %v4491
        %v5356 = vpack.c.bf16 %v4497, %v4495
        %v5357 = vpack.c.bf16 %v4501, %v4499
        %v5358 = vpack.c.bf16 %v4505, %v4503
        %v5359 = vpack.c.bf16 %v4509, %v4507
        %v5360 = vpack.c.bf16 %v4513, %v4511
        %v5361 = vpack.c.bf16 %v4517, %v4515
        %v5362 = vpack.c.bf16 %v4521, %v4519
        %v5363 = vpack.c.bf16 %v4525, %v4523
        %v5364 = vpack.c.bf16 %v4529, %v4527
        %v5365 = vpack.c.bf16 %v4533, %v4531
        %v5366 = vpack.c.bf16 %v4537, %v4535
        %v5367 = vpack.c.bf16 %v4541, %v4539
        %v5368 = vpack.c.bf16 %v4545, %v4543
        %v5369 = vpack.c.bf16 %v4549, %v4547
        %v5370 = vpack.c.bf16 %v4553, %v4551
        %v5371 = vpack.c.bf16 %v4557, %v4555
        %v5372 = vpack.c.bf16 %v4561, %v4559
        %v5373 = vpack.c.bf16 %v4565, %v4563
        %v5374 = vpack.c.bf16 %v4569, %v4567
        %v5375 = vpack.c.bf16 %v4573, %v4571
        %v5376 = vpack.c.bf16 %v4577, %v4575
        %v5377 = vpack.c.bf16 %v4581, %v4579
        %v5378 = vpack.c.bf16 %v4585, %v4583
        %v5379 = vpack.c.bf16 %v4589, %v4587
        %v5380 = vpack.c.bf16 %v4593, %v4591
        %v5381 = vpack.c.bf16 %v4597, %v4595
        %v5382 = vpack.c.bf16 %v4601, %v4599
        %v5383 = vpack.c.bf16 %v4605, %v4603
        %v5384 = vpack.c.bf16 %v4609, %v4607
        %v5385 = vpack.c.bf16 %v4613, %v4611
        %v5386 = vpack.c.bf16 %v4617, %v4615
        %v5387 = vpack.c.bf16 %v4621, %v4619
        %v5388 = vpack.c.bf16 %v4625, %v4623
        %v5389 = vpack.c.bf16 %v4629, %v4627
        %v5390 = vpack.c.bf16 %v4633, %v4631
        %v5391 = vpack.c.bf16 %v4637, %v4635
        %v5392 = vpack.c.bf16 %v4641, %v4639
        %v5393 = vpack.c.bf16 %v4645, %v4643
        %v5394 = vpack.c.bf16 %v4649, %v4647
        %v5395 = vpack.c.bf16 %v4653, %v4651
        %v5396 = vpack.c.bf16 %v4657, %v4655
        %v5397 = vpack.c.bf16 %v4661, %v4659
        %v5398 = vpack.c.bf16 %v4665, %v4663
        %v5399 = vpack.c.bf16 %v4669, %v4667
        %v5400 = vpack.c.bf16 %v4673, %v4671
        %v5401 = vpack.c.bf16 %v4677, %v4675
        %v5402 = vpack.c.bf16 %v4681, %v4679
        %v5403 = vpack.c.bf16 %v4685, %v4683
        %v5404 = vpack.c.bf16 %v4689, %v4687
        %v5405 = vpack.c.bf16 %v4693, %v4691
        %v5406 = vpack.c.bf16 %v4697, %v4695
        %v5407 = vpack.c.bf16 %v4701, %v4699
        %v5408 = vpack.c.bf16 %v4705, %v4703
        %v5409 = vpack.c.bf16 %v4709, %v4707
        %v5410 = vpack.c.bf16 %v4713, %v4711
        %v5411 = vpack.c.bf16 %v4717, %v4715
        %v5412 = vpack.c.bf16 %v4721, %v4719
        %v5413 = vpack.c.bf16 %v4725, %v4723
        %v5414 = vpack.c.bf16 %v4729, %v4727
        %v5415 = vpack.c.bf16 %v4733, %v4731
        %v5416 = vpack.c.bf16 %v4737, %v4735
        %v5417 = vpack.c.bf16 %v4741, %v4739
        %v5418 = vpack.c.bf16 %v4745, %v4743
        %v5419 = vpack.c.bf16 %v4749, %v4747
        %v5420 = vpack.c.bf16 %v4753, %v4751
        %v5421 = vpack.c.bf16 %v4757, %v4755
        %v5422 = vpack.c.bf16 %v4761, %v4759
        %v5423 = vpack.c.bf16 %v4765, %v4763
        %v5424 = vpack.c.bf16 %v4769, %v4767
        %v5425 = vpack.c.bf16 %v4773, %v4771
        %v5426 = vpack.c.bf16 %v4777, %v4775
        %v5427 = vpack.c.bf16 %v4781, %v4779
        %v5428 = vpack.c.bf16 %v4785, %v4783
        %v5429 = vpack.c.bf16 %v4789, %v4787
        %v5430 = vpack.c.bf16 %v4793, %v4791
        %v5431 = vpack.c.bf16 %v4797, %v4795
        %v5432 = vpack.c.bf16 %v4801, %v4799
        %v5433 = vpack.c.bf16 %v4805, %v4803
        %v5434 = vpack.c.bf16 %v4809, %v4807
        %v5435 = vpack.c.bf16 %v4813, %v4811
        %v5436 = vpack.c.bf16 %v4817, %v4815
        %v5437 = vpack.c.bf16 %v4821, %v4819
        %v5438 = vpack.c.bf16 %v4825, %v4823
        %v5439 = vpack.c.bf16 %v4829, %v4827
        %v5440 = vpack.c.bf16 %v4833, %v4831
        %v5441 = vpack.c.bf16 %v4837, %v4835
        %v5442 = vpack.c.bf16 %v4841, %v4839
        %v5443 = vpack.c.bf16 %v4845, %v4843
        %v5444 = vpack.c.bf16 %v4849, %v4847
        %v5445 = vpack.c.bf16 %v4853, %v4851
        %v5446 = vpack.c.bf16 %v4857, %v4855
        %v5447 = vpack.c.bf16 %v4861, %v4859
        %v5448 = vpack.c.bf16 %v4865, %v4863
        %v5449 = vpack.c.bf16 %v4869, %v4867
        %v5450 = vpack.c.bf16 %v4873, %v4871
        %v5451 = vpack.c.bf16 %v4877, %v4875
        %v5452 = vpack.c.bf16 %v4881, %v4879
        %v5453 = vpack.c.bf16 %v4885, %v4883
        %v5454 = vpack.c.bf16 %v4889, %v4887
        %v5455 = vpack.c.bf16 %v4893, %v4891
        %v5456 = vpack.c.bf16 %v4897, %v4895
        %v5457 = vpack.c.bf16 %v4901, %v4899
        %v5458 = vpack.c.bf16 %v4905, %v4903
        %v5459 = vpack.c.bf16 %v4909, %v4907
        %v5460 = vpack.c.bf16 %v4913, %v4911
        %v5461 = vpack.c.bf16 %v4917, %v4915
        %v5462 = vpack.c.bf16 %v4921, %v4919
        %v5463 = vpack.c.bf16 %v4925, %v4923
        %v5464 = vpack.c.bf16 %v4929, %v4927
        %v5465 = vpack.c.bf16 %v4933, %v4931
        %v5466 = vpack.c.bf16 %v4937, %v4935
        %v5467 = vpack.c.bf16 %v4941, %v4939
        %v5468 = vpack.c.bf16 %v4945, %v4943
        %v5469 = vpack.c.bf16 %v4949, %v4947
        %v5470 = vpack.c.bf16 %v4953, %v4951
        %v5471 = vpack.c.bf16 %v4957, %v4955
        %v5472 = vpack.c.bf16 %v4961, %v4959
        %v5473 = vpack.c.bf16 %v4965, %v4963
        %v5474 = vpack.c.bf16 %v4969, %v4967
        %v5475 = vpack.c.bf16 %v4973, %v4971
        %v5476 = vpack.c.bf16 %v4977, %v4975
        %v5477 = vpack.c.bf16 %v4981, %v4979
        %v5478 = vpack.c.bf16 %v4985, %v4983
        %v5479 = vpack.c.bf16 %v4989, %v4987
        %v5480 = vpack.c.bf16 %v4993, %v4991
        %v5481 = vpack.c.bf16 %v4997, %v4995
        %v5482 = vpack.c.bf16 %v5001, %v4999
        %v5483 = vpack.c.bf16 %v5005, %v5003
        %v5484 = vpack.c.bf16 %v5009, %v5007
        %v5485 = vpack.c.bf16 %v5013, %v5011
        %v5486 = vpack.c.bf16 %v5017, %v5015
        %v5487 = vpack.c.bf16 %v5021, %v5019
        %v5488 = vpack.c.bf16 %v5025, %v5023
        %v5489 = vpack.c.bf16 %v5029, %v5027
        %v5490 = vpack.c.bf16 %v5033, %v5031
        %v5491 = vpack.c.bf16 %v5037, %v5035
        %v5492 = vpack.c.bf16 %v5041, %v5039
        %v5493 = vpack.c.bf16 %v5045, %v5043
        %v5494 = vpack.c.bf16 %v5049, %v5047
        %v5495 = vpack.c.bf16 %v5053, %v5051
        %v5496 = vpack.c.bf16 %v5057, %v5055
        %v5497 = vpack.c.bf16 %v5061, %v5059
        %v5498 = vpack.c.bf16 %v5065, %v5063
        %v5499 = vpack.c.bf16 %v5069, %v5067
        %v5500 = vpack.c.bf16 %v5073, %v5071
        %v5501 = vpack.c.bf16 %v5077, %v5075
        %v5502 = vpack.c.bf16 %v5081, %v5079
        %v5503 = vpack.c.bf16 %v5085, %v5083
        %v5504 = vpack.c.bf16 %v5089, %v5087
        %v5505 = vpack.c.bf16 %v5093, %v5091
        %v5506 = vpack.c.bf16 %v5097, %v5095
        %v5507 = vpack.c.bf16 %v5101, %v5099
        %v5508 = vpack.c.bf16 %v5105, %v5103
        %v5509 = vpack.c.bf16 %v5109, %v5107
        %v5510 = vpack.c.bf16 %v5113, %v5111
        %v5511 = vpack.c.bf16 %v5117, %v5115
        %v5512 = vpack.c.bf16 %v5121, %v5119
        %v5513 = vpack.c.bf16 %v5125, %v5123
        %v5514 = vpack.c.bf16 %v5129, %v5127
        %v5515 = vpack.c.bf16 %v5133, %v5131
        %v5516 = vpack.c.bf16 %v5137, %v5135
        %v5517 = vpack.c.bf16 %v5141, %v5139
        %v5518 = vpack.c.bf16 %v5145, %v5143
        %v5519 = vpack.c.bf16 %v5149, %v5147
        %v5520 = vpack.c.bf16 %v5153, %v5151
        %v5521 = vpack.c.bf16 %v5157, %v5155
        %v5522 = vpack.c.bf16 %v5161, %v5159
        %v5523 = vpack.c.bf16 %v5165, %v5163
        %v5524 = vpack.c.bf16 %v5169, %v5167
        %v5525 = vpack.c.bf16 %v5173, %v5171
        %v5526 = vpack.c.bf16 %v5177, %v5175
        %v5527 = vpack.c.bf16 %v5181, %v5179
        %v5528 = vpack.c.bf16 %v5185, %v5183
        %v5529 = vpack.c.bf16 %v5189, %v5187
        %v5530 = vpack.c.bf16 %v5193, %v5191
        %v5531 = vpack.c.bf16 %v5197, %v5195
        %v5532 = vpack.c.bf16 %v5201, %v5199
        %v5533 = vpack.c.bf16 %v5205, %v5203
        %v5534 = vpack.c.bf16 %v5209, %v5207
        %v5535 = vpack.c.bf16 %v5213, %v5211
        %v5536 = vpack.c.bf16 %v5217, %v5215
        %v5537 = vpack.c.bf16 %v5221, %v5219
        %v5538 = vpack.c.bf16 %v5225, %v5223
        %v5539 = vpack.c.bf16 %v5229, %v5227
        %v5540 = vpack.c.bf16 %v5233, %v5231
        %v5541 = vpack.c.bf16 %v5237, %v5235
        %v5542 = vpack.c.bf16 %v5241, %v5239
        %v5543 = vpack.c.bf16 %v5245, %v5243
        %v5544 = vpack.c.bf16 %v5249, %v5247
        %v5545 = vpack.c.bf16 %v5253, %v5251
        %v5546 = vpack.c.bf16 %v5257, %v5255
        %v5547 = vpack.c.bf16 %v5261, %v5259
        %v5548 = vpack.c.bf16 %v5265, %v5263
        %v5549 = vpack.c.bf16 %v5269, %v5267
        %v5550 = vpack.c.bf16 %v5273, %v5271
        %v5551 = vpack.c.bf16 %v5277, %v5275
        %v5552 = vpack.c.bf16 %v5281, %v5279
        %v5553 = vpack.c.bf16 %v5285, %v5283
        %v5554 = vpack.c.bf16 %v5289, %v5287
        %v5555 = vpack.c.bf16 %v5293, %v5291
        %v5556 = vpack.c.bf16 %v5297, %v5295
        %v5557 = vpack.c.bf16 %v5301, %v5299
        %v5558 = vpack.c.bf16 %v625, %v624
        %v5559 = vpack.c.bf16 %v627, %v626
        %v5560 = vpack.c.bf16 %v629, %v628
        %v5561 = vpack.c.bf16 %v631, %v630
        %v5562 = vpack.c.bf16 %v633, %v632
        %v5563 = vpack.c.bf16 %v635, %v634
        %v5564 = vpack.c.bf16 %v637, %v636
        %v5565 = vpack.c.bf16 %v639, %v638
        %v5567 = vunpack.c.l.b16 %v5558
        %v5568 = vunpack.c.h.b16 %v5558
        %v5569 = vpack.c.b16 %v5567, %v5567
        %v5570 = vpack.c.b16 %v5568, %v5568
        %v5605 = vunpack.c.l.b16 %v5302
        %v5606 = vunpack.c.h.b16 %v5302
        %v5607 = vunpack.c.l.b16 %v5303
        %v5608 = vunpack.c.h.b16 %v5303
        %v5609 = vunpack.c.l.b16 %v5304
        %v5610 = vunpack.c.h.b16 %v5304
        %v5611 = vunpack.c.l.b16 %v5305
        %v5612 = vunpack.c.h.b16 %v5305
        %v5613 = vunpack.c.l.b16 %v5306
        %v5614 = vunpack.c.h.b16 %v5306
        %v5615 = vunpack.c.l.b16 %v5307
        %v5616 = vunpack.c.h.b16 %v5307
        %v5617 = vunpack.c.l.b16 %v5308
        %v5618 = vunpack.c.h.b16 %v5308
        %v5619 = vunpack.c.l.b16 %v5309
        %v5620 = vunpack.c.h.b16 %v5309
        %v5621 = vunpack.c.l.b16 %v5310
        %v5622 = vunpack.c.h.b16 %v5310
        %v5623 = vunpack.c.l.b16 %v5311
        %v5624 = vunpack.c.h.b16 %v5311
        %v5625 = vunpack.c.l.b16 %v5312
        %v5626 = vunpack.c.h.b16 %v5312
        %v5627 = vunpack.c.l.b16 %v5313
        %v5628 = vunpack.c.h.b16 %v5313
        %v5629 = vunpack.c.l.b16 %v5314
        %v5630 = vunpack.c.h.b16 %v5314
        %v5631 = vunpack.c.l.b16 %v5315
        %v5632 = vunpack.c.h.b16 %v5315
        %v5633 = vunpack.c.l.b16 %v5316
        %v5634 = vunpack.c.h.b16 %v5316
        %v5635 = vunpack.c.l.b16 %v5317
        %v5636 = vunpack.c.h.b16 %v5317
        %v5637 = vunpack.c.l.b16 %v5318
        %v5638 = vunpack.c.h.b16 %v5318
        %v5639 = vunpack.c.l.b16 %v5319
        %v5640 = vunpack.c.h.b16 %v5319
        %v5641 = vunpack.c.l.b16 %v5320
        %v5642 = vunpack.c.h.b16 %v5320
        %v5643 = vunpack.c.l.b16 %v5321
        %v5644 = vunpack.c.h.b16 %v5321
        %v5645 = vunpack.c.l.b16 %v5322
        %v5646 = vunpack.c.h.b16 %v5322
        %v5647 = vunpack.c.l.b16 %v5323
        %v5648 = vunpack.c.h.b16 %v5323
        %v5649 = vunpack.c.l.b16 %v5324
        %v5650 = vunpack.c.h.b16 %v5324
        %v5651 = vunpack.c.l.b16 %v5325
        %v5652 = vunpack.c.h.b16 %v5325
        %v5653 = vunpack.c.l.b16 %v5326
        %v5654 = vunpack.c.h.b16 %v5326
        %v5655 = vunpack.c.l.b16 %v5327
        %v5656 = vunpack.c.h.b16 %v5327
        %v5657 = vunpack.c.l.b16 %v5328
        %v5658 = vunpack.c.h.b16 %v5328
        %v5659 = vunpack.c.l.b16 %v5329
        %v5660 = vunpack.c.h.b16 %v5329
        %v5661 = vunpack.c.l.b16 %v5330
        %v5662 = vunpack.c.h.b16 %v5330
        %v5663 = vunpack.c.l.b16 %v5331
        %v5664 = vunpack.c.h.b16 %v5331
        %v5665 = vunpack.c.l.b16 %v5332
        %v5666 = vunpack.c.h.b16 %v5332
        %v5667 = vunpack.c.l.b16 %v5333
        %v5668 = vunpack.c.h.b16 %v5333
        %v5669 = vpack.c.b16 %v5607, %v5605
        %v5670 = vpack.c.b16 %v5608, %v5606
        %v5671 = vpack.c.b16 %v5611, %v5609
        %v5672 = vpack.c.b16 %v5612, %v5610
        %v5673 = vpack.c.b16 %v5615, %v5613
        %v5674 = vpack.c.b16 %v5616, %v5614
        %v5675 = vpack.c.b16 %v5619, %v5617
        %v5676 = vpack.c.b16 %v5620, %v5618
        %v5677 = vpack.c.b16 %v5623, %v5621
        %v5678 = vpack.c.b16 %v5624, %v5622
        %v5679 = vpack.c.b16 %v5627, %v5625
        %v5680 = vpack.c.b16 %v5628, %v5626
        %v5681 = vpack.c.b16 %v5631, %v5629
        %v5682 = vpack.c.b16 %v5632, %v5630
        %v5683 = vpack.c.b16 %v5635, %v5633
        %v5684 = vpack.c.b16 %v5636, %v5634
        %v5685 = vpack.c.b16 %v5639, %v5637
        %v5686 = vpack.c.b16 %v5640, %v5638
        %v5687 = vpack.c.b16 %v5643, %v5641
        %v5688 = vpack.c.b16 %v5644, %v5642
        %v5689 = vpack.c.b16 %v5647, %v5645
        %v5690 = vpack.c.b16 %v5648, %v5646
        %v5691 = vpack.c.b16 %v5651, %v5649
        %v5692 = vpack.c.b16 %v5652, %v5650
        %v5693 = vpack.c.b16 %v5655, %v5653
        %v5694 = vpack.c.b16 %v5656, %v5654
        %v5695 = vpack.c.b16 %v5659, %v5657
        %v5696 = vpack.c.b16 %v5660, %v5658
        %v5697 = vpack.c.b16 %v5663, %v5661
        %v5698 = vpack.c.b16 %v5664, %v5662
        %v5699 = vpack.c.b16 %v5667, %v5665
        %v5700 = vpack.c.b16 %v5668, %v5666
        %5733 = vmatpush.bf16.xpose.msra.mxu0 %v5683
        %5734 = vmatpush.bf16.xpose.msra.mxu0 %v5681
        %5735 = vmatpush.bf16.xpose.msra.mxu0 %v5679
        %5736 = vmatpush.bf16.xpose.msra.mxu0 %v5677
        %5737 = vmatpush.bf16.xpose.msra.mxu0 %v5675
        %5738 = vmatpush.bf16.xpose.msra.mxu0 %v5673
        %5739 = vmatpush.bf16.xpose.msra.mxu0 %v5671
        %5740 = vmatpush.bf16.xpose.msra.mxu0 %v5669
        %5741 = vmatmul.bf16.gmra.mxu0 %v5569
        %v5742 = vpop.f32.mrf.mxu0
        %v5743 = vadd.f32 0.0, %v5742
        %v5744 = vpop.f32.mrf.mxu0
        %5745 = vdwg.mxu0
        %5746 = vmatpush.bf16.xpose.msra.mxu0 %v5684
        %5747 = vmatpush.bf16.xpose.msra.mxu0 %v5682
        %5748 = vmatpush.bf16.xpose.msra.mxu0 %v5680
        %5749 = vmatpush.bf16.xpose.msra.mxu0 %v5678
        %5750 = vmatpush.bf16.xpose.msra.mxu0 %v5676
        %5751 = vmatpush.bf16.xpose.msra.mxu0 %v5674
        %5752 = vmatpush.bf16.xpose.msra.mxu0 %v5672
        %5753 = vmatpush.bf16.xpose.msra.mxu0 %v5670
        %5754 = vmatmul.bf16.gmra.mxu0 %v5570
        %v5755 = vpop.f32.mrf.mxu0
        %v5756 = vadd.f32 %v5743, %v5755
        %v5757 = vpop.f32.mrf.mxu0
        %5758 = vdwg.mxu0
        %5759 = vmatpush.bf16.xpose.msra.mxu0 %v5699
        %5760 = vmatpush.bf16.xpose.msra.mxu0 %v5697
        %5761 = vmatpush.bf16.xpose.msra.mxu0 %v5695
        %5762 = vmatpush.bf16.xpose.msra.mxu0 %v5693
        %5763 = vmatpush.bf16.xpose.msra.mxu0 %v5691
        %5764 = vmatpush.bf16.xpose.msra.mxu0 %v5689
        %5765 = vmatpush.bf16.xpose.msra.mxu0 %v5687
        %5766 = vmatpush.bf16.xpose.msra.mxu0 %v5685
        %5767 = vmatmul.bf16.gmra.mxu0 %v5569
        %v5768 = vpop.f32.mrf.mxu0
        %v5769 = vadd.f32 0.0, %v5768
        %v5770 = vpop.f32.mrf.mxu0
        %5771 = vdwg.mxu0
        %5772 = vmatpush.bf16.xpose.msra.mxu0 %v5700
        %5773 = vmatpush.bf16.xpose.msra.mxu0 %v5698
        %5774 = vmatpush.bf16.xpose.msra.mxu0 %v5696
        %5775 = vmatpush.bf16.xpose.msra.mxu0 %v5694
        %5776 = vmatpush.bf16.xpose.msra.mxu0 %v5692
        %5777 = vmatpush.bf16.xpose.msra.mxu0 %v5690
        %5778 = vmatpush.bf16.xpose.msra.mxu0 %v5688
        %5779 = vmatpush.bf16.xpose.msra.mxu0 %v5686
        %5780 = vmatmul.bf16.gmra.mxu0 %v5570
        %v5781 = vpop.f32.mrf.mxu0
        %v5782 = vadd.f32 %v5769, %v5781
        %v5783 = vpop.f32.mrf.mxu0
        %5784 = vdwg.mxu0
        %v5786 = vunpack.c.l.b16 %v5559
        %v5787 = vunpack.c.h.b16 %v5559
        %v5788 = vpack.c.b16 %v5786, %v5786
        %v5789 = vpack.c.b16 %v5787, %v5787
        %v5824 = vunpack.c.l.b16 %v5334
        %v5825 = vunpack.c.h.b16 %v5334
        %v5826 = vunpack.c.l.b16 %v5335
        %v5827 = vunpack.c.h.b16 %v5335
        %v5828 = vunpack.c.l.b16 %v5336
        %v5829 = vunpack.c.h.b16 %v5336
        %v5830 = vunpack.c.l.b16 %v5337
        %v5831 = vunpack.c.h.b16 %v5337
        %v5832 = vunpack.c.l.b16 %v5338
        %v5833 = vunpack.c.h.b16 %v5338
        %v5834 = vunpack.c.l.b16 %v5339
        %v5835 = vunpack.c.h.b16 %v5339
        %v5836 = vunpack.c.l.b16 %v5340
        %v5837 = vunpack.c.h.b16 %v5340
        %v5838 = vunpack.c.l.b16 %v5341
        %v5839 = vunpack.c.h.b16 %v5341
        %v5840 = vunpack.c.l.b16 %v5342
        %v5841 = vunpack.c.h.b16 %v5342
        %v5842 = vunpack.c.l.b16 %v5343
        %v5843 = vunpack.c.h.b16 %v5343
        %v5844 = vunpack.c.l.b16 %v5344
        %v5845 = vunpack.c.h.b16 %v5344
        %v5846 = vunpack.c.l.b16 %v5345
        %v5847 = vunpack.c.h.b16 %v5345
        %v5848 = vunpack.c.l.b16 %v5346
        %v5849 = vunpack.c.h.b16 %v5346
        %v5850 = vunpack.c.l.b16 %v5347
        %v5851 = vunpack.c.h.b16 %v5347
        %v5852 = vunpack.c.l.b16 %v5348
        %v5853 = vunpack.c.h.b16 %v5348
        %v5854 = vunpack.c.l.b16 %v5349
        %v5855 = vunpack.c.h.b16 %v5349
        %v5856 = vunpack.c.l.b16 %v5350
        %v5857 = vunpack.c.h.b16 %v5350
        %v5858 = vunpack.c.l.b16 %v5351
        %v5859 = vunpack.c.h.b16 %v5351
        %v5860 = vunpack.c.l.b16 %v5352
        %v5861 = vunpack.c.h.b16 %v5352
        %v5862 = vunpack.c.l.b16 %v5353
        %v5863 = vunpack.c.h.b16 %v5353
        %v5864 = vunpack.c.l.b16 %v5354
        %v5865 = vunpack.c.h.b16 %v5354
        %v5866 = vunpack.c.l.b16 %v5355
        %v5867 = vunpack.c.h.b16 %v5355
        %v5868 = vunpack.c.l.b16 %v5356
        %v5869 = vunpack.c.h.b16 %v5356
        %v5870 = vunpack.c.l.b16 %v5357
        %v5871 = vunpack.c.h.b16 %v5357
        %v5872 = vunpack.c.l.b16 %v5358
        %v5873 = vunpack.c.h.b16 %v5358
        %v5874 = vunpack.c.l.b16 %v5359
        %v5875 = vunpack.c.h.b16 %v5359
        %v5876 = vunpack.c.l.b16 %v5360
        %v5877 = vunpack.c.h.b16 %v5360
        %v5878 = vunpack.c.l.b16 %v5361
        %v5879 = vunpack.c.h.b16 %v5361
        %v5880 = vunpack.c.l.b16 %v5362
        %v5881 = vunpack.c.h.b16 %v5362
        %v5882 = vunpack.c.l.b16 %v5363
        %v5883 = vunpack.c.h.b16 %v5363
        %v5884 = vunpack.c.l.b16 %v5364
        %v5885 = vunpack.c.h.b16 %v5364
        %v5886 = vunpack.c.l.b16 %v5365
        %v5887 = vunpack.c.h.b16 %v5365
        %v5888 = vpack.c.b16 %v5826, %v5824
        %v5889 = vpack.c.b16 %v5827, %v5825
        %v5890 = vpack.c.b16 %v5830, %v5828
        %v5891 = vpack.c.b16 %v5831, %v5829
        %v5892 = vpack.c.b16 %v5834, %v5832
        %v5893 = vpack.c.b16 %v5835, %v5833
        %v5894 = vpack.c.b16 %v5838, %v5836
        %v5895 = vpack.c.b16 %v5839, %v5837
        %v5896 = vpack.c.b16 %v5842, %v5840
        %v5897 = vpack.c.b16 %v5843, %v5841
        %v5898 = vpack.c.b16 %v5846, %v5844
        %v5899 = vpack.c.b16 %v5847, %v5845
        %v5900 = vpack.c.b16 %v5850, %v5848
        %v5901 = vpack.c.b16 %v5851, %v5849
        %v5902 = vpack.c.b16 %v5854, %v5852
        %v5903 = vpack.c.b16 %v5855, %v5853
        %v5904 = vpack.c.b16 %v5858, %v5856
        %v5905 = vpack.c.b16 %v5859, %v5857
        %v5906 = vpack.c.b16 %v5862, %v5860
        %v5907 = vpack.c.b16 %v5863, %v5861
        %v5908 = vpack.c.b16 %v5866, %v5864
        %v5909 = vpack.c.b16 %v5867, %v5865
        %v5910 = vpack.c.b16 %v5870, %v5868
        %v5911 = vpack.c.b16 %v5871, %v5869
        %v5912 = vpack.c.b16 %v5874, %v5872
        %v5913 = vpack.c.b16 %v5875, %v5873
        %v5914 = vpack.c.b16 %v5878, %v5876
        %v5915 = vpack.c.b16 %v5879, %v5877
        %v5916 = vpack.c.b16 %v5882, %v5880
        %v5917 = vpack.c.b16 %v5883, %v5881
        %v5918 = vpack.c.b16 %v5886, %v5884
        %v5919 = vpack.c.b16 %v5887, %v5885
        %5952 = vmatpush.bf16.xpose.msra.mxu0 %v5902
        %5953 = vmatpush.bf16.xpose.msra.mxu0 %v5900
        %5954 = vmatpush.bf16.xpose.msra.mxu0 %v5898
        %5955 = vmatpush.bf16.xpose.msra.mxu0 %v5896
        %5956 = vmatpush.bf16.xpose.msra.mxu0 %v5894
        %5957 = vmatpush.bf16.xpose.msra.mxu0 %v5892
        %5958 = vmatpush.bf16.xpose.msra.mxu0 %v5890
        %5959 = vmatpush.bf16.xpose.msra.mxu0 %v5888
        %5960 = vmatmul.bf16.gmra.mxu0 %v5788
        %v5961 = vpop.f32.mrf.mxu0
        %v5962 = vadd.f32 0.0, %v5961
        %v5963 = vpop.f32.mrf.mxu0
        %5964 = vdwg.mxu0
        %5965 = vmatpush.bf16.xpose.msra.mxu0 %v5903
        %5966 = vmatpush.bf16.xpose.msra.mxu0 %v5901
        %5967 = vmatpush.bf16.xpose.msra.mxu0 %v5899
        %5968 = vmatpush.bf16.xpose.msra.mxu0 %v5897
        %5969 = vmatpush.bf16.xpose.msra.mxu0 %v5895
        %5970 = vmatpush.bf16.xpose.msra.mxu0 %v5893
        %5971 = vmatpush.bf16.xpose.msra.mxu0 %v5891
        %5972 = vmatpush.bf16.xpose.msra.mxu0 %v5889
        %5973 = vmatmul.bf16.gmra.mxu0 %v5789
        %v5974 = vpop.f32.mrf.mxu0
        %v5975 = vadd.f32 %v5962, %v5974
        %v5976 = vpop.f32.mrf.mxu0
        %5977 = vdwg.mxu0
        %5978 = vmatpush.bf16.xpose.msra.mxu0 %v5918
        %5979 = vmatpush.bf16.xpose.msra.mxu0 %v5916
        %5980 = vmatpush.bf16.xpose.msra.mxu0 %v5914
        %5981 = vmatpush.bf16.xpose.msra.mxu0 %v5912
        %5982 = vmatpush.bf16.xpose.msra.mxu0 %v5910
        %5983 = vmatpush.bf16.xpose.msra.mxu0 %v5908
        %5984 = vmatpush.bf16.xpose.msra.mxu0 %v5906
        %5985 = vmatpush.bf16.xpose.msra.mxu0 %v5904
        %5986 = vmatmul.bf16.gmra.mxu0 %v5788
        %v5987 = vpop.f32.mrf.mxu0
        %v5988 = vadd.f32 0.0, %v5987
        %v5989 = vpop.f32.mrf.mxu0
        %5990 = vdwg.mxu0
        %5991 = vmatpush.bf16.xpose.msra.mxu0 %v5919
        %5992 = vmatpush.bf16.xpose.msra.mxu0 %v5917
        %5993 = vmatpush.bf16.xpose.msra.mxu0 %v5915
        %5994 = vmatpush.bf16.xpose.msra.mxu0 %v5913
        %5995 = vmatpush.bf16.xpose.msra.mxu0 %v5911
        %5996 = vmatpush.bf16.xpose.msra.mxu0 %v5909
        %5997 = vmatpush.bf16.xpose.msra.mxu0 %v5907
        %5998 = vmatpush.bf16.xpose.msra.mxu0 %v5905
        %5999 = vmatmul.bf16.gmra.mxu0 %v5789
        %v6000 = vpop.f32.mrf.mxu0
        %v6001 = vadd.f32 %v5988, %v6000
        %v6002 = vpop.f32.mrf.mxu0
        %6003 = vdwg.mxu0
        %v6005 = vunpack.c.l.b16 %v5560
        %v6006 = vunpack.c.h.b16 %v5560
        %v6007 = vpack.c.b16 %v6005, %v6005
        %v6008 = vpack.c.b16 %v6006, %v6006
        %v6043 = vunpack.c.l.b16 %v5366
        %v6044 = vunpack.c.h.b16 %v5366
        %v6045 = vunpack.c.l.b16 %v5367
        %v6046 = vunpack.c.h.b16 %v5367
        %v6047 = vunpack.c.l.b16 %v5368
        %v6048 = vunpack.c.h.b16 %v5368
        %v6049 = vunpack.c.l.b16 %v5369
        %v6050 = vunpack.c.h.b16 %v5369
        %v6051 = vunpack.c.l.b16 %v5370
        %v6052 = vunpack.c.h.b16 %v5370
        %v6053 = vunpack.c.l.b16 %v5371
        %v6054 = vunpack.c.h.b16 %v5371
        %v6055 = vunpack.c.l.b16 %v5372
        %v6056 = vunpack.c.h.b16 %v5372
        %v6057 = vunpack.c.l.b16 %v5373
        %v6058 = vunpack.c.h.b16 %v5373
        %v6059 = vunpack.c.l.b16 %v5374
        %v6060 = vunpack.c.h.b16 %v5374
        %v6061 = vunpack.c.l.b16 %v5375
        %v6062 = vunpack.c.h.b16 %v5375
        %v6063 = vunpack.c.l.b16 %v5376
        %v6064 = vunpack.c.h.b16 %v5376
        %v6065 = vunpack.c.l.b16 %v5377
        %v6066 = vunpack.c.h.b16 %v5377
        %v6067 = vunpack.c.l.b16 %v5378
        %v6068 = vunpack.c.h.b16 %v5378
        %v6069 = vunpack.c.l.b16 %v5379
        %v6070 = vunpack.c.h.b16 %v5379
        %v6071 = vunpack.c.l.b16 %v5380
        %v6072 = vunpack.c.h.b16 %v5380
        %v6073 = vunpack.c.l.b16 %v5381
        %v6074 = vunpack.c.h.b16 %v5381
        %v6075 = vunpack.c.l.b16 %v5382
        %v6076 = vunpack.c.h.b16 %v5382
        %v6077 = vunpack.c.l.b16 %v5383
        %v6078 = vunpack.c.h.b16 %v5383
        %v6079 = vunpack.c.l.b16 %v5384
        %v6080 = vunpack.c.h.b16 %v5384
        %v6081 = vunpack.c.l.b16 %v5385
        %v6082 = vunpack.c.h.b16 %v5385
        %v6083 = vunpack.c.l.b16 %v5386
        %v6084 = vunpack.c.h.b16 %v5386
        %v6085 = vunpack.c.l.b16 %v5387
        %v6086 = vunpack.c.h.b16 %v5387
        %v6087 = vunpack.c.l.b16 %v5388
        %v6088 = vunpack.c.h.b16 %v5388
        %v6089 = vunpack.c.l.b16 %v5389
        %v6090 = vunpack.c.h.b16 %v5389
        %v6091 = vunpack.c.l.b16 %v5390
        %v6092 = vunpack.c.h.b16 %v5390
        %v6093 = vunpack.c.l.b16 %v5391
        %v6094 = vunpack.c.h.b16 %v5391
        %v6095 = vunpack.c.l.b16 %v5392
        %v6096 = vunpack.c.h.b16 %v5392
        %v6097 = vunpack.c.l.b16 %v5393
        %v6098 = vunpack.c.h.b16 %v5393
        %v6099 = vunpack.c.l.b16 %v5394
        %v6100 = vunpack.c.h.b16 %v5394
        %v6101 = vunpack.c.l.b16 %v5395
        %v6102 = vunpack.c.h.b16 %v5395
        %v6103 = vunpack.c.l.b16 %v5396
        %v6104 = vunpack.c.h.b16 %v5396
        %v6105 = vunpack.c.l.b16 %v5397
        %v6106 = vunpack.c.h.b16 %v5397
        %v6107 = vpack.c.b16 %v6045, %v6043
        %v6108 = vpack.c.b16 %v6046, %v6044
        %v6109 = vpack.c.b16 %v6049, %v6047
        %v6110 = vpack.c.b16 %v6050, %v6048
        %v6111 = vpack.c.b16 %v6053, %v6051
        %v6112 = vpack.c.b16 %v6054, %v6052
        %v6113 = vpack.c.b16 %v6057, %v6055
        %v6114 = vpack.c.b16 %v6058, %v6056
        %v6115 = vpack.c.b16 %v6061, %v6059
        %v6116 = vpack.c.b16 %v6062, %v6060
        %v6117 = vpack.c.b16 %v6065, %v6063
        %v6118 = vpack.c.b16 %v6066, %v6064
        %v6119 = vpack.c.b16 %v6069, %v6067
        %v6120 = vpack.c.b16 %v6070, %v6068
        %v6121 = vpack.c.b16 %v6073, %v6071
        %v6122 = vpack.c.b16 %v6074, %v6072
        %v6123 = vpack.c.b16 %v6077, %v6075
        %v6124 = vpack.c.b16 %v6078, %v6076
        %v6125 = vpack.c.b16 %v6081, %v6079
        %v6126 = vpack.c.b16 %v6082, %v6080
        %v6127 = vpack.c.b16 %v6085, %v6083
        %v6128 = vpack.c.b16 %v6086, %v6084
        %v6129 = vpack.c.b16 %v6089, %v6087
        %v6130 = vpack.c.b16 %v6090, %v6088
        %v6131 = vpack.c.b16 %v6093, %v6091
        %v6132 = vpack.c.b16 %v6094, %v6092
        %v6133 = vpack.c.b16 %v6097, %v6095
        %v6134 = vpack.c.b16 %v6098, %v6096
        %v6135 = vpack.c.b16 %v6101, %v6099
        %v6136 = vpack.c.b16 %v6102, %v6100
        %v6137 = vpack.c.b16 %v6105, %v6103
        %v6138 = vpack.c.b16 %v6106, %v6104
        %6171 = vmatpush.bf16.xpose.msra.mxu0 %v6121
        %6172 = vmatpush.bf16.xpose.msra.mxu0 %v6119
        %6173 = vmatpush.bf16.xpose.msra.mxu0 %v6117
        %6174 = vmatpush.bf16.xpose.msra.mxu0 %v6115
        %6175 = vmatpush.bf16.xpose.msra.mxu0 %v6113
        %6176 = vmatpush.bf16.xpose.msra.mxu0 %v6111
        %6177 = vmatpush.bf16.xpose.msra.mxu0 %v6109
        %6178 = vmatpush.bf16.xpose.msra.mxu0 %v6107
        %6179 = vmatmul.bf16.gmra.mxu0 %v6007
        %v6180 = vpop.f32.mrf.mxu0
        %v6181 = vadd.f32 0.0, %v6180
        %v6182 = vpop.f32.mrf.mxu0
        %6183 = vdwg.mxu0
        %6184 = vmatpush.bf16.xpose.msra.mxu0 %v6122
        %6185 = vmatpush.bf16.xpose.msra.mxu0 %v6120
        %6186 = vmatpush.bf16.xpose.msra.mxu0 %v6118
        %6187 = vmatpush.bf16.xpose.msra.mxu0 %v6116
        %6188 = vmatpush.bf16.xpose.msra.mxu0 %v6114
        %6189 = vmatpush.bf16.xpose.msra.mxu0 %v6112
        %6190 = vmatpush.bf16.xpose.msra.mxu0 %v6110
        %6191 = vmatpush.bf16.xpose.msra.mxu0 %v6108
        %6192 = vmatmul.bf16.gmra.mxu0 %v6008
        %v6193 = vpop.f32.mrf.mxu0
        %v6194 = vadd.f32 %v6181, %v6193
        %v6195 = vpop.f32.mrf.mxu0
        %6196 = vdwg.mxu0
        %6197 = vmatpush.bf16.xpose.msra.mxu0 %v6137
        %6198 = vmatpush.bf16.xpose.msra.mxu0 %v6135
        %6199 = vmatpush.bf16.xpose.msra.mxu0 %v6133
        %6200 = vmatpush.bf16.xpose.msra.mxu0 %v6131
        %6201 = vmatpush.bf16.xpose.msra.mxu0 %v6129
        %6202 = vmatpush.bf16.xpose.msra.mxu0 %v6127
        %6203 = vmatpush.bf16.xpose.msra.mxu0 %v6125
        %6204 = vmatpush.bf16.xpose.msra.mxu0 %v6123
        %6205 = vmatmul.bf16.gmra.mxu0 %v6007
        %v6206 = vpop.f32.mrf.mxu0
        %v6207 = vadd.f32 0.0, %v6206
        %v6208 = vpop.f32.mrf.mxu0
        %6209 = vdwg.mxu0
        %6210 = vmatpush.bf16.xpose.msra.mxu0 %v6138
        %6211 = vmatpush.bf16.xpose.msra.mxu0 %v6136
        %6212 = vmatpush.bf16.xpose.msra.mxu0 %v6134
        %6213 = vmatpush.bf16.xpose.msra.mxu0 %v6132
        %6214 = vmatpush.bf16.xpose.msra.mxu0 %v6130
        %6215 = vmatpush.bf16.xpose.msra.mxu0 %v6128
        %6216 = vmatpush.bf16.xpose.msra.mxu0 %v6126
        %6217 = vmatpush.bf16.xpose.msra.mxu0 %v6124
        %6218 = vmatmul.bf16.gmra.mxu0 %v6008
        %v6219 = vpop.f32.mrf.mxu0
        %v6220 = vadd.f32 %v6207, %v6219
        %v6221 = vpop.f32.mrf.mxu0
        %6222 = vdwg.mxu0
        %v6224 = vunpack.c.l.b16 %v5561
        %v6225 = vunpack.c.h.b16 %v5561
        %v6226 = vpack.c.b16 %v6224, %v6224
        %v6227 = vpack.c.b16 %v6225, %v6225
        %v6262 = vunpack.c.l.b16 %v5398
        %v6263 = vunpack.c.h.b16 %v5398
        %v6264 = vunpack.c.l.b16 %v5399
        %v6265 = vunpack.c.h.b16 %v5399
        %v6266 = vunpack.c.l.b16 %v5400
        %v6267 = vunpack.c.h.b16 %v5400
        %v6268 = vunpack.c.l.b16 %v5401
        %v6269 = vunpack.c.h.b16 %v5401
        %v6270 = vunpack.c.l.b16 %v5402
        %v6271 = vunpack.c.h.b16 %v5402
        %v6272 = vunpack.c.l.b16 %v5403
        %v6273 = vunpack.c.h.b16 %v5403
        %v6274 = vunpack.c.l.b16 %v5404
        %v6275 = vunpack.c.h.b16 %v5404
        %v6276 = vunpack.c.l.b16 %v5405
        %v6277 = vunpack.c.h.b16 %v5405
        %v6278 = vunpack.c.l.b16 %v5406
        %v6279 = vunpack.c.h.b16 %v5406
        %v6280 = vunpack.c.l.b16 %v5407
        %v6281 = vunpack.c.h.b16 %v5407
        %v6282 = vunpack.c.l.b16 %v5408
        %v6283 = vunpack.c.h.b16 %v5408
        %v6284 = vunpack.c.l.b16 %v5409
        %v6285 = vunpack.c.h.b16 %v5409
        %v6286 = vunpack.c.l.b16 %v5410
        %v6287 = vunpack.c.h.b16 %v5410
        %v6288 = vunpack.c.l.b16 %v5411
        %v6289 = vunpack.c.h.b16 %v5411
        %v6290 = vunpack.c.l.b16 %v5412
        %v6291 = vunpack.c.h.b16 %v5412
        %v6292 = vunpack.c.l.b16 %v5413
        %v6293 = vunpack.c.h.b16 %v5413
        %v6294 = vunpack.c.l.b16 %v5414
        %v6295 = vunpack.c.h.b16 %v5414
        %v6296 = vunpack.c.l.b16 %v5415
        %v6297 = vunpack.c.h.b16 %v5415
        %v6298 = vunpack.c.l.b16 %v5416
        %v6299 = vunpack.c.h.b16 %v5416
        %v6300 = vunpack.c.l.b16 %v5417
        %v6301 = vunpack.c.h.b16 %v5417
        %v6302 = vunpack.c.l.b16 %v5418
        %v6303 = vunpack.c.h.b16 %v5418
        %v6304 = vunpack.c.l.b16 %v5419
        %v6305 = vunpack.c.h.b16 %v5419
        %v6306 = vunpack.c.l.b16 %v5420
        %v6307 = vunpack.c.h.b16 %v5420
        %v6308 = vunpack.c.l.b16 %v5421
        %v6309 = vunpack.c.h.b16 %v5421
        %v6310 = vunpack.c.l.b16 %v5422
        %v6311 = vunpack.c.h.b16 %v5422
        %v6312 = vunpack.c.l.b16 %v5423
        %v6313 = vunpack.c.h.b16 %v5423
        %v6314 = vunpack.c.l.b16 %v5424
        %v6315 = vunpack.c.h.b16 %v5424
        %v6316 = vunpack.c.l.b16 %v5425
        %v6317 = vunpack.c.h.b16 %v5425
        %v6318 = vunpack.c.l.b16 %v5426
        %v6319 = vunpack.c.h.b16 %v5426
        %v6320 = vunpack.c.l.b16 %v5427
        %v6321 = vunpack.c.h.b16 %v5427
        %v6322 = vunpack.c.l.b16 %v5428
        %v6323 = vunpack.c.h.b16 %v5428
        %v6324 = vunpack.c.l.b16 %v5429
        %v6325 = vunpack.c.h.b16 %v5429
        %v6326 = vpack.c.b16 %v6264, %v6262
        %v6327 = vpack.c.b16 %v6265, %v6263
        %v6328 = vpack.c.b16 %v6268, %v6266
        %v6329 = vpack.c.b16 %v6269, %v6267
        %v6330 = vpack.c.b16 %v6272, %v6270
        %v6331 = vpack.c.b16 %v6273, %v6271
        %v6332 = vpack.c.b16 %v6276, %v6274
        %v6333 = vpack.c.b16 %v6277, %v6275
        %v6334 = vpack.c.b16 %v6280, %v6278
        %v6335 = vpack.c.b16 %v6281, %v6279
        %v6336 = vpack.c.b16 %v6284, %v6282
        %v6337 = vpack.c.b16 %v6285, %v6283
        %v6338 = vpack.c.b16 %v6288, %v6286
        %v6339 = vpack.c.b16 %v6289, %v6287
        %v6340 = vpack.c.b16 %v6292, %v6290
        %v6341 = vpack.c.b16 %v6293, %v6291
        %v6342 = vpack.c.b16 %v6296, %v6294
        %v6343 = vpack.c.b16 %v6297, %v6295
        %v6344 = vpack.c.b16 %v6300, %v6298
        %v6345 = vpack.c.b16 %v6301, %v6299
        %v6346 = vpack.c.b16 %v6304, %v6302
        %v6347 = vpack.c.b16 %v6305, %v6303
        %v6348 = vpack.c.b16 %v6308, %v6306
        %v6349 = vpack.c.b16 %v6309, %v6307
        %v6350 = vpack.c.b16 %v6312, %v6310
        %v6351 = vpack.c.b16 %v6313, %v6311
        %v6352 = vpack.c.b16 %v6316, %v6314
        %v6353 = vpack.c.b16 %v6317, %v6315
        %v6354 = vpack.c.b16 %v6320, %v6318
        %v6355 = vpack.c.b16 %v6321, %v6319
        %v6356 = vpack.c.b16 %v6324, %v6322
        %v6357 = vpack.c.b16 %v6325, %v6323
        %6390 = vmatpush.bf16.xpose.msra.mxu0 %v6340
        %6391 = vmatpush.bf16.xpose.msra.mxu0 %v6338
        %6392 = vmatpush.bf16.xpose.msra.mxu0 %v6336
        %6393 = vmatpush.bf16.xpose.msra.mxu0 %v6334
        %6394 = vmatpush.bf16.xpose.msra.mxu0 %v6332
        %6395 = vmatpush.bf16.xpose.msra.mxu0 %v6330
        %6396 = vmatpush.bf16.xpose.msra.mxu0 %v6328
        %6397 = vmatpush.bf16.xpose.msra.mxu0 %v6326
        %6398 = vmatmul.bf16.gmra.mxu0 %v6226
        %v6399 = vpop.f32.mrf.mxu0
        %v6400 = vadd.f32 0.0, %v6399
        %v6401 = vpop.f32.mrf.mxu0
        %6402 = vdwg.mxu0
        %6403 = vmatpush.bf16.xpose.msra.mxu0 %v6341
        %6404 = vmatpush.bf16.xpose.msra.mxu0 %v6339
        %6405 = vmatpush.bf16.xpose.msra.mxu0 %v6337
        %6406 = vmatpush.bf16.xpose.msra.mxu0 %v6335
        %6407 = vmatpush.bf16.xpose.msra.mxu0 %v6333
        %6408 = vmatpush.bf16.xpose.msra.mxu0 %v6331
        %6409 = vmatpush.bf16.xpose.msra.mxu0 %v6329
        %6410 = vmatpush.bf16.xpose.msra.mxu0 %v6327
        %6411 = vmatmul.bf16.gmra.mxu0 %v6227
        %v6412 = vpop.f32.mrf.mxu0
        %v6413 = vadd.f32 %v6400, %v6412
        %v6414 = vpop.f32.mrf.mxu0
        %6415 = vdwg.mxu0
        %6416 = vmatpush.bf16.xpose.msra.mxu0 %v6356
        %6417 = vmatpush.bf16.xpose.msra.mxu0 %v6354
        %6418 = vmatpush.bf16.xpose.msra.mxu0 %v6352
        %6419 = vmatpush.bf16.xpose.msra.mxu0 %v6350
        %6420 = vmatpush.bf16.xpose.msra.mxu0 %v6348
        %6421 = vmatpush.bf16.xpose.msra.mxu0 %v6346
        %6422 = vmatpush.bf16.xpose.msra.mxu0 %v6344
        %6423 = vmatpush.bf16.xpose.msra.mxu0 %v6342
        %6424 = vmatmul.bf16.gmra.mxu0 %v6226
        %v6425 = vpop.f32.mrf.mxu0
        %v6426 = vadd.f32 0.0, %v6425
        %v6427 = vpop.f32.mrf.mxu0
        %6428 = vdwg.mxu0
        %6429 = vmatpush.bf16.xpose.msra.mxu0 %v6357
        %6430 = vmatpush.bf16.xpose.msra.mxu0 %v6355
        %6431 = vmatpush.bf16.xpose.msra.mxu0 %v6353
        %6432 = vmatpush.bf16.xpose.msra.mxu0 %v6351
        %6433 = vmatpush.bf16.xpose.msra.mxu0 %v6349
        %6434 = vmatpush.bf16.xpose.msra.mxu0 %v6347
        %6435 = vmatpush.bf16.xpose.msra.mxu0 %v6345
        %6436 = vmatpush.bf16.xpose.msra.mxu0 %v6343
        %6437 = vmatmul.bf16.gmra.mxu0 %v6227
        %v6438 = vpop.f32.mrf.mxu0
        %v6439 = vadd.f32 %v6426, %v6438
        %v6440 = vpop.f32.mrf.mxu0
        %6441 = vdwg.mxu0
        %v6443 = vunpack.c.l.b16 %v5562
        %v6444 = vunpack.c.h.b16 %v5562
        %v6445 = vpack.c.b16 %v6443, %v6443
        %v6446 = vpack.c.b16 %v6444, %v6444
        %v6481 = vunpack.c.l.b16 %v5430
        %v6482 = vunpack.c.h.b16 %v5430
        %v6483 = vunpack.c.l.b16 %v5431
        %v6484 = vunpack.c.h.b16 %v5431
        %v6485 = vunpack.c.l.b16 %v5432
        %v6486 = vunpack.c.h.b16 %v5432
        %v6487 = vunpack.c.l.b16 %v5433
        %v6488 = vunpack.c.h.b16 %v5433
        %v6489 = vunpack.c.l.b16 %v5434
        %v6490 = vunpack.c.h.b16 %v5434
        %v6491 = vunpack.c.l.b16 %v5435
        %v6492 = vunpack.c.h.b16 %v5435
        %v6493 = vunpack.c.l.b16 %v5436
        %v6494 = vunpack.c.h.b16 %v5436
        %v6495 = vunpack.c.l.b16 %v5437
        %v6496 = vunpack.c.h.b16 %v5437
        %v6497 = vunpack.c.l.b16 %v5438
        %v6498 = vunpack.c.h.b16 %v5438
        %v6499 = vunpack.c.l.b16 %v5439
        %v6500 = vunpack.c.h.b16 %v5439
        %v6501 = vunpack.c.l.b16 %v5440
        %v6502 = vunpack.c.h.b16 %v5440
        %v6503 = vunpack.c.l.b16 %v5441
        %v6504 = vunpack.c.h.b16 %v5441
        %v6505 = vunpack.c.l.b16 %v5442
        %v6506 = vunpack.c.h.b16 %v5442
        %v6507 = vunpack.c.l.b16 %v5443
        %v6508 = vunpack.c.h.b16 %v5443
        %v6509 = vunpack.c.l.b16 %v5444
        %v6510 = vunpack.c.h.b16 %v5444
        %v6511 = vunpack.c.l.b16 %v5445
        %v6512 = vunpack.c.h.b16 %v5445
        %v6513 = vunpack.c.l.b16 %v5446
        %v6514 = vunpack.c.h.b16 %v5446
        %v6515 = vunpack.c.l.b16 %v5447
        %v6516 = vunpack.c.h.b16 %v5447
        %v6517 = vunpack.c.l.b16 %v5448
        %v6518 = vunpack.c.h.b16 %v5448
        %v6519 = vunpack.c.l.b16 %v5449
        %v6520 = vunpack.c.h.b16 %v5449
        %v6521 = vunpack.c.l.b16 %v5450
        %v6522 = vunpack.c.h.b16 %v5450
        %v6523 = vunpack.c.l.b16 %v5451
        %v6524 = vunpack.c.h.b16 %v5451
        %v6525 = vunpack.c.l.b16 %v5452
        %v6526 = vunpack.c.h.b16 %v5452
        %v6527 = vunpack.c.l.b16 %v5453
        %v6528 = vunpack.c.h.b16 %v5453
        %v6529 = vunpack.c.l.b16 %v5454
        %v6530 = vunpack.c.h.b16 %v5454
        %v6531 = vunpack.c.l.b16 %v5455
        %v6532 = vunpack.c.h.b16 %v5455
        %v6533 = vunpack.c.l.b16 %v5456
        %v6534 = vunpack.c.h.b16 %v5456
        %v6535 = vunpack.c.l.b16 %v5457
        %v6536 = vunpack.c.h.b16 %v5457
        %v6537 = vunpack.c.l.b16 %v5458
        %v6538 = vunpack.c.h.b16 %v5458
        %v6539 = vunpack.c.l.b16 %v5459
        %v6540 = vunpack.c.h.b16 %v5459
        %v6541 = vunpack.c.l.b16 %v5460
        %v6542 = vunpack.c.h.b16 %v5460
        %v6543 = vunpack.c.l.b16 %v5461
        %v6544 = vunpack.c.h.b16 %v5461
        %v6545 = vpack.c.b16 %v6483, %v6481
        %v6546 = vpack.c.b16 %v6484, %v6482
        %v6547 = vpack.c.b16 %v6487, %v6485
        %v6548 = vpack.c.b16 %v6488, %v6486
        %v6549 = vpack.c.b16 %v6491, %v6489
        %v6550 = vpack.c.b16 %v6492, %v6490
        %v6551 = vpack.c.b16 %v6495, %v6493
        %v6552 = vpack.c.b16 %v6496, %v6494
        %v6553 = vpack.c.b16 %v6499, %v6497
        %v6554 = vpack.c.b16 %v6500, %v6498
        %v6555 = vpack.c.b16 %v6503, %v6501
        %v6556 = vpack.c.b16 %v6504, %v6502
        %v6557 = vpack.c.b16 %v6507, %v6505
        %v6558 = vpack.c.b16 %v6508, %v6506
        %v6559 = vpack.c.b16 %v6511, %v6509
        %v6560 = vpack.c.b16 %v6512, %v6510
        %v6561 = vpack.c.b16 %v6515, %v6513
        %v6562 = vpack.c.b16 %v6516, %v6514
        %v6563 = vpack.c.b16 %v6519, %v6517
        %v6564 = vpack.c.b16 %v6520, %v6518
        %v6565 = vpack.c.b16 %v6523, %v6521
        %v6566 = vpack.c.b16 %v6524, %v6522
        %v6567 = vpack.c.b16 %v6527, %v6525
        %v6568 = vpack.c.b16 %v6528, %v6526
        %v6569 = vpack.c.b16 %v6531, %v6529
        %v6570 = vpack.c.b16 %v6532, %v6530
        %v6571 = vpack.c.b16 %v6535, %v6533
        %v6572 = vpack.c.b16 %v6536, %v6534
        %v6573 = vpack.c.b16 %v6539, %v6537
        %v6574 = vpack.c.b16 %v6540, %v6538
        %v6575 = vpack.c.b16 %v6543, %v6541
        %v6576 = vpack.c.b16 %v6544, %v6542
        %6609 = vmatpush.bf16.xpose.msra.mxu0 %v6559
        %6610 = vmatpush.bf16.xpose.msra.mxu0 %v6557
        %6611 = vmatpush.bf16.xpose.msra.mxu0 %v6555
        %6612 = vmatpush.bf16.xpose.msra.mxu0 %v6553
        %6613 = vmatpush.bf16.xpose.msra.mxu0 %v6551
        %6614 = vmatpush.bf16.xpose.msra.mxu0 %v6549
        %6615 = vmatpush.bf16.xpose.msra.mxu0 %v6547
        %6616 = vmatpush.bf16.xpose.msra.mxu0 %v6545
        %6617 = vmatmul.bf16.gmra.mxu0 %v6445
        %v6618 = vpop.f32.mrf.mxu0
        %v6619 = vadd.f32 0.0, %v6618
        %v6620 = vpop.f32.mrf.mxu0
        %6621 = vdwg.mxu0
        %6622 = vmatpush.bf16.xpose.msra.mxu0 %v6560
        %6623 = vmatpush.bf16.xpose.msra.mxu0 %v6558
        %6624 = vmatpush.bf16.xpose.msra.mxu0 %v6556
        %6625 = vmatpush.bf16.xpose.msra.mxu0 %v6554
        %6626 = vmatpush.bf16.xpose.msra.mxu0 %v6552
        %6627 = vmatpush.bf16.xpose.msra.mxu0 %v6550
        %6628 = vmatpush.bf16.xpose.msra.mxu0 %v6548
        %6629 = vmatpush.bf16.xpose.msra.mxu0 %v6546
        %6630 = vmatmul.bf16.gmra.mxu0 %v6446
        %v6631 = vpop.f32.mrf.mxu0
        %v6632 = vadd.f32 %v6619, %v6631
        %v6633 = vpop.f32.mrf.mxu0
        %6634 = vdwg.mxu0
        %6635 = vmatpush.bf16.xpose.msra.mxu0 %v6575
        %6636 = vmatpush.bf16.xpose.msra.mxu0 %v6573
        %6637 = vmatpush.bf16.xpose.msra.mxu0 %v6571
        %6638 = vmatpush.bf16.xpose.msra.mxu0 %v6569
        %6639 = vmatpush.bf16.xpose.msra.mxu0 %v6567
        %6640 = vmatpush.bf16.xpose.msra.mxu0 %v6565
        %6641 = vmatpush.bf16.xpose.msra.mxu0 %v6563
        %6642 = vmatpush.bf16.xpose.msra.mxu0 %v6561
        %6643 = vmatmul.bf16.gmra.mxu0 %v6445
        %v6644 = vpop.f32.mrf.mxu0
        %v6645 = vadd.f32 0.0, %v6644
        %v6646 = vpop.f32.mrf.mxu0
        %6647 = vdwg.mxu0
        %6648 = vmatpush.bf16.xpose.msra.mxu0 %v6576
        %6649 = vmatpush.bf16.xpose.msra.mxu0 %v6574
        %6650 = vmatpush.bf16.xpose.msra.mxu0 %v6572
        %6651 = vmatpush.bf16.xpose.msra.mxu0 %v6570
        %6652 = vmatpush.bf16.xpose.msra.mxu0 %v6568
        %6653 = vmatpush.bf16.xpose.msra.mxu0 %v6566
        %6654 = vmatpush.bf16.xpose.msra.mxu0 %v6564
        %6655 = vmatpush.bf16.xpose.msra.mxu0 %v6562
        %6656 = vmatmul.bf16.gmra.mxu0 %v6446
        %v6657 = vpop.f32.mrf.mxu0
        %v6658 = vadd.f32 %v6645, %v6657
        %v6659 = vpop.f32.mrf.mxu0
        %6660 = vdwg.mxu0
        %v6662 = vunpack.c.l.b16 %v5563
        %v6663 = vunpack.c.h.b16 %v5563
        %v6664 = vpack.c.b16 %v6662, %v6662
        %v6665 = vpack.c.b16 %v6663, %v6663
        %v6700 = vunpack.c.l.b16 %v5462
        %v6701 = vunpack.c.h.b16 %v5462
        %v6702 = vunpack.c.l.b16 %v5463
        %v6703 = vunpack.c.h.b16 %v5463
        %v6704 = vunpack.c.l.b16 %v5464
        %v6705 = vunpack.c.h.b16 %v5464
        %v6706 = vunpack.c.l.b16 %v5465
        %v6707 = vunpack.c.h.b16 %v5465
        %v6708 = vunpack.c.l.b16 %v5466
        %v6709 = vunpack.c.h.b16 %v5466
        %v6710 = vunpack.c.l.b16 %v5467
        %v6711 = vunpack.c.h.b16 %v5467
        %v6712 = vunpack.c.l.b16 %v5468
        %v6713 = vunpack.c.h.b16 %v5468
        %v6714 = vunpack.c.l.b16 %v5469
        %v6715 = vunpack.c.h.b16 %v5469
        %v6716 = vunpack.c.l.b16 %v5470
        %v6717 = vunpack.c.h.b16 %v5470
        %v6718 = vunpack.c.l.b16 %v5471
        %v6719 = vunpack.c.h.b16 %v5471
        %v6720 = vunpack.c.l.b16 %v5472
        %v6721 = vunpack.c.h.b16 %v5472
        %v6722 = vunpack.c.l.b16 %v5473
        %v6723 = vunpack.c.h.b16 %v5473
        %v6724 = vunpack.c.l.b16 %v5474
        %v6725 = vunpack.c.h.b16 %v5474
        %v6726 = vunpack.c.l.b16 %v5475
        %v6727 = vunpack.c.h.b16 %v5475
        %v6728 = vunpack.c.l.b16 %v5476
        %v6729 = vunpack.c.h.b16 %v5476
        %v6730 = vunpack.c.l.b16 %v5477
        %v6731 = vunpack.c.h.b16 %v5477
        %v6732 = vunpack.c.l.b16 %v5478
        %v6733 = vunpack.c.h.b16 %v5478
        %v6734 = vunpack.c.l.b16 %v5479
        %v6735 = vunpack.c.h.b16 %v5479
        %v6736 = vunpack.c.l.b16 %v5480
        %v6737 = vunpack.c.h.b16 %v5480
        %v6738 = vunpack.c.l.b16 %v5481
        %v6739 = vunpack.c.h.b16 %v5481
        %v6740 = vunpack.c.l.b16 %v5482
        %v6741 = vunpack.c.h.b16 %v5482
        %v6742 = vunpack.c.l.b16 %v5483
        %v6743 = vunpack.c.h.b16 %v5483
        %v6744 = vunpack.c.l.b16 %v5484
        %v6745 = vunpack.c.h.b16 %v5484
        %v6746 = vunpack.c.l.b16 %v5485
        %v6747 = vunpack.c.h.b16 %v5485
        %v6748 = vunpack.c.l.b16 %v5486
        %v6749 = vunpack.c.h.b16 %v5486
        %v6750 = vunpack.c.l.b16 %v5487
        %v6751 = vunpack.c.h.b16 %v5487
        %v6752 = vunpack.c.l.b16 %v5488
        %v6753 = vunpack.c.h.b16 %v5488
        %v6754 = vunpack.c.l.b16 %v5489
        %v6755 = vunpack.c.h.b16 %v5489
        %v6756 = vunpack.c.l.b16 %v5490
        %v6757 = vunpack.c.h.b16 %v5490
        %v6758 = vunpack.c.l.b16 %v5491
        %v6759 = vunpack.c.h.b16 %v5491
        %v6760 = vunpack.c.l.b16 %v5492
        %v6761 = vunpack.c.h.b16 %v5492
        %v6762 = vunpack.c.l.b16 %v5493
        %v6763 = vunpack.c.h.b16 %v5493
        %v6764 = vpack.c.b16 %v6702, %v6700
        %v6765 = vpack.c.b16 %v6703, %v6701
        %v6766 = vpack.c.b16 %v6706, %v6704
        %v6767 = vpack.c.b16 %v6707, %v6705
        %v6768 = vpack.c.b16 %v6710, %v6708
        %v6769 = vpack.c.b16 %v6711, %v6709
        %v6770 = vpack.c.b16 %v6714, %v6712
        %v6771 = vpack.c.b16 %v6715, %v6713
        %v6772 = vpack.c.b16 %v6718, %v6716
        %v6773 = vpack.c.b16 %v6719, %v6717
        %v6774 = vpack.c.b16 %v6722, %v6720
        %v6775 = vpack.c.b16 %v6723, %v6721
        %v6776 = vpack.c.b16 %v6726, %v6724
        %v6777 = vpack.c.b16 %v6727, %v6725
        %v6778 = vpack.c.b16 %v6730, %v6728
        %v6779 = vpack.c.b16 %v6731, %v6729
        %v6780 = vpack.c.b16 %v6734, %v6732
        %v6781 = vpack.c.b16 %v6735, %v6733
        %v6782 = vpack.c.b16 %v6738, %v6736
        %v6783 = vpack.c.b16 %v6739, %v6737
        %v6784 = vpack.c.b16 %v6742, %v6740
        %v6785 = vpack.c.b16 %v6743, %v6741
        %v6786 = vpack.c.b16 %v6746, %v6744
        %v6787 = vpack.c.b16 %v6747, %v6745
        %v6788 = vpack.c.b16 %v6750, %v6748
        %v6789 = vpack.c.b16 %v6751, %v6749
        %v6790 = vpack.c.b16 %v6754, %v6752
        %v6791 = vpack.c.b16 %v6755, %v6753
        %v6792 = vpack.c.b16 %v6758, %v6756
        %v6793 = vpack.c.b16 %v6759, %v6757
        %v6794 = vpack.c.b16 %v6762, %v6760
        %v6795 = vpack.c.b16 %v6763, %v6761
        %6828 = vmatpush.bf16.xpose.msra.mxu0 %v6778
        %6829 = vmatpush.bf16.xpose.msra.mxu0 %v6776
        %6830 = vmatpush.bf16.xpose.msra.mxu0 %v6774
        %6831 = vmatpush.bf16.xpose.msra.mxu0 %v6772
        %6832 = vmatpush.bf16.xpose.msra.mxu0 %v6770
        %6833 = vmatpush.bf16.xpose.msra.mxu0 %v6768
        %6834 = vmatpush.bf16.xpose.msra.mxu0 %v6766
        %6835 = vmatpush.bf16.xpose.msra.mxu0 %v6764
        %6836 = vmatmul.bf16.gmra.mxu0 %v6664
        %v6837 = vpop.f32.mrf.mxu0
        %v6838 = vadd.f32 0.0, %v6837
        %v6839 = vpop.f32.mrf.mxu0
        %6840 = vdwg.mxu0
        %6841 = vmatpush.bf16.xpose.msra.mxu0 %v6779
        %6842 = vmatpush.bf16.xpose.msra.mxu0 %v6777
        %6843 = vmatpush.bf16.xpose.msra.mxu0 %v6775
        %6844 = vmatpush.bf16.xpose.msra.mxu0 %v6773
        %6845 = vmatpush.bf16.xpose.msra.mxu0 %v6771
        %6846 = vmatpush.bf16.xpose.msra.mxu0 %v6769
        %6847 = vmatpush.bf16.xpose.msra.mxu0 %v6767
        %6848 = vmatpush.bf16.xpose.msra.mxu0 %v6765
        %6849 = vmatmul.bf16.gmra.mxu0 %v6665
        %v6850 = vpop.f32.mrf.mxu0
        %v6851 = vadd.f32 %v6838, %v6850
        %v6852 = vpop.f32.mrf.mxu0
        %6853 = vdwg.mxu0
        %6854 = vmatpush.bf16.xpose.msra.mxu0 %v6794
        %6855 = vmatpush.bf16.xpose.msra.mxu0 %v6792
        %6856 = vmatpush.bf16.xpose.msra.mxu0 %v6790
        %6857 = vmatpush.bf16.xpose.msra.mxu0 %v6788
        %6858 = vmatpush.bf16.xpose.msra.mxu0 %v6786
        %6859 = vmatpush.bf16.xpose.msra.mxu0 %v6784
        %6860 = vmatpush.bf16.xpose.msra.mxu0 %v6782
        %6861 = vmatpush.bf16.xpose.msra.mxu0 %v6780
        %6862 = vmatmul.bf16.gmra.mxu0 %v6664
        %v6863 = vpop.f32.mrf.mxu0
        %v6864 = vadd.f32 0.0, %v6863
        %v6865 = vpop.f32.mrf.mxu0
        %6866 = vdwg.mxu0
        %6867 = vmatpush.bf16.xpose.msra.mxu0 %v6795
        %6868 = vmatpush.bf16.xpose.msra.mxu0 %v6793
        %6869 = vmatpush.bf16.xpose.msra.mxu0 %v6791
        %6870 = vmatpush.bf16.xpose.msra.mxu0 %v6789
        %6871 = vmatpush.bf16.xpose.msra.mxu0 %v6787
        %6872 = vmatpush.bf16.xpose.msra.mxu0 %v6785
        %6873 = vmatpush.bf16.xpose.msra.mxu0 %v6783
        %6874 = vmatpush.bf16.xpose.msra.mxu0 %v6781
        %6875 = vmatmul.bf16.gmra.mxu0 %v6665
        %v6876 = vpop.f32.mrf.mxu0
        %v6877 = vadd.f32 %v6864, %v6876
        %v6878 = vpop.f32.mrf.mxu0
        %6879 = vdwg.mxu0
        %v6881 = vunpack.c.l.b16 %v5564
        %v6882 = vunpack.c.h.b16 %v5564
        %v6883 = vpack.c.b16 %v6881, %v6881
        %v6884 = vpack.c.b16 %v6882, %v6882
        %v6919 = vunpack.c.l.b16 %v5494
        %v6920 = vunpack.c.h.b16 %v5494
        %v6921 = vunpack.c.l.b16 %v5495
        %v6922 = vunpack.c.h.b16 %v5495
        %v6923 = vunpack.c.l.b16 %v5496
        %v6924 = vunpack.c.h.b16 %v5496
        %v6925 = vunpack.c.l.b16 %v5497
        %v6926 = vunpack.c.h.b16 %v5497
        %v6927 = vunpack.c.l.b16 %v5498
        %v6928 = vunpack.c.h.b16 %v5498
        %v6929 = vunpack.c.l.b16 %v5499
        %v6930 = vunpack.c.h.b16 %v5499
        %v6931 = vunpack.c.l.b16 %v5500
        %v6932 = vunpack.c.h.b16 %v5500
        %v6933 = vunpack.c.l.b16 %v5501
        %v6934 = vunpack.c.h.b16 %v5501
        %v6935 = vunpack.c.l.b16 %v5502
        %v6936 = vunpack.c.h.b16 %v5502
        %v6937 = vunpack.c.l.b16 %v5503
        %v6938 = vunpack.c.h.b16 %v5503
        %v6939 = vunpack.c.l.b16 %v5504
        %v6940 = vunpack.c.h.b16 %v5504
        %v6941 = vunpack.c.l.b16 %v5505
        %v6942 = vunpack.c.h.b16 %v5505
        %v6943 = vunpack.c.l.b16 %v5506
        %v6944 = vunpack.c.h.b16 %v5506
        %v6945 = vunpack.c.l.b16 %v5507
        %v6946 = vunpack.c.h.b16 %v5507
        %v6947 = vunpack.c.l.b16 %v5508
        %v6948 = vunpack.c.h.b16 %v5508
        %v6949 = vunpack.c.l.b16 %v5509
        %v6950 = vunpack.c.h.b16 %v5509
        %v6951 = vunpack.c.l.b16 %v5510
        %v6952 = vunpack.c.h.b16 %v5510
        %v6953 = vunpack.c.l.b16 %v5511
        %v6954 = vunpack.c.h.b16 %v5511
        %v6955 = vunpack.c.l.b16 %v5512
        %v6956 = vunpack.c.h.b16 %v5512
        %v6957 = vunpack.c.l.b16 %v5513
        %v6958 = vunpack.c.h.b16 %v5513
        %v6959 = vunpack.c.l.b16 %v5514
        %v6960 = vunpack.c.h.b16 %v5514
        %v6961 = vunpack.c.l.b16 %v5515
        %v6962 = vunpack.c.h.b16 %v5515
        %v6963 = vunpack.c.l.b16 %v5516
        %v6964 = vunpack.c.h.b16 %v5516
        %v6965 = vunpack.c.l.b16 %v5517
        %v6966 = vunpack.c.h.b16 %v5517
        %v6967 = vunpack.c.l.b16 %v5518
        %v6968 = vunpack.c.h.b16 %v5518
        %v6969 = vunpack.c.l.b16 %v5519
        %v6970 = vunpack.c.h.b16 %v5519
        %v6971 = vunpack.c.l.b16 %v5520
        %v6972 = vunpack.c.h.b16 %v5520
        %v6973 = vunpack.c.l.b16 %v5521
        %v6974 = vunpack.c.h.b16 %v5521
        %v6975 = vunpack.c.l.b16 %v5522
        %v6976 = vunpack.c.h.b16 %v5522
        %v6977 = vunpack.c.l.b16 %v5523
        %v6978 = vunpack.c.h.b16 %v5523
        %v6979 = vunpack.c.l.b16 %v5524
        %v6980 = vunpack.c.h.b16 %v5524
        %v6981 = vunpack.c.l.b16 %v5525
        %v6982 = vunpack.c.h.b16 %v5525
        %v6983 = vpack.c.b16 %v6921, %v6919
        %v6984 = vpack.c.b16 %v6922, %v6920
        %v6985 = vpack.c.b16 %v6925, %v6923
        %v6986 = vpack.c.b16 %v6926, %v6924
        %v6987 = vpack.c.b16 %v6929, %v6927
        %v6988 = vpack.c.b16 %v6930, %v6928
        %v6989 = vpack.c.b16 %v6933, %v6931
        %v6990 = vpack.c.b16 %v6934, %v6932
        %v6991 = vpack.c.b16 %v6937, %v6935
        %v6992 = vpack.c.b16 %v6938, %v6936
        %v6993 = vpack.c.b16 %v6941, %v6939
        %v6994 = vpack.c.b16 %v6942, %v6940
        %v6995 = vpack.c.b16 %v6945, %v6943
        %v6996 = vpack.c.b16 %v6946, %v6944
        %v6997 = vpack.c.b16 %v6949, %v6947
        %v6998 = vpack.c.b16 %v6950, %v6948
        %v6999 = vpack.c.b16 %v6953, %v6951
        %v7000 = vpack.c.b16 %v6954, %v6952
        %v7001 = vpack.c.b16 %v6957, %v6955
        %v7002 = vpack.c.b16 %v6958, %v6956
        %v7003 = vpack.c.b16 %v6961, %v6959
        %v7004 = vpack.c.b16 %v6962, %v6960
        %v7005 = vpack.c.b16 %v6965, %v6963
        %v7006 = vpack.c.b16 %v6966, %v6964
        %v7007 = vpack.c.b16 %v6969, %v6967
        %v7008 = vpack.c.b16 %v6970, %v6968
        %v7009 = vpack.c.b16 %v6973, %v6971
        %v7010 = vpack.c.b16 %v6974, %v6972
        %v7011 = vpack.c.b16 %v6977, %v6975
        %v7012 = vpack.c.b16 %v6978, %v6976
        %v7013 = vpack.c.b16 %v6981, %v6979
        %v7014 = vpack.c.b16 %v6982, %v6980
        %7047 = vmatpush.bf16.xpose.msra.mxu0 %v6997
        %7048 = vmatpush.bf16.xpose.msra.mxu0 %v6995
        %7049 = vmatpush.bf16.xpose.msra.mxu0 %v6993
        %7050 = vmatpush.bf16.xpose.msra.mxu0 %v6991
        %7051 = vmatpush.bf16.xpose.msra.mxu0 %v6989
        %7052 = vmatpush.bf16.xpose.msra.mxu0 %v6987
        %7053 = vmatpush.bf16.xpose.msra.mxu0 %v6985
        %7054 = vmatpush.bf16.xpose.msra.mxu0 %v6983
        %7055 = vmatmul.bf16.gmra.mxu0 %v6883
        %v7056 = vpop.f32.mrf.mxu0
        %v7057 = vadd.f32 0.0, %v7056
        %v7058 = vpop.f32.mrf.mxu0
        %7059 = vdwg.mxu0
        %7060 = vmatpush.bf16.xpose.msra.mxu0 %v6998
        %7061 = vmatpush.bf16.xpose.msra.mxu0 %v6996
        %7062 = vmatpush.bf16.xpose.msra.mxu0 %v6994
        %7063 = vmatpush.bf16.xpose.msra.mxu0 %v6992
        %7064 = vmatpush.bf16.xpose.msra.mxu0 %v6990
        %7065 = vmatpush.bf16.xpose.msra.mxu0 %v6988
        %7066 = vmatpush.bf16.xpose.msra.mxu0 %v6986
        %7067 = vmatpush.bf16.xpose.msra.mxu0 %v6984
        %7068 = vmatmul.bf16.gmra.mxu0 %v6884
        %v7069 = vpop.f32.mrf.mxu0
        %v7070 = vadd.f32 %v7057, %v7069
        %v7071 = vpop.f32.mrf.mxu0
        %7072 = vdwg.mxu0
        %7073 = vmatpush.bf16.xpose.msra.mxu0 %v7013
        %7074 = vmatpush.bf16.xpose.msra.mxu0 %v7011
        %7075 = vmatpush.bf16.xpose.msra.mxu0 %v7009
        %7076 = vmatpush.bf16.xpose.msra.mxu0 %v7007
        %7077 = vmatpush.bf16.xpose.msra.mxu0 %v7005
        %7078 = vmatpush.bf16.xpose.msra.mxu0 %v7003
        %7079 = vmatpush.bf16.xpose.msra.mxu0 %v7001
        %7080 = vmatpush.bf16.xpose.msra.mxu0 %v6999
        %7081 = vmatmul.bf16.gmra.mxu0 %v6883
        %v7082 = vpop.f32.mrf.mxu0
        %v7083 = vadd.f32 0.0, %v7082
        %v7084 = vpop.f32.mrf.mxu0
        %7085 = vdwg.mxu0
        %7086 = vmatpush.bf16.xpose.msra.mxu0 %v7014
        %7087 = vmatpush.bf16.xpose.msra.mxu0 %v7012
        %7088 = vmatpush.bf16.xpose.msra.mxu0 %v7010
        %7089 = vmatpush.bf16.xpose.msra.mxu0 %v7008
        %7090 = vmatpush.bf16.xpose.msra.mxu0 %v7006
        %7091 = vmatpush.bf16.xpose.msra.mxu0 %v7004
        %7092 = vmatpush.bf16.xpose.msra.mxu0 %v7002
        %7093 = vmatpush.bf16.xpose.msra.mxu0 %v7000
        %7094 = vmatmul.bf16.gmra.mxu0 %v6884
        %v7095 = vpop.f32.mrf.mxu0
        %v7096 = vadd.f32 %v7083, %v7095
        %v7097 = vpop.f32.mrf.mxu0
        %7098 = vdwg.mxu0
        %v7100 = vunpack.c.l.b16 %v5565
        %v7101 = vunpack.c.h.b16 %v5565
        %v7102 = vpack.c.b16 %v7100, %v7100
        %v7103 = vpack.c.b16 %v7101, %v7101
        %v7138 = vunpack.c.l.b16 %v5526
        %v7139 = vunpack.c.h.b16 %v5526
        %v7140 = vunpack.c.l.b16 %v5527
        %v7141 = vunpack.c.h.b16 %v5527
        %v7142 = vunpack.c.l.b16 %v5528
        %v7143 = vunpack.c.h.b16 %v5528
        %v7144 = vunpack.c.l.b16 %v5529
        %v7145 = vunpack.c.h.b16 %v5529
        %v7146 = vunpack.c.l.b16 %v5530
        %v7147 = vunpack.c.h.b16 %v5530
        %v7148 = vunpack.c.l.b16 %v5531
        %v7149 = vunpack.c.h.b16 %v5531
        %v7150 = vunpack.c.l.b16 %v5532
        %v7151 = vunpack.c.h.b16 %v5532
        %v7152 = vunpack.c.l.b16 %v5533
        %v7153 = vunpack.c.h.b16 %v5533
        %v7154 = vunpack.c.l.b16 %v5534
        %v7155 = vunpack.c.h.b16 %v5534
        %v7156 = vunpack.c.l.b16 %v5535
        %v7157 = vunpack.c.h.b16 %v5535
        %v7158 = vunpack.c.l.b16 %v5536
        %v7159 = vunpack.c.h.b16 %v5536
        %v7160 = vunpack.c.l.b16 %v5537
        %v7161 = vunpack.c.h.b16 %v5537
        %v7162 = vunpack.c.l.b16 %v5538
        %v7163 = vunpack.c.h.b16 %v5538
        %v7164 = vunpack.c.l.b16 %v5539
        %v7165 = vunpack.c.h.b16 %v5539
        %v7166 = vunpack.c.l.b16 %v5540
        %v7167 = vunpack.c.h.b16 %v5540
        %v7168 = vunpack.c.l.b16 %v5541
        %v7169 = vunpack.c.h.b16 %v5541
        %v7170 = vunpack.c.l.b16 %v5542
        %v7171 = vunpack.c.h.b16 %v5542
        %v7172 = vunpack.c.l.b16 %v5543
        %v7173 = vunpack.c.h.b16 %v5543
        %v7174 = vunpack.c.l.b16 %v5544
        %v7175 = vunpack.c.h.b16 %v5544
        %v7176 = vunpack.c.l.b16 %v5545
        %v7177 = vunpack.c.h.b16 %v5545
        %v7178 = vunpack.c.l.b16 %v5546
        %v7179 = vunpack.c.h.b16 %v5546
        %v7180 = vunpack.c.l.b16 %v5547
        %v7181 = vunpack.c.h.b16 %v5547
        %v7182 = vunpack.c.l.b16 %v5548
        %v7183 = vunpack.c.h.b16 %v5548
        %v7184 = vunpack.c.l.b16 %v5549
        %v7185 = vunpack.c.h.b16 %v5549
        %v7186 = vunpack.c.l.b16 %v5550
        %v7187 = vunpack.c.h.b16 %v5550
        %v7188 = vunpack.c.l.b16 %v5551
        %v7189 = vunpack.c.h.b16 %v5551
        %v7190 = vunpack.c.l.b16 %v5552
        %v7191 = vunpack.c.h.b16 %v5552
        %v7192 = vunpack.c.l.b16 %v5553
        %v7193 = vunpack.c.h.b16 %v5553
        %v7194 = vunpack.c.l.b16 %v5554
        %v7195 = vunpack.c.h.b16 %v5554
        %v7196 = vunpack.c.l.b16 %v5555
        %v7197 = vunpack.c.h.b16 %v5555
        %v7198 = vunpack.c.l.b16 %v5556
        %v7199 = vunpack.c.h.b16 %v5556
        %v7200 = vunpack.c.l.b16 %v5557
        %v7201 = vunpack.c.h.b16 %v5557
        %v7202 = vpack.c.b16 %v7140, %v7138
        %v7203 = vpack.c.b16 %v7141, %v7139
        %v7204 = vpack.c.b16 %v7144, %v7142
        %v7205 = vpack.c.b16 %v7145, %v7143
        %v7206 = vpack.c.b16 %v7148, %v7146
        %v7207 = vpack.c.b16 %v7149, %v7147
        %v7208 = vpack.c.b16 %v7152, %v7150
        %v7209 = vpack.c.b16 %v7153, %v7151
        %v7210 = vpack.c.b16 %v7156, %v7154
        %v7211 = vpack.c.b16 %v7157, %v7155
        %v7212 = vpack.c.b16 %v7160, %v7158
        %v7213 = vpack.c.b16 %v7161, %v7159
        %v7214 = vpack.c.b16 %v7164, %v7162
        %v7215 = vpack.c.b16 %v7165, %v7163
        %v7216 = vpack.c.b16 %v7168, %v7166
        %v7217 = vpack.c.b16 %v7169, %v7167
        %v7218 = vpack.c.b16 %v7172, %v7170
        %v7219 = vpack.c.b16 %v7173, %v7171
        %v7220 = vpack.c.b16 %v7176, %v7174
        %v7221 = vpack.c.b16 %v7177, %v7175
        %v7222 = vpack.c.b16 %v7180, %v7178
        %v7223 = vpack.c.b16 %v7181, %v7179
        %v7224 = vpack.c.b16 %v7184, %v7182
        %v7225 = vpack.c.b16 %v7185, %v7183
        %v7226 = vpack.c.b16 %v7188, %v7186
        %v7227 = vpack.c.b16 %v7189, %v7187
        %v7228 = vpack.c.b16 %v7192, %v7190
        %v7229 = vpack.c.b16 %v7193, %v7191
        %v7230 = vpack.c.b16 %v7196, %v7194
        %v7231 = vpack.c.b16 %v7197, %v7195
        %v7232 = vpack.c.b16 %v7200, %v7198
        %v7233 = vpack.c.b16 %v7201, %v7199
        %7266 = vmatpush.bf16.xpose.msra.mxu0 %v7216
        %7267 = vmatpush.bf16.xpose.msra.mxu0 %v7214
        %7268 = vmatpush.bf16.xpose.msra.mxu0 %v7212
        %7269 = vmatpush.bf16.xpose.msra.mxu0 %v7210
        %7270 = vmatpush.bf16.xpose.msra.mxu0 %v7208
        %7271 = vmatpush.bf16.xpose.msra.mxu0 %v7206
        %7272 = vmatpush.bf16.xpose.msra.mxu0 %v7204
        %7273 = vmatpush.bf16.xpose.msra.mxu0 %v7202
        %7274 = vmatmul.bf16.gmra.mxu0 %v7102
        %v7275 = vpop.f32.mrf.mxu0
        %v7276 = vadd.f32 0.0, %v7275
        %v7277 = vpop.f32.mrf.mxu0
        %7278 = vdwg.mxu0
        %7279 = vmatpush.bf16.xpose.msra.mxu0 %v7217
        %7280 = vmatpush.bf16.xpose.msra.mxu0 %v7215
        %7281 = vmatpush.bf16.xpose.msra.mxu0 %v7213
        %7282 = vmatpush.bf16.xpose.msra.mxu0 %v7211
        %7283 = vmatpush.bf16.xpose.msra.mxu0 %v7209
        %7284 = vmatpush.bf16.xpose.msra.mxu0 %v7207
        %7285 = vmatpush.bf16.xpose.msra.mxu0 %v7205
        %7286 = vmatpush.bf16.xpose.msra.mxu0 %v7203
        %7287 = vmatmul.bf16.gmra.mxu0 %v7103
        %v7288 = vpop.f32.mrf.mxu0
        %v7289 = vadd.f32 %v7276, %v7288
        %v7290 = vpop.f32.mrf.mxu0
        %7291 = vdwg.mxu0
        %7292 = vmatpush.bf16.xpose.msra.mxu0 %v7232
        %7293 = vmatpush.bf16.xpose.msra.mxu0 %v7230
        %7294 = vmatpush.bf16.xpose.msra.mxu0 %v7228
        %7295 = vmatpush.bf16.xpose.msra.mxu0 %v7226
        %7296 = vmatpush.bf16.xpose.msra.mxu0 %v7224
        %7297 = vmatpush.bf16.xpose.msra.mxu0 %v7222
        %7298 = vmatpush.bf16.xpose.msra.mxu0 %v7220
        %7299 = vmatpush.bf16.xpose.msra.mxu0 %v7218
        %7300 = vmatmul.bf16.gmra.mxu0 %v7102
        %v7301 = vpop.f32.mrf.mxu0
        %v7302 = vadd.f32 0.0, %v7301
        %v7303 = vpop.f32.mrf.mxu0
        %7304 = vdwg.mxu0
        %7305 = vmatpush.bf16.xpose.msra.mxu0 %v7233
        %7306 = vmatpush.bf16.xpose.msra.mxu0 %v7231
        %7307 = vmatpush.bf16.xpose.msra.mxu0 %v7229
        %7308 = vmatpush.bf16.xpose.msra.mxu0 %v7227
        %7309 = vmatpush.bf16.xpose.msra.mxu0 %v7225
        %7310 = vmatpush.bf16.xpose.msra.mxu0 %v7223
        %7311 = vmatpush.bf16.xpose.msra.mxu0 %v7221
        %7312 = vmatpush.bf16.xpose.msra.mxu0 %v7219
        %7313 = vmatmul.bf16.gmra.mxu0 %v7103
        %v7314 = vpop.f32.mrf.mxu0
        %v7315 = vadd.f32 %v7302, %v7314
        %v7316 = vpop.f32.mrf.mxu0
        %7317 = vdwg.mxu0
        %v7318 = vrcp.pop %v5756
        %v7319 = vrcp.pop %v5782
        %v7320 = vrcp.pop %v5975
        %v7321 = vrcp.pop %v6001
        %v7322 = vrcp.pop %v6194
        %v7323 = vrcp.pop %v6220
        %v7324 = vrcp.pop %v6413
        %v7325 = vrcp.pop %v6439
        %v7326 = vrcp.pop %v6632
        %v7327 = vrcp.pop %v6658
        %v7328 = vrcp.pop %v6851
        %v7329 = vrcp.pop %v6877
        %v7330 = vrcp.pop %v7070
        %v7331 = vrcp.pop %v7096
        %v7332 = vrcp.pop %v7289
        %v7333 = vrcp.pop %v7315
        %v7334 = vperm.slane %v7318, 4
        %v7335 = vperm.slane %v7319, 4
        %v7336 = vperm.slane %v7320, 4
        %v7337 = vperm.slane %v7321, 4
        %v7338 = vperm.slane %v7322, 4
        %v7339 = vperm.slane %v7323, 4
        %v7340 = vperm.slane %v7324, 4
        %v7341 = vperm.slane %v7325, 4
        %v7342 = vperm.slane %v7326, 4
        %v7343 = vperm.slane %v7327, 4
        %v7344 = vperm.slane %v7328, 4
        %v7345 = vperm.slane %v7329, 4
        %v7346 = vperm.slane %v7330, 4
        %v7347 = vperm.slane %v7331, 4
        %v7348 = vperm.slane %v7332, 4
        %v7349 = vperm.slane %v7333, 4
        %v7350 = vmul.f32 %v5756, %v7334
        %v7351 = vmul.f32 %v5782, %v7335
        %v7352 = vmul.f32 %v5975, %v7336
        %v7353 = vmul.f32 %v6001, %v7337
        %v7354 = vmul.f32 %v6194, %v7338
        %v7355 = vmul.f32 %v6220, %v7339
        %v7356 = vmul.f32 %v6413, %v7340
        %v7357 = vmul.f32 %v6439, %v7341
        %v7358 = vmul.f32 %v6632, %v7342
        %v7359 = vmul.f32 %v6658, %v7343
        %v7360 = vmul.f32 %v6851, %v7344
        %v7361 = vmul.f32 %v6877, %v7345
        %v7362 = vmul.f32 %v7070, %v7346
        %v7363 = vmul.f32 %v7096, %v7347
        %v7364 = vmul.f32 %v7289, %v7348
        %v7365 = vmul.f32 %v7315, %v7349
        %v7366 = vld [vmem:[%s4] sm:$0xff]
        %v7367 = vld [vmem:[%s4 + $0x8] sm:$0xff]
        %v7368 = vld [vmem:[%s4 + $0x10] sm:$0xff]
        %v7369 = vld [vmem:[%s4 + $0x18] sm:$0xff]
        %v7370 = vpack.c.bf16 %v7367, %v7366
        %v7371 = vpack.c.bf16 %v7369, %v7368
        %v7372 = vpack.c.bf16 %v7352, %v7350
        %v7373 = vpack.c.bf16 %v7353, %v7351
        %v7374 = vpack.c.bf16 %v7356, %v7354
        %v7375 = vpack.c.bf16 %v7357, %v7355
        %v7376 = vpack.c.bf16 %v7360, %v7358
        %v7377 = vpack.c.bf16 %v7361, %v7359
        %v7378 = vpack.c.bf16 %v7364, %v7362
        %v7379 = vpack.c.bf16 %v7365, %v7363
        %7380 = vset.pattern.permute.xlu0 2
        %7381 = vperm.xlu0 %7380, %v313
        %v7382 = vpop.permute.xlu0 %7381
        %7384 = vset.pattern.permute.xlu0 2
        %7385 = vperm.xlu0 %7384, %v314
        %v7386 = vpop.permute.xlu0 %7385
        %7388 = vset.pattern.permute.xlu0 2
        %7389 = vperm.xlu0 %7388, %v315
        %v7390 = vpop.permute.xlu0 %7389
        %7392 = vset.pattern.permute.xlu0 2
        %7393 = vperm.xlu0 %7392, %v316
        %v7394 = vpop.permute.xlu0 %7393
        %vm7396 = vcmask 523264
        %v7398 = vsel %vm7396, %v7370, 0
        %v7401 = vsel %vm7396, %v7371, 0
        %7403 = vmatpush.bf16.msra.mxu0 0
        %7404 = vmatpush.bf16.msra.mxu0 0
        %7405 = vmatpush.bf16.msra.mxu0 0
        %7406 = vmatpush.bf16.msra.mxu0 0
        %7407 = vmatpush.bf16.msra.mxu0 %v7378
        %7408 = vmatpush.bf16.msra.mxu0 %v7376
        %7409 = vmatpush.bf16.msra.mxu0 %v7374
        %7410 = vmatpush.bf16.msra.mxu0 %v7372
        %7411 = vmatmul.bf16.gmra.mxu0 %v7398
        %v7412 = vpop.f32.mrf.mxu0
        %v7413 = vadd.f32 %v7382, %v7412
        %v7414 = vpop.f32.mrf.mxu0
        %v7415 = vadd.f32 %v7386, %v7414
        %7416 = vmatmul.bf16.gmra.mxu0 %v7401
        %v7417 = vpop.f32.mrf.mxu0
        %v7418 = vadd.f32 %v7390, %v7417
        %v7419 = vpop.f32.mrf.mxu0
        %v7420 = vadd.f32 %v7394, %v7419
        %7421 = vdwg.mxu0
        %7422 = vmatpush.bf16.msra.mxu0 0
        %7423 = vmatpush.bf16.msra.mxu0 0
        %7424 = vmatpush.bf16.msra.mxu0 0
        %7425 = vmatpush.bf16.msra.mxu0 0
        %7426 = vmatpush.bf16.msra.mxu0 %v7379
        %7427 = vmatpush.bf16.msra.mxu0 %v7377
        %7428 = vmatpush.bf16.msra.mxu0 %v7375
        %7429 = vmatpush.bf16.msra.mxu0 %v7373
        %7430 = vmatmul.bf16.gmra.mxu0 %v7398
        %v7431 = vpop.f32.mrf.mxu0
        %v7432 = vadd.f32 %v7382, %v7431
        %v7433 = vpop.f32.mrf.mxu0
        %v7434 = vadd.f32 %v7386, %v7433
        %7435 = vmatmul.bf16.gmra.mxu0 %v7401
        %v7436 = vpop.f32.mrf.mxu0
        %v7437 = vadd.f32 %v7390, %v7436
        %v7438 = vpop.f32.mrf.mxu0
        %v7439 = vadd.f32 %v7394, %v7438
        %7440 = vdwg.mxu0
        %v7441 = vadd.f32 %v7413, %v640
        %v7442 = vadd.f32 %v7432, %v641
        %v7443 = vadd.f32 %v7415, %v642
        %v7444 = vadd.f32 %v7434, %v643
        %v7445 = vadd.f32 %v7418, %v644
        %v7446 = vadd.f32 %v7437, %v645
        %v7447 = vadd.f32 %v7420, %v646
        %v7448 = vadd.f32 %v7439, %v647
        %v7449 = vadd.f32 %v7441, %v7443
        %v7450 = vadd.f32 %v7449, %v7445
        %v7451 = vadd.f32 %v7450, %v7447
        %v7452 = vrot.slane %v7451, 4
        %v7453 = vadd.f32 %v7451, %v7452
        %v7454 = vrot.slane %v7453, 2
        %v7455 = vadd.f32 %v7453, %v7454
        %v7456 = vrot.slane %v7455, 1
        %v7457 = vadd.f32 %v7455, %v7456
        %v7458 = vadd.f32 %v7442, %v7444
        %v7459 = vadd.f32 %v7458, %v7446
        %v7460 = vadd.f32 %v7459, %v7448
        %v7461 = vrot.slane %v7460, 4
        %v7462 = vadd.f32 %v7460, %v7461
        %v7463 = vrot.slane %v7462, 2
        %v7464 = vadd.f32 %v7462, %v7463
        %v7465 = vrot.slane %v7464, 1
        %v7466 = vadd.f32 %v7464, %v7465
        %v7467 = vmul.f32 %v7457, %v349
        %v7468 = vmul.f32 %v7466, %v349
        %v7469 = vsub.f32 %v7441, %v7467
        %v7470 = vsub.f32 %v7442, %v7468
        %v7471 = vsub.f32 %v7443, %v7467
        %v7472 = vsub.f32 %v7444, %v7468
        %v7473 = vsub.f32 %v7445, %v7467
        %v7474 = vsub.f32 %v7446, %v7468
        %v7475 = vsub.f32 %v7447, %v7467
        %v7476 = vsub.f32 %v7448, %v7468
        %v7477 = vmul.f32 %v7469, %v7469
        %v7478 = vmul.f32 %v7470, %v7470
        %v7479 = vmul.f32 %v7471, %v7471
        %v7480 = vmul.f32 %v7472, %v7472
        %v7481 = vmul.f32 %v7473, %v7473
        %v7482 = vmul.f32 %v7474, %v7474
        %v7483 = vmul.f32 %v7475, %v7475
        %v7484 = vmul.f32 %v7476, %v7476
        %v7485 = vadd.f32 %v7477, %v7479
        %v7486 = vadd.f32 %v7485, %v7481
        %v7487 = vadd.f32 %v7486, %v7483
        %v7488 = vrot.slane %v7487, 4
        %v7489 = vadd.f32 %v7487, %v7488
        %v7490 = vrot.slane %v7489, 2
        %v7491 = vadd.f32 %v7489, %v7490
        %v7492 = vrot.slane %v7491, 1
        %v7493 = vadd.f32 %v7491, %v7492
        %v7494 = vadd.f32 %v7478, %v7480
        %v7495 = vadd.f32 %v7494, %v7482
        %v7496 = vadd.f32 %v7495, %v7484
        %v7497 = vrot.slane %v7496, 4
        %v7498 = vadd.f32 %v7496, %v7497
        %v7499 = vrot.slane %v7498, 2
        %v7500 = vadd.f32 %v7498, %v7499
        %v7501 = vrot.slane %v7500, 1
        %v7502 = vadd.f32 %v7500, %v7501
        %v7503 = vmul.f32 %v7493, %v349
        %v7504 = vmul.f32 %v7502, %v349
        %v7505 = vadd.f32 %v7503, 1e-05
        %v7506 = vadd.f32 %v7504, 1e-05
        %v7507 = vrsqrt.pop %v7505
        %v7508 = vmul.f32 %v7507, %v7505
        %v7509 = vmul.f32 %v7508, %v7507
        %v7510 = vmul.f32 0.5, %v7509
        %v7511 = vsub.f32 1.5, %v7510
        %v7512 = vmul.f32 %v7507, %v7511
        %vm7513 = vweird.f32 %v7505
        %vm7514 = vweird.f32 %v7507
        %vm7515 = vmor %vm7513, %vm7514
        %v7516 = vsel %vm7515, %v7507, %v7512
        %v7517 = vrsqrt.pop %v7506
        %v7518 = vmul.f32 %v7517, %v7506
        %v7519 = vmul.f32 %v7518, %v7517
        %v7520 = vmul.f32 0.5, %v7519
        %v7521 = vsub.f32 1.5, %v7520
        %v7522 = vmul.f32 %v7517, %v7521
        %vm7523 = vweird.f32 %v7506
        %vm7524 = vweird.f32 %v7517
        %vm7525 = vmor %vm7523, %vm7524
        %v7526 = vsel %vm7525, %v7517, %v7522
        %v7527 = vmul.f32 %v7469, %v7516
        %v7528 = vmul.f32 %v7470, %v7526
        %v7529 = vmul.f32 %v7471, %v7516
        %v7530 = vmul.f32 %v7472, %v7526
        %v7531 = vmul.f32 %v7473, %v7516
        %v7532 = vmul.f32 %v7474, %v7526
        %v7533 = vmul.f32 %v7475, %v7516
        %v7534 = vmul.f32 %v7476, %v7526
        %7535 = vset.pattern.permute.xlu0 3
        %7536 = vperm.xlu0 %7535, %v313
        %v7537 = vpop.permute.xlu0 %7536
        %7539 = vset.pattern.permute.xlu0 3
        %7540 = vperm.xlu0 %7539, %v314
        %v7541 = vpop.permute.xlu0 %7540
        %7543 = vset.pattern.permute.xlu0 3
        %7544 = vperm.xlu0 %7543, %v315
        %v7545 = vpop.permute.xlu0 %7544
        %7547 = vset.pattern.permute.xlu0 3
        %7548 = vperm.xlu0 %7547, %v316
        %v7549 = vpop.permute.xlu0 %7548
        %v7551 = vmul.f32 %v7527, %v7537
        %v7552 = vmul.f32 %v7528, %v7537
        %v7553 = vmul.f32 %v7529, %v7541
        %v7554 = vmul.f32 %v7530, %v7541
        %v7555 = vmul.f32 %v7531, %v7545
        %v7556 = vmul.f32 %v7532, %v7545
        %v7557 = vmul.f32 %v7533, %v7549
        %v7558 = vmul.f32 %v7534, %v7549
        %7559 = vset.pattern.permute.xlu0 4
        %7560 = vperm.xlu0 %7559, %v313
        %v7561 = vpop.permute.xlu0 %7560
        %7563 = vset.pattern.permute.xlu0 4
        %7564 = vperm.xlu0 %7563, %v314
        %v7565 = vpop.permute.xlu0 %7564
        %7567 = vset.pattern.permute.xlu0 4
        %7568 = vperm.xlu0 %7567, %v315
        %v7569 = vpop.permute.xlu0 %7568
        %7571 = vset.pattern.permute.xlu0 4
        %7572 = vperm.xlu0 %7571, %v316
        %v7573 = vpop.permute.xlu0 %7572
        %v7575 = vadd.f32 %v7551, %v7561
        %v7576 = vadd.f32 %v7552, %v7561
        %v7577 = vadd.f32 %v7553, %v7565
        %v7578 = vadd.f32 %v7554, %v7565
        %v7579 = vadd.f32 %v7555, %v7569
        %v7580 = vadd.f32 %v7556, %v7569
        %v7581 = vadd.f32 %v7557, %v7573
        %v7582 = vadd.f32 %v7558, %v7573
        %v7583 = vadd.f32 %v7575, %v7441
        %v7584 = vadd.f32 %v7576, %v7442
        %v7585 = vadd.f32 %v7577, %v7443
        %v7586 = vadd.f32 %v7578, %v7444
        %v7587 = vadd.f32 %v7579, %v7445
        %v7588 = vadd.f32 %v7580, %v7446
        %v7589 = vadd.f32 %v7581, %v7447
        %v7590 = vadd.f32 %v7582, %v7448
        %7591 = vst [vmem:[%s304] sm:$0xff] %v7583
        %7592 = vst [vmem:[%s304 + $0x8] sm:$0xff] %v7584
        %7593 = vst [vmem:[%s304 + $0x10] sm:$0xff] %v7585
        %7594 = vst [vmem:[%s304 + $0x18] sm:$0xff] %v7586
        %7595 = vst [vmem:[%s304 + $0x20] sm:$0xff] %v7587
        %7596 = vst [vmem:[%s304 + $0x28] sm:$0xff] %v7588
        %7597 = vst [vmem:[%s304 + $0x30] sm:$0xff] %v7589
        %7598 = vst [vmem:[%s304 + $0x38] sm:$0xff] %v7590
        %s7599 = sand.u32 %s183, 1
        %s7600 = scalar_lea.sflag [#allocation4], %s7599
        %s7601 = sand.u32 %s183, 1
        %s7602 = smul.addr %s7601, 64
        %s7603 = scalar_lea.vmem [#allocation5], %s7602
        // Predicated region
        $region49: #{tpu_custom_call.1} parent=43 // pred_check
          %p7604 = pneg %p193
        $region50: #{tpu_custom_call.1} parent=43 // pred_check_branch
          %7606 = sbr.rel (%p7604) target = $region52
        $region51: #{tpu_custom_call.1} parent=43 // pred_region
          %s7607 = smul.u32 2, %s28
          %7609 = vsyncadd %s7600, 0
          %s7610 = smul.addr %s27, 8
          %s7611 = sadd.s32 %s7607, %s7610
          %s7612 = smul.addr %s7611, 8
          %s7613 = scalar_lea.hbm %s6, %s7612
          %s7614 = sshll.u32 %s7603, 4
          %s7615 = int_to_ptr.vmem [resolvable:$true] %s7614
          %s7616 = sshll.u32 %s7613, 4
          %s7617 = int_to_ptr.hbm [resolvable:$true] %s7616
          %7622 = dma.vmem_to_hbm [thread:$0]  %s7615, 1024, %s7617, %s7600, 256, 256, 16
        $region52: #{tpu_custom_call.1} parent=43 // pred_fallthru
          _
      $region44: #{tpu_custom_call.1} parent=5 // pred_fallthru
        _
      %p7623 = scmp.le.s32.totalorder 2, %s18
      // Predicated region
      $region53: #{tpu_custom_call.1} parent=5 // pred_check
        %p7624 = pneg %p7623
      $region54: #{tpu_custom_call.1} parent=5 // pred_check_branch
        %7626 = sbr.rel (%p7624) target = $region56
      $region55: #{tpu_custom_call.1} parent=5 // pred_region
        %s7627 = ssub.s32 %s18, 2
        // Predicated region
        $region57: #{tpu_custom_call.1} parent=55 // pred_check
          %p7628 = pneg %p199
        $region58: #{tpu_custom_call.1} parent=55 // pred_check_branch
          %7630 = sbr.rel (%p7628) target = $region60
        $region59: #{tpu_custom_call.1} parent=55 // pred_region
          %s7631 = sand.u32 %s184, 1
          %s7632 = scalar_lea.sflag [#allocation4], %s7631
          %s7633 = sand.u32 %s184, 1
          %s7634 = smul.addr %s7633, 64
          %s7635 = scalar_lea.vmem [#allocation5], %s7634
          %7637 = dma.done %s7632, 1024
        $region60: #{tpu_custom_call.1} parent=55 // pred_fallthru
          _
      $region56: #{tpu_custom_call.1} parent=5 // pred_fallthru
        _
    $region6: #{tpu_custom_call.1} parent=1 // loop_footer
      %s22 = sadd.s32 1, %s18
    $region7: #{tpu_custom_call.1} parent=1 // loop_footer_branch
      %17 = sbr.rel target = $region3
    $region8: #{tpu_custom_call.1} parent=1 // loop_exit
      _
    %7638 = vsyncpa [#allocation3], 1
    %s7639 = scalar_lea.sflag [#allocation3], 1
    %7640 = vsyncpa %s7639, 1
    %7641 = vsyncpa [#allocation4], 1
    %s7642 = scalar_lea.sflag [#allocation4], 1
    %7643 = vsyncpa %s7642, 1

</llo_original>
